<compile_context>
chip_gen: v7x
topology: tpu7x:2x2x1
jax: 0.10.0
libtpu: 0.0.40
codegen_flags: <defaults>
</compile_context>

<pallas_src>
import jax
import jax.numpy as jnp
import numpy as np
from jax.experimental import pallas as pl
from jax.experimental.pallas import tpu as pltpu


# ----------------------------------------------------------------------------
# Fused Pallas kernel: whole forward pass for one image.
#   activations: (C, H*W)  [channels on sublanes, pixels on lanes]
#   selectors  : (HW_in, 9*HW_out) 0/1   weights: (Cout, K) bf16
# ----------------------------------------------------------------------------
def _attention_kernel(x_ref, q1_ref, w1_ref, b1_ref, s1_ref, w2_ref, b2_ref,
                      q2_ref, w3_ref, b3_ref, s2_ref, w4_ref, b4_ref,
                      w5_ref, b5_ref, u_ref, o_ref, im1_ref, im2_ref):
    bf16 = jnp.bfloat16

    def mm(a, b):
        # bf16 (or f32) operands, f32 accumulation on the MXU
        return jnp.dot(a, b, preferred_element_type=jnp.float32)

    hw1 = im1_ref.shape[1]      # spatial size after pool1 (64 for 16x16 input)
    hw2 = im2_ref.shape[1]      # spatial size after pool2 (16)

    # ---- pool1: MaxPool2d(3,2,1) -- ONE lane-dense tap matmul + slice max ----
    xb = x_ref[0]                                            # (512, 256) bf16
    taps1 = mm(xb, q1_ref[...])                              # (512, 9*hw1) f32
    p1 = taps1[:, 0:hw1]
    for t in range(1, 9):
        p1 = jnp.maximum(p1, taps1[:, t * hw1:(t + 1) * hw1])   # (512, hw1)

    # ---- conv1: 1x1, 512 -> 64, + ReLU --------------------------------------
    a1 = jnp.maximum(mm(w1_ref[...], p1.astype(bf16)) + b1_ref[...], 0.0)  # (64, hw1)

    # ---- conv2: 3x3 (pad 1), 64 -> 128, + ReLU ------------------------------
    # im2col: one lane-dense shift matmul, scatter tap blocks into VMEM scratch,
    # then a single K=576 weight matmul (accumulation stays inside the MXU).
    sh1 = mm(a1.astype(bf16), s1_ref[...])                   # (64, 9*hw1) f32
    for t in range(9):
        im1_ref[t * 64:(t + 1) * 64, :] = sh1[:, t * hw1:(t + 1) * hw1].astype(bf16)
    a2 = jnp.maximum(mm(w2_ref[...], im1_ref[...]) + b2_ref[...], 0.0)     # (128, hw1)

    # ---- pool2 ---------------------------------------------------------------
    taps2 = mm(a2.astype(bf16), q2_ref[...])                 # (128, 9*hw2) f32
    p2 = taps2[:, 0:hw2]
    for t in range(1, 9):
        p2 = jnp.maximum(p2, taps2[:, t * hw2:(t + 1) * hw2])   # (128, hw2)

    # ---- conv3: 1x1, 128 -> 64, + ReLU --------------------------------------
    a3 = jnp.maximum(mm(w3_ref[...], p2.astype(bf16)) + b3_ref[...], 0.0)  # (64, hw2)

    # ---- conv4: 3x3 (pad 1), 64 -> 128, + ReLU ------------------------------
    sh2 = mm(a3.astype(bf16), s2_ref[...])                   # (64, 9*hw2) f32
    for t in range(9):
        im2_ref[t * 64:(t + 1) * 64, :] = sh2[:, t * hw2:(t + 1) * hw2].astype(bf16)
    a4 = jnp.maximum(mm(w4_ref[...], im2_ref[...]) + b4_ref[...], 0.0)     # (128, hw2)

    # ---- conv5: 1x1, 128 -> 1 (+ReLU), 4x nearest upsample, sigmoid ---------
    # Cout == 1: VPU multiply + sublane reduce (no 1-wide MXU matmul).
    z = jnp.sum(a4 * w5_ref[...], axis=0, keepdims=True) + b5_ref[...]     # (1, hw2)
    z = jnp.maximum(z, 0.0)                                  # F.relu(conv5)
    # Upsample with a 0/1 selector matmul (copies commute with relu/sigmoid).
    z8 = jnp.broadcast_to(z, (8, hw2))                       # pad M to 8 sublanes
    zu = mm(z8.astype(jnp.float32), u_ref[...])              # (8, 16*hw2), rows equal
    o_ref[0] = pl.reciprocal(1.0 + jnp.exp(-zu[0:1, :]), approx=True)      # sigmoid


# ----------------------------------------------------------------------------
# Host-side one-time constant construction (selectors, concatenated weights)
# ----------------------------------------------------------------------------
def _pool_selectors_cat(H, W):
    """Concatenated 0/1 tap selectors for MaxPool2d(3,2,1): (HW, 9*Ho*Wo).

    Out-of-bounds taps select the (always in-bounds) window-center pixel, so
    the max over duplicated valid values is a no-op (== -inf padding)."""
    Ho, Wo = (H - 1) // 2 + 1, (W - 1) // 2 + 1
    Q = np.zeros((9, H * W, Ho * Wo), np.float32)
    for kh in range(3):
        for kw in range(3):
            t = kh * 3 + kw
            for io in range(Ho):
                for jo in range(Wo):
                    i, j = 2 * io + kh - 1, 2 * jo + kw - 1
                    if not (0 <= i < H and 0 <= j < W):
                        i, j = 2 * io, 2 * jo          # duplicate the center tap
                    Q[t, i * W + j, io * Wo + jo] = 1.0
    return Q.transpose(1, 0, 2).reshape(H * W, 9 * Ho * Wo)


def _shift_selectors_cat(H, W):
    """Concatenated 0/1 shift selectors for a 3x3 conv (pad 1): (HW, 9*HW)."""
    S = np.zeros((9, H * W, H * W), np.float32)
    for kh in range(3):
        for kw in range(3):
            t = kh * 3 + kw
            for i in range(H):
                for j in range(W):
                    si, sj = i + kh - 1, j + kw - 1
                    if 0 <= si < H and 0 <= sj < W:
                        S[t, si * W + sj, i * W + j] = 1.0
    return S.transpose(1, 0, 2).reshape(H * W, 9 * H * W)


def _upsample_selector(H2, W2, f=4):
    """0/1 nearest-neighbour upsample selector: (H2*W2, (f*H2)*(f*W2))."""
    Ho, Wo = H2 * f, W2 * f
    U = np.zeros((H2 * W2, Ho * Wo), np.float32)
    for i in range(Ho):
        for j in range(Wo):
            U[(i // f) * W2 + (j // f), i * Wo + j] = 1.0
    return U


def init_params(key):
    """Deterministic synthetic parameters, shapes per Attention.__init__."""
    def u(k, shape, fan_in):
        bound = 1.0 / np.sqrt(float(fan_in))
        return jax.random.uniform(k, shape, jnp.float32, -bound, bound)

    ks = jax.random.split(key, 10)
    return {
        "w1": u(ks[0], (512, 64), 512),          "b1": u(ks[1], (64,), 512),
        "w2": u(ks[2], (3, 3, 64, 128), 64 * 9), "b2": u(ks[3], (128,), 64 * 9),
        "w3": u(ks[4], (128, 64), 128),          "b3": u(ks[5], (64,), 128),
        "w4": u(ks[6], (3, 3, 64, 128), 64 * 9), "b4": u(ks[7], (128,), 64 * 9),
        "w5": u(ks[8], (128, 1), 128),           "b5": u(ks[9], (1,), 128),
    }


def prepare_constants(params, H, W):
    """One-time: concatenated bf16 weights/selectors + f32 biases."""
    H1, W1 = (H - 1) // 2 + 1, (W - 1) // 2 + 1
    H2, W2 = (H1 - 1) // 2 + 1, (W1 - 1) // 2 + 1
    bf, f32 = jnp.bfloat16, jnp.float32
    p = params
    # (3,3,Cin,Cout) -> (Cout, 9*Cin) with column index = tap*64 + ci
    w2c = jnp.transpose(p["w2"].reshape(9, 64, 128), (2, 0, 1)).reshape(128, 9 * 64)
    w4c = jnp.transpose(p["w4"].reshape(9, 64, 128), (2, 0, 1)).reshape(128, 9 * 64)
    return {
        "q1": jnp.asarray(_pool_selectors_cat(H, W), bf),      # (HW,  9*HW1)
        "w1t": p["w1"].T.astype(bf),                           # (64, 512)
        "b1": p["b1"].reshape(-1, 1).astype(f32),
        "s1": jnp.asarray(_shift_selectors_cat(H1, W1), bf),   # (HW1, 9*HW1)
        "w2c": w2c.astype(bf),                                 # (128, 576)
        "b2": p["b2"].reshape(-1, 1).astype(f32),
        "q2": jnp.asarray(_pool_selectors_cat(H1, W1), bf),    # (HW1, 9*HW2)
        "w3t": p["w3"].T.astype(bf),                           # (64, 128)
        "b3": p["b3"].reshape(-1, 1).astype(f32),
        "s2": jnp.asarray(_shift_selectors_cat(H2, W2), bf),   # (HW2, 9*HW2)
        "w4c": w4c.astype(bf),                                 # (128, 576)
        "b4": p["b4"].reshape(-1, 1).astype(f32),
        "w5": p["w5"].reshape(-1, 1).astype(f32),              # (128, 1)
        "b5": p["b5"].reshape(1, 1).astype(f32),
        "u": jnp.asarray(_upsample_selector(H2, W2), f32),     # (HW2, 16*HW2)
    }


_CONSTS = ("q1", "w1t", "b1", "s1", "w2c", "b2",
           "q2", "w3t", "b3", "s2", "w4c", "b4", "w5", "b5", "u")


# ----------------------------------------------------------------------------
# Forward pass (NCHW in, NCHW out -- matches the PyTorch module)
# ----------------------------------------------------------------------------
def attention_forward(x_nchw, consts):
    N, C, H, W = x_nchw.shape
    H1, W1 = (H - 1) // 2 + 1, (W - 1) // 2 + 1        # after pool1
    H2, W2 = (H1 - 1) // 2 + 1, (W1 - 1) // 2 + 1      # after pool2
    hw, hw1, hw2 = H * W, H1 * W1, H2 * W2
    hw_out = 16 * hw2                                   # after 4x upsample

    # NCHW is contiguous with HW minor -> free reshape to (N, C, H*W).
    # bf16 input: half the kernel input DMA & VMEM double-buffer.
    x = x_nchw.reshape(N, C, hw).astype(jnp.bfloat16)

    flops = N * (2 * C * hw * 9 * hw1                  # pool1 taps (one matmul)
                 + 2 * 64 * C * hw1                    # conv1
                 + 2 * 64 * hw1 * 9 * hw1              # conv2 im2col shifts
                 + 2 * 128 * 9 * 64 * hw1              # conv2 weights (K=576)
                 + 2 * 128 * hw1 * 9 * hw2             # pool2 taps
                 + 2 * 64 * 128 * hw2                  # conv3
                 + 2 * 64 * hw2 * 9 * hw2              # conv4 im2col shifts
                 + 2 * 128 * 9 * 64 * hw2              # conv4 weights (K=576)
                 + 2 * 128 * hw2                       # conv5
                 + 2 * 8 * hw2 * hw_out)               # upsample selector
    bytes_accessed = (int(x.size) * 2
                      + sum(int(v.size) * v.dtype.itemsize for v in consts.values())
                      + N * hw_out * 4)

    out = pl.pallas_call(
        _attention_kernel,
        out_shape=jax.ShapeDtypeStruct((N, 1, hw_out), jnp.float32),
        grid=(N,),
        in_specs=[pl.BlockSpec((1, C, hw), lambda n: (n, 0, 0))]
        + [pl.BlockSpec(tuple(consts[k].shape), lambda n: (0, 0)) for k in _CONSTS],
        out_specs=pl.BlockSpec((1, 1, hw_out), lambda n: (n, 0, 0)),
        scratch_shapes=[pltpu.VMEM((9 * 64, hw1), jnp.bfloat16),   # conv2 im2col
                        pltpu.VMEM((9 * 64, hw2), jnp.bfloat16)],  # conv4 im2col
        compiler_params=pltpu.CompilerParams(
            dimension_semantics=("parallel",),        # images across TensorCores
            vmem_limit_bytes=32 * 1024 * 1024),       # safe on v7x's 64 MiB too
        cost_estimate=pl.CostEstimate(flops=int(flops),
                                      transcendentals=int(N * hw_out),
                                      bytes_accessed=int(bytes_accessed)),
    )(x, *[consts[k] for k in _CONSTS])

    # Sigmoid and 4x nearest upsample already applied in-kernel (lane-dense).
    return out.reshape(N, 1, 4 * H2, 4 * W2)


# ----------------------------------------------------------------------------
# Plain-JAX (XLA) reference of the PyTorch module, for a correctness check
# ----------------------------------------------------------------------------
def reference_forward(x, p):
    dn = ("NCHW", "HWIO", "NCHW")

    def conv(v, w, b, pad):
        out = jax.lax.conv_general_dilated(v, w, (1, 1), pad, dimension_numbers=dn)
        return out + b.reshape(1, -1, 1, 1)

    def pool(v):
        return jax.lax.reduce_window(v, -jnp.inf, jax.lax.max,
                                     (1, 1, 3, 3), (1, 1, 2, 2),
                                     ((0, 0), (0, 0), (1, 1), (1, 1)))

    relu = jax.nn.relu
    v = pool(x)
    v = relu(conv(v, p["w1"].reshape(1, 1, 512, 64), p["b1"], ((0, 0), (0, 0))))
    v = relu(conv(v, p["w2"], p["b2"], ((1, 1), (1, 1))))
    v = pool(v)
    v = relu(conv(v, p["w3"].reshape(1, 1, 128, 64), p["b3"], ((0, 0), (0, 0))))
    v = relu(conv(v, p["w4"], p["b4"], ((1, 1), (1, 1))))
    v = relu(conv(v, p["w5"].reshape(1, 1, 128, 1), p["b5"], ((0, 0), (0, 0))))
    v = jnp.repeat(jnp.repeat(v, 4, axis=2), 4, axis=3)
    return jax.nn.sigmoid(v)


# ----------------------------------------------------------------------------
if __name__ == "__main__":
    key = jax.random.PRNGKey(0)
    pkey, xkey = jax.random.split(key)

    params = init_params(pkey)
    H = W = 16
    consts = prepare_constants(params, H, W)

    # Input: batch=2, channels=512 (required by conv1), spatial 16x16 (NCHW).
    x = jax.random.normal(xkey, (2, 512, H, W), dtype=jnp.float32)

    fwd = jax.jit(attention_forward)
    out = jax.block_until_ready(fwd(x, consts))

    assert out.shape == (2, 1, 16, 16), out.shape
    assert bool(jnp.all(jnp.isfinite(out)))
    assert bool(jnp.all((out > 0.0) & (out <= 1.0 + 1e-3)))   # sigmoid(relu(.)) range

    # Cross-check against the XLA reference (bf16 operands -> loose tolerance).
    ref = reference_forward(x, params)
    err = float(jnp.max(jnp.abs(out - ref)))
    assert err < 2e-2, f"max abs error vs reference: {err}"

    print("KERNEL_OK")
</pallas_src>

<mosaic_0001>
module attributes {stable_mosaic.version = 11 : i64} {
  func.func @_attention_kernel(%arg0: i32, %arg1: memref<1x512x256xbf16, #tpu.memory_space<vmem>>, %arg2: memref<256x576xbf16, #tpu.memory_space<vmem>>, %arg3: memref<64x512xbf16, #tpu.memory_space<vmem>>, %arg4: memref<64x1xf32, #tpu.memory_space<vmem>>, %arg5: memref<64x576xbf16, #tpu.memory_space<vmem>>, %arg6: memref<128x576xbf16, #tpu.memory_space<vmem>>, %arg7: memref<128x1xf32, #tpu.memory_space<vmem>>, %arg8: memref<64x144xbf16, #tpu.memory_space<vmem>>, %arg9: memref<64x128xbf16, #tpu.memory_space<vmem>>, %arg10: memref<64x1xf32, #tpu.memory_space<vmem>>, %arg11: memref<16x144xbf16, #tpu.memory_space<vmem>>, %arg12: memref<128x576xbf16, #tpu.memory_space<vmem>>, %arg13: memref<128x1xf32, #tpu.memory_space<vmem>>, %arg14: memref<128x1xf32, #tpu.memory_space<vmem>>, %arg15: memref<1x1xf32, #tpu.memory_space<vmem>>, %arg16: memref<16x256xf32, #tpu.memory_space<vmem>>, %arg17: memref<1x1x256xf32, #tpu.memory_space<vmem>>, %arg18: memref<576x64xbf16, #tpu.memory_space<vmem>>, %arg19: memref<576x16xbf16, #tpu.memory_space<vmem>>) attributes {dimension_semantics = [#tpu.dimension_semantics<parallel>], iteration_bounds = array<i64: 2>, scalar_prefetch = 0 : i64, scratch_operands = 2 : i64, tpu.core_type = #tpu.core_type<tc>, window_params = [{transform_indices = @transform_0, window_bounds = array<i64: 1, 512, 256>}, {pipeline_mode = #tpu.pipeline_mode<synchronous>, transform_indices = @transform_1, window_bounds = array<i64: 256, 576>}, {pipeline_mode = #tpu.pipeline_mode<synchronous>, transform_indices = @transform_2, window_bounds = array<i64: 64, 512>}, {pipeline_mode = #tpu.pipeline_mode<synchronous>, transform_indices = @transform_3, window_bounds = array<i64: 64, 1>}, {pipeline_mode = #tpu.pipeline_mode<synchronous>, transform_indices = @transform_4, window_bounds = array<i64: 64, 576>}, {pipeline_mode = #tpu.pipeline_mode<synchronous>, transform_indices = @transform_5, window_bounds = array<i64: 128, 576>}, {pipeline_mode = #tpu.pipeline_mode<synchronous>, transform_indices = @transform_6, window_bounds = array<i64: 128, 1>}, {pipeline_mode = #tpu.pipeline_mode<synchronous>, transform_indices = @transform_7, window_bounds = array<i64: 64, 144>}, {pipeline_mode = #tpu.pipeline_mode<synchronous>, transform_indices = @transform_8, window_bounds = array<i64: 64, 128>}, {pipeline_mode = #tpu.pipeline_mode<synchronous>, transform_indices = @transform_9, window_bounds = array<i64: 64, 1>}, {pipeline_mode = #tpu.pipeline_mode<synchronous>, transform_indices = @transform_10, window_bounds = array<i64: 16, 144>}, {pipeline_mode = #tpu.pipeline_mode<synchronous>, transform_indices = @transform_11, window_bounds = array<i64: 128, 576>}, {pipeline_mode = #tpu.pipeline_mode<synchronous>, transform_indices = @transform_12, window_bounds = array<i64: 128, 1>}, {pipeline_mode = #tpu.pipeline_mode<synchronous>, transform_indices = @transform_13, window_bounds = array<i64: 128, 1>}, {pipeline_mode = #tpu.pipeline_mode<synchronous>, transform_indices = @transform_14, window_bounds = array<i64: 1, 1>}, {pipeline_mode = #tpu.pipeline_mode<synchronous>, transform_indices = @transform_15, window_bounds = array<i64: 16, 256>}, {transform_indices = @transform_16, window_bounds = array<i64: 1, 1, 256>}]} {
    %c0 = arith.constant 0 : index
    %c0_0 = arith.constant 0 : index
    %c0_1 = arith.constant 0 : index
    %0 = vector.load %arg1[%c0, %c0_0, %c0_1] : memref<1x512x256xbf16, #tpu.memory_space<vmem>>, vector<1x512x256xbf16>
    %1 = vector.shape_cast %0 : vector<1x512x256xbf16> to vector<512x256xbf16>
    %c0_2 = arith.constant 0 : index
    %c0_3 = arith.constant 0 : index
    %2 = vector.load %arg2[%c0_2, %c0_3] : memref<256x576xbf16, #tpu.memory_space<vmem>>, vector<256x576xbf16>
    %cst = arith.constant dense<0.000000e+00> : vector<512x576xf32>
    %3 = tpu.matmul %1, %2, %cst {dimension_numbers = #tpu.dot_dimension_numbers<[1], [0], [0], [1], [0, 0, 1, 1], [], []>} : vector<512x256xbf16>, vector<256x576xbf16>, vector<512x576xf32> -> vector<512x576xf32>
    %4 = vector.extract_strided_slice %3 {offsets = [0, 0], sizes = [512, 64], strides = [1, 1]} : vector<512x576xf32> to vector<512x64xf32>
    %5 = vector.extract_strided_slice %3 {offsets = [0, 64], sizes = [512, 64], strides = [1, 1]} : vector<512x576xf32> to vector<512x64xf32>
    %6 = arith.maximumf %4, %5 : vector<512x64xf32>
    %7 = vector.extract_strided_slice %3 {offsets = [0, 128], sizes = [512, 64], strides = [1, 1]} : vector<512x576xf32> to vector<512x64xf32>
    %8 = arith.maximumf %6, %7 : vector<512x64xf32>
    %9 = vector.extract_strided_slice %3 {offsets = [0, 192], sizes = [512, 64], strides = [1, 1]} : vector<512x576xf32> to vector<512x64xf32>
    %10 = arith.maximumf %8, %9 : vector<512x64xf32>
    %11 = vector.extract_strided_slice %3 {offsets = [0, 256], sizes = [512, 64], strides = [1, 1]} : vector<512x576xf32> to vector<512x64xf32>
    %12 = arith.maximumf %10, %11 : vector<512x64xf32>
    %13 = vector.extract_strided_slice %3 {offsets = [0, 320], sizes = [512, 64], strides = [1, 1]} : vector<512x576xf32> to vector<512x64xf32>
    %14 = arith.maximumf %12, %13 : vector<512x64xf32>
    %15 = vector.extract_strided_slice %3 {offsets = [0, 384], sizes = [512, 64], strides = [1, 1]} : vector<512x576xf32> to vector<512x64xf32>
    %16 = arith.maximumf %14, %15 : vector<512x64xf32>
    %17 = vector.extract_strided_slice %3 {offsets = [0, 448], sizes = [512, 64], strides = [1, 1]} : vector<512x576xf32> to vector<512x64xf32>
    %18 = arith.maximumf %16, %17 : vector<512x64xf32>
    %19 = vector.extract_strided_slice %3 {offsets = [0, 512], sizes = [512, 64], strides = [1, 1]} : vector<512x576xf32> to vector<512x64xf32>
    %20 = arith.maximumf %18, %19 : vector<512x64xf32>
    %c0_4 = arith.constant 0 : index
    %c0_5 = arith.constant 0 : index
    %21 = vector.load %arg3[%c0_4, %c0_5] : memref<64x512xbf16, #tpu.memory_space<vmem>>, vector<64x512xbf16>
    %22 = arith.truncf %20 : vector<512x64xf32> to vector<512x64xbf16>
    %cst_6 = arith.constant dense<0.000000e+00> : vector<64x64xf32>
    %23 = tpu.matmul %21, %22, %cst_6 {dimension_numbers = #tpu.dot_dimension_numbers<[1], [0], [0], [1], [0, 0, 1, 1], [], []>} : vector<64x512xbf16>, vector<512x64xbf16>, vector<64x64xf32> -> vector<64x64xf32>
    %c0_7 = arith.constant 0 : index
    %c0_8 = arith.constant 0 : index
    %24 = vector.load %arg4[%c0_7, %c0_8] : memref<64x1xf32, #tpu.memory_space<vmem>>, vector<64x1xf32>
    %25 = vector.broadcast %24 : vector<64x1xf32> to vector<64x64xf32>
    %26 = arith.addf %23, %25 : vector<64x64xf32>
    %cst_9 = arith.constant 0.000000e+00 : f32
    %27 = vector.broadcast %cst_9 : f32 to vector<64x64xf32>
    %28 = arith.maximumf %26, %27 : vector<64x64xf32>
    %29 = arith.truncf %28 : vector<64x64xf32> to vector<64x64xbf16>
    %c0_10 = arith.constant 0 : index
    %c0_11 = arith.constant 0 : index
    %30 = vector.load %arg5[%c0_10, %c0_11] : memref<64x576xbf16, #tpu.memory_space<vmem>>, vector<64x576xbf16>
    %cst_12 = arith.constant dense<0.000000e+00> : vector<64x576xf32>
    %31 = tpu.matmul %29, %30, %cst_12 {dimension_numbers = #tpu.dot_dimension_numbers<[1], [0], [0], [1], [0, 0, 1, 1], [], []>} : vector<64x64xbf16>, vector<64x576xbf16>, vector<64x576xf32> -> vector<64x576xf32>
    %32 = vector.extract_strided_slice %31 {offsets = [0, 0], sizes = [64, 64], strides = [1, 1]} : vector<64x576xf32> to vector<64x64xf32>
    %33 = arith.truncf %32 : vector<64x64xf32> to vector<64x64xbf16>
    %c0_13 = arith.constant 0 : index
    %c0_14 = arith.constant 0 : index
    %34 = vector.load %arg18[%c0_13, %c0_14] : memref<576x64xbf16, #tpu.memory_space<vmem>>, vector<64x64xbf16>
    tpu.vector_store %arg18[%c0_13, %c0_14], %33 {strides = array<i32>} : memref<576x64xbf16, #tpu.memory_space<vmem>>, vector<64x64xbf16>,
    %35 = vector.extract_strided_slice %31 {offsets = [0, 64], sizes = [64, 64], strides = [1, 1]} : vector<64x576xf32> to vector<64x64xf32>
    %36 = arith.truncf %35 : vector<64x64xf32> to vector<64x64xbf16>
    %c64 = arith.constant 64 : index
    %c0_15 = arith.constant 0 : index
    %37 = vector.load %arg18[%c64, %c0_15] : memref<576x64xbf16, #tpu.memory_space<vmem>>, vector<64x64xbf16>
    tpu.vector_store %arg18[%c64, %c0_15], %36 {strides = array<i32>} : memref<576x64xbf16, #tpu.memory_space<vmem>>, vector<64x64xbf16>,
    %38 = vector.extract_strided_slice %31 {offsets = [0, 128], sizes = [64, 64], strides = [1, 1]} : vector<64x576xf32> to vector<64x64xf32>
    %39 = arith.truncf %38 : vector<64x64xf32> to vector<64x64xbf16>
    %c128 = arith.constant 128 : index
    %c0_16 = arith.constant 0 : index
    %40 = vector.load %arg18[%c128, %c0_16] : memref<576x64xbf16, #tpu.memory_space<vmem>>, vector<64x64xbf16>
    tpu.vector_store %arg18[%c128, %c0_16], %39 {strides = array<i32>} : memref<576x64xbf16, #tpu.memory_space<vmem>>, vector<64x64xbf16>,
    %41 = vector.extract_strided_slice %31 {offsets = [0, 192], sizes = [64, 64], strides = [1, 1]} : vector<64x576xf32> to vector<64x64xf32>
    %42 = arith.truncf %41 : vector<64x64xf32> to vector<64x64xbf16>
    %c192 = arith.constant 192 : index
    %c0_17 = arith.constant 0 : index
    %43 = vector.load %arg18[%c192, %c0_17] : memref<576x64xbf16, #tpu.memory_space<vmem>>, vector<64x64xbf16>
    tpu.vector_store %arg18[%c192, %c0_17], %42 {strides = array<i32>} : memref<576x64xbf16, #tpu.memory_space<vmem>>, vector<64x64xbf16>,
    %44 = vector.extract_strided_slice %31 {offsets = [0, 256], sizes = [64, 64], strides = [1, 1]} : vector<64x576xf32> to vector<64x64xf32>
    %45 = arith.truncf %44 : vector<64x64xf32> to vector<64x64xbf16>
    %c256 = arith.constant 256 : index
    %c0_18 = arith.constant 0 : index
    %46 = vector.load %arg18[%c256, %c0_18] : memref<576x64xbf16, #tpu.memory_space<vmem>>, vector<64x64xbf16>
    tpu.vector_store %arg18[%c256, %c0_18], %45 {strides = array<i32>} : memref<576x64xbf16, #tpu.memory_space<vmem>>, vector<64x64xbf16>,
    %47 = vector.extract_strided_slice %31 {offsets = [0, 320], sizes = [64, 64], strides = [1, 1]} : vector<64x576xf32> to vector<64x64xf32>
    %48 = arith.truncf %47 : vector<64x64xf32> to vector<64x64xbf16>
    %c320 = arith.constant 320 : index
    %c0_19 = arith.constant 0 : index
    %49 = vector.load %arg18[%c320, %c0_19] : memref<576x64xbf16, #tpu.memory_space<vmem>>, vector<64x64xbf16>
    tpu.vector_store %arg18[%c320, %c0_19], %48 {strides = array<i32>} : memref<576x64xbf16, #tpu.memory_space<vmem>>, vector<64x64xbf16>,
    %50 = vector.extract_strided_slice %31 {offsets = [0, 384], sizes = [64, 64], strides = [1, 1]} : vector<64x576xf32> to vector<64x64xf32>
    %51 = arith.truncf %50 : vector<64x64xf32> to vector<64x64xbf16>
    %c384 = arith.constant 384 : index
    %c0_20 = arith.constant 0 : index
    %52 = vector.load %arg18[%c384, %c0_20] : memref<576x64xbf16, #tpu.memory_space<vmem>>, vector<64x64xbf16>
    tpu.vector_store %arg18[%c384, %c0_20], %51 {strides = array<i32>} : memref<576x64xbf16, #tpu.memory_space<vmem>>, vector<64x64xbf16>,
    %53 = vector.extract_strided_slice %31 {offsets = [0, 448], sizes = [64, 64], strides = [1, 1]} : vector<64x576xf32> to vector<64x64xf32>
    %54 = arith.truncf %53 : vector<64x64xf32> to vector<64x64xbf16>
    %c448 = arith.constant 448 : index
    %c0_21 = arith.constant 0 : index
    %55 = vector.load %arg18[%c448, %c0_21] : memref<576x64xbf16, #tpu.memory_space<vmem>>, vector<64x64xbf16>
    tpu.vector_store %arg18[%c448, %c0_21], %54 {strides = array<i32>} : memref<576x64xbf16, #tpu.memory_space<vmem>>, vector<64x64xbf16>,
    %56 = vector.extract_strided_slice %31 {offsets = [0, 512], sizes = [64, 64], strides = [1, 1]} : vector<64x576xf32> to vector<64x64xf32>
    %57 = arith.truncf %56 : vector<64x64xf32> to vector<64x64xbf16>
    %c512 = arith.constant 512 : index
    %c0_22 = arith.constant 0 : index
    %58 = vector.load %arg18[%c512, %c0_22] : memref<576x64xbf16, #tpu.memory_space<vmem>>, vector<64x64xbf16>
    tpu.vector_store %arg18[%c512, %c0_22], %57 {strides = array<i32>} : memref<576x64xbf16, #tpu.memory_space<vmem>>, vector<64x64xbf16>,
    %c0_23 = arith.constant 0 : index
    %c0_24 = arith.constant 0 : index
    %59 = vector.load %arg6[%c0_23, %c0_24] : memref<128x576xbf16, #tpu.memory_space<vmem>>, vector<128x576xbf16>
    %c0_25 = arith.constant 0 : index
    %c0_26 = arith.constant 0 : index
    %60 = vector.load %arg18[%c0_25, %c0_26] : memref<576x64xbf16, #tpu.memory_space<vmem>>, vector<576x64xbf16>
    %cst_27 = arith.constant dense<0.000000e+00> : vector<128x64xf32>
    %61 = tpu.matmul %59, %60, %cst_27 {dimension_numbers = #tpu.dot_dimension_numbers<[1], [0], [0], [1], [0, 0, 1, 1], [], []>} : vector<128x576xbf16>, vector<576x64xbf16>, vector<128x64xf32> -> vector<128x64xf32>
    %c0_28 = arith.constant 0 : index
    %c0_29 = arith.constant 0 : index
    %62 = vector.load %arg7[%c0_28, %c0_29] : memref<128x1xf32, #tpu.memory_space<vmem>>, vector<128x1xf32>
    %63 = vector.broadcast %62 : vector<128x1xf32> to vector<128x64xf32>
    %64 = arith.addf %61, %63 : vector<128x64xf32>
    %cst_30 = arith.constant 0.000000e+00 : f32
    %65 = vector.broadcast %cst_30 : f32 to vector<128x64xf32>
    %66 = arith.maximumf %64, %65 : vector<128x64xf32>
    %67 = arith.truncf %66 : vector<128x64xf32> to vector<128x64xbf16>
    %c0_31 = arith.constant 0 : index
    %c0_32 = arith.constant 0 : index
    %68 = vector.load %arg8[%c0_31, %c0_32] : memref<64x144xbf16, #tpu.memory_space<vmem>>, vector<64x144xbf16>
    %cst_33 = arith.constant dense<0.000000e+00> : vector<128x144xf32>
    %69 = tpu.matmul %67, %68, %cst_33 {dimension_numbers = #tpu.dot_dimension_numbers<[1], [0], [0], [1], [0, 0, 1, 1], [], []>} : vector<128x64xbf16>, vector<64x144xbf16>, vector<128x144xf32> -> vector<128x144xf32>
    %70 = vector.extract_strided_slice %69 {offsets = [0, 0], sizes = [128, 16], strides = [1, 1]} : vector<128x144xf32> to vector<128x16xf32>
    %71 = vector.extract_strided_slice %69 {offsets = [0, 16], sizes = [128, 16], strides = [1, 1]} : vector<128x144xf32> to vector<128x16xf32>
    %72 = arith.maximumf %70, %71 : vector<128x16xf32>
    %73 = vector.extract_strided_slice %69 {offsets = [0, 32], sizes = [128, 16], strides = [1, 1]} : vector<128x144xf32> to vector<128x16xf32>
    %74 = arith.maximumf %72, %73 : vector<128x16xf32>
    %75 = vector.extract_strided_slice %69 {offsets = [0, 48], sizes = [128, 16], strides = [1, 1]} : vector<128x144xf32> to vector<128x16xf32>
    %76 = arith.maximumf %74, %75 : vector<128x16xf32>
    %77 = vector.extract_strided_slice %69 {offsets = [0, 64], sizes = [128, 16], strides = [1, 1]} : vector<128x144xf32> to vector<128x16xf32>
    %78 = arith.maximumf %76, %77 : vector<128x16xf32>
    %79 = vector.extract_strided_slice %69 {offsets = [0, 80], sizes = [128, 16], strides = [1, 1]} : vector<128x144xf32> to vector<128x16xf32>
    %80 = arith.maximumf %78, %79 : vector<128x16xf32>
    %81 = vector.extract_strided_slice %69 {offsets = [0, 96], sizes = [128, 16], strides = [1, 1]} : vector<128x144xf32> to vector<128x16xf32>
    %82 = arith.maximumf %80, %81 : vector<128x16xf32>
    %83 = vector.extract_strided_slice %69 {offsets = [0, 112], sizes = [128, 16], strides = [1, 1]} : vector<128x144xf32> to vector<128x16xf32>
    %84 = arith.maximumf %82, %83 : vector<128x16xf32>
    %85 = vector.extract_strided_slice %69 {offsets = [0, 128], sizes = [128, 16], strides = [1, 1]} : vector<128x144xf32> to vector<128x16xf32>
    %86 = arith.maximumf %84, %85 : vector<128x16xf32>
    %c0_34 = arith.constant 0 : index
    %c0_35 = arith.constant 0 : index
    %87 = vector.load %arg9[%c0_34, %c0_35] : memref<64x128xbf16, #tpu.memory_space<vmem>>, vector<64x128xbf16>
    %88 = arith.truncf %86 : vector<128x16xf32> to vector<128x16xbf16>
    %cst_36 = arith.constant dense<0.000000e+00> : vector<64x16xf32>
    %89 = tpu.matmul %87, %88, %cst_36 {dimension_numbers = #tpu.dot_dimension_numbers<[1], [0], [0], [1], [0, 0, 1, 1], [], []>} : vector<64x128xbf16>, vector<128x16xbf16>, vector<64x16xf32> -> vector<64x16xf32>
    %c0_37 = arith.constant 0 : index
    %c0_38 = arith.constant 0 : index
    %90 = vector.load %arg10[%c0_37, %c0_38] : memref<64x1xf32, #tpu.memory_space<vmem>>, vector<64x1xf32>
    %91 = vector.broadcast %90 : vector<64x1xf32> to vector<64x16xf32>
    %92 = arith.addf %89, %91 : vector<64x16xf32>
    %cst_39 = arith.constant 0.000000e+00 : f32
    %93 = vector.broadcast %cst_39 : f32 to vector<64x16xf32>
    %94 = arith.maximumf %92, %93 : vector<64x16xf32>
    %95 = arith.truncf %94 : vector<64x16xf32> to vector<64x16xbf16>
    %c0_40 = arith.constant 0 : index
    %c0_41 = arith.constant 0 : index
    %96 = vector.load %arg11[%c0_40, %c0_41] : memref<16x144xbf16, #tpu.memory_space<vmem>>, vector<16x144xbf16>
    %cst_42 = arith.constant dense<0.000000e+00> : vector<64x144xf32>
    %97 = tpu.matmul %95, %96, %cst_42 {dimension_numbers = #tpu.dot_dimension_numbers<[1], [0], [0], [1], [0, 0, 1, 1], [], []>} : vector<64x16xbf16>, vector<16x144xbf16>, vector<64x144xf32> -> vector<64x144xf32>
    %98 = vector.extract_strided_slice %97 {offsets = [0, 0], sizes = [64, 16], strides = [1, 1]} : vector<64x144xf32> to vector<64x16xf32>
    %99 = arith.truncf %98 : vector<64x16xf32> to vector<64x16xbf16>
    %c0_43 = arith.constant 0 : index
    %c0_44 = arith.constant 0 : index
    %100 = vector.load %arg19[%c0_43, %c0_44] : memref<576x16xbf16, #tpu.memory_space<vmem>>, vector<64x16xbf16>
    tpu.vector_store %arg19[%c0_43, %c0_44], %99 {strides = array<i32>} : memref<576x16xbf16, #tpu.memory_space<vmem>>, vector<64x16xbf16>,
    %101 = vector.extract_strided_slice %97 {offsets = [0, 16], sizes = [64, 16], strides = [1, 1]} : vector<64x144xf32> to vector<64x16xf32>
    %102 = arith.truncf %101 : vector<64x16xf32> to vector<64x16xbf16>
    %c64_45 = arith.constant 64 : index
    %c0_46 = arith.constant 0 : index
    %103 = vector.load %arg19[%c64_45, %c0_46] : memref<576x16xbf16, #tpu.memory_space<vmem>>, vector<64x16xbf16>
    tpu.vector_store %arg19[%c64_45, %c0_46], %102 {strides = array<i32>} : memref<576x16xbf16, #tpu.memory_space<vmem>>, vector<64x16xbf16>,
    %104 = vector.extract_strided_slice %97 {offsets = [0, 32], sizes = [64, 16], strides = [1, 1]} : vector<64x144xf32> to vector<64x16xf32>
    %105 = arith.truncf %104 : vector<64x16xf32> to vector<64x16xbf16>
    %c128_47 = arith.constant 128 : index
    %c0_48 = arith.constant 0 : index
    %106 = vector.load %arg19[%c128_47, %c0_48] : memref<576x16xbf16, #tpu.memory_space<vmem>>, vector<64x16xbf16>
    tpu.vector_store %arg19[%c128_47, %c0_48], %105 {strides = array<i32>} : memref<576x16xbf16, #tpu.memory_space<vmem>>, vector<64x16xbf16>,
    %107 = vector.extract_strided_slice %97 {offsets = [0, 48], sizes = [64, 16], strides = [1, 1]} : vector<64x144xf32> to vector<64x16xf32>
    %108 = arith.truncf %107 : vector<64x16xf32> to vector<64x16xbf16>
    %c192_49 = arith.constant 192 : index
    %c0_50 = arith.constant 0 : index
    %109 = vector.load %arg19[%c192_49, %c0_50] : memref<576x16xbf16, #tpu.memory_space<vmem>>, vector<64x16xbf16>
    tpu.vector_store %arg19[%c192_49, %c0_50], %108 {strides = array<i32>} : memref<576x16xbf16, #tpu.memory_space<vmem>>, vector<64x16xbf16>,
    %110 = vector.extract_strided_slice %97 {offsets = [0, 64], sizes = [64, 16], strides = [1, 1]} : vector<64x144xf32> to vector<64x16xf32>
    %111 = arith.truncf %110 : vector<64x16xf32> to vector<64x16xbf16>
    %c256_51 = arith.constant 256 : index
    %c0_52 = arith.constant 0 : index
    %112 = vector.load %arg19[%c256_51, %c0_52] : memref<576x16xbf16, #tpu.memory_space<vmem>>, vector<64x16xbf16>
    tpu.vector_store %arg19[%c256_51, %c0_52], %111 {strides = array<i32>} : memref<576x16xbf16, #tpu.memory_space<vmem>>, vector<64x16xbf16>,
    %113 = vector.extract_strided_slice %97 {offsets = [0, 80], sizes = [64, 16], strides = [1, 1]} : vector<64x144xf32> to vector<64x16xf32>
    %114 = arith.truncf %113 : vector<64x16xf32> to vector<64x16xbf16>
    %c320_53 = arith.constant 320 : index
    %c0_54 = arith.constant 0 : index
    %115 = vector.load %arg19[%c320_53, %c0_54] : memref<576x16xbf16, #tpu.memory_space<vmem>>, vector<64x16xbf16>
    tpu.vector_store %arg19[%c320_53, %c0_54], %114 {strides = array<i32>} : memref<576x16xbf16, #tpu.memory_space<vmem>>, vector<64x16xbf16>,
    %116 = vector.extract_strided_slice %97 {offsets = [0, 96], sizes = [64, 16], strides = [1, 1]} : vector<64x144xf32> to vector<64x16xf32>
    %117 = arith.truncf %116 : vector<64x16xf32> to vector<64x16xbf16>
    %c384_55 = arith.constant 384 : index
    %c0_56 = arith.constant 0 : index
    %118 = vector.load %arg19[%c384_55, %c0_56] : memref<576x16xbf16, #tpu.memory_space<vmem>>, vector<64x16xbf16>
    tpu.vector_store %arg19[%c384_55, %c0_56], %117 {strides = array<i32>} : memref<576x16xbf16, #tpu.memory_space<vmem>>, vector<64x16xbf16>,
    %119 = vector.extract_strided_slice %97 {offsets = [0, 112], sizes = [64, 16], strides = [1, 1]} : vector<64x144xf32> to vector<64x16xf32>
    %120 = arith.truncf %119 : vector<64x16xf32> to vector<64x16xbf16>
    %c448_57 = arith.constant 448 : index
    %c0_58 = arith.constant 0 : index
    %121 = vector.load %arg19[%c448_57, %c0_58] : memref<576x16xbf16, #tpu.memory_space<vmem>>, vector<64x16xbf16>
    tpu.vector_store %arg19[%c448_57, %c0_58], %120 {strides = array<i32>} : memref<576x16xbf16, #tpu.memory_space<vmem>>, vector<64x16xbf16>,
    %122 = vector.extract_strided_slice %97 {offsets = [0, 128], sizes = [64, 16], strides = [1, 1]} : vector<64x144xf32> to vector<64x16xf32>
    %123 = arith.truncf %122 : vector<64x16xf32> to vector<64x16xbf16>
    %c512_59 = arith.constant 512 : index
    %c0_60 = arith.constant 0 : index
    %124 = vector.load %arg19[%c512_59, %c0_60] : memref<576x16xbf16, #tpu.memory_space<vmem>>, vector<64x16xbf16>
    tpu.vector_store %arg19[%c512_59, %c0_60], %123 {strides = array<i32>} : memref<576x16xbf16, #tpu.memory_space<vmem>>, vector<64x16xbf16>,
    %c0_61 = arith.constant 0 : index
    %c0_62 = arith.constant 0 : index
    %125 = vector.load %arg12[%c0_61, %c0_62] : memref<128x576xbf16, #tpu.memory_space<vmem>>, vector<128x576xbf16>
    %c0_63 = arith.constant 0 : index
    %c0_64 = arith.constant 0 : index
    %126 = vector.load %arg19[%c0_63, %c0_64] : memref<576x16xbf16, #tpu.memory_space<vmem>>, vector<576x16xbf16>
    %cst_65 = arith.constant dense<0.000000e+00> : vector<128x16xf32>
    %127 = tpu.matmul %125, %126, %cst_65 {dimension_numbers = #tpu.dot_dimension_numbers<[1], [0], [0], [1], [0, 0, 1, 1], [], []>} : vector<128x576xbf16>, vector<576x16xbf16>, vector<128x16xf32> -> vector<128x16xf32>
    %c0_66 = arith.constant 0 : index
    %c0_67 = arith.constant 0 : index
    %128 = vector.load %arg13[%c0_66, %c0_67] : memref<128x1xf32, #tpu.memory_space<vmem>>, vector<128x1xf32>
    %129 = vector.broadcast %128 : vector<128x1xf32> to vector<128x16xf32>
    %130 = arith.addf %127, %129 : vector<128x16xf32>
    %cst_68 = arith.constant 0.000000e+00 : f32
    %131 = vector.broadcast %cst_68 : f32 to vector<128x16xf32>
    %132 = arith.maximumf %130, %131 : vector<128x16xf32>
    %c0_69 = arith.constant 0 : index
    %c0_70 = arith.constant 0 : index
    %133 = vector.load %arg14[%c0_69, %c0_70] : memref<128x1xf32, #tpu.memory_space<vmem>>, vector<128x1xf32>
    %134 = vector.broadcast %133 : vector<128x1xf32> to vector<128x16xf32>
    %135 = arith.mulf %132, %134 : vector<128x16xf32>
    %cst_71 = arith.constant dense<0.000000e+00> : vector<16xf32>
    %136 = vector.multi_reduction <add>, %135, %cst_71 [0] : vector<128x16xf32> to vector<16xf32>
    %137 = vector.shape_cast %136 : vector<16xf32> to vector<1x16xf32>
    %c0_72 = arith.constant 0 : index
    %c0_73 = arith.constant 0 : index
    %138 = vector.load %arg15[%c0_72, %c0_73] : memref<1x1xf32, #tpu.memory_space<vmem>>, vector<1x1xf32>
    %139 = vector.broadcast %138 : vector<1x1xf32> to vector<1x16xf32>
    %140 = arith.addf %137, %139 : vector<1x16xf32>
    %cst_74 = arith.constant 0.000000e+00 : f32
    %141 = vector.broadcast %cst_74 : f32 to vector<1x16xf32>
    %142 = arith.maximumf %140, %141 : vector<1x16xf32>
    %143 = vector.shape_cast %142 : vector<1x16xf32> to vector<1x16xf32>
    %144 = vector.broadcast %143 : vector<1x16xf32> to vector<8x16xf32>
    %c0_75 = arith.constant 0 : index
    %c0_76 = arith.constant 0 : index
    %145 = vector.load %arg16[%c0_75, %c0_76] : memref<16x256xf32, #tpu.memory_space<vmem>>, vector<16x256xf32>
    %cst_77 = arith.constant dense<0.000000e+00> : vector<8x256xf32>
    %146 = tpu.matmul %144, %145, %cst_77 {dimension_numbers = #tpu.dot_dimension_numbers<[1], [0], [0], [1], [0, 0, 1, 1], [], []>} : vector<8x16xf32>, vector<16x256xf32>, vector<8x256xf32> -> vector<8x256xf32>
    %147 = vector.extract_strided_slice %146 {offsets = [0, 0], sizes = [1, 256], strides = [1, 1]} : vector<8x256xf32> to vector<1x256xf32>
    %cst_78 = arith.constant 0.000000e+00 : f32
    %148 = vector.broadcast %cst_78 : f32 to vector<1x256xf32>
    %149 = arith.subf %148, %147 : vector<1x256xf32>
    %150 = math.exp %149 : vector<1x256xf32>
    %cst_79 = arith.constant 1.000000e+00 : f32
    %151 = vector.broadcast %cst_79 : f32 to vector<1x256xf32>
    %152 = arith.addf %151, %150 : vector<1x256xf32>
    %153 = tpu.reciprocal %152 {approx = true} : vector<1x256xf32> -> vector<1x256xf32>
    %c0_80 = arith.constant 0 : index
    %c0_81 = arith.constant 0 : index
    %c0_82 = arith.constant 0 : index
    %154 = vector.load %arg17[%c0_80, %c0_81, %c0_82] : memref<1x1x256xf32, #tpu.memory_space<vmem>>, vector<1x1x256xf32>
    %155 = vector.shape_cast %154 : vector<1x1x256xf32> to vector<1x256xf32>
    %156 = vector.shape_cast %153 : vector<1x256xf32> to vector<1x1x256xf32>
    tpu.vector_store %arg17[%c0_80, %c0_81, %c0_82], %156 {strides = array<i32>} : memref<1x1x256xf32, #tpu.memory_space<vmem>>, vector<1x1x256xf32>,
    return
  }
  func.func @transform_0(%arg0: i32) -> (i32, i32, i32) {
    %c0_i32 = arith.constant 0 : i32
    %c0_i32_0 = arith.constant 0 : i32
    %c0_i32_1 = arith.constant 0 : i32
    return %arg0, %c0_i32, %c0_i32_0 : i32, i32, i32
  }
  func.func @transform_1(%arg0: i32) -> (i32, i32) {
    %c0_i32 = arith.constant 0 : i32
    %c0_i32_0 = arith.constant 0 : i32
    %c0_i32_1 = arith.constant 0 : i32
    return %c0_i32, %c0_i32_0 : i32, i32
  }
  func.func @transform_2(%arg0: i32) -> (i32, i32) {
    %c0_i32 = arith.constant 0 : i32
    %c0_i32_0 = arith.constant 0 : i32
    %c0_i32_1 = arith.constant 0 : i32
    return %c0_i32, %c0_i32_0 : i32, i32
  }
  func.func @transform_3(%arg0: i32) -> (i32, i32) {
    %c0_i32 = arith.constant 0 : i32
    %c0_i32_0 = arith.constant 0 : i32
    %c0_i32_1 = arith.constant 0 : i32
    return %c0_i32, %c0_i32_0 : i32, i32
  }
  func.func @transform_4(%arg0: i32) -> (i32, i32) {
    %c0_i32 = arith.constant 0 : i32
    %c0_i32_0 = arith.constant 0 : i32
    %c0_i32_1 = arith.constant 0 : i32
    return %c0_i32, %c0_i32_0 : i32, i32
  }
  func.func @transform_5(%arg0: i32) -> (i32, i32) {
    %c0_i32 = arith.constant 0 : i32
    %c0_i32_0 = arith.constant 0 : i32
    %c0_i32_1 = arith.constant 0 : i32
    return %c0_i32, %c0_i32_0 : i32, i32
  }
  func.func @transform_6(%arg0: i32) -> (i32, i32) {
    %c0_i32 = arith.constant 0 : i32
    %c0_i32_0 = arith.constant 0 : i32
    %c0_i32_1 = arith.constant 0 : i32
    return %c0_i32, %c0_i32_0 : i32, i32
  }
  func.func @transform_7(%arg0: i32) -> (i32, i32) {
    %c0_i32 = arith.constant 0 : i32
    %c0_i32_0 = arith.constant 0 : i32
    %c0_i32_1 = arith.constant 0 : i32
    return %c0_i32, %c0_i32_0 : i32, i32
  }
  func.func @transform_8(%arg0: i32) -> (i32, i32) {
    %c0_i32 = arith.constant 0 : i32
    %c0_i32_0 = arith.constant 0 : i32
    %c0_i32_1 = arith.constant 0 : i32
    return %c0_i32, %c0_i32_0 : i32, i32
  }
  func.func @transform_9(%arg0: i32) -> (i32, i32) {
    %c0_i32 = arith.constant 0 : i32
    %c0_i32_0 = arith.constant 0 : i32
    %c0_i32_1 = arith.constant 0 : i32
    return %c0_i32, %c0_i32_0 : i32, i32
  }
  func.func @transform_10(%arg0: i32) -> (i32, i32) {
    %c0_i32 = arith.constant 0 : i32
    %c0_i32_0 = arith.constant 0 : i32
    %c0_i32_1 = arith.constant 0 : i32
    return %c0_i32, %c0_i32_0 : i32, i32
  }
  func.func @transform_11(%arg0: i32) -> (i32, i32) {
    %c0_i32 = arith.constant 0 : i32
    %c0_i32_0 = arith.constant 0 : i32
    %c0_i32_1 = arith.constant 0 : i32
    return %c0_i32, %c0_i32_0 : i32, i32
  }
  func.func @transform_12(%arg0: i32) -> (i32, i32) {
    %c0_i32 = arith.constant 0 : i32
    %c0_i32_0 = arith.constant 0 : i32
    %c0_i32_1 = arith.constant 0 : i32
    return %c0_i32, %c0_i32_0 : i32, i32
  }
  func.func @transform_13(%arg0: i32) -> (i32, i32) {
    %c0_i32 = arith.constant 0 : i32
    %c0_i32_0 = arith.constant 0 : i32
    %c0_i32_1 = arith.constant 0 : i32
    return %c0_i32, %c0_i32_0 : i32, i32
  }
  func.func @transform_14(%arg0: i32) -> (i32, i32) {
    %c0_i32 = arith.constant 0 : i32
    %c0_i32_0 = arith.constant 0 : i32
    %c0_i32_1 = arith.constant 0 : i32
    return %c0_i32, %c0_i32_0 : i32, i32
  }
  func.func @transform_15(%arg0: i32) -> (i32, i32) {
    %c0_i32 = arith.constant 0 : i32
    %c0_i32_0 = arith.constant 0 : i32
    %c0_i32_1 = arith.constant 0 : i32
    return %c0_i32, %c0_i32_0 : i32, i32
  }
  func.func @transform_16(%arg0: i32) -> (i32, i32, i32) {
    %c0_i32 = arith.constant 0 : i32
    %c0_i32_0 = arith.constant 0 : i32
    %c0_i32_1 = arith.constant 0 : i32
    return %arg0, %c0_i32, %c0_i32_0 : i32, i32, i32
  }
}

</mosaic_0001>

<llo_original>
// kernel: attention_forward.1
$region0: #{attention_forward.1}
  #allocation0 [shape = 'u32[]', space=smem, size = 0x4, offset = 0x4, fixed_abs, tag = 'smem constant byte address 0x4 - core index']
  #allocation1 [shape = 'u32[144,128]{1,0:T(1,128)}', space=vmem, size = 0x12000, scoped, tag = 'internal scratch']
  #allocation2 [shape = 'bf16[576,64]{1,0:T(16,128)(2,1)}', space=vmem, size = 0x24000, scoped, tag = 'scratch operand']
  #allocation3 [shape = 'bf16[576,16]{1,0:T(16,128)(2,1)}', space=vmem, size = 0x24000, scoped, tag = 'scratch operand']
  #allocation4 [shape = 'f32[1,1]{1,0:T(1,128)S(1)}', space=vmem, size = 0x200, scoped, tag = 'scoped memory for attention_forward.1']
  %s0 = inlined_call_operand.vmem [shape: bf16[2,512,256], index: 0, kind: input, shape index: {}]
  %s1 = inlined_call_operand.vmem [shape: bf16[256,576], index: 1, kind: input, shape index: {}]
  %s2 = inlined_call_operand.vmem [shape: bf16[64,512], index: 2, kind: input, shape index: {}]
  %s3 = inlined_call_operand.vmem [shape: f32[64,1], index: 3, kind: input, shape index: {}]
  %s4 = inlined_call_operand.vmem [shape: bf16[64,576], index: 4, kind: input, shape index: {}]
  %s5 = inlined_call_operand.vmem [shape: bf16[128,576], index: 5, kind: input, shape index: {}]
  %s6 = inlined_call_operand.vmem [shape: f32[128,1], index: 6, kind: input, shape index: {}]
  %s7 = inlined_call_operand.vmem [shape: bf16[64,144], index: 7, kind: input, shape index: {}]
  %s8 = inlined_call_operand.vmem [shape: bf16[64,128], index: 8, kind: input, shape index: {}]
  %s9 = inlined_call_operand.vmem [shape: f32[64,1], index: 9, kind: input, shape index: {}]
  %s10 = inlined_call_operand.vmem [shape: bf16[16,144], index: 10, kind: input, shape index: {}]
  %s11 = inlined_call_operand.vmem [shape: bf16[128,576], index: 11, kind: input, shape index: {}]
  %s12 = inlined_call_operand.vmem [shape: f32[128,1], index: 12, kind: input, shape index: {}]
  %s13 = inlined_call_operand.vmem [shape: f32[128,1], index: 13, kind: input, shape index: {}]
  %s14 = inlined_call_operand.<no memory space> [shape: f32[1,1], index: 14, kind: input, shape index: {}]
  %s15 = inlined_call_operand.vmem [shape: f32[16,256], index: 15, kind: input, shape index: {}]
  %s16 = inlined_call_operand.vmem [shape: f32[2,1,256], index: 16, kind: output, shape index: {}]
  %s17 = sld [smem:[#allocation0]]
  $region97: #{attention_forward.1} parent=0
    _
  %s19 = ssub.s32 1, %s17
  %s20 = scalar_select 0, %s19, %s17
  %v21 = vstv %s14
  %22 = vst [vmem:[#allocation4] sm:$0x1] %v21
  loop: start=0, step=1, limit=4
  $region2: #{attention_forward.1} parent=0 // loop_pre_header
    _
  $region3: #{attention_forward.1} parent=0 // loop_header
    %s24 = sphi 0, %s28
    %p25 = scmp.ge.s32.totalorder %s24, 4
    %s34 = sphi 0, %s36
    %s37 = sphi 0, %s34
    %s38 = sphi 0, %s37
    %s54 = sphi 0, %s38
    %s58 = sphi 0, %s58
    %s60 = sphi 0, %s58
    %s61 = sphi 0, %s60
    %s75 = sphi 0, %s61
    %s79 = sphi 0, %s79
    %s81 = sphi 0, %s79
    %s82 = sphi 0, %s81
    %s96 = sphi 0, %s82
    %s100 = sphi 0, %s100
    %s102 = sphi 0, %s100
    %s103 = sphi 0, %s102
    %s117 = sphi 0, %s103
    %s121 = sphi 0, %s121
    %s123 = sphi 0, %s121
    %s124 = sphi 0, %s123
    %s138 = sphi 0, %s124
    %s142 = sphi 0, %s142
    %s144 = sphi 0, %s142
    %s145 = sphi 0, %s144
    %s159 = sphi 0, %s145
    %s163 = sphi 0, %s163
    %s165 = sphi 0, %s163
    %s166 = sphi 0, %s165
    %s180 = sphi 0, %s166
    %s184 = sphi 0, %s184
    %s186 = sphi 0, %s184
    %s187 = sphi 0, %s186
    %s201 = sphi 0, %s187
    %s205 = sphi 0, %s205
    %s207 = sphi 0, %s205
    %s208 = sphi 0, %s207
    %s222 = sphi 0, %s208
    %s226 = sphi 0, %s226
    %s228 = sphi 0, %s226
    %s229 = sphi 0, %s228
    %s243 = sphi 0, %s229
    %s247 = sphi 0, %s247
    %s249 = sphi 0, %s247
    %s250 = sphi 0, %s249
    %s264 = sphi 0, %s250
    %s268 = sphi 0, %s268
    %s270 = sphi 0, %s268
    %s271 = sphi 0, %s270
    %s285 = sphi 0, %s271
    %s289 = sphi 0, %s289
    %s291 = sphi 0, %s289
    %s292 = sphi 0, %s291
    %s306 = sphi 0, %s292
    %s310 = sphi 0, %s310
    %s312 = sphi 0, %s310
    %s313 = sphi 0, %s312
    %s327 = sphi 0, %s313
    %s331 = sphi 0, %s331
    %s333 = sphi 0, %s331
    %s334 = sphi 0, %s333
    %s348 = sphi 0, %s334
    %s352 = sphi 0, %s352
    %s354 = sphi 0, %s352
    %s355 = sphi 0, %s354
    %s369 = sphi 0, %s355
    %s375 = sphi 0, %s377
    %s378 = sphi 0, %s375
    %s379 = sphi 0, %s378
    %s395 = sphi 0, %s379
  $region4: #{attention_forward.1} parent=0 // loop_header_branch
    %27 = sbr.rel (%p25) target = $region8
  $region5: #{attention_forward.1} parent=0 // loop_body
    %s29 = ssub.s32 %s24, 1
    %s30 = ssub.s32 %s24, 2
    %s31 = sadd.s32 %s24, 1
    %s32 = ssub.s32 %s24, %s31
    %p33 = scmp.eq.s32.totalorder %s32, 0
    %s35 = sadd.s32 %s34, 1
    %s36 = scalar_select %p33, %s34, %s35
    %p39 = pneg %p33
    %p40 = scmp.eq.s32.totalorder %s24, 1
    %p41 = por %p39, %p40
    %p42 = scmp.ne.s32.totalorder %s34, %s37
    %p43 = scmp.eq.s32.totalorder %s24, 0
    %p44 = por %p42, %p43
    %p45 = scmp.ne.s32.totalorder %s34, %s37
    %p46 = scmp.eq.s32.totalorder %s29, 1
    %p47 = por %p45, %p46
    %p48 = scmp.ne.s32.totalorder %s37, %s38
    %p49 = scmp.eq.s32.totalorder %s29, 0
    %p50 = por %p48, %p49
    %p51 = scmp.ne.s32.totalorder %s37, %s38
    %p52 = scmp.eq.s32.totalorder %s30, 1
    %p53 = por %p51, %p52
    %p55 = scmp.ne.s32.totalorder %s38, %s54
    %p56 = scmp.eq.s32.totalorder %s30, 0
    %p57 = por %p55, %p56
    %s59 = sadd.s32 %s58, 1
    %p62 = scmp.eq.s32.totalorder %s24, 1
    %p63 = scmp.ne.s32.totalorder %s58, %s60
    %p64 = scmp.eq.s32.totalorder %s24, 0
    %p65 = por %p63, %p64
    %p66 = scmp.ne.s32.totalorder %s58, %s60
    %p67 = scmp.eq.s32.totalorder %s29, 1
    %p68 = por %p66, %p67
    %p69 = scmp.ne.s32.totalorder %s60, %s61
    %p70 = scmp.eq.s32.totalorder %s29, 0
    %p71 = por %p69, %p70
    %p72 = scmp.ne.s32.totalorder %s60, %s61
    %p73 = scmp.eq.s32.totalorder %s30, 1
    %p74 = por %p72, %p73
    %p76 = scmp.ne.s32.totalorder %s61, %s75
    %p77 = scmp.eq.s32.totalorder %s30, 0
    %p78 = por %p76, %p77
    %s80 = sadd.s32 %s79, 1
    %p83 = scmp.eq.s32.totalorder %s24, 1
    %p84 = scmp.ne.s32.totalorder %s79, %s81
    %p85 = scmp.eq.s32.totalorder %s24, 0
    %p86 = por %p84, %p85
    %p87 = scmp.ne.s32.totalorder %s79, %s81
    %p88 = scmp.eq.s32.totalorder %s29, 1
    %p89 = por %p87, %p88
    %p90 = scmp.ne.s32.totalorder %s81, %s82
    %p91 = scmp.eq.s32.totalorder %s29, 0
    %p92 = por %p90, %p91
    %p93 = scmp.ne.s32.totalorder %s81, %s82
    %p94 = scmp.eq.s32.totalorder %s30, 1
    %p95 = por %p93, %p94
    %p97 = scmp.ne.s32.totalorder %s82, %s96
    %p98 = scmp.eq.s32.totalorder %s30, 0
    %p99 = por %p97, %p98
    %s101 = sadd.s32 %s100, 1
    %p104 = scmp.eq.s32.totalorder %s24, 1
    %p105 = scmp.ne.s32.totalorder %s100, %s102
    %p106 = scmp.eq.s32.totalorder %s24, 0
    %p107 = por %p105, %p106
    %p108 = scmp.ne.s32.totalorder %s100, %s102
    %p109 = scmp.eq.s32.totalorder %s29, 1
    %p110 = por %p108, %p109
    %p111 = scmp.ne.s32.totalorder %s102, %s103
    %p112 = scmp.eq.s32.totalorder %s29, 0
    %p113 = por %p111, %p112
    %p114 = scmp.ne.s32.totalorder %s102, %s103
    %p115 = scmp.eq.s32.totalorder %s30, 1
    %p116 = por %p114, %p115
    %p118 = scmp.ne.s32.totalorder %s103, %s117
    %p119 = scmp.eq.s32.totalorder %s30, 0
    %p120 = por %p118, %p119
    %s122 = sadd.s32 %s121, 1
    %p125 = scmp.eq.s32.totalorder %s24, 1
    %p126 = scmp.ne.s32.totalorder %s121, %s123
    %p127 = scmp.eq.s32.totalorder %s24, 0
    %p128 = por %p126, %p127
    %p129 = scmp.ne.s32.totalorder %s121, %s123
    %p130 = scmp.eq.s32.totalorder %s29, 1
    %p131 = por %p129, %p130
    %p132 = scmp.ne.s32.totalorder %s123, %s124
    %p133 = scmp.eq.s32.totalorder %s29, 0
    %p134 = por %p132, %p133
    %p135 = scmp.ne.s32.totalorder %s123, %s124
    %p136 = scmp.eq.s32.totalorder %s30, 1
    %p137 = por %p135, %p136
    %p139 = scmp.ne.s32.totalorder %s124, %s138
    %p140 = scmp.eq.s32.totalorder %s30, 0
    %p141 = por %p139, %p140
    %s143 = sadd.s32 %s142, 1
    %p146 = scmp.eq.s32.totalorder %s24, 1
    %p147 = scmp.ne.s32.totalorder %s142, %s144
    %p148 = scmp.eq.s32.totalorder %s24, 0
    %p149 = por %p147, %p148
    %p150 = scmp.ne.s32.totalorder %s142, %s144
    %p151 = scmp.eq.s32.totalorder %s29, 1
    %p152 = por %p150, %p151
    %p153 = scmp.ne.s32.totalorder %s144, %s145
    %p154 = scmp.eq.s32.totalorder %s29, 0
    %p155 = por %p153, %p154
    %p156 = scmp.ne.s32.totalorder %s144, %s145
    %p157 = scmp.eq.s32.totalorder %s30, 1
    %p158 = por %p156, %p157
    %p160 = scmp.ne.s32.totalorder %s145, %s159
    %p161 = scmp.eq.s32.totalorder %s30, 0
    %p162 = por %p160, %p161
    %s164 = sadd.s32 %s163, 1
    %p167 = scmp.eq.s32.totalorder %s24, 1
    %p168 = scmp.ne.s32.totalorder %s163, %s165
    %p169 = scmp.eq.s32.totalorder %s24, 0
    %p170 = por %p168, %p169
    %p171 = scmp.ne.s32.totalorder %s163, %s165
    %p172 = scmp.eq.s32.totalorder %s29, 1
    %p173 = por %p171, %p172
    %p174 = scmp.ne.s32.totalorder %s165, %s166
    %p175 = scmp.eq.s32.totalorder %s29, 0
    %p176 = por %p174, %p175
    %p177 = scmp.ne.s32.totalorder %s165, %s166
    %p178 = scmp.eq.s32.totalorder %s30, 1
    %p179 = por %p177, %p178
    %p181 = scmp.ne.s32.totalorder %s166, %s180
    %p182 = scmp.eq.s32.totalorder %s30, 0
    %p183 = por %p181, %p182
    %s185 = sadd.s32 %s184, 1
    %p188 = scmp.eq.s32.totalorder %s24, 1
    %p189 = scmp.ne.s32.totalorder %s184, %s186
    %p190 = scmp.eq.s32.totalorder %s24, 0
    %p191 = por %p189, %p190
    %p192 = scmp.ne.s32.totalorder %s184, %s186
    %p193 = scmp.eq.s32.totalorder %s29, 1
    %p194 = por %p192, %p193
    %p195 = scmp.ne.s32.totalorder %s186, %s187
    %p196 = scmp.eq.s32.totalorder %s29, 0
    %p197 = por %p195, %p196
    %p198 = scmp.ne.s32.totalorder %s186, %s187
    %p199 = scmp.eq.s32.totalorder %s30, 1
    %p200 = por %p198, %p199
    %p202 = scmp.ne.s32.totalorder %s187, %s201
    %p203 = scmp.eq.s32.totalorder %s30, 0
    %p204 = por %p202, %p203
    %s206 = sadd.s32 %s205, 1
    %p209 = scmp.eq.s32.totalorder %s24, 1
    %p210 = scmp.ne.s32.totalorder %s205, %s207
    %p211 = scmp.eq.s32.totalorder %s24, 0
    %p212 = por %p210, %p211
    %p213 = scmp.ne.s32.totalorder %s205, %s207
    %p214 = scmp.eq.s32.totalorder %s29, 1
    %p215 = por %p213, %p214
    %p216 = scmp.ne.s32.totalorder %s207, %s208
    %p217 = scmp.eq.s32.totalorder %s29, 0
    %p218 = por %p216, %p217
    %p219 = scmp.ne.s32.totalorder %s207, %s208
    %p220 = scmp.eq.s32.totalorder %s30, 1
    %p221 = por %p219, %p220
    %p223 = scmp.ne.s32.totalorder %s208, %s222
    %p224 = scmp.eq.s32.totalorder %s30, 0
    %p225 = por %p223, %p224
    %s227 = sadd.s32 %s226, 1
    %p230 = scmp.eq.s32.totalorder %s24, 1
    %p231 = scmp.ne.s32.totalorder %s226, %s228
    %p232 = scmp.eq.s32.totalorder %s24, 0
    %p233 = por %p231, %p232
    %p234 = scmp.ne.s32.totalorder %s226, %s228
    %p235 = scmp.eq.s32.totalorder %s29, 1
    %p236 = por %p234, %p235
    %p237 = scmp.ne.s32.totalorder %s228, %s229
    %p238 = scmp.eq.s32.totalorder %s29, 0
    %p239 = por %p237, %p238
    %p240 = scmp.ne.s32.totalorder %s228, %s229
    %p241 = scmp.eq.s32.totalorder %s30, 1
    %p242 = por %p240, %p241
    %p244 = scmp.ne.s32.totalorder %s229, %s243
    %p245 = scmp.eq.s32.totalorder %s30, 0
    %p246 = por %p244, %p245
    %s248 = sadd.s32 %s247, 1
    %p251 = scmp.eq.s32.totalorder %s24, 1
    %p252 = scmp.ne.s32.totalorder %s247, %s249
    %p253 = scmp.eq.s32.totalorder %s24, 0
    %p254 = por %p252, %p253
    %p255 = scmp.ne.s32.totalorder %s247, %s249
    %p256 = scmp.eq.s32.totalorder %s29, 1
    %p257 = por %p255, %p256
    %p258 = scmp.ne.s32.totalorder %s249, %s250
    %p259 = scmp.eq.s32.totalorder %s29, 0
    %p260 = por %p258, %p259
    %p261 = scmp.ne.s32.totalorder %s249, %s250
    %p262 = scmp.eq.s32.totalorder %s30, 1
    %p263 = por %p261, %p262
    %p265 = scmp.ne.s32.totalorder %s250, %s264
    %p266 = scmp.eq.s32.totalorder %s30, 0
    %p267 = por %p265, %p266
    %s269 = sadd.s32 %s268, 1
    %p272 = scmp.eq.s32.totalorder %s24, 1
    %p273 = scmp.ne.s32.totalorder %s268, %s270
    %p274 = scmp.eq.s32.totalorder %s24, 0
    %p275 = por %p273, %p274
    %p276 = scmp.ne.s32.totalorder %s268, %s270
    %p277 = scmp.eq.s32.totalorder %s29, 1
    %p278 = por %p276, %p277
    %p279 = scmp.ne.s32.totalorder %s270, %s271
    %p280 = scmp.eq.s32.totalorder %s29, 0
    %p281 = por %p279, %p280
    %p282 = scmp.ne.s32.totalorder %s270, %s271
    %p283 = scmp.eq.s32.totalorder %s30, 1
    %p284 = por %p282, %p283
    %p286 = scmp.ne.s32.totalorder %s271, %s285
    %p287 = scmp.eq.s32.totalorder %s30, 0
    %p288 = por %p286, %p287
    %s290 = sadd.s32 %s289, 1
    %p293 = scmp.eq.s32.totalorder %s24, 1
    %p294 = scmp.ne.s32.totalorder %s289, %s291
    %p295 = scmp.eq.s32.totalorder %s24, 0
    %p296 = por %p294, %p295
    %p297 = scmp.ne.s32.totalorder %s289, %s291
    %p298 = scmp.eq.s32.totalorder %s29, 1
    %p299 = por %p297, %p298
    %p300 = scmp.ne.s32.totalorder %s291, %s292
    %p301 = scmp.eq.s32.totalorder %s29, 0
    %p302 = por %p300, %p301
    %p303 = scmp.ne.s32.totalorder %s291, %s292
    %p304 = scmp.eq.s32.totalorder %s30, 1
    %p305 = por %p303, %p304
    %p307 = scmp.ne.s32.totalorder %s292, %s306
    %p308 = scmp.eq.s32.totalorder %s30, 0
    %p309 = por %p307, %p308
    %s311 = sadd.s32 %s310, 1
    %p314 = scmp.eq.s32.totalorder %s24, 1
    %p315 = scmp.ne.s32.totalorder %s310, %s312
    %p316 = scmp.eq.s32.totalorder %s24, 0
    %p317 = por %p315, %p316
    %p318 = scmp.ne.s32.totalorder %s310, %s312
    %p319 = scmp.eq.s32.totalorder %s29, 1
    %p320 = por %p318, %p319
    %p321 = scmp.ne.s32.totalorder %s312, %s313
    %p322 = scmp.eq.s32.totalorder %s29, 0
    %p323 = por %p321, %p322
    %p324 = scmp.ne.s32.totalorder %s312, %s313
    %p325 = scmp.eq.s32.totalorder %s30, 1
    %p326 = por %p324, %p325
    %p328 = scmp.ne.s32.totalorder %s313, %s327
    %p329 = scmp.eq.s32.totalorder %s30, 0
    %p330 = por %p328, %p329
    %s332 = sadd.s32 %s331, 1
    %p335 = scmp.eq.s32.totalorder %s24, 1
    %p336 = scmp.ne.s32.totalorder %s331, %s333
    %p337 = scmp.eq.s32.totalorder %s24, 0
    %p338 = por %p336, %p337
    %p339 = scmp.ne.s32.totalorder %s331, %s333
    %p340 = scmp.eq.s32.totalorder %s29, 1
    %p341 = por %p339, %p340
    %p342 = scmp.ne.s32.totalorder %s333, %s334
    %p343 = scmp.eq.s32.totalorder %s29, 0
    %p344 = por %p342, %p343
    %p345 = scmp.ne.s32.totalorder %s333, %s334
    %p346 = scmp.eq.s32.totalorder %s30, 1
    %p347 = por %p345, %p346
    %p349 = scmp.ne.s32.totalorder %s334, %s348
    %p350 = scmp.eq.s32.totalorder %s30, 0
    %p351 = por %p349, %p350
    %s353 = sadd.s32 %s352, 1
    %p356 = scmp.eq.s32.totalorder %s24, 1
    %p357 = scmp.ne.s32.totalorder %s352, %s354
    %p358 = scmp.eq.s32.totalorder %s24, 0
    %p359 = por %p357, %p358
    %p360 = scmp.ne.s32.totalorder %s352, %s354
    %p361 = scmp.eq.s32.totalorder %s29, 1
    %p362 = por %p360, %p361
    %p363 = scmp.ne.s32.totalorder %s354, %s355
    %p364 = scmp.eq.s32.totalorder %s29, 0
    %p365 = por %p363, %p364
    %p366 = scmp.ne.s32.totalorder %s354, %s355
    %p367 = scmp.eq.s32.totalorder %s30, 1
    %p368 = por %p366, %p367
    %p370 = scmp.ne.s32.totalorder %s355, %s369
    %p371 = scmp.eq.s32.totalorder %s30, 0
    %p372 = por %p370, %p371
    %s373 = ssub.s32 %s24, %s31
    %p374 = scmp.eq.s32.totalorder %s373, 0
    %s376 = sadd.s32 %s375, 1
    %s377 = scalar_select %p374, %s375, %s376
    %p380 = pneg %p374
    %p381 = scmp.eq.s32.totalorder %s24, 1
    %p382 = por %p380, %p381
    %p383 = scmp.ne.s32.totalorder %s375, %s378
    %p384 = scmp.eq.s32.totalorder %s24, 0
    %p385 = por %p383, %p384
    %p386 = scmp.ne.s32.totalorder %s375, %s378
    %p387 = scmp.eq.s32.totalorder %s29, 1
    %p388 = por %p386, %p387
    %p389 = scmp.ne.s32.totalorder %s378, %s379
    %p390 = scmp.eq.s32.totalorder %s29, 0
    %p391 = por %p389, %p390
    %p392 = scmp.ne.s32.totalorder %s378, %s379
    %p393 = scmp.eq.s32.totalorder %s30, 1
    %p394 = por %p392, %p393
    %p396 = scmp.ne.s32.totalorder %s379, %s395
    %p397 = scmp.eq.s32.totalorder %s30, 0
    %p398 = por %p396, %p397
    %p399 = scmp.le.s32.totalorder 1, %s24
    %p400 = scmp.lt.s32.totalorder %s24, 3
    %p401 = pnand %p399, %p400
    %p402 = pneg %p401
    // Predicated region
    $region9: #{attention_forward.1} parent=5 // pred_check
      _
    $region10: #{attention_forward.1} parent=5 // pred_check_branch
      %404 = sbr.rel (%p401) target = $region12
    $region11: #{attention_forward.1} parent=5 // pred_region
      %s405 = ssub.s32 %s24, 1
      // Predicated region
      $region13: #{attention_forward.1} parent=11 // pred_check
        %p406 = pneg %p71
      $region14: #{attention_forward.1} parent=11 // pred_check_branch
        %408 = sbr.rel (%p406) target = $region16
      $region15: #{attention_forward.1} parent=11 // pred_region
        _
      $region16: #{attention_forward.1} parent=11 // pred_fallthru
        _
      // Predicated region
      $region17: #{attention_forward.1} parent=11 // pred_check
        %p409 = pneg %p92
      $region18: #{attention_forward.1} parent=11 // pred_check_branch
        %411 = sbr.rel (%p409) target = $region20
      $region19: #{attention_forward.1} parent=11 // pred_region
        _
      $region20: #{attention_forward.1} parent=11 // pred_fallthru
        _
      // Predicated region
      $region21: #{attention_forward.1} parent=11 // pred_check
        %p412 = pneg %p113
      $region22: #{attention_forward.1} parent=11 // pred_check_branch
        %414 = sbr.rel (%p412) target = $region24
      $region23: #{attention_forward.1} parent=11 // pred_region
        _
      $region24: #{attention_forward.1} parent=11 // pred_fallthru
        _
      // Predicated region
      $region25: #{attention_forward.1} parent=11 // pred_check
        %p415 = pneg %p134
      $region26: #{attention_forward.1} parent=11 // pred_check_branch
        %417 = sbr.rel (%p415) target = $region28
      $region27: #{attention_forward.1} parent=11 // pred_region
        _
      $region28: #{attention_forward.1} parent=11 // pred_fallthru
        _
      // Predicated region
      $region29: #{attention_forward.1} parent=11 // pred_check
        %p418 = pneg %p155
      $region30: #{attention_forward.1} parent=11 // pred_check_branch
        %420 = sbr.rel (%p418) target = $region32
      $region31: #{attention_forward.1} parent=11 // pred_region
        _
      $region32: #{attention_forward.1} parent=11 // pred_fallthru
        _
      // Predicated region
      $region33: #{attention_forward.1} parent=11 // pred_check
        %p421 = pneg %p176
      $region34: #{attention_forward.1} parent=11 // pred_check_branch
        %423 = sbr.rel (%p421) target = $region36
      $region35: #{attention_forward.1} parent=11 // pred_region
        _
      $region36: #{attention_forward.1} parent=11 // pred_fallthru
        _
      // Predicated region
      $region37: #{attention_forward.1} parent=11 // pred_check
        %p424 = pneg %p197
      $region38: #{attention_forward.1} parent=11 // pred_check_branch
        %426 = sbr.rel (%p424) target = $region40
      $region39: #{attention_forward.1} parent=11 // pred_region
        _
      $region40: #{attention_forward.1} parent=11 // pred_fallthru
        _
      // Predicated region
      $region41: #{attention_forward.1} parent=11 // pred_check
        %p427 = pneg %p218
      $region42: #{attention_forward.1} parent=11 // pred_check_branch
        %429 = sbr.rel (%p427) target = $region44
      $region43: #{attention_forward.1} parent=11 // pred_region
        _
      $region44: #{attention_forward.1} parent=11 // pred_fallthru
        _
      // Predicated region
      $region45: #{attention_forward.1} parent=11 // pred_check
        %p430 = pneg %p239
      $region46: #{attention_forward.1} parent=11 // pred_check_branch
        %432 = sbr.rel (%p430) target = $region48
      $region47: #{attention_forward.1} parent=11 // pred_region
        _
      $region48: #{attention_forward.1} parent=11 // pred_fallthru
        _
      // Predicated region
      $region49: #{attention_forward.1} parent=11 // pred_check
        %p433 = pneg %p260
      $region50: #{attention_forward.1} parent=11 // pred_check_branch
        %435 = sbr.rel (%p433) target = $region52
      $region51: #{attention_forward.1} parent=11 // pred_region
        _
      $region52: #{attention_forward.1} parent=11 // pred_fallthru
        _
      // Predicated region
      $region53: #{attention_forward.1} parent=11 // pred_check
        %p436 = pneg %p281
      $region54: #{attention_forward.1} parent=11 // pred_check_branch
        %438 = sbr.rel (%p436) target = $region56
      $region55: #{attention_forward.1} parent=11 // pred_region
        _
      $region56: #{attention_forward.1} parent=11 // pred_fallthru
        _
      // Predicated region
      $region57: #{attention_forward.1} parent=11 // pred_check
        %p439 = pneg %p302
      $region58: #{attention_forward.1} parent=11 // pred_check_branch
        %441 = sbr.rel (%p439) target = $region60
      $region59: #{attention_forward.1} parent=11 // pred_region
        _
      $region60: #{attention_forward.1} parent=11 // pred_fallthru
        _
      // Predicated region
      $region61: #{attention_forward.1} parent=11 // pred_check
        %p442 = pneg %p323
      $region62: #{attention_forward.1} parent=11 // pred_check_branch
        %444 = sbr.rel (%p442) target = $region64
      $region63: #{attention_forward.1} parent=11 // pred_region
        _
      $region64: #{attention_forward.1} parent=11 // pred_fallthru
        _
      // Predicated region
      $region65: #{attention_forward.1} parent=11 // pred_check
        %p445 = pneg %p344
      $region66: #{attention_forward.1} parent=11 // pred_check_branch
        %447 = sbr.rel (%p445) target = $region68
      $region67: #{attention_forward.1} parent=11 // pred_region
        _
      $region68: #{attention_forward.1} parent=11 // pred_fallthru
        _
      // Predicated region
      $region69: #{attention_forward.1} parent=11 // pred_check
        %p448 = pneg %p365
      $region70: #{attention_forward.1} parent=11 // pred_check_branch
        %450 = sbr.rel (%p448) target = $region72
      $region71: #{attention_forward.1} parent=11 // pred_region
        _
      $region72: #{attention_forward.1} parent=11 // pred_fallthru
        _
    $region12: #{attention_forward.1} parent=5 // pred_fallthru
      _
    %p451 = scmp.lt.s32.totalorder %s24, 2
    // Predicated region
    $region73: #{attention_forward.1} parent=5 // pred_check
      %p452 = pneg %p451
    $region74: #{attention_forward.1} parent=5 // pred_check_branch
      %454 = sbr.rel (%p452) target = $region76
    $region75: #{attention_forward.1} parent=5 // pred_region
      // Predicated region
      $region77: #{attention_forward.1} parent=75 // pred_check
        %p455 = pneg %p44
      $region78: #{attention_forward.1} parent=75 // pred_check_branch
        %457 = sbr.rel (%p455) target = $region80
      $region79: #{attention_forward.1} parent=75 // pred_region
        %p458 = scmp.lt.s32.totalorder %s24, 1
        %s459 = scalar_select %p458, %s24, 1
        %s460 = smul.addr %s459, 128
        %s461 = smul.addr %s460, 4
        %s462 = scalar_lea.vmem %s0, %s461
      $region80: #{attention_forward.1} parent=75 // pred_fallthru
        _
    $region76: #{attention_forward.1} parent=5 // pred_fallthru
      _
    %p463 = scmp.le.s32.totalorder 1, %s24
    %p464 = scmp.lt.s32.totalorder %s24, 3
    %p465 = pnand %p463, %p464
    %p466 = pneg %p465
    // Predicated region
    $region81: #{attention_forward.1} parent=5 // pred_check
      _
    $region82: #{attention_forward.1} parent=5 // pred_check_branch
      %468 = sbr.rel (%p465) target = $region84
    $region83: #{attention_forward.1} parent=5 // pred_region
      %s469 = ssub.s32 %s24, 1
      %p470 = scmp.lt.s32.totalorder %s29, 1
      %s471 = scalar_select %p470, %s29, 1
      %s472 = smul.addr %s471, 128
      %s473 = smul.addr %s472, 4
      %s474 = scalar_lea.vmem %s0, %s473
      %p475 = pneg %p50
      %p476 = pneg %p47
      %p477 = pneg %p71
      %p478 = pneg %p68
      %p479 = pneg %p92
      %p480 = pneg %p89
      %p481 = pneg %p113
      %p482 = pneg %p110
      %p483 = pneg %p134
      %p484 = pneg %p131
      %p485 = pneg %p155
      %p486 = pneg %p152
      %p487 = pneg %p176
      %p488 = pneg %p173
      %p489 = pneg %p197
      %p490 = pneg %p194
      %p491 = pneg %p218
      %p492 = pneg %p215
      %p493 = pneg %p239
      %p494 = pneg %p236
      %p495 = pneg %p260
      %p496 = pneg %p257
      %p497 = pneg %p281
      %p498 = pneg %p278
      %p499 = pneg %p302
      %p500 = pneg %p299
      %p501 = pneg %p323
      %p502 = pneg %p320
      %p503 = pneg %p344
      %p504 = pneg %p341
      %p505 = pneg %p365
      %p506 = pneg %p362
      %p507 = pneg %p391
      %p508 = pneg %p388
      %p509 = scmp.lt.s32.totalorder %s29, 1
      %s510 = scalar_select %p509, %s29, 1
      %s511 = smul.addr %s510, 2
      %s512 = scalar_lea.vmem %s16, %s511
      %p513 = scmp.lt.s32.totalorder %s29, 1
      %s514 = scalar_select %p513, %s29, 1
      %s515 = smul.addr %s514, 128
      %s516 = smul.addr %s515, 4
      %s517 = scalar_lea.vmem %s0, %s516
      %p518 = scmp.lt.s32.totalorder %s29, 1
      %s519 = scalar_select %p518, %s29, 1
      %s520 = smul.addr %s519, 2
      %s521 = scalar_lea.vmem %s16, %s520
      %v523 = vld [vmem:[%s517] sm:$0xff]
      %v524 = vld [vmem:[%s517 + $0x8] sm:$0xff]
      %v525 = vld [vmem:[%s517 + $0x10] sm:$0xff]
      %v526 = vld [vmem:[%s517 + $0x18] sm:$0xff]
      %v527 = vld [vmem:[%s517 + $0x20] sm:$0xff]
      %v528 = vld [vmem:[%s517 + $0x28] sm:$0xff]
      %v529 = vld [vmem:[%s517 + $0x30] sm:$0xff]
      %v530 = vld [vmem:[%s517 + $0x38] sm:$0xff]
      %v531 = vld [vmem:[%s517 + $0x40] sm:$0xff]
      %v532 = vld [vmem:[%s517 + $0x48] sm:$0xff]
      %v533 = vld [vmem:[%s517 + $0x50] sm:$0xff]
      %v534 = vld [vmem:[%s517 + $0x58] sm:$0xff]
      %v535 = vld [vmem:[%s517 + $0x60] sm:$0xff]
      %v536 = vld [vmem:[%s517 + $0x68] sm:$0xff]
      %v537 = vld [vmem:[%s517 + $0x70] sm:$0xff]
      %v538 = vld [vmem:[%s517 + $0x78] sm:$0xff]
      %v539 = vld [vmem:[%s517 + $0x80] sm:$0xff]
      %v540 = vld [vmem:[%s517 + $0x88] sm:$0xff]
      %v541 = vld [vmem:[%s517 + $0x90] sm:$0xff]
      %v542 = vld [vmem:[%s517 + $0x98] sm:$0xff]
      %v543 = vld [vmem:[%s517 + $0xa0] sm:$0xff]
      %v544 = vld [vmem:[%s517 + $0xa8] sm:$0xff]
      %v545 = vld [vmem:[%s517 + $0xb0] sm:$0xff]
      %v546 = vld [vmem:[%s517 + $0xb8] sm:$0xff]
      %v547 = vld [vmem:[%s517 + $0xc0] sm:$0xff]
      %v548 = vld [vmem:[%s517 + $0xc8] sm:$0xff]
      %v549 = vld [vmem:[%s517 + $0xd0] sm:$0xff]
      %v550 = vld [vmem:[%s517 + $0xd8] sm:$0xff]
      %v551 = vld [vmem:[%s517 + $0xe0] sm:$0xff]
      %v552 = vld [vmem:[%s517 + $0xe8] sm:$0xff]
      %v553 = vld [vmem:[%s517 + $0xf0] sm:$0xff]
      %v554 = vld [vmem:[%s517 + $0xf8] sm:$0xff]
      %v555 = vld [vmem:[%s517 + $0x100] sm:$0xff]
      %v556 = vld [vmem:[%s517 + $0x108] sm:$0xff]
      %v557 = vld [vmem:[%s517 + $0x110] sm:$0xff]
      %v558 = vld [vmem:[%s517 + $0x118] sm:$0xff]
      %v559 = vld [vmem:[%s517 + $0x120] sm:$0xff]
      %v560 = vld [vmem:[%s517 + $0x128] sm:$0xff]
      %v561 = vld [vmem:[%s517 + $0x130] sm:$0xff]
      %v562 = vld [vmem:[%s517 + $0x138] sm:$0xff]
      %v563 = vld [vmem:[%s517 + $0x140] sm:$0xff]
      %v564 = vld [vmem:[%s517 + $0x148] sm:$0xff]
      %v565 = vld [vmem:[%s517 + $0x150] sm:$0xff]
      %v566 = vld [vmem:[%s517 + $0x158] sm:$0xff]
      %v567 = vld [vmem:[%s517 + $0x160] sm:$0xff]
      %v568 = vld [vmem:[%s517 + $0x168] sm:$0xff]
      %v569 = vld [vmem:[%s517 + $0x170] sm:$0xff]
      %v570 = vld [vmem:[%s517 + $0x178] sm:$0xff]
      %v571 = vld [vmem:[%s517 + $0x180] sm:$0xff]
      %v572 = vld [vmem:[%s517 + $0x188] sm:$0xff]
      %v573 = vld [vmem:[%s517 + $0x190] sm:$0xff]
      %v574 = vld [vmem:[%s517 + $0x198] sm:$0xff]
      %v575 = vld [vmem:[%s517 + $0x1a0] sm:$0xff]
      %v576 = vld [vmem:[%s517 + $0x1a8] sm:$0xff]
      %v577 = vld [vmem:[%s517 + $0x1b0] sm:$0xff]
      %v578 = vld [vmem:[%s517 + $0x1b8] sm:$0xff]
      %v579 = vld [vmem:[%s517 + $0x1c0] sm:$0xff]
      %v580 = vld [vmem:[%s517 + $0x1c8] sm:$0xff]
      %v581 = vld [vmem:[%s517 + $0x1d0] sm:$0xff]
      %v582 = vld [vmem:[%s517 + $0x1d8] sm:$0xff]
      %v583 = vld [vmem:[%s517 + $0x1e0] sm:$0xff]
      %v584 = vld [vmem:[%s517 + $0x1e8] sm:$0xff]
      %v585 = vld [vmem:[%s517 + $0x1f0] sm:$0xff]
      %v586 = vld [vmem:[%s517 + $0x1f8] sm:$0xff]
      %v587 = vld [vmem:[%s1] sm:$0xff]
      %v588 = vld [vmem:[%s1 + $0x8] sm:$0xff]
      %v589 = vld [vmem:[%s1 + $0x10] sm:$0xf]
      %v590 = vld [vmem:[%s1 + $0x14] sm:$0xff]
      %v591 = vld [vmem:[%s1 + $0x1c] sm:$0xff]
      %v592 = vld [vmem:[%s1 + $0x24] sm:$0xf]
      %v593 = vld [vmem:[%s1 + $0x28] sm:$0xff]
      %v594 = vld [vmem:[%s1 + $0x30] sm:$0xff]
      %v595 = vld [vmem:[%s1 + $0x38] sm:$0xf]
      %v596 = vld [vmem:[%s1 + $0x3c] sm:$0xff]
      %v597 = vld [vmem:[%s1 + $0x44] sm:$0xff]
      %v598 = vld [vmem:[%s1 + $0x4c] sm:$0xf]
      %v599 = vld [vmem:[%s1 + $0x50] sm:$0xff]
      %v600 = vld [vmem:[%s1 + $0x58] sm:$0xff]
      %v601 = vld [vmem:[%s1 + $0x60] sm:$0xf]
      %v602 = vld [vmem:[%s1 + $0x64] sm:$0xff]
      %v603 = vld [vmem:[%s1 + $0x6c] sm:$0xff]
      %v604 = vld [vmem:[%s1 + $0x74] sm:$0xf]
      %v605 = vld [vmem:[%s1 + $0x78] sm:$0xff]
      %v606 = vld [vmem:[%s1 + $0x80] sm:$0xff]
      %v607 = vld [vmem:[%s1 + $0x88] sm:$0xf]
      %v608 = vld [vmem:[%s1 + $0x8c] sm:$0xff]
      %v609 = vld [vmem:[%s1 + $0x94] sm:$0xff]
      %v610 = vld [vmem:[%s1 + $0x9c] sm:$0xf]
      %v611 = vld [vmem:[%s1 + $0xa0] sm:$0xff]
      %v612 = vld [vmem:[%s1 + $0xa8] sm:$0xff]
      %v613 = vld [vmem:[%s1 + $0xb0] sm:$0xf]
      %v614 = vld [vmem:[%s1 + $0xb4] sm:$0xff]
      %v615 = vld [vmem:[%s1 + $0xbc] sm:$0xff]
      %v616 = vld [vmem:[%s1 + $0xc4] sm:$0xf]
      %v617 = vld [vmem:[%s1 + $0xc8] sm:$0xff]
      %v618 = vld [vmem:[%s1 + $0xd0] sm:$0xff]
      %v619 = vld [vmem:[%s1 + $0xd8] sm:$0xf]
      %v620 = vld [vmem:[%s1 + $0xdc] sm:$0xff]
      %v621 = vld [vmem:[%s1 + $0xe4] sm:$0xff]
      %v622 = vld [vmem:[%s1 + $0xec] sm:$0xf]
      %v623 = vld [vmem:[%s1 + $0xf0] sm:$0xff]
      %v624 = vld [vmem:[%s1 + $0xf8] sm:$0xff]
      %v625 = vld [vmem:[%s1 + $0x100] sm:$0xf]
      %v626 = vld [vmem:[%s1 + $0x104] sm:$0xff]
      %v627 = vld [vmem:[%s1 + $0x10c] sm:$0xff]
      %v628 = vld [vmem:[%s1 + $0x114] sm:$0xf]
      %v629 = vld [vmem:[%s1 + $0x118] sm:$0xff]
      %v630 = vld [vmem:[%s1 + $0x120] sm:$0xff]
      %v631 = vld [vmem:[%s1 + $0x128] sm:$0xf]
      %v632 = vld [vmem:[%s1 + $0x12c] sm:$0xff]
      %v633 = vld [vmem:[%s1 + $0x134] sm:$0xff]
      %v634 = vld [vmem:[%s1 + $0x13c] sm:$0xf]
      %v635 = vld [vmem:[%s1 + $0x140] sm:$0xff]
      %v636 = vld [vmem:[%s1 + $0x148] sm:$0xff]
      %v637 = vld [vmem:[%s1 + $0x150] sm:$0xf]
      %v638 = vld [vmem:[%s1 + $0x154] sm:$0xff]
      %v639 = vld [vmem:[%s1 + $0x15c] sm:$0xff]
      %v640 = vld [vmem:[%s1 + $0x164] sm:$0xf]
      %v641 = vld [vmem:[%s1 + $0x168] sm:$0xff]
      %v642 = vld [vmem:[%s1 + $0x170] sm:$0xff]
      %v643 = vld [vmem:[%s1 + $0x178] sm:$0xf]
      %v644 = vld [vmem:[%s1 + $0x17c] sm:$0xff]
      %v645 = vld [vmem:[%s1 + $0x184] sm:$0xff]
      %v646 = vld [vmem:[%s1 + $0x18c] sm:$0xf]
      %v647 = vld [vmem:[%s1 + $0x190] sm:$0xff]
      %v648 = vld [vmem:[%s1 + $0x198] sm:$0xff]
      %v649 = vld [vmem:[%s1 + $0x1a0] sm:$0xf]
      %v650 = vld [vmem:[%s1 + $0x1a4] sm:$0xff]
      %v651 = vld [vmem:[%s1 + $0x1ac] sm:$0xff]
      %v652 = vld [vmem:[%s1 + $0x1b4] sm:$0xf]
      %v653 = vld [vmem:[%s1 + $0x1b8] sm:$0xff]
      %v654 = vld [vmem:[%s1 + $0x1c0] sm:$0xff]
      %v655 = vld [vmem:[%s1 + $0x1c8] sm:$0xf]
      %v656 = vld [vmem:[%s1 + $0x1cc] sm:$0xff]
      %v657 = vld [vmem:[%s1 + $0x1d4] sm:$0xff]
      %v658 = vld [vmem:[%s1 + $0x1dc] sm:$0xf]
      %v659 = vld [vmem:[%s1 + $0x1e0] sm:$0xff]
      %v660 = vld [vmem:[%s1 + $0x1e8] sm:$0xff]
      %v661 = vld [vmem:[%s1 + $0x1f0] sm:$0xf]
      %v662 = vld [vmem:[%s1 + $0x1f4] sm:$0xff]
      %v663 = vld [vmem:[%s1 + $0x1fc] sm:$0xff]
      %v664 = vld [vmem:[%s1 + $0x204] sm:$0xf]
      %v665 = vld [vmem:[%s1 + $0x208] sm:$0xff]
      %v666 = vld [vmem:[%s1 + $0x210] sm:$0xff]
      %v667 = vld [vmem:[%s1 + $0x218] sm:$0xf]
      %v668 = vld [vmem:[%s1 + $0x21c] sm:$0xff]
      %v669 = vld [vmem:[%s1 + $0x224] sm:$0xff]
      %v670 = vld [vmem:[%s1 + $0x22c] sm:$0xf]
      %v671 = vld [vmem:[%s1 + $0x230] sm:$0xff]
      %v672 = vld [vmem:[%s1 + $0x238] sm:$0xff]
      %v673 = vld [vmem:[%s1 + $0x240] sm:$0xf]
      %v674 = vld [vmem:[%s1 + $0x244] sm:$0xff]
      %v675 = vld [vmem:[%s1 + $0x24c] sm:$0xff]
      %v676 = vld [vmem:[%s1 + $0x254] sm:$0xf]
      %v677 = vld [vmem:[%s1 + $0x258] sm:$0xff]
      %v678 = vld [vmem:[%s1 + $0x260] sm:$0xff]
      %v679 = vld [vmem:[%s1 + $0x268] sm:$0xf]
      %v680 = vld [vmem:[%s1 + $0x26c] sm:$0xff]
      %v681 = vld [vmem:[%s1 + $0x274] sm:$0xff]
      %v682 = vld [vmem:[%s1 + $0x27c] sm:$0xf]
      %v747 = vunpack.c.l.b16 %v523
      %v748 = vunpack.c.h.b16 %v523
      %v749 = vunpack.c.l.b16 %v524
      %v750 = vunpack.c.h.b16 %v524
      %v751 = vunpack.c.l.b16 %v525
      %v752 = vunpack.c.h.b16 %v525
      %v753 = vunpack.c.l.b16 %v526
      %v754 = vunpack.c.h.b16 %v526
      %v755 = vunpack.c.l.b16 %v527
      %v756 = vunpack.c.h.b16 %v527
      %v757 = vunpack.c.l.b16 %v528
      %v758 = vunpack.c.h.b16 %v528
      %v759 = vunpack.c.l.b16 %v529
      %v760 = vunpack.c.h.b16 %v529
      %v761 = vunpack.c.l.b16 %v530
      %v762 = vunpack.c.h.b16 %v530
      %v763 = vunpack.c.l.b16 %v531
      %v764 = vunpack.c.h.b16 %v531
      %v765 = vunpack.c.l.b16 %v532
      %v766 = vunpack.c.h.b16 %v532
      %v767 = vunpack.c.l.b16 %v533
      %v768 = vunpack.c.h.b16 %v533
      %v769 = vunpack.c.l.b16 %v534
      %v770 = vunpack.c.h.b16 %v534
      %v771 = vunpack.c.l.b16 %v535
      %v772 = vunpack.c.h.b16 %v535
      %v773 = vunpack.c.l.b16 %v536
      %v774 = vunpack.c.h.b16 %v536
      %v775 = vunpack.c.l.b16 %v537
      %v776 = vunpack.c.h.b16 %v537
      %v777 = vunpack.c.l.b16 %v538
      %v778 = vunpack.c.h.b16 %v538
      %v779 = vunpack.c.l.b16 %v539
      %v780 = vunpack.c.h.b16 %v539
      %v781 = vunpack.c.l.b16 %v540
      %v782 = vunpack.c.h.b16 %v540
      %v783 = vunpack.c.l.b16 %v541
      %v784 = vunpack.c.h.b16 %v541
      %v785 = vunpack.c.l.b16 %v542
      %v786 = vunpack.c.h.b16 %v542
      %v787 = vunpack.c.l.b16 %v543
      %v788 = vunpack.c.h.b16 %v543
      %v789 = vunpack.c.l.b16 %v544
      %v790 = vunpack.c.h.b16 %v544
      %v791 = vunpack.c.l.b16 %v545
      %v792 = vunpack.c.h.b16 %v545
      %v793 = vunpack.c.l.b16 %v546
      %v794 = vunpack.c.h.b16 %v546
      %v795 = vunpack.c.l.b16 %v547
      %v796 = vunpack.c.h.b16 %v547
      %v797 = vunpack.c.l.b16 %v548
      %v798 = vunpack.c.h.b16 %v548
      %v799 = vunpack.c.l.b16 %v549
      %v800 = vunpack.c.h.b16 %v549
      %v801 = vunpack.c.l.b16 %v550
      %v802 = vunpack.c.h.b16 %v550
      %v803 = vunpack.c.l.b16 %v551
      %v804 = vunpack.c.h.b16 %v551
      %v805 = vunpack.c.l.b16 %v552
      %v806 = vunpack.c.h.b16 %v552
      %v807 = vunpack.c.l.b16 %v553
      %v808 = vunpack.c.h.b16 %v553
      %v809 = vunpack.c.l.b16 %v554
      %v810 = vunpack.c.h.b16 %v554
      %v811 = vunpack.c.l.b16 %v555
      %v812 = vunpack.c.h.b16 %v555
      %v813 = vunpack.c.l.b16 %v556
      %v814 = vunpack.c.h.b16 %v556
      %v815 = vunpack.c.l.b16 %v557
      %v816 = vunpack.c.h.b16 %v557
      %v817 = vunpack.c.l.b16 %v558
      %v818 = vunpack.c.h.b16 %v558
      %v819 = vunpack.c.l.b16 %v559
      %v820 = vunpack.c.h.b16 %v559
      %v821 = vunpack.c.l.b16 %v560
      %v822 = vunpack.c.h.b16 %v560
      %v823 = vunpack.c.l.b16 %v561
      %v824 = vunpack.c.h.b16 %v561
      %v825 = vunpack.c.l.b16 %v562
      %v826 = vunpack.c.h.b16 %v562
      %v827 = vunpack.c.l.b16 %v563
      %v828 = vunpack.c.h.b16 %v563
      %v829 = vunpack.c.l.b16 %v564
      %v830 = vunpack.c.h.b16 %v564
      %v831 = vunpack.c.l.b16 %v565
      %v832 = vunpack.c.h.b16 %v565
      %v833 = vunpack.c.l.b16 %v566
      %v834 = vunpack.c.h.b16 %v566
      %v835 = vunpack.c.l.b16 %v567
      %v836 = vunpack.c.h.b16 %v567
      %v837 = vunpack.c.l.b16 %v568
      %v838 = vunpack.c.h.b16 %v568
      %v839 = vunpack.c.l.b16 %v569
      %v840 = vunpack.c.h.b16 %v569
      %v841 = vunpack.c.l.b16 %v570
      %v842 = vunpack.c.h.b16 %v570
      %v843 = vunpack.c.l.b16 %v571
      %v844 = vunpack.c.h.b16 %v571
      %v845 = vunpack.c.l.b16 %v572
      %v846 = vunpack.c.h.b16 %v572
      %v847 = vunpack.c.l.b16 %v573
      %v848 = vunpack.c.h.b16 %v573
      %v849 = vunpack.c.l.b16 %v574
      %v850 = vunpack.c.h.b16 %v574
      %v851 = vunpack.c.l.b16 %v575
      %v852 = vunpack.c.h.b16 %v575
      %v853 = vunpack.c.l.b16 %v576
      %v854 = vunpack.c.h.b16 %v576
      %v855 = vunpack.c.l.b16 %v577
      %v856 = vunpack.c.h.b16 %v577
      %v857 = vunpack.c.l.b16 %v578
      %v858 = vunpack.c.h.b16 %v578
      %v859 = vunpack.c.l.b16 %v579
      %v860 = vunpack.c.h.b16 %v579
      %v861 = vunpack.c.l.b16 %v580
      %v862 = vunpack.c.h.b16 %v580
      %v863 = vunpack.c.l.b16 %v581
      %v864 = vunpack.c.h.b16 %v581
      %v865 = vunpack.c.l.b16 %v582
      %v866 = vunpack.c.h.b16 %v582
      %v867 = vunpack.c.l.b16 %v583
      %v868 = vunpack.c.h.b16 %v583
      %v869 = vunpack.c.l.b16 %v584
      %v870 = vunpack.c.h.b16 %v584
      %v871 = vunpack.c.l.b16 %v585
      %v872 = vunpack.c.h.b16 %v585
      %v873 = vunpack.c.l.b16 %v586
      %v874 = vunpack.c.h.b16 %v586
      %v875 = vpack.c.b16 %v749, %v747
      %v876 = vpack.c.b16 %v750, %v748
      %v877 = vpack.c.b16 %v753, %v751
      %v878 = vpack.c.b16 %v754, %v752
      %v879 = vpack.c.b16 %v757, %v755
      %v880 = vpack.c.b16 %v758, %v756
      %v881 = vpack.c.b16 %v761, %v759
      %v882 = vpack.c.b16 %v762, %v760
      %v883 = vpack.c.b16 %v765, %v763
      %v884 = vpack.c.b16 %v766, %v764
      %v885 = vpack.c.b16 %v769, %v767
      %v886 = vpack.c.b16 %v770, %v768
      %v887 = vpack.c.b16 %v773, %v771
      %v888 = vpack.c.b16 %v774, %v772
      %v889 = vpack.c.b16 %v777, %v775
      %v890 = vpack.c.b16 %v778, %v776
      %v891 = vpack.c.b16 %v781, %v779
      %v892 = vpack.c.b16 %v782, %v780
      %v893 = vpack.c.b16 %v785, %v783
      %v894 = vpack.c.b16 %v786, %v784
      %v895 = vpack.c.b16 %v789, %v787
      %v896 = vpack.c.b16 %v790, %v788
      %v897 = vpack.c.b16 %v793, %v791
      %v898 = vpack.c.b16 %v794, %v792
      %v899 = vpack.c.b16 %v797, %v795
      %v900 = vpack.c.b16 %v798, %v796
      %v901 = vpack.c.b16 %v801, %v799
      %v902 = vpack.c.b16 %v802, %v800
      %v903 = vpack.c.b16 %v805, %v803
      %v904 = vpack.c.b16 %v806, %v804
      %v905 = vpack.c.b16 %v809, %v807
      %v906 = vpack.c.b16 %v810, %v808
      %v907 = vpack.c.b16 %v813, %v811
      %v908 = vpack.c.b16 %v814, %v812
      %v909 = vpack.c.b16 %v817, %v815
      %v910 = vpack.c.b16 %v818, %v816
      %v911 = vpack.c.b16 %v821, %v819
      %v912 = vpack.c.b16 %v822, %v820
      %v913 = vpack.c.b16 %v825, %v823
      %v914 = vpack.c.b16 %v826, %v824
      %v915 = vpack.c.b16 %v829, %v827
      %v916 = vpack.c.b16 %v830, %v828
      %v917 = vpack.c.b16 %v833, %v831
      %v918 = vpack.c.b16 %v834, %v832
      %v919 = vpack.c.b16 %v837, %v835
      %v920 = vpack.c.b16 %v838, %v836
      %v921 = vpack.c.b16 %v841, %v839
      %v922 = vpack.c.b16 %v842, %v840
      %v923 = vpack.c.b16 %v845, %v843
      %v924 = vpack.c.b16 %v846, %v844
      %v925 = vpack.c.b16 %v849, %v847
      %v926 = vpack.c.b16 %v850, %v848
      %v927 = vpack.c.b16 %v853, %v851
      %v928 = vpack.c.b16 %v854, %v852
      %v929 = vpack.c.b16 %v857, %v855
      %v930 = vpack.c.b16 %v858, %v856
      %v931 = vpack.c.b16 %v861, %v859
      %v932 = vpack.c.b16 %v862, %v860
      %v933 = vpack.c.b16 %v865, %v863
      %v934 = vpack.c.b16 %v866, %v864
      %v935 = vpack.c.b16 %v869, %v867
      %v936 = vpack.c.b16 %v870, %v868
      %v937 = vpack.c.b16 %v873, %v871
      %v938 = vpack.c.b16 %v874, %v872
      %v1099 = vunpack.c.l.b16 %v587
      %v1100 = vunpack.c.h.b16 %v587
      %v1101 = vunpack.c.l.b16 %v588
      %v1102 = vunpack.c.h.b16 %v588
      %v1103 = vunpack.c.l.b16 %v589
      %v1104 = vunpack.c.l.b16 %v590
      %v1105 = vunpack.c.h.b16 %v590
      %v1106 = vunpack.c.l.b16 %v591
      %v1107 = vunpack.c.h.b16 %v591
      %v1108 = vunpack.c.l.b16 %v592
      %v1109 = vunpack.c.l.b16 %v593
      %v1110 = vunpack.c.h.b16 %v593
      %v1111 = vunpack.c.l.b16 %v594
      %v1112 = vunpack.c.h.b16 %v594
      %v1113 = vunpack.c.l.b16 %v595
      %v1114 = vunpack.c.l.b16 %v596
      %v1115 = vunpack.c.h.b16 %v596
      %v1116 = vunpack.c.l.b16 %v597
      %v1117 = vunpack.c.h.b16 %v597
      %v1118 = vunpack.c.l.b16 %v598
      %v1119 = vunpack.c.l.b16 %v599
      %v1120 = vunpack.c.h.b16 %v599
      %v1121 = vunpack.c.l.b16 %v600
      %v1122 = vunpack.c.h.b16 %v600
      %v1123 = vunpack.c.l.b16 %v601
      %v1124 = vunpack.c.l.b16 %v602
      %v1125 = vunpack.c.h.b16 %v602
      %v1126 = vunpack.c.l.b16 %v603
      %v1127 = vunpack.c.h.b16 %v603
      %v1128 = vunpack.c.l.b16 %v604
      %v1129 = vunpack.c.l.b16 %v605
      %v1130 = vunpack.c.h.b16 %v605
      %v1131 = vunpack.c.l.b16 %v606
      %v1132 = vunpack.c.h.b16 %v606
      %v1133 = vunpack.c.l.b16 %v607
      %v1134 = vunpack.c.l.b16 %v608
      %v1135 = vunpack.c.h.b16 %v608
      %v1136 = vunpack.c.l.b16 %v609
      %v1137 = vunpack.c.h.b16 %v609
      %v1138 = vunpack.c.l.b16 %v610
      %v1139 = vunpack.c.l.b16 %v611
      %v1140 = vunpack.c.h.b16 %v611
      %v1141 = vunpack.c.l.b16 %v612
      %v1142 = vunpack.c.h.b16 %v612
      %v1143 = vunpack.c.l.b16 %v613
      %v1144 = vunpack.c.l.b16 %v614
      %v1145 = vunpack.c.h.b16 %v614
      %v1146 = vunpack.c.l.b16 %v615
      %v1147 = vunpack.c.h.b16 %v615
      %v1148 = vunpack.c.l.b16 %v616
      %v1149 = vunpack.c.l.b16 %v617
      %v1150 = vunpack.c.h.b16 %v617
      %v1151 = vunpack.c.l.b16 %v618
      %v1152 = vunpack.c.h.b16 %v618
      %v1153 = vunpack.c.l.b16 %v619
      %v1154 = vunpack.c.l.b16 %v620
      %v1155 = vunpack.c.h.b16 %v620
      %v1156 = vunpack.c.l.b16 %v621
      %v1157 = vunpack.c.h.b16 %v621
      %v1158 = vunpack.c.l.b16 %v622
      %v1159 = vunpack.c.l.b16 %v623
      %v1160 = vunpack.c.h.b16 %v623
      %v1161 = vunpack.c.l.b16 %v624
      %v1162 = vunpack.c.h.b16 %v624
      %v1163 = vunpack.c.l.b16 %v625
      %v1164 = vunpack.c.l.b16 %v626
      %v1165 = vunpack.c.h.b16 %v626
      %v1166 = vunpack.c.l.b16 %v627
      %v1167 = vunpack.c.h.b16 %v627
      %v1168 = vunpack.c.l.b16 %v628
      %v1169 = vunpack.c.l.b16 %v629
      %v1170 = vunpack.c.h.b16 %v629
      %v1171 = vunpack.c.l.b16 %v630
      %v1172 = vunpack.c.h.b16 %v630
      %v1173 = vunpack.c.l.b16 %v631
      %v1174 = vunpack.c.l.b16 %v632
      %v1175 = vunpack.c.h.b16 %v632
      %v1176 = vunpack.c.l.b16 %v633
      %v1177 = vunpack.c.h.b16 %v633
      %v1178 = vunpack.c.l.b16 %v634
      %v1179 = vunpack.c.l.b16 %v635
      %v1180 = vunpack.c.h.b16 %v635
      %v1181 = vunpack.c.l.b16 %v636
      %v1182 = vunpack.c.h.b16 %v636
      %v1183 = vunpack.c.l.b16 %v637
      %v1184 = vunpack.c.l.b16 %v638
      %v1185 = vunpack.c.h.b16 %v638
      %v1186 = vunpack.c.l.b16 %v639
      %v1187 = vunpack.c.h.b16 %v639
      %v1188 = vunpack.c.l.b16 %v640
      %v1189 = vunpack.c.l.b16 %v641
      %v1190 = vunpack.c.h.b16 %v641
      %v1191 = vunpack.c.l.b16 %v642
      %v1192 = vunpack.c.h.b16 %v642
      %v1193 = vunpack.c.l.b16 %v643
      %v1194 = vunpack.c.l.b16 %v644
      %v1195 = vunpack.c.h.b16 %v644
      %v1196 = vunpack.c.l.b16 %v645
      %v1197 = vunpack.c.h.b16 %v645
      %v1198 = vunpack.c.l.b16 %v646
      %v1199 = vunpack.c.l.b16 %v647
      %v1200 = vunpack.c.h.b16 %v647
      %v1201 = vunpack.c.l.b16 %v648
      %v1202 = vunpack.c.h.b16 %v648
      %v1203 = vunpack.c.l.b16 %v649
      %v1204 = vunpack.c.l.b16 %v650
      %v1205 = vunpack.c.h.b16 %v650
      %v1206 = vunpack.c.l.b16 %v651
      %v1207 = vunpack.c.h.b16 %v651
      %v1208 = vunpack.c.l.b16 %v652
      %v1209 = vunpack.c.l.b16 %v653
      %v1210 = vunpack.c.h.b16 %v653
      %v1211 = vunpack.c.l.b16 %v654
      %v1212 = vunpack.c.h.b16 %v654
      %v1213 = vunpack.c.l.b16 %v655
      %v1214 = vunpack.c.l.b16 %v656
      %v1215 = vunpack.c.h.b16 %v656
      %v1216 = vunpack.c.l.b16 %v657
      %v1217 = vunpack.c.h.b16 %v657
      %v1218 = vunpack.c.l.b16 %v658
      %v1219 = vunpack.c.l.b16 %v659
      %v1220 = vunpack.c.h.b16 %v659
      %v1221 = vunpack.c.l.b16 %v660
      %v1222 = vunpack.c.h.b16 %v660
      %v1223 = vunpack.c.l.b16 %v661
      %v1224 = vunpack.c.l.b16 %v662
      %v1225 = vunpack.c.h.b16 %v662
      %v1226 = vunpack.c.l.b16 %v663
      %v1227 = vunpack.c.h.b16 %v663
      %v1228 = vunpack.c.l.b16 %v664
      %v1229 = vunpack.c.l.b16 %v665
      %v1230 = vunpack.c.h.b16 %v665
      %v1231 = vunpack.c.l.b16 %v666
      %v1232 = vunpack.c.h.b16 %v666
      %v1233 = vunpack.c.l.b16 %v667
      %v1234 = vunpack.c.l.b16 %v668
      %v1235 = vunpack.c.h.b16 %v668
      %v1236 = vunpack.c.l.b16 %v669
      %v1237 = vunpack.c.h.b16 %v669
      %v1238 = vunpack.c.l.b16 %v670
      %v1239 = vunpack.c.l.b16 %v671
      %v1240 = vunpack.c.h.b16 %v671
      %v1241 = vunpack.c.l.b16 %v672
      %v1242 = vunpack.c.h.b16 %v672
      %v1243 = vunpack.c.l.b16 %v673
      %v1244 = vunpack.c.l.b16 %v674
      %v1245 = vunpack.c.h.b16 %v674
      %v1246 = vunpack.c.l.b16 %v675
      %v1247 = vunpack.c.h.b16 %v675
      %v1248 = vunpack.c.l.b16 %v676
      %v1249 = vunpack.c.l.b16 %v677
      %v1250 = vunpack.c.h.b16 %v677
      %v1251 = vunpack.c.l.b16 %v678
      %v1252 = vunpack.c.h.b16 %v678
      %v1253 = vunpack.c.l.b16 %v679
      %v1254 = vunpack.c.l.b16 %v680
      %v1255 = vunpack.c.h.b16 %v680
      %v1256 = vunpack.c.l.b16 %v681
      %v1257 = vunpack.c.h.b16 %v681
      %v1258 = vunpack.c.l.b16 %v682
      %v1259 = vpack.c.b16 %v1104, %v1099
      %v1260 = vpack.c.b16 %v1105, %v1100
      %v1261 = vpack.c.b16 %v1106, %v1101
      %v1262 = vpack.c.b16 %v1107, %v1102
      %v1263 = vpack.c.b16 %v1108, %v1103
      %v1264 = vpack.c.b16 %v1114, %v1109
      %v1265 = vpack.c.b16 %v1115, %v1110
      %v1266 = vpack.c.b16 %v1116, %v1111
      %v1267 = vpack.c.b16 %v1117, %v1112
      %v1268 = vpack.c.b16 %v1118, %v1113
      %v1269 = vpack.c.b16 %v1124, %v1119
      %v1270 = vpack.c.b16 %v1125, %v1120
      %v1271 = vpack.c.b16 %v1126, %v1121
      %v1272 = vpack.c.b16 %v1127, %v1122
      %v1273 = vpack.c.b16 %v1128, %v1123
      %v1274 = vpack.c.b16 %v1134, %v1129
      %v1275 = vpack.c.b16 %v1135, %v1130
      %v1276 = vpack.c.b16 %v1136, %v1131
      %v1277 = vpack.c.b16 %v1137, %v1132
      %v1278 = vpack.c.b16 %v1138, %v1133
      %v1279 = vpack.c.b16 %v1144, %v1139
      %v1280 = vpack.c.b16 %v1145, %v1140
      %v1281 = vpack.c.b16 %v1146, %v1141
      %v1282 = vpack.c.b16 %v1147, %v1142
      %v1283 = vpack.c.b16 %v1148, %v1143
      %v1284 = vpack.c.b16 %v1154, %v1149
      %v1285 = vpack.c.b16 %v1155, %v1150
      %v1286 = vpack.c.b16 %v1156, %v1151
      %v1287 = vpack.c.b16 %v1157, %v1152
      %v1288 = vpack.c.b16 %v1158, %v1153
      %v1289 = vpack.c.b16 %v1164, %v1159
      %v1290 = vpack.c.b16 %v1165, %v1160
      %v1291 = vpack.c.b16 %v1166, %v1161
      %v1292 = vpack.c.b16 %v1167, %v1162
      %v1293 = vpack.c.b16 %v1168, %v1163
      %v1294 = vpack.c.b16 %v1174, %v1169
      %v1295 = vpack.c.b16 %v1175, %v1170
      %v1296 = vpack.c.b16 %v1176, %v1171
      %v1297 = vpack.c.b16 %v1177, %v1172
      %v1298 = vpack.c.b16 %v1178, %v1173
      %v1299 = vpack.c.b16 %v1184, %v1179
      %v1300 = vpack.c.b16 %v1185, %v1180
      %v1301 = vpack.c.b16 %v1186, %v1181
      %v1302 = vpack.c.b16 %v1187, %v1182
      %v1303 = vpack.c.b16 %v1188, %v1183
      %v1304 = vpack.c.b16 %v1194, %v1189
      %v1305 = vpack.c.b16 %v1195, %v1190
      %v1306 = vpack.c.b16 %v1196, %v1191
      %v1307 = vpack.c.b16 %v1197, %v1192
      %v1308 = vpack.c.b16 %v1198, %v1193
      %v1309 = vpack.c.b16 %v1204, %v1199
      %v1310 = vpack.c.b16 %v1205, %v1200
      %v1311 = vpack.c.b16 %v1206, %v1201
      %v1312 = vpack.c.b16 %v1207, %v1202
      %v1313 = vpack.c.b16 %v1208, %v1203
      %v1314 = vpack.c.b16 %v1214, %v1209
      %v1315 = vpack.c.b16 %v1215, %v1210
      %v1316 = vpack.c.b16 %v1216, %v1211
      %v1317 = vpack.c.b16 %v1217, %v1212
      %v1318 = vpack.c.b16 %v1218, %v1213
      %v1319 = vpack.c.b16 %v1224, %v1219
      %v1320 = vpack.c.b16 %v1225, %v1220
      %v1321 = vpack.c.b16 %v1226, %v1221
      %v1322 = vpack.c.b16 %v1227, %v1222
      %v1323 = vpack.c.b16 %v1228, %v1223
      %v1324 = vpack.c.b16 %v1234, %v1229
      %v1325 = vpack.c.b16 %v1235, %v1230
      %v1326 = vpack.c.b16 %v1236, %v1231
      %v1327 = vpack.c.b16 %v1237, %v1232
      %v1328 = vpack.c.b16 %v1238, %v1233
      %v1329 = vpack.c.b16 %v1244, %v1239
      %v1330 = vpack.c.b16 %v1245, %v1240
      %v1331 = vpack.c.b16 %v1246, %v1241
      %v1332 = vpack.c.b16 %v1247, %v1242
      %v1333 = vpack.c.b16 %v1248, %v1243
      %v1334 = vpack.c.b16 %v1254, %v1249
      %v1335 = vpack.c.b16 %v1255, %v1250
      %v1336 = vpack.c.b16 %v1256, %v1251
      %v1337 = vpack.c.b16 %v1257, %v1252
      %v1338 = vpack.c.b16 %v1258, %v1253
      %1419 = vmatprep.subr.bf16.mxu0 %v1260
      %1420 = vmatpush1.bf16.msra.mxu0 %v1259
      %1421 = vmatprep.subr.bf16.mxu0 %v1265
      %1422 = vmatpush1.bf16.msra.mxu0 %v1264
      %1423 = vmatprep.subr.bf16.mxu0 %v1270
      %1424 = vmatpush1.bf16.msra.mxu0 %v1269
      %1425 = vmatprep.subr.bf16.mxu0 %v1275
      %1426 = vmatpush1.bf16.msra.mxu0 %v1274
      %1427 = vmatprep.subr.bf16.mxu0 %v1280
      %1428 = vmatpush1.bf16.msra.mxu0 %v1279
      %1429 = vmatprep.subr.bf16.mxu0 %v1285
      %1430 = vmatpush1.bf16.msra.mxu0 %v1284
      %1431 = vmatprep.subr.bf16.mxu0 %v1290
      %1432 = vmatpush1.bf16.msra.mxu0 %v1289
      %1433 = vmatprep.subr.bf16.mxu0 %v1295
      %1434 = vmatpush1.bf16.msra.mxu0 %v1294
      %1435 = vmatprep.subr.bf16.mxu0 %v1300
      %1436 = vmatpush1.bf16.msra.mxu0 %v1299
      %1437 = vmatprep.subr.bf16.mxu0 %v1305
      %1438 = vmatpush1.bf16.msra.mxu0 %v1304
      %1439 = vmatprep.subr.bf16.mxu0 %v1310
      %1440 = vmatpush1.bf16.msra.mxu0 %v1309
      %1441 = vmatprep.subr.bf16.mxu0 %v1315
      %1442 = vmatpush1.bf16.msra.mxu0 %v1314
      %1443 = vmatprep.subr.bf16.mxu0 %v1320
      %1444 = vmatpush1.bf16.msra.mxu0 %v1319
      %1445 = vmatprep.subr.bf16.mxu0 %v1325
      %1446 = vmatpush1.bf16.msra.mxu0 %v1324
      %1447 = vmatprep.subr.bf16.mxu0 %v1330
      %1448 = vmatpush1.bf16.msra.mxu0 %v1329
      %1449 = vmatprep.subr.bf16.mxu0 %v1335
      %1450 = vmatpush1.bf16.msra.mxu0 %v1334
      %1451 = vmatprep.mubr.bf16.mxu0 %v876
      %1452 = vmatmul.mubr.bf16.gmra.mrb[0].mxu0 %v875
      %v1453 = vpop.f32.mrb[0].mxu0
      %v1454 = vadd.f32 0.0, %v1453
      %v1455 = vpop.f32.mrb[0].mxu0
      %v1456 = vadd.f32 0.0, %v1455
      %v1457 = vpop.f32.mrb[0].mxu0
      %v1458 = vadd.f32 0.0, %v1457
      %v1459 = vpop.f32.mrb[0].mxu0
      %v1460 = vadd.f32 0.0, %v1459
      %1461 = vmatprep.mubr.bf16.mxu0 %v878
      %1462 = vmatmul.mubr.bf16.gmra.mrb[0].mxu0 %v877
      %v1463 = vpop.f32.mrb[0].mxu0
      %v1464 = vadd.f32 0.0, %v1463
      %v1465 = vpop.f32.mrb[0].mxu0
      %v1466 = vadd.f32 0.0, %v1465
      %v1467 = vpop.f32.mrb[0].mxu0
      %v1468 = vadd.f32 0.0, %v1467
      %v1469 = vpop.f32.mrb[0].mxu0
      %v1470 = vadd.f32 0.0, %v1469
      %1471 = vmatprep.mubr.bf16.mxu0 %v880
      %1472 = vmatmul.mubr.bf16.gmra.mrb[0].mxu0 %v879
      %v1473 = vpop.f32.mrb[0].mxu0
      %v1474 = vadd.f32 0.0, %v1473
      %v1475 = vpop.f32.mrb[0].mxu0
      %v1476 = vadd.f32 0.0, %v1475
      %v1477 = vpop.f32.mrb[0].mxu0
      %v1478 = vadd.f32 0.0, %v1477
      %v1479 = vpop.f32.mrb[0].mxu0
      %v1480 = vadd.f32 0.0, %v1479
      %1481 = vmatprep.mubr.bf16.mxu0 %v882
      %1482 = vmatmul.mubr.bf16.gmra.mrb[0].mxu0 %v881
      %v1483 = vpop.f32.mrb[0].mxu0
      %v1484 = vadd.f32 0.0, %v1483
      %v1485 = vpop.f32.mrb[0].mxu0
      %v1486 = vadd.f32 0.0, %v1485
      %v1487 = vpop.f32.mrb[0].mxu0
      %v1488 = vadd.f32 0.0, %v1487
      %v1489 = vpop.f32.mrb[0].mxu0
      %v1490 = vadd.f32 0.0, %v1489
      %1491 = vmatprep.mubr.bf16.mxu0 %v884
      %1492 = vmatmul.mubr.bf16.gmra.mrb[0].mxu0 %v883
      %v1493 = vpop.f32.mrb[0].mxu0
      %v1494 = vadd.f32 0.0, %v1493
      %v1495 = vpop.f32.mrb[0].mxu0
      %v1496 = vadd.f32 0.0, %v1495
      %v1497 = vpop.f32.mrb[0].mxu0
      %v1498 = vadd.f32 0.0, %v1497
      %v1499 = vpop.f32.mrb[0].mxu0
      %v1500 = vadd.f32 0.0, %v1499
      %1501 = vmatprep.mubr.bf16.mxu0 %v886
      %1502 = vmatmul.mubr.bf16.gmra.mrb[0].mxu0 %v885
      %v1503 = vpop.f32.mrb[0].mxu0
      %v1504 = vadd.f32 0.0, %v1503
      %v1505 = vpop.f32.mrb[0].mxu0
      %v1506 = vadd.f32 0.0, %v1505
      %v1507 = vpop.f32.mrb[0].mxu0
      %v1508 = vadd.f32 0.0, %v1507
      %v1509 = vpop.f32.mrb[0].mxu0
      %v1510 = vadd.f32 0.0, %v1509
      %1511 = vmatprep.mubr.bf16.mxu0 %v888
      %1512 = vmatmul.mubr.bf16.gmra.mrb[0].mxu0 %v887
      %v1513 = vpop.f32.mrb[0].mxu0
      %v1514 = vadd.f32 0.0, %v1513
      %v1515 = vpop.f32.mrb[0].mxu0
      %v1516 = vadd.f32 0.0, %v1515
      %v1517 = vpop.f32.mrb[0].mxu0
      %v1518 = vadd.f32 0.0, %v1517
      %v1519 = vpop.f32.mrb[0].mxu0
      %v1520 = vadd.f32 0.0, %v1519
      %1521 = vmatprep.mubr.bf16.mxu0 %v890
      %1522 = vmatmul.mubr.bf16.gmra.mrb[0].mxu0 %v889
      %v1523 = vpop.f32.mrb[0].mxu0
      %v1524 = vadd.f32 0.0, %v1523
      %v1525 = vpop.f32.mrb[0].mxu0
      %v1526 = vadd.f32 0.0, %v1525
      %v1527 = vpop.f32.mrb[0].mxu0
      %v1528 = vadd.f32 0.0, %v1527
      %v1529 = vpop.f32.mrb[0].mxu0
      %v1530 = vadd.f32 0.0, %v1529
      %1531 = vmatprep.mubr.bf16.mxu0 %v892
      %1532 = vmatmul.mubr.bf16.gmra.mrb[0].mxu0 %v891
      %v1533 = vpop.f32.mrb[0].mxu0
      %v1534 = vadd.f32 0.0, %v1533
      %v1535 = vpop.f32.mrb[0].mxu0
      %v1536 = vadd.f32 0.0, %v1535
      %v1537 = vpop.f32.mrb[0].mxu0
      %v1538 = vadd.f32 0.0, %v1537
      %v1539 = vpop.f32.mrb[0].mxu0
      %v1540 = vadd.f32 0.0, %v1539
      %1541 = vmatprep.mubr.bf16.mxu0 %v894
      %1542 = vmatmul.mubr.bf16.gmra.mrb[0].mxu0 %v893
      %v1543 = vpop.f32.mrb[0].mxu0
      %v1544 = vadd.f32 0.0, %v1543
      %v1545 = vpop.f32.mrb[0].mxu0
      %v1546 = vadd.f32 0.0, %v1545
      %v1547 = vpop.f32.mrb[0].mxu0
      %v1548 = vadd.f32 0.0, %v1547
      %v1549 = vpop.f32.mrb[0].mxu0
      %v1550 = vadd.f32 0.0, %v1549
      %1551 = vmatprep.mubr.bf16.mxu0 %v896
      %1552 = vmatmul.mubr.bf16.gmra.mrb[0].mxu0 %v895
      %v1553 = vpop.f32.mrb[0].mxu0
      %v1554 = vadd.f32 0.0, %v1553
      %v1555 = vpop.f32.mrb[0].mxu0
      %v1556 = vadd.f32 0.0, %v1555
      %v1557 = vpop.f32.mrb[0].mxu0
      %v1558 = vadd.f32 0.0, %v1557
      %v1559 = vpop.f32.mrb[0].mxu0
      %v1560 = vadd.f32 0.0, %v1559
      %1561 = vmatprep.mubr.bf16.mxu0 %v898
      %1562 = vmatmul.mubr.bf16.gmra.mrb[0].mxu0 %v897
      %v1563 = vpop.f32.mrb[0].mxu0
      %v1564 = vadd.f32 0.0, %v1563
      %v1565 = vpop.f32.mrb[0].mxu0
      %v1566 = vadd.f32 0.0, %v1565
      %v1567 = vpop.f32.mrb[0].mxu0
      %v1568 = vadd.f32 0.0, %v1567
      %v1569 = vpop.f32.mrb[0].mxu0
      %v1570 = vadd.f32 0.0, %v1569
      %1571 = vmatprep.mubr.bf16.mxu0 %v900
      %1572 = vmatmul.mubr.bf16.gmra.mrb[0].mxu0 %v899
      %v1573 = vpop.f32.mrb[0].mxu0
      %v1574 = vadd.f32 0.0, %v1573
      %v1575 = vpop.f32.mrb[0].mxu0
      %v1576 = vadd.f32 0.0, %v1575
      %v1577 = vpop.f32.mrb[0].mxu0
      %v1578 = vadd.f32 0.0, %v1577
      %v1579 = vpop.f32.mrb[0].mxu0
      %v1580 = vadd.f32 0.0, %v1579
      %1581 = vmatprep.mubr.bf16.mxu0 %v902
      %1582 = vmatmul.mubr.bf16.gmra.mrb[0].mxu0 %v901
      %v1583 = vpop.f32.mrb[0].mxu0
      %v1584 = vadd.f32 0.0, %v1583
      %v1585 = vpop.f32.mrb[0].mxu0
      %v1586 = vadd.f32 0.0, %v1585
      %v1587 = vpop.f32.mrb[0].mxu0
      %v1588 = vadd.f32 0.0, %v1587
      %v1589 = vpop.f32.mrb[0].mxu0
      %v1590 = vadd.f32 0.0, %v1589
      %1591 = vmatprep.mubr.bf16.mxu0 %v904
      %1592 = vmatmul.mubr.bf16.gmra.mrb[0].mxu0 %v903
      %v1593 = vpop.f32.mrb[0].mxu0
      %v1594 = vadd.f32 0.0, %v1593
      %v1595 = vpop.f32.mrb[0].mxu0
      %v1596 = vadd.f32 0.0, %v1595
      %v1597 = vpop.f32.mrb[0].mxu0
      %v1598 = vadd.f32 0.0, %v1597
      %v1599 = vpop.f32.mrb[0].mxu0
      %v1600 = vadd.f32 0.0, %v1599
      %1601 = vmatprep.mubr.bf16.mxu0 %v906
      %1602 = vmatmul.mubr.bf16.gmra.mrb[0].mxu0 %v905
      %v1603 = vpop.f32.mrb[0].mxu0
      %v1604 = vadd.f32 0.0, %v1603
      %v1605 = vpop.f32.mrb[0].mxu0
      %v1606 = vadd.f32 0.0, %v1605
      %v1607 = vpop.f32.mrb[0].mxu0
      %v1608 = vadd.f32 0.0, %v1607
      %v1609 = vpop.f32.mrb[0].mxu0
      %v1610 = vadd.f32 0.0, %v1609
      %1611 = vmatprep.mubr.bf16.mxu0 %v908
      %1612 = vmatmul.mubr.bf16.gmra.mrb[0].mxu0 %v907
      %v1613 = vpop.f32.mrb[0].mxu0
      %v1614 = vadd.f32 0.0, %v1613
      %v1615 = vpop.f32.mrb[0].mxu0
      %v1616 = vadd.f32 0.0, %v1615
      %v1617 = vpop.f32.mrb[0].mxu0
      %v1618 = vadd.f32 0.0, %v1617
      %v1619 = vpop.f32.mrb[0].mxu0
      %v1620 = vadd.f32 0.0, %v1619
      %1621 = vmatprep.mubr.bf16.mxu0 %v910
      %1622 = vmatmul.mubr.bf16.gmra.mrb[0].mxu0 %v909
      %v1623 = vpop.f32.mrb[0].mxu0
      %v1624 = vadd.f32 0.0, %v1623
      %v1625 = vpop.f32.mrb[0].mxu0
      %v1626 = vadd.f32 0.0, %v1625
      %v1627 = vpop.f32.mrb[0].mxu0
      %v1628 = vadd.f32 0.0, %v1627
      %v1629 = vpop.f32.mrb[0].mxu0
      %v1630 = vadd.f32 0.0, %v1629
      %1631 = vmatprep.mubr.bf16.mxu0 %v912
      %1632 = vmatmul.mubr.bf16.gmra.mrb[0].mxu0 %v911
      %v1633 = vpop.f32.mrb[0].mxu0
      %v1634 = vadd.f32 0.0, %v1633
      %v1635 = vpop.f32.mrb[0].mxu0
      %v1636 = vadd.f32 0.0, %v1635
      %v1637 = vpop.f32.mrb[0].mxu0
      %v1638 = vadd.f32 0.0, %v1637
      %v1639 = vpop.f32.mrb[0].mxu0
      %v1640 = vadd.f32 0.0, %v1639
      %1641 = vmatprep.mubr.bf16.mxu0 %v914
      %1642 = vmatmul.mubr.bf16.gmra.mrb[0].mxu0 %v913
      %v1643 = vpop.f32.mrb[0].mxu0
      %v1644 = vadd.f32 0.0, %v1643
      %v1645 = vpop.f32.mrb[0].mxu0
      %v1646 = vadd.f32 0.0, %v1645
      %v1647 = vpop.f32.mrb[0].mxu0
      %v1648 = vadd.f32 0.0, %v1647
      %v1649 = vpop.f32.mrb[0].mxu0
      %v1650 = vadd.f32 0.0, %v1649
      %1651 = vmatprep.mubr.bf16.mxu0 %v916
      %1652 = vmatmul.mubr.bf16.gmra.mrb[0].mxu0 %v915
      %v1653 = vpop.f32.mrb[0].mxu0
      %v1654 = vadd.f32 0.0, %v1653
      %v1655 = vpop.f32.mrb[0].mxu0
      %v1656 = vadd.f32 0.0, %v1655
      %v1657 = vpop.f32.mrb[0].mxu0
      %v1658 = vadd.f32 0.0, %v1657
      %v1659 = vpop.f32.mrb[0].mxu0
      %v1660 = vadd.f32 0.0, %v1659
      %1661 = vmatprep.mubr.bf16.mxu0 %v918
      %1662 = vmatmul.mubr.bf16.gmra.mrb[0].mxu0 %v917
      %v1663 = vpop.f32.mrb[0].mxu0
      %v1664 = vadd.f32 0.0, %v1663
      %v1665 = vpop.f32.mrb[0].mxu0
      %v1666 = vadd.f32 0.0, %v1665
      %v1667 = vpop.f32.mrb[0].mxu0
      %v1668 = vadd.f32 0.0, %v1667
      %v1669 = vpop.f32.mrb[0].mxu0
      %v1670 = vadd.f32 0.0, %v1669
      %1671 = vmatprep.mubr.bf16.mxu0 %v920
      %1672 = vmatmul.mubr.bf16.gmra.mrb[0].mxu0 %v919
      %v1673 = vpop.f32.mrb[0].mxu0
      %v1674 = vadd.f32 0.0, %v1673
      %v1675 = vpop.f32.mrb[0].mxu0
      %v1676 = vadd.f32 0.0, %v1675
      %v1677 = vpop.f32.mrb[0].mxu0
      %v1678 = vadd.f32 0.0, %v1677
      %v1679 = vpop.f32.mrb[0].mxu0
      %v1680 = vadd.f32 0.0, %v1679
      %1681 = vmatprep.mubr.bf16.mxu0 %v922
      %1682 = vmatmul.mubr.bf16.gmra.mrb[0].mxu0 %v921
      %v1683 = vpop.f32.mrb[0].mxu0
      %v1684 = vadd.f32 0.0, %v1683
      %v1685 = vpop.f32.mrb[0].mxu0
      %v1686 = vadd.f32 0.0, %v1685
      %v1687 = vpop.f32.mrb[0].mxu0
      %v1688 = vadd.f32 0.0, %v1687
      %v1689 = vpop.f32.mrb[0].mxu0
      %v1690 = vadd.f32 0.0, %v1689
      %1691 = vmatprep.mubr.bf16.mxu0 %v924
      %1692 = vmatmul.mubr.bf16.gmra.mrb[0].mxu0 %v923
      %v1693 = vpop.f32.mrb[0].mxu0
      %v1694 = vadd.f32 0.0, %v1693
      %v1695 = vpop.f32.mrb[0].mxu0
      %v1696 = vadd.f32 0.0, %v1695
      %v1697 = vpop.f32.mrb[0].mxu0
      %v1698 = vadd.f32 0.0, %v1697
      %v1699 = vpop.f32.mrb[0].mxu0
      %v1700 = vadd.f32 0.0, %v1699
      %1701 = vmatprep.mubr.bf16.mxu0 %v926
      %1702 = vmatmul.mubr.bf16.gmra.mrb[0].mxu0 %v925
      %v1703 = vpop.f32.mrb[0].mxu0
      %v1704 = vadd.f32 0.0, %v1703
      %v1705 = vpop.f32.mrb[0].mxu0
      %v1706 = vadd.f32 0.0, %v1705
      %v1707 = vpop.f32.mrb[0].mxu0
      %v1708 = vadd.f32 0.0, %v1707
      %v1709 = vpop.f32.mrb[0].mxu0
      %v1710 = vadd.f32 0.0, %v1709
      %1711 = vmatprep.mubr.bf16.mxu0 %v928
      %1712 = vmatmul.mubr.bf16.gmra.mrb[0].mxu0 %v927
      %v1713 = vpop.f32.mrb[0].mxu0
      %v1714 = vadd.f32 0.0, %v1713
      %v1715 = vpop.f32.mrb[0].mxu0
      %v1716 = vadd.f32 0.0, %v1715
      %v1717 = vpop.f32.mrb[0].mxu0
      %v1718 = vadd.f32 0.0, %v1717
      %v1719 = vpop.f32.mrb[0].mxu0
      %v1720 = vadd.f32 0.0, %v1719
      %1721 = vmatprep.mubr.bf16.mxu0 %v930
      %1722 = vmatmul.mubr.bf16.gmra.mrb[0].mxu0 %v929
      %v1723 = vpop.f32.mrb[0].mxu0
      %v1724 = vadd.f32 0.0, %v1723
      %v1725 = vpop.f32.mrb[0].mxu0
      %v1726 = vadd.f32 0.0, %v1725
      %v1727 = vpop.f32.mrb[0].mxu0
      %v1728 = vadd.f32 0.0, %v1727
      %v1729 = vpop.f32.mrb[0].mxu0
      %v1730 = vadd.f32 0.0, %v1729
      %1731 = vmatprep.mubr.bf16.mxu0 %v932
      %1732 = vmatmul.mubr.bf16.gmra.mrb[0].mxu0 %v931
      %v1733 = vpop.f32.mrb[0].mxu0
      %v1734 = vadd.f32 0.0, %v1733
      %v1735 = vpop.f32.mrb[0].mxu0
      %v1736 = vadd.f32 0.0, %v1735
      %v1737 = vpop.f32.mrb[0].mxu0
      %v1738 = vadd.f32 0.0, %v1737
      %v1739 = vpop.f32.mrb[0].mxu0
      %v1740 = vadd.f32 0.0, %v1739
      %1741 = vmatprep.mubr.bf16.mxu0 %v934
      %1742 = vmatmul.mubr.bf16.gmra.mrb[0].mxu0 %v933
      %v1743 = vpop.f32.mrb[0].mxu0
      %v1744 = vadd.f32 0.0, %v1743
      %v1745 = vpop.f32.mrb[0].mxu0
      %v1746 = vadd.f32 0.0, %v1745
      %v1747 = vpop.f32.mrb[0].mxu0
      %v1748 = vadd.f32 0.0, %v1747
      %v1749 = vpop.f32.mrb[0].mxu0
      %v1750 = vadd.f32 0.0, %v1749
      %1751 = vmatprep.mubr.bf16.mxu0 %v936
      %1752 = vmatmul.mubr.bf16.gmra.mrb[0].mxu0 %v935
      %v1753 = vpop.f32.mrb[0].mxu0
      %v1754 = vadd.f32 0.0, %v1753
      %v1755 = vpop.f32.mrb[0].mxu0
      %v1756 = vadd.f32 0.0, %v1755
      %v1757 = vpop.f32.mrb[0].mxu0
      %v1758 = vadd.f32 0.0, %v1757
      %v1759 = vpop.f32.mrb[0].mxu0
      %v1760 = vadd.f32 0.0, %v1759
      %1761 = vmatprep.mubr.bf16.mxu0 %v938
      %1762 = vmatmul.mubr.bf16.gmra.mrb[0].mxu0 %v937
      %v1763 = vpop.f32.mrb[0].mxu0
      %v1764 = vadd.f32 0.0, %v1763
      %v1765 = vpop.f32.mrb[0].mxu0
      %v1766 = vadd.f32 0.0, %v1765
      %v1767 = vpop.f32.mrb[0].mxu0
      %v1768 = vadd.f32 0.0, %v1767
      %v1769 = vpop.f32.mrb[0].mxu0
      %v1770 = vadd.f32 0.0, %v1769
      %1771 = vdwg.mxu0
      %1772 = vmatprep.subr.bf16.mxu0 %v1262
      %1773 = vmatpush1.bf16.msra.mxu0 %v1261
      %1774 = vmatprep.subr.bf16.mxu0 %v1267
      %1775 = vmatpush1.bf16.msra.mxu0 %v1266
      %1776 = vmatprep.subr.bf16.mxu0 %v1272
      %1777 = vmatpush1.bf16.msra.mxu0 %v1271
      %1778 = vmatprep.subr.bf16.mxu0 %v1277
      %1779 = vmatpush1.bf16.msra.mxu0 %v1276
      %1780 = vmatprep.subr.bf16.mxu0 %v1282
      %1781 = vmatpush1.bf16.msra.mxu0 %v1281
      %1782 = vmatprep.subr.bf16.mxu0 %v1287
      %1783 = vmatpush1.bf16.msra.mxu0 %v1286
      %1784 = vmatprep.subr.bf16.mxu0 %v1292
      %1785 = vmatpush1.bf16.msra.mxu0 %v1291
      %1786 = vmatprep.subr.bf16.mxu0 %v1297
      %1787 = vmatpush1.bf16.msra.mxu0 %v1296
      %1788 = vmatprep.subr.bf16.mxu0 %v1302
      %1789 = vmatpush1.bf16.msra.mxu0 %v1301
      %1790 = vmatprep.subr.bf16.mxu0 %v1307
      %1791 = vmatpush1.bf16.msra.mxu0 %v1306
      %1792 = vmatprep.subr.bf16.mxu0 %v1312
      %1793 = vmatpush1.bf16.msra.mxu0 %v1311
      %1794 = vmatprep.subr.bf16.mxu0 %v1317
      %1795 = vmatpush1.bf16.msra.mxu0 %v1316
      %1796 = vmatprep.subr.bf16.mxu0 %v1322
      %1797 = vmatpush1.bf16.msra.mxu0 %v1321
      %1798 = vmatprep.subr.bf16.mxu0 %v1327
      %1799 = vmatpush1.bf16.msra.mxu0 %v1326
      %1800 = vmatprep.subr.bf16.mxu0 %v1332
      %1801 = vmatpush1.bf16.msra.mxu0 %v1331
      %1802 = vmatprep.subr.bf16.mxu0 %v1337
      %1803 = vmatpush1.bf16.msra.mxu0 %v1336
      %1804 = vmatprep.mubr.bf16.mxu0 %v876
      %1805 = vmatmul.mubr.bf16.gmra.mrb[0].mxu0 %v875
      %v1806 = vpop.f32.mrb[0].mxu0
      %v1807 = vadd.f32 0.0, %v1806
      %v1808 = vpop.f32.mrb[0].mxu0
      %v1809 = vadd.f32 0.0, %v1808
      %v1810 = vpop.f32.mrb[0].mxu0
      %v1811 = vadd.f32 0.0, %v1810
      %v1812 = vpop.f32.mrb[0].mxu0
      %v1813 = vadd.f32 0.0, %v1812
      %1814 = vmatprep.mubr.bf16.mxu0 %v878
      %1815 = vmatmul.mubr.bf16.gmra.mrb[0].mxu0 %v877
      %v1816 = vpop.f32.mrb[0].mxu0
      %v1817 = vadd.f32 0.0, %v1816
      %v1818 = vpop.f32.mrb[0].mxu0
      %v1819 = vadd.f32 0.0, %v1818
      %v1820 = vpop.f32.mrb[0].mxu0
      %v1821 = vadd.f32 0.0, %v1820
      %v1822 = vpop.f32.mrb[0].mxu0
      %v1823 = vadd.f32 0.0, %v1822
      %1824 = vmatprep.mubr.bf16.mxu0 %v880
      %1825 = vmatmul.mubr.bf16.gmra.mrb[0].mxu0 %v879
      %v1826 = vpop.f32.mrb[0].mxu0
      %v1827 = vadd.f32 0.0, %v1826
      %v1828 = vpop.f32.mrb[0].mxu0
      %v1829 = vadd.f32 0.0, %v1828
      %v1830 = vpop.f32.mrb[0].mxu0
      %v1831 = vadd.f32 0.0, %v1830
      %v1832 = vpop.f32.mrb[0].mxu0
      %v1833 = vadd.f32 0.0, %v1832
      %1834 = vmatprep.mubr.bf16.mxu0 %v882
      %1835 = vmatmul.mubr.bf16.gmra.mrb[0].mxu0 %v881
      %v1836 = vpop.f32.mrb[0].mxu0
      %v1837 = vadd.f32 0.0, %v1836
      %v1838 = vpop.f32.mrb[0].mxu0
      %v1839 = vadd.f32 0.0, %v1838
      %v1840 = vpop.f32.mrb[0].mxu0
      %v1841 = vadd.f32 0.0, %v1840
      %v1842 = vpop.f32.mrb[0].mxu0
      %v1843 = vadd.f32 0.0, %v1842
      %1844 = vmatprep.mubr.bf16.mxu0 %v884
      %1845 = vmatmul.mubr.bf16.gmra.mrb[0].mxu0 %v883
      %v1846 = vpop.f32.mrb[0].mxu0
      %v1847 = vadd.f32 0.0, %v1846
      %v1848 = vpop.f32.mrb[0].mxu0
      %v1849 = vadd.f32 0.0, %v1848
      %v1850 = vpop.f32.mrb[0].mxu0
      %v1851 = vadd.f32 0.0, %v1850
      %v1852 = vpop.f32.mrb[0].mxu0
      %v1853 = vadd.f32 0.0, %v1852
      %1854 = vmatprep.mubr.bf16.mxu0 %v886
      %1855 = vmatmul.mubr.bf16.gmra.mrb[0].mxu0 %v885
      %v1856 = vpop.f32.mrb[0].mxu0
      %v1857 = vadd.f32 0.0, %v1856
      %v1858 = vpop.f32.mrb[0].mxu0
      %v1859 = vadd.f32 0.0, %v1858
      %v1860 = vpop.f32.mrb[0].mxu0
      %v1861 = vadd.f32 0.0, %v1860
      %v1862 = vpop.f32.mrb[0].mxu0
      %v1863 = vadd.f32 0.0, %v1862
      %1864 = vmatprep.mubr.bf16.mxu0 %v888
      %1865 = vmatmul.mubr.bf16.gmra.mrb[0].mxu0 %v887
      %v1866 = vpop.f32.mrb[0].mxu0
      %v1867 = vadd.f32 0.0, %v1866
      %v1868 = vpop.f32.mrb[0].mxu0
      %v1869 = vadd.f32 0.0, %v1868
      %v1870 = vpop.f32.mrb[0].mxu0
      %v1871 = vadd.f32 0.0, %v1870
      %v1872 = vpop.f32.mrb[0].mxu0
      %v1873 = vadd.f32 0.0, %v1872
      %1874 = vmatprep.mubr.bf16.mxu0 %v890
      %1875 = vmatmul.mubr.bf16.gmra.mrb[0].mxu0 %v889
      %v1876 = vpop.f32.mrb[0].mxu0
      %v1877 = vadd.f32 0.0, %v1876
      %v1878 = vpop.f32.mrb[0].mxu0
      %v1879 = vadd.f32 0.0, %v1878
      %v1880 = vpop.f32.mrb[0].mxu0
      %v1881 = vadd.f32 0.0, %v1880
      %v1882 = vpop.f32.mrb[0].mxu0
      %v1883 = vadd.f32 0.0, %v1882
      %1884 = vmatprep.mubr.bf16.mxu0 %v892
      %1885 = vmatmul.mubr.bf16.gmra.mrb[0].mxu0 %v891
      %v1886 = vpop.f32.mrb[0].mxu0
      %v1887 = vadd.f32 0.0, %v1886
      %v1888 = vpop.f32.mrb[0].mxu0
      %v1889 = vadd.f32 0.0, %v1888
      %v1890 = vpop.f32.mrb[0].mxu0
      %v1891 = vadd.f32 0.0, %v1890
      %v1892 = vpop.f32.mrb[0].mxu0
      %v1893 = vadd.f32 0.0, %v1892
      %1894 = vmatprep.mubr.bf16.mxu0 %v894
      %1895 = vmatmul.mubr.bf16.gmra.mrb[0].mxu0 %v893
      %v1896 = vpop.f32.mrb[0].mxu0
      %v1897 = vadd.f32 0.0, %v1896
      %v1898 = vpop.f32.mrb[0].mxu0
      %v1899 = vadd.f32 0.0, %v1898
      %v1900 = vpop.f32.mrb[0].mxu0
      %v1901 = vadd.f32 0.0, %v1900
      %v1902 = vpop.f32.mrb[0].mxu0
      %v1903 = vadd.f32 0.0, %v1902
      %1904 = vmatprep.mubr.bf16.mxu0 %v896
      %1905 = vmatmul.mubr.bf16.gmra.mrb[0].mxu0 %v895
      %v1906 = vpop.f32.mrb[0].mxu0
      %v1907 = vadd.f32 0.0, %v1906
      %v1908 = vpop.f32.mrb[0].mxu0
      %v1909 = vadd.f32 0.0, %v1908
      %v1910 = vpop.f32.mrb[0].mxu0
      %v1911 = vadd.f32 0.0, %v1910
      %v1912 = vpop.f32.mrb[0].mxu0
      %v1913 = vadd.f32 0.0, %v1912
      %1914 = vmatprep.mubr.bf16.mxu0 %v898
      %1915 = vmatmul.mubr.bf16.gmra.mrb[0].mxu0 %v897
      %v1916 = vpop.f32.mrb[0].mxu0
      %v1917 = vadd.f32 0.0, %v1916
      %v1918 = vpop.f32.mrb[0].mxu0
      %v1919 = vadd.f32 0.0, %v1918
      %v1920 = vpop.f32.mrb[0].mxu0
      %v1921 = vadd.f32 0.0, %v1920
      %v1922 = vpop.f32.mrb[0].mxu0
      %v1923 = vadd.f32 0.0, %v1922
      %1924 = vmatprep.mubr.bf16.mxu0 %v900
      %1925 = vmatmul.mubr.bf16.gmra.mrb[0].mxu0 %v899
      %v1926 = vpop.f32.mrb[0].mxu0
      %v1927 = vadd.f32 0.0, %v1926
      %v1928 = vpop.f32.mrb[0].mxu0
      %v1929 = vadd.f32 0.0, %v1928
      %v1930 = vpop.f32.mrb[0].mxu0
      %v1931 = vadd.f32 0.0, %v1930
      %v1932 = vpop.f32.mrb[0].mxu0
      %v1933 = vadd.f32 0.0, %v1932
      %1934 = vmatprep.mubr.bf16.mxu0 %v902
      %1935 = vmatmul.mubr.bf16.gmra.mrb[0].mxu0 %v901
      %v1936 = vpop.f32.mrb[0].mxu0
      %v1937 = vadd.f32 0.0, %v1936
      %v1938 = vpop.f32.mrb[0].mxu0
      %v1939 = vadd.f32 0.0, %v1938
      %v1940 = vpop.f32.mrb[0].mxu0
      %v1941 = vadd.f32 0.0, %v1940
      %v1942 = vpop.f32.mrb[0].mxu0
      %v1943 = vadd.f32 0.0, %v1942
      %1944 = vmatprep.mubr.bf16.mxu0 %v904
      %1945 = vmatmul.mubr.bf16.gmra.mrb[0].mxu0 %v903
      %v1946 = vpop.f32.mrb[0].mxu0
      %v1947 = vadd.f32 0.0, %v1946
      %v1948 = vpop.f32.mrb[0].mxu0
      %v1949 = vadd.f32 0.0, %v1948
      %v1950 = vpop.f32.mrb[0].mxu0
      %v1951 = vadd.f32 0.0, %v1950
      %v1952 = vpop.f32.mrb[0].mxu0
      %v1953 = vadd.f32 0.0, %v1952
      %1954 = vmatprep.mubr.bf16.mxu0 %v906
      %1955 = vmatmul.mubr.bf16.gmra.mrb[0].mxu0 %v905
      %v1956 = vpop.f32.mrb[0].mxu0
      %v1957 = vadd.f32 0.0, %v1956
      %v1958 = vpop.f32.mrb[0].mxu0
      %v1959 = vadd.f32 0.0, %v1958
      %v1960 = vpop.f32.mrb[0].mxu0
      %v1961 = vadd.f32 0.0, %v1960
      %v1962 = vpop.f32.mrb[0].mxu0
      %v1963 = vadd.f32 0.0, %v1962
      %1964 = vmatprep.mubr.bf16.mxu0 %v908
      %1965 = vmatmul.mubr.bf16.gmra.mrb[0].mxu0 %v907
      %v1966 = vpop.f32.mrb[0].mxu0
      %v1967 = vadd.f32 0.0, %v1966
      %v1968 = vpop.f32.mrb[0].mxu0
      %v1969 = vadd.f32 0.0, %v1968
      %v1970 = vpop.f32.mrb[0].mxu0
      %v1971 = vadd.f32 0.0, %v1970
      %v1972 = vpop.f32.mrb[0].mxu0
      %v1973 = vadd.f32 0.0, %v1972
      %1974 = vmatprep.mubr.bf16.mxu0 %v910
      %1975 = vmatmul.mubr.bf16.gmra.mrb[0].mxu0 %v909
      %v1976 = vpop.f32.mrb[0].mxu0
      %v1977 = vadd.f32 0.0, %v1976
      %v1978 = vpop.f32.mrb[0].mxu0
      %v1979 = vadd.f32 0.0, %v1978
      %v1980 = vpop.f32.mrb[0].mxu0
      %v1981 = vadd.f32 0.0, %v1980
      %v1982 = vpop.f32.mrb[0].mxu0
      %v1983 = vadd.f32 0.0, %v1982
      %1984 = vmatprep.mubr.bf16.mxu0 %v912
      %1985 = vmatmul.mubr.bf16.gmra.mrb[0].mxu0 %v911
      %v1986 = vpop.f32.mrb[0].mxu0
      %v1987 = vadd.f32 0.0, %v1986
      %v1988 = vpop.f32.mrb[0].mxu0
      %v1989 = vadd.f32 0.0, %v1988
      %v1990 = vpop.f32.mrb[0].mxu0
      %v1991 = vadd.f32 0.0, %v1990
      %v1992 = vpop.f32.mrb[0].mxu0
      %v1993 = vadd.f32 0.0, %v1992
      %1994 = vmatprep.mubr.bf16.mxu0 %v914
      %1995 = vmatmul.mubr.bf16.gmra.mrb[0].mxu0 %v913
      %v1996 = vpop.f32.mrb[0].mxu0
      %v1997 = vadd.f32 0.0, %v1996
      %v1998 = vpop.f32.mrb[0].mxu0
      %v1999 = vadd.f32 0.0, %v1998
      %v2000 = vpop.f32.mrb[0].mxu0
      %v2001 = vadd.f32 0.0, %v2000
      %v2002 = vpop.f32.mrb[0].mxu0
      %v2003 = vadd.f32 0.0, %v2002
      %2004 = vmatprep.mubr.bf16.mxu0 %v916
      %2005 = vmatmul.mubr.bf16.gmra.mrb[0].mxu0 %v915
      %v2006 = vpop.f32.mrb[0].mxu0
      %v2007 = vadd.f32 0.0, %v2006
      %v2008 = vpop.f32.mrb[0].mxu0
      %v2009 = vadd.f32 0.0, %v2008
      %v2010 = vpop.f32.mrb[0].mxu0
      %v2011 = vadd.f32 0.0, %v2010
      %v2012 = vpop.f32.mrb[0].mxu0
      %v2013 = vadd.f32 0.0, %v2012
      %2014 = vmatprep.mubr.bf16.mxu0 %v918
      %2015 = vmatmul.mubr.bf16.gmra.mrb[0].mxu0 %v917
      %v2016 = vpop.f32.mrb[0].mxu0
      %v2017 = vadd.f32 0.0, %v2016
      %v2018 = vpop.f32.mrb[0].mxu0
      %v2019 = vadd.f32 0.0, %v2018
      %v2020 = vpop.f32.mrb[0].mxu0
      %v2021 = vadd.f32 0.0, %v2020
      %v2022 = vpop.f32.mrb[0].mxu0
      %v2023 = vadd.f32 0.0, %v2022
      %2024 = vmatprep.mubr.bf16.mxu0 %v920
      %2025 = vmatmul.mubr.bf16.gmra.mrb[0].mxu0 %v919
      %v2026 = vpop.f32.mrb[0].mxu0
      %v2027 = vadd.f32 0.0, %v2026
      %v2028 = vpop.f32.mrb[0].mxu0
      %v2029 = vadd.f32 0.0, %v2028
      %v2030 = vpop.f32.mrb[0].mxu0
      %v2031 = vadd.f32 0.0, %v2030
      %v2032 = vpop.f32.mrb[0].mxu0
      %v2033 = vadd.f32 0.0, %v2032
      %2034 = vmatprep.mubr.bf16.mxu0 %v922
      %2035 = vmatmul.mubr.bf16.gmra.mrb[0].mxu0 %v921
      %v2036 = vpop.f32.mrb[0].mxu0
      %v2037 = vadd.f32 0.0, %v2036
      %v2038 = vpop.f32.mrb[0].mxu0
      %v2039 = vadd.f32 0.0, %v2038
      %v2040 = vpop.f32.mrb[0].mxu0
      %v2041 = vadd.f32 0.0, %v2040
      %v2042 = vpop.f32.mrb[0].mxu0
      %v2043 = vadd.f32 0.0, %v2042
      %2044 = vmatprep.mubr.bf16.mxu0 %v924
      %2045 = vmatmul.mubr.bf16.gmra.mrb[0].mxu0 %v923
      %v2046 = vpop.f32.mrb[0].mxu0
      %v2047 = vadd.f32 0.0, %v2046
      %v2048 = vpop.f32.mrb[0].mxu0
      %v2049 = vadd.f32 0.0, %v2048
      %v2050 = vpop.f32.mrb[0].mxu0
      %v2051 = vadd.f32 0.0, %v2050
      %v2052 = vpop.f32.mrb[0].mxu0
      %v2053 = vadd.f32 0.0, %v2052
      %2054 = vmatprep.mubr.bf16.mxu0 %v926
      %2055 = vmatmul.mubr.bf16.gmra.mrb[0].mxu0 %v925
      %v2056 = vpop.f32.mrb[0].mxu0
      %v2057 = vadd.f32 0.0, %v2056
      %v2058 = vpop.f32.mrb[0].mxu0
      %v2059 = vadd.f32 0.0, %v2058
      %v2060 = vpop.f32.mrb[0].mxu0
      %v2061 = vadd.f32 0.0, %v2060
      %v2062 = vpop.f32.mrb[0].mxu0
      %v2063 = vadd.f32 0.0, %v2062
      %2064 = vmatprep.mubr.bf16.mxu0 %v928
      %2065 = vmatmul.mubr.bf16.gmra.mrb[0].mxu0 %v927
      %v2066 = vpop.f32.mrb[0].mxu0
      %v2067 = vadd.f32 0.0, %v2066
      %v2068 = vpop.f32.mrb[0].mxu0
      %v2069 = vadd.f32 0.0, %v2068
      %v2070 = vpop.f32.mrb[0].mxu0
      %v2071 = vadd.f32 0.0, %v2070
      %v2072 = vpop.f32.mrb[0].mxu0
      %v2073 = vadd.f32 0.0, %v2072
      %2074 = vmatprep.mubr.bf16.mxu0 %v930
      %2075 = vmatmul.mubr.bf16.gmra.mrb[0].mxu0 %v929
      %v2076 = vpop.f32.mrb[0].mxu0
      %v2077 = vadd.f32 0.0, %v2076
      %v2078 = vpop.f32.mrb[0].mxu0
      %v2079 = vadd.f32 0.0, %v2078
      %v2080 = vpop.f32.mrb[0].mxu0
      %v2081 = vadd.f32 0.0, %v2080
      %v2082 = vpop.f32.mrb[0].mxu0
      %v2083 = vadd.f32 0.0, %v2082
      %2084 = vmatprep.mubr.bf16.mxu0 %v932
      %2085 = vmatmul.mubr.bf16.gmra.mrb[0].mxu0 %v931
      %v2086 = vpop.f32.mrb[0].mxu0
      %v2087 = vadd.f32 0.0, %v2086
      %v2088 = vpop.f32.mrb[0].mxu0
      %v2089 = vadd.f32 0.0, %v2088
      %v2090 = vpop.f32.mrb[0].mxu0
      %v2091 = vadd.f32 0.0, %v2090
      %v2092 = vpop.f32.mrb[0].mxu0
      %v2093 = vadd.f32 0.0, %v2092
      %2094 = vmatprep.mubr.bf16.mxu0 %v934
      %2095 = vmatmul.mubr.bf16.gmra.mrb[0].mxu0 %v933
      %v2096 = vpop.f32.mrb[0].mxu0
      %v2097 = vadd.f32 0.0, %v2096
      %v2098 = vpop.f32.mrb[0].mxu0
      %v2099 = vadd.f32 0.0, %v2098
      %v2100 = vpop.f32.mrb[0].mxu0
      %v2101 = vadd.f32 0.0, %v2100
      %v2102 = vpop.f32.mrb[0].mxu0
      %v2103 = vadd.f32 0.0, %v2102
      %2104 = vmatprep.mubr.bf16.mxu0 %v936
      %2105 = vmatmul.mubr.bf16.gmra.mrb[0].mxu0 %v935
      %v2106 = vpop.f32.mrb[0].mxu0
      %v2107 = vadd.f32 0.0, %v2106
      %v2108 = vpop.f32.mrb[0].mxu0
      %v2109 = vadd.f32 0.0, %v2108
      %v2110 = vpop.f32.mrb[0].mxu0
      %v2111 = vadd.f32 0.0, %v2110
      %v2112 = vpop.f32.mrb[0].mxu0
      %v2113 = vadd.f32 0.0, %v2112
      %2114 = vmatprep.mubr.bf16.mxu0 %v938
      %2115 = vmatmul.mubr.bf16.gmra.mrb[0].mxu0 %v937
      %v2116 = vpop.f32.mrb[0].mxu0
      %v2117 = vadd.f32 0.0, %v2116
      %v2118 = vpop.f32.mrb[0].mxu0
      %v2119 = vadd.f32 0.0, %v2118
      %v2120 = vpop.f32.mrb[0].mxu0
      %v2121 = vadd.f32 0.0, %v2120
      %v2122 = vpop.f32.mrb[0].mxu0
      %v2123 = vadd.f32 0.0, %v2122
      %2124 = vdwg.mxu0
      %2125 = vmatprep.subr.bf16.mxu0 0
      %2126 = vmatpush1.bf16.msra.mxu0 %v1263
      %2127 = vmatprep.subr.bf16.mxu0 0
      %2128 = vmatpush1.bf16.msra.mxu0 %v1268
      %2129 = vmatprep.subr.bf16.mxu0 0
      %2130 = vmatpush1.bf16.msra.mxu0 %v1273
      %2131 = vmatprep.subr.bf16.mxu0 0
      %2132 = vmatpush1.bf16.msra.mxu0 %v1278
      %2133 = vmatprep.subr.bf16.mxu0 0
      %2134 = vmatpush1.bf16.msra.mxu0 %v1283
      %2135 = vmatprep.subr.bf16.mxu0 0
      %2136 = vmatpush1.bf16.msra.mxu0 %v1288
      %2137 = vmatprep.subr.bf16.mxu0 0
      %2138 = vmatpush1.bf16.msra.mxu0 %v1293
      %2139 = vmatprep.subr.bf16.mxu0 0
      %2140 = vmatpush1.bf16.msra.mxu0 %v1298
      %2141 = vmatprep.subr.bf16.mxu0 0
      %2142 = vmatpush1.bf16.msra.mxu0 %v1303
      %2143 = vmatprep.subr.bf16.mxu0 0
      %2144 = vmatpush1.bf16.msra.mxu0 %v1308
      %2145 = vmatprep.subr.bf16.mxu0 0
      %2146 = vmatpush1.bf16.msra.mxu0 %v1313
      %2147 = vmatprep.subr.bf16.mxu0 0
      %2148 = vmatpush1.bf16.msra.mxu0 %v1318
      %2149 = vmatprep.subr.bf16.mxu0 0
      %2150 = vmatpush1.bf16.msra.mxu0 %v1323
      %2151 = vmatprep.subr.bf16.mxu0 0
      %2152 = vmatpush1.bf16.msra.mxu0 %v1328
      %2153 = vmatprep.subr.bf16.mxu0 0
      %2154 = vmatpush1.bf16.msra.mxu0 %v1333
      %2155 = vmatprep.subr.bf16.mxu0 0
      %2156 = vmatpush1.bf16.msra.mxu0 %v1338
      %2157 = vmatprep.mubr.bf16.mxu0 %v876
      %2158 = vmatmul.mubr.bf16.gmra.mrb[0].mxu0 %v875
      %v2159 = vpop.f32.mrb[0].mxu0
      %v2160 = vadd.f32 0.0, %v2159
      %v2161 = vpop.f32.mrb[0].mxu0
      %v2162 = vpop.f32.mrb[0].mxu0
      %v2163 = vadd.f32 0.0, %v2162
      %v2164 = vpop.f32.mrb[0].mxu0
      %2165 = vmatprep.mubr.bf16.mxu0 %v878
      %2166 = vmatmul.mubr.bf16.gmra.mrb[0].mxu0 %v877
      %v2167 = vpop.f32.mrb[0].mxu0
      %v2168 = vadd.f32 0.0, %v2167
      %v2169 = vpop.f32.mrb[0].mxu0
      %v2170 = vpop.f32.mrb[0].mxu0
      %v2171 = vadd.f32 0.0, %v2170
      %v2172 = vpop.f32.mrb[0].mxu0
      %2173 = vmatprep.mubr.bf16.mxu0 %v880
      %2174 = vmatmul.mubr.bf16.gmra.mrb[0].mxu0 %v879
      %v2175 = vpop.f32.mrb[0].mxu0
      %v2176 = vadd.f32 0.0, %v2175
      %v2177 = vpop.f32.mrb[0].mxu0
      %v2178 = vpop.f32.mrb[0].mxu0
      %v2179 = vadd.f32 0.0, %v2178
      %v2180 = vpop.f32.mrb[0].mxu0
      %2181 = vmatprep.mubr.bf16.mxu0 %v882
      %2182 = vmatmul.mubr.bf16.gmra.mrb[0].mxu0 %v881
      %v2183 = vpop.f32.mrb[0].mxu0
      %v2184 = vadd.f32 0.0, %v2183
      %v2185 = vpop.f32.mrb[0].mxu0
      %v2186 = vpop.f32.mrb[0].mxu0
      %v2187 = vadd.f32 0.0, %v2186
      %v2188 = vpop.f32.mrb[0].mxu0
      %2189 = vmatprep.mubr.bf16.mxu0 %v884
      %2190 = vmatmul.mubr.bf16.gmra.mrb[0].mxu0 %v883
      %v2191 = vpop.f32.mrb[0].mxu0
      %v2192 = vadd.f32 0.0, %v2191
      %v2193 = vpop.f32.mrb[0].mxu0
      %v2194 = vpop.f32.mrb[0].mxu0
      %v2195 = vadd.f32 0.0, %v2194
      %v2196 = vpop.f32.mrb[0].mxu0
      %2197 = vmatprep.mubr.bf16.mxu0 %v886
      %2198 = vmatmul.mubr.bf16.gmra.mrb[0].mxu0 %v885
      %v2199 = vpop.f32.mrb[0].mxu0
      %v2200 = vadd.f32 0.0, %v2199
      %v2201 = vpop.f32.mrb[0].mxu0
      %v2202 = vpop.f32.mrb[0].mxu0
      %v2203 = vadd.f32 0.0, %v2202
      %v2204 = vpop.f32.mrb[0].mxu0
      %2205 = vmatprep.mubr.bf16.mxu0 %v888
      %2206 = vmatmul.mubr.bf16.gmra.mrb[0].mxu0 %v887
      %v2207 = vpop.f32.mrb[0].mxu0
      %v2208 = vadd.f32 0.0, %v2207
      %v2209 = vpop.f32.mrb[0].mxu0
      %v2210 = vpop.f32.mrb[0].mxu0
      %v2211 = vadd.f32 0.0, %v2210
      %v2212 = vpop.f32.mrb[0].mxu0
      %2213 = vmatprep.mubr.bf16.mxu0 %v890
      %2214 = vmatmul.mubr.bf16.gmra.mrb[0].mxu0 %v889
      %v2215 = vpop.f32.mrb[0].mxu0
      %v2216 = vadd.f32 0.0, %v2215
      %v2217 = vpop.f32.mrb[0].mxu0
      %v2218 = vpop.f32.mrb[0].mxu0
      %v2219 = vadd.f32 0.0, %v2218
      %v2220 = vpop.f32.mrb[0].mxu0
      %2221 = vmatprep.mubr.bf16.mxu0 %v892
      %2222 = vmatmul.mubr.bf16.gmra.mrb[0].mxu0 %v891
      %v2223 = vpop.f32.mrb[0].mxu0
      %v2224 = vadd.f32 0.0, %v2223
      %v2225 = vpop.f32.mrb[0].mxu0
      %v2226 = vpop.f32.mrb[0].mxu0
      %v2227 = vadd.f32 0.0, %v2226
      %v2228 = vpop.f32.mrb[0].mxu0
      %2229 = vmatprep.mubr.bf16.mxu0 %v894
      %2230 = vmatmul.mubr.bf16.gmra.mrb[0].mxu0 %v893
      %v2231 = vpop.f32.mrb[0].mxu0
      %v2232 = vadd.f32 0.0, %v2231
      %v2233 = vpop.f32.mrb[0].mxu0
      %v2234 = vpop.f32.mrb[0].mxu0
      %v2235 = vadd.f32 0.0, %v2234
      %v2236 = vpop.f32.mrb[0].mxu0
      %2237 = vmatprep.mubr.bf16.mxu0 %v896
      %2238 = vmatmul.mubr.bf16.gmra.mrb[0].mxu0 %v895
      %v2239 = vpop.f32.mrb[0].mxu0
      %v2240 = vadd.f32 0.0, %v2239
      %v2241 = vpop.f32.mrb[0].mxu0
      %v2242 = vpop.f32.mrb[0].mxu0
      %v2243 = vadd.f32 0.0, %v2242
      %v2244 = vpop.f32.mrb[0].mxu0
      %2245 = vmatprep.mubr.bf16.mxu0 %v898
      %2246 = vmatmul.mubr.bf16.gmra.mrb[0].mxu0 %v897
      %v2247 = vpop.f32.mrb[0].mxu0
      %v2248 = vadd.f32 0.0, %v2247
      %v2249 = vpop.f32.mrb[0].mxu0
      %v2250 = vpop.f32.mrb[0].mxu0
      %v2251 = vadd.f32 0.0, %v2250
      %v2252 = vpop.f32.mrb[0].mxu0
      %2253 = vmatprep.mubr.bf16.mxu0 %v900
      %2254 = vmatmul.mubr.bf16.gmra.mrb[0].mxu0 %v899
      %v2255 = vpop.f32.mrb[0].mxu0
      %v2256 = vadd.f32 0.0, %v2255
      %v2257 = vpop.f32.mrb[0].mxu0
      %v2258 = vpop.f32.mrb[0].mxu0
      %v2259 = vadd.f32 0.0, %v2258
      %v2260 = vpop.f32.mrb[0].mxu0
      %2261 = vmatprep.mubr.bf16.mxu0 %v902
      %2262 = vmatmul.mubr.bf16.gmra.mrb[0].mxu0 %v901
      %v2263 = vpop.f32.mrb[0].mxu0
      %v2264 = vadd.f32 0.0, %v2263
      %v2265 = vpop.f32.mrb[0].mxu0
      %v2266 = vpop.f32.mrb[0].mxu0
      %v2267 = vadd.f32 0.0, %v2266
      %v2268 = vpop.f32.mrb[0].mxu0
      %2269 = vmatprep.mubr.bf16.mxu0 %v904
      %2270 = vmatmul.mubr.bf16.gmra.mrb[0].mxu0 %v903
      %v2271 = vpop.f32.mrb[0].mxu0
      %v2272 = vadd.f32 0.0, %v2271
      %v2273 = vpop.f32.mrb[0].mxu0
      %v2274 = vpop.f32.mrb[0].mxu0
      %v2275 = vadd.f32 0.0, %v2274
      %v2276 = vpop.f32.mrb[0].mxu0
      %2277 = vmatprep.mubr.bf16.mxu0 %v906
      %2278 = vmatmul.mubr.bf16.gmra.mrb[0].mxu0 %v905
      %v2279 = vpop.f32.mrb[0].mxu0
      %v2280 = vadd.f32 0.0, %v2279
      %v2281 = vpop.f32.mrb[0].mxu0
      %v2282 = vpop.f32.mrb[0].mxu0
      %v2283 = vadd.f32 0.0, %v2282
      %v2284 = vpop.f32.mrb[0].mxu0
      %2285 = vmatprep.mubr.bf16.mxu0 %v908
      %2286 = vmatmul.mubr.bf16.gmra.mrb[0].mxu0 %v907
      %v2287 = vpop.f32.mrb[0].mxu0
      %v2288 = vadd.f32 0.0, %v2287
      %v2289 = vpop.f32.mrb[0].mxu0
      %v2290 = vpop.f32.mrb[0].mxu0
      %v2291 = vadd.f32 0.0, %v2290
      %v2292 = vpop.f32.mrb[0].mxu0
      %2293 = vmatprep.mubr.bf16.mxu0 %v910
      %2294 = vmatmul.mubr.bf16.gmra.mrb[0].mxu0 %v909
      %v2295 = vpop.f32.mrb[0].mxu0
      %v2296 = vadd.f32 0.0, %v2295
      %v2297 = vpop.f32.mrb[0].mxu0
      %v2298 = vpop.f32.mrb[0].mxu0
      %v2299 = vadd.f32 0.0, %v2298
      %v2300 = vpop.f32.mrb[0].mxu0
      %2301 = vmatprep.mubr.bf16.mxu0 %v912
      %2302 = vmatmul.mubr.bf16.gmra.mrb[0].mxu0 %v911
      %v2303 = vpop.f32.mrb[0].mxu0
      %v2304 = vadd.f32 0.0, %v2303
      %v2305 = vpop.f32.mrb[0].mxu0
      %v2306 = vpop.f32.mrb[0].mxu0
      %v2307 = vadd.f32 0.0, %v2306
      %v2308 = vpop.f32.mrb[0].mxu0
      %2309 = vmatprep.mubr.bf16.mxu0 %v914
      %2310 = vmatmul.mubr.bf16.gmra.mrb[0].mxu0 %v913
      %v2311 = vpop.f32.mrb[0].mxu0
      %v2312 = vadd.f32 0.0, %v2311
      %v2313 = vpop.f32.mrb[0].mxu0
      %v2314 = vpop.f32.mrb[0].mxu0
      %v2315 = vadd.f32 0.0, %v2314
      %v2316 = vpop.f32.mrb[0].mxu0
      %2317 = vmatprep.mubr.bf16.mxu0 %v916
      %2318 = vmatmul.mubr.bf16.gmra.mrb[0].mxu0 %v915
      %v2319 = vpop.f32.mrb[0].mxu0
      %v2320 = vadd.f32 0.0, %v2319
      %v2321 = vpop.f32.mrb[0].mxu0
      %v2322 = vpop.f32.mrb[0].mxu0
      %v2323 = vadd.f32 0.0, %v2322
      %v2324 = vpop.f32.mrb[0].mxu0
      %2325 = vmatprep.mubr.bf16.mxu0 %v918
      %2326 = vmatmul.mubr.bf16.gmra.mrb[0].mxu0 %v917
      %v2327 = vpop.f32.mrb[0].mxu0
      %v2328 = vadd.f32 0.0, %v2327
      %v2329 = vpop.f32.mrb[0].mxu0
      %v2330 = vpop.f32.mrb[0].mxu0
      %v2331 = vadd.f32 0.0, %v2330
      %v2332 = vpop.f32.mrb[0].mxu0
      %2333 = vmatprep.mubr.bf16.mxu0 %v920
      %2334 = vmatmul.mubr.bf16.gmra.mrb[0].mxu0 %v919
      %v2335 = vpop.f32.mrb[0].mxu0
      %v2336 = vadd.f32 0.0, %v2335
      %v2337 = vpop.f32.mrb[0].mxu0
      %v2338 = vpop.f32.mrb[0].mxu0
      %v2339 = vadd.f32 0.0, %v2338
      %v2340 = vpop.f32.mrb[0].mxu0
      %2341 = vmatprep.mubr.bf16.mxu0 %v922
      %2342 = vmatmul.mubr.bf16.gmra.mrb[0].mxu0 %v921
      %v2343 = vpop.f32.mrb[0].mxu0
      %v2344 = vadd.f32 0.0, %v2343
      %v2345 = vpop.f32.mrb[0].mxu0
      %v2346 = vpop.f32.mrb[0].mxu0
      %v2347 = vadd.f32 0.0, %v2346
      %v2348 = vpop.f32.mrb[0].mxu0
      %2349 = vmatprep.mubr.bf16.mxu0 %v924
      %2350 = vmatmul.mubr.bf16.gmra.mrb[0].mxu0 %v923
      %v2351 = vpop.f32.mrb[0].mxu0
      %v2352 = vadd.f32 0.0, %v2351
      %v2353 = vpop.f32.mrb[0].mxu0
      %v2354 = vpop.f32.mrb[0].mxu0
      %v2355 = vadd.f32 0.0, %v2354
      %v2356 = vpop.f32.mrb[0].mxu0
      %2357 = vmatprep.mubr.bf16.mxu0 %v926
      %2358 = vmatmul.mubr.bf16.gmra.mrb[0].mxu0 %v925
      %v2359 = vpop.f32.mrb[0].mxu0
      %v2360 = vadd.f32 0.0, %v2359
      %v2361 = vpop.f32.mrb[0].mxu0
      %v2362 = vpop.f32.mrb[0].mxu0
      %v2363 = vadd.f32 0.0, %v2362
      %v2364 = vpop.f32.mrb[0].mxu0
      %2365 = vmatprep.mubr.bf16.mxu0 %v928
      %2366 = vmatmul.mubr.bf16.gmra.mrb[0].mxu0 %v927
      %v2367 = vpop.f32.mrb[0].mxu0
      %v2368 = vadd.f32 0.0, %v2367
      %v2369 = vpop.f32.mrb[0].mxu0
      %v2370 = vpop.f32.mrb[0].mxu0
      %v2371 = vadd.f32 0.0, %v2370
      %v2372 = vpop.f32.mrb[0].mxu0
      %2373 = vmatprep.mubr.bf16.mxu0 %v930
      %2374 = vmatmul.mubr.bf16.gmra.mrb[0].mxu0 %v929
      %v2375 = vpop.f32.mrb[0].mxu0
      %v2376 = vadd.f32 0.0, %v2375
      %v2377 = vpop.f32.mrb[0].mxu0
      %v2378 = vpop.f32.mrb[0].mxu0
      %v2379 = vadd.f32 0.0, %v2378
      %v2380 = vpop.f32.mrb[0].mxu0
      %2381 = vmatprep.mubr.bf16.mxu0 %v932
      %2382 = vmatmul.mubr.bf16.gmra.mrb[0].mxu0 %v931
      %v2383 = vpop.f32.mrb[0].mxu0
      %v2384 = vadd.f32 0.0, %v2383
      %v2385 = vpop.f32.mrb[0].mxu0
      %v2386 = vpop.f32.mrb[0].mxu0
      %v2387 = vadd.f32 0.0, %v2386
      %v2388 = vpop.f32.mrb[0].mxu0
      %2389 = vmatprep.mubr.bf16.mxu0 %v934
      %2390 = vmatmul.mubr.bf16.gmra.mrb[0].mxu0 %v933
      %v2391 = vpop.f32.mrb[0].mxu0
      %v2392 = vadd.f32 0.0, %v2391
      %v2393 = vpop.f32.mrb[0].mxu0
      %v2394 = vpop.f32.mrb[0].mxu0
      %v2395 = vadd.f32 0.0, %v2394
      %v2396 = vpop.f32.mrb[0].mxu0
      %2397 = vmatprep.mubr.bf16.mxu0 %v936
      %2398 = vmatmul.mubr.bf16.gmra.mrb[0].mxu0 %v935
      %v2399 = vpop.f32.mrb[0].mxu0
      %v2400 = vadd.f32 0.0, %v2399
      %v2401 = vpop.f32.mrb[0].mxu0
      %v2402 = vpop.f32.mrb[0].mxu0
      %v2403 = vadd.f32 0.0, %v2402
      %v2404 = vpop.f32.mrb[0].mxu0
      %2405 = vmatprep.mubr.bf16.mxu0 %v938
      %2406 = vmatmul.mubr.bf16.gmra.mrb[0].mxu0 %v937
      %v2407 = vpop.f32.mrb[0].mxu0
      %v2408 = vadd.f32 0.0, %v2407
      %v2409 = vpop.f32.mrb[0].mxu0
      %v2410 = vpop.f32.mrb[0].mxu0
      %v2411 = vadd.f32 0.0, %v2410
      %v2412 = vpop.f32.mrb[0].mxu0
      %2413 = vdwg.mxu0
      %2478 = vrot.lane.b32.xlu0 %v1454, 64
      %v2479 = vpop.permute.xlu0 %2478
      %2480 = vrot.lane.b32.xlu0 %v1458, 64
      %v2481 = vpop.permute.xlu0 %2480
      %2482 = vrot.lane.b32.xlu0 %v1464, 64
      %v2483 = vpop.permute.xlu0 %2482
      %2484 = vrot.lane.b32.xlu0 %v1468, 64
      %v2485 = vpop.permute.xlu0 %2484
      %2486 = vrot.lane.b32.xlu0 %v1474, 64
      %v2487 = vpop.permute.xlu0 %2486
      %2488 = vrot.lane.b32.xlu0 %v1478, 64
      %v2489 = vpop.permute.xlu0 %2488
      %2490 = vrot.lane.b32.xlu0 %v1484, 64
      %v2491 = vpop.permute.xlu0 %2490
      %2492 = vrot.lane.b32.xlu0 %v1488, 64
      %v2493 = vpop.permute.xlu0 %2492
      %2494 = vrot.lane.b32.xlu0 %v1494, 64
      %v2495 = vpop.permute.xlu0 %2494
      %2496 = vrot.lane.b32.xlu0 %v1498, 64
      %v2497 = vpop.permute.xlu0 %2496
      %2498 = vrot.lane.b32.xlu0 %v1504, 64
      %v2499 = vpop.permute.xlu0 %2498
      %2500 = vrot.lane.b32.xlu0 %v1508, 64
      %v2501 = vpop.permute.xlu0 %2500
      %2502 = vrot.lane.b32.xlu0 %v1514, 64
      %v2503 = vpop.permute.xlu0 %2502
      %2504 = vrot.lane.b32.xlu0 %v1518, 64
      %v2505 = vpop.permute.xlu0 %2504
      %2506 = vrot.lane.b32.xlu0 %v1524, 64
      %v2507 = vpop.permute.xlu0 %2506
      %2508 = vrot.lane.b32.xlu0 %v1528, 64
      %v2509 = vpop.permute.xlu0 %2508
      %2510 = vrot.lane.b32.xlu0 %v1534, 64
      %v2511 = vpop.permute.xlu0 %2510
      %2512 = vrot.lane.b32.xlu0 %v1538, 64
      %v2513 = vpop.permute.xlu0 %2512
      %2514 = vrot.lane.b32.xlu0 %v1544, 64
      %v2515 = vpop.permute.xlu0 %2514
      %2516 = vrot.lane.b32.xlu0 %v1548, 64
      %v2517 = vpop.permute.xlu0 %2516
      %2518 = vrot.lane.b32.xlu0 %v1554, 64
      %v2519 = vpop.permute.xlu0 %2518
      %2520 = vrot.lane.b32.xlu0 %v1558, 64
      %v2521 = vpop.permute.xlu0 %2520
      %2522 = vrot.lane.b32.xlu0 %v1564, 64
      %v2523 = vpop.permute.xlu0 %2522
      %2524 = vrot.lane.b32.xlu0 %v1568, 64
      %v2525 = vpop.permute.xlu0 %2524
      %2526 = vrot.lane.b32.xlu0 %v1574, 64
      %v2527 = vpop.permute.xlu0 %2526
      %2528 = vrot.lane.b32.xlu0 %v1578, 64
      %v2529 = vpop.permute.xlu0 %2528
      %2530 = vrot.lane.b32.xlu0 %v1584, 64
      %v2531 = vpop.permute.xlu0 %2530
      %2532 = vrot.lane.b32.xlu0 %v1588, 64
      %v2533 = vpop.permute.xlu0 %2532
      %2534 = vrot.lane.b32.xlu0 %v1594, 64
      %v2535 = vpop.permute.xlu0 %2534
      %2536 = vrot.lane.b32.xlu0 %v1598, 64
      %v2537 = vpop.permute.xlu0 %2536
      %2538 = vrot.lane.b32.xlu0 %v1604, 64
      %v2539 = vpop.permute.xlu0 %2538
      %2540 = vrot.lane.b32.xlu0 %v1608, 64
      %v2541 = vpop.permute.xlu0 %2540
      %2542 = vrot.lane.b32.xlu0 %v1614, 64
      %v2543 = vpop.permute.xlu0 %2542
      %2544 = vrot.lane.b32.xlu0 %v1618, 64
      %v2545 = vpop.permute.xlu0 %2544
      %2546 = vrot.lane.b32.xlu0 %v1624, 64
      %v2547 = vpop.permute.xlu0 %2546
      %2548 = vrot.lane.b32.xlu0 %v1628, 64
      %v2549 = vpop.permute.xlu0 %2548
      %2550 = vrot.lane.b32.xlu0 %v1634, 64
      %v2551 = vpop.permute.xlu0 %2550
      %2552 = vrot.lane.b32.xlu0 %v1638, 64
      %v2553 = vpop.permute.xlu0 %2552
      %2554 = vrot.lane.b32.xlu0 %v1644, 64
      %v2555 = vpop.permute.xlu0 %2554
      %2556 = vrot.lane.b32.xlu0 %v1648, 64
      %v2557 = vpop.permute.xlu0 %2556
      %2558 = vrot.lane.b32.xlu0 %v1654, 64
      %v2559 = vpop.permute.xlu0 %2558
      %2560 = vrot.lane.b32.xlu0 %v1658, 64
      %v2561 = vpop.permute.xlu0 %2560
      %2562 = vrot.lane.b32.xlu0 %v1664, 64
      %v2563 = vpop.permute.xlu0 %2562
      %2564 = vrot.lane.b32.xlu0 %v1668, 64
      %v2565 = vpop.permute.xlu0 %2564
      %2566 = vrot.lane.b32.xlu0 %v1674, 64
      %v2567 = vpop.permute.xlu0 %2566
      %2568 = vrot.lane.b32.xlu0 %v1678, 64
      %v2569 = vpop.permute.xlu0 %2568
      %2570 = vrot.lane.b32.xlu0 %v1684, 64
      %v2571 = vpop.permute.xlu0 %2570
      %2572 = vrot.lane.b32.xlu0 %v1688, 64
      %v2573 = vpop.permute.xlu0 %2572
      %2574 = vrot.lane.b32.xlu0 %v1694, 64
      %v2575 = vpop.permute.xlu0 %2574
      %2576 = vrot.lane.b32.xlu0 %v1698, 64
      %v2577 = vpop.permute.xlu0 %2576
      %2578 = vrot.lane.b32.xlu0 %v1704, 64
      %v2579 = vpop.permute.xlu0 %2578
      %2580 = vrot.lane.b32.xlu0 %v1708, 64
      %v2581 = vpop.permute.xlu0 %2580
      %2582 = vrot.lane.b32.xlu0 %v1714, 64
      %v2583 = vpop.permute.xlu0 %2582
      %2584 = vrot.lane.b32.xlu0 %v1718, 64
      %v2585 = vpop.permute.xlu0 %2584
      %2586 = vrot.lane.b32.xlu0 %v1724, 64
      %v2587 = vpop.permute.xlu0 %2586
      %2588 = vrot.lane.b32.xlu0 %v1728, 64
      %v2589 = vpop.permute.xlu0 %2588
      %2590 = vrot.lane.b32.xlu0 %v1734, 64
      %v2591 = vpop.permute.xlu0 %2590
      %2592 = vrot.lane.b32.xlu0 %v1738, 64
      %v2593 = vpop.permute.xlu0 %2592
      %2594 = vrot.lane.b32.xlu0 %v1744, 64
      %v2595 = vpop.permute.xlu0 %2594
      %2596 = vrot.lane.b32.xlu0 %v1748, 64
      %v2597 = vpop.permute.xlu0 %2596
      %2598 = vrot.lane.b32.xlu0 %v1754, 64
      %v2599 = vpop.permute.xlu0 %2598
      %2600 = vrot.lane.b32.xlu0 %v1758, 64
      %v2601 = vpop.permute.xlu0 %2600
      %2602 = vrot.lane.b32.xlu0 %v1764, 64
      %v2603 = vpop.permute.xlu0 %2602
      %2604 = vrot.lane.b32.xlu0 %v1768, 64
      %v2605 = vpop.permute.xlu0 %2604
      %v2670 = vmax.f32 %v1454, %v2479
      %v2671 = vmax.f32 %v1458, %v2481
      %v2672 = vmax.f32 %v1464, %v2483
      %v2673 = vmax.f32 %v1468, %v2485
      %v2674 = vmax.f32 %v1474, %v2487
      %v2675 = vmax.f32 %v1478, %v2489
      %v2676 = vmax.f32 %v1484, %v2491
      %v2677 = vmax.f32 %v1488, %v2493
      %v2678 = vmax.f32 %v1494, %v2495
      %v2679 = vmax.f32 %v1498, %v2497
      %v2680 = vmax.f32 %v1504, %v2499
      %v2681 = vmax.f32 %v1508, %v2501
      %v2682 = vmax.f32 %v1514, %v2503
      %v2683 = vmax.f32 %v1518, %v2505
      %v2684 = vmax.f32 %v1524, %v2507
      %v2685 = vmax.f32 %v1528, %v2509
      %v2686 = vmax.f32 %v1534, %v2511
      %v2687 = vmax.f32 %v1538, %v2513
      %v2688 = vmax.f32 %v1544, %v2515
      %v2689 = vmax.f32 %v1548, %v2517
      %v2690 = vmax.f32 %v1554, %v2519
      %v2691 = vmax.f32 %v1558, %v2521
      %v2692 = vmax.f32 %v1564, %v2523
      %v2693 = vmax.f32 %v1568, %v2525
      %v2694 = vmax.f32 %v1574, %v2527
      %v2695 = vmax.f32 %v1578, %v2529
      %v2696 = vmax.f32 %v1584, %v2531
      %v2697 = vmax.f32 %v1588, %v2533
      %v2698 = vmax.f32 %v1594, %v2535
      %v2699 = vmax.f32 %v1598, %v2537
      %v2700 = vmax.f32 %v1604, %v2539
      %v2701 = vmax.f32 %v1608, %v2541
      %v2702 = vmax.f32 %v1614, %v2543
      %v2703 = vmax.f32 %v1618, %v2545
      %v2704 = vmax.f32 %v1624, %v2547
      %v2705 = vmax.f32 %v1628, %v2549
      %v2706 = vmax.f32 %v1634, %v2551
      %v2707 = vmax.f32 %v1638, %v2553
      %v2708 = vmax.f32 %v1644, %v2555
      %v2709 = vmax.f32 %v1648, %v2557
      %v2710 = vmax.f32 %v1654, %v2559
      %v2711 = vmax.f32 %v1658, %v2561
      %v2712 = vmax.f32 %v1664, %v2563
      %v2713 = vmax.f32 %v1668, %v2565
      %v2714 = vmax.f32 %v1674, %v2567
      %v2715 = vmax.f32 %v1678, %v2569
      %v2716 = vmax.f32 %v1684, %v2571
      %v2717 = vmax.f32 %v1688, %v2573
      %v2718 = vmax.f32 %v1694, %v2575
      %v2719 = vmax.f32 %v1698, %v2577
      %v2720 = vmax.f32 %v1704, %v2579
      %v2721 = vmax.f32 %v1708, %v2581
      %v2722 = vmax.f32 %v1714, %v2583
      %v2723 = vmax.f32 %v1718, %v2585
      %v2724 = vmax.f32 %v1724, %v2587
      %v2725 = vmax.f32 %v1728, %v2589
      %v2726 = vmax.f32 %v1734, %v2591
      %v2727 = vmax.f32 %v1738, %v2593
      %v2728 = vmax.f32 %v1744, %v2595
      %v2729 = vmax.f32 %v1748, %v2597
      %v2730 = vmax.f32 %v1754, %v2599
      %v2731 = vmax.f32 %v1758, %v2601
      %v2732 = vmax.f32 %v1764, %v2603
      %v2733 = vmax.f32 %v1768, %v2605
      %v2734 = vmax.f32 %v2670, %v1456
      %v2735 = vmax.f32 %v2671, %v1460
      %v2736 = vmax.f32 %v2672, %v1466
      %v2737 = vmax.f32 %v2673, %v1470
      %v2738 = vmax.f32 %v2674, %v1476
      %v2739 = vmax.f32 %v2675, %v1480
      %v2740 = vmax.f32 %v2676, %v1486
      %v2741 = vmax.f32 %v2677, %v1490
      %v2742 = vmax.f32 %v2678, %v1496
      %v2743 = vmax.f32 %v2679, %v1500
      %v2744 = vmax.f32 %v2680, %v1506
      %v2745 = vmax.f32 %v2681, %v1510
      %v2746 = vmax.f32 %v2682, %v1516
      %v2747 = vmax.f32 %v2683, %v1520
      %v2748 = vmax.f32 %v2684, %v1526
      %v2749 = vmax.f32 %v2685, %v1530
      %v2750 = vmax.f32 %v2686, %v1536
      %v2751 = vmax.f32 %v2687, %v1540
      %v2752 = vmax.f32 %v2688, %v1546
      %v2753 = vmax.f32 %v2689, %v1550
      %v2754 = vmax.f32 %v2690, %v1556
      %v2755 = vmax.f32 %v2691, %v1560
      %v2756 = vmax.f32 %v2692, %v1566
      %v2757 = vmax.f32 %v2693, %v1570
      %v2758 = vmax.f32 %v2694, %v1576
      %v2759 = vmax.f32 %v2695, %v1580
      %v2760 = vmax.f32 %v2696, %v1586
      %v2761 = vmax.f32 %v2697, %v1590
      %v2762 = vmax.f32 %v2698, %v1596
      %v2763 = vmax.f32 %v2699, %v1600
      %v2764 = vmax.f32 %v2700, %v1606
      %v2765 = vmax.f32 %v2701, %v1610
      %v2766 = vmax.f32 %v2702, %v1616
      %v2767 = vmax.f32 %v2703, %v1620
      %v2768 = vmax.f32 %v2704, %v1626
      %v2769 = vmax.f32 %v2705, %v1630
      %v2770 = vmax.f32 %v2706, %v1636
      %v2771 = vmax.f32 %v2707, %v1640
      %v2772 = vmax.f32 %v2708, %v1646
      %v2773 = vmax.f32 %v2709, %v1650
      %v2774 = vmax.f32 %v2710, %v1656
      %v2775 = vmax.f32 %v2711, %v1660
      %v2776 = vmax.f32 %v2712, %v1666
      %v2777 = vmax.f32 %v2713, %v1670
      %v2778 = vmax.f32 %v2714, %v1676
      %v2779 = vmax.f32 %v2715, %v1680
      %v2780 = vmax.f32 %v2716, %v1686
      %v2781 = vmax.f32 %v2717, %v1690
      %v2782 = vmax.f32 %v2718, %v1696
      %v2783 = vmax.f32 %v2719, %v1700
      %v2784 = vmax.f32 %v2720, %v1706
      %v2785 = vmax.f32 %v2721, %v1710
      %v2786 = vmax.f32 %v2722, %v1716
      %v2787 = vmax.f32 %v2723, %v1720
      %v2788 = vmax.f32 %v2724, %v1726
      %v2789 = vmax.f32 %v2725, %v1730
      %v2790 = vmax.f32 %v2726, %v1736
      %v2791 = vmax.f32 %v2727, %v1740
      %v2792 = vmax.f32 %v2728, %v1746
      %v2793 = vmax.f32 %v2729, %v1750
      %v2794 = vmax.f32 %v2730, %v1756
      %v2795 = vmax.f32 %v2731, %v1760
      %v2796 = vmax.f32 %v2732, %v1766
      %v2797 = vmax.f32 %v2733, %v1770
      %2862 = vrot.lane.b32.xlu0 %v1456, 64
      %v2863 = vpop.permute.xlu0 %2862
      %2864 = vrot.lane.b32.xlu0 %v1460, 64
      %v2865 = vpop.permute.xlu0 %2864
      %2866 = vrot.lane.b32.xlu0 %v1466, 64
      %v2867 = vpop.permute.xlu0 %2866
      %2868 = vrot.lane.b32.xlu0 %v1470, 64
      %v2869 = vpop.permute.xlu0 %2868
      %2870 = vrot.lane.b32.xlu0 %v1476, 64
      %v2871 = vpop.permute.xlu0 %2870
      %2872 = vrot.lane.b32.xlu0 %v1480, 64
      %v2873 = vpop.permute.xlu0 %2872
      %2874 = vrot.lane.b32.xlu0 %v1486, 64
      %v2875 = vpop.permute.xlu0 %2874
      %2876 = vrot.lane.b32.xlu0 %v1490, 64
      %v2877 = vpop.permute.xlu0 %2876
      %2878 = vrot.lane.b32.xlu0 %v1496, 64
      %v2879 = vpop.permute.xlu0 %2878
      %2880 = vrot.lane.b32.xlu0 %v1500, 64
      %v2881 = vpop.permute.xlu0 %2880
      %2882 = vrot.lane.b32.xlu0 %v1506, 64
      %v2883 = vpop.permute.xlu0 %2882
      %2884 = vrot.lane.b32.xlu0 %v1510, 64
      %v2885 = vpop.permute.xlu0 %2884
      %2886 = vrot.lane.b32.xlu0 %v1516, 64
      %v2887 = vpop.permute.xlu0 %2886
      %2888 = vrot.lane.b32.xlu0 %v1520, 64
      %v2889 = vpop.permute.xlu0 %2888
      %2890 = vrot.lane.b32.xlu0 %v1526, 64
      %v2891 = vpop.permute.xlu0 %2890
      %2892 = vrot.lane.b32.xlu0 %v1530, 64
      %v2893 = vpop.permute.xlu0 %2892
      %2894 = vrot.lane.b32.xlu0 %v1536, 64
      %v2895 = vpop.permute.xlu0 %2894
      %2896 = vrot.lane.b32.xlu0 %v1540, 64
      %v2897 = vpop.permute.xlu0 %2896
      %2898 = vrot.lane.b32.xlu0 %v1546, 64
      %v2899 = vpop.permute.xlu0 %2898
      %2900 = vrot.lane.b32.xlu0 %v1550, 64
      %v2901 = vpop.permute.xlu0 %2900
      %2902 = vrot.lane.b32.xlu0 %v1556, 64
      %v2903 = vpop.permute.xlu0 %2902
      %2904 = vrot.lane.b32.xlu0 %v1560, 64
      %v2905 = vpop.permute.xlu0 %2904
      %2906 = vrot.lane.b32.xlu0 %v1566, 64
      %v2907 = vpop.permute.xlu0 %2906
      %2908 = vrot.lane.b32.xlu0 %v1570, 64
      %v2909 = vpop.permute.xlu0 %2908
      %2910 = vrot.lane.b32.xlu0 %v1576, 64
      %v2911 = vpop.permute.xlu0 %2910
      %2912 = vrot.lane.b32.xlu0 %v1580, 64
      %v2913 = vpop.permute.xlu0 %2912
      %2914 = vrot.lane.b32.xlu0 %v1586, 64
      %v2915 = vpop.permute.xlu0 %2914
      %2916 = vrot.lane.b32.xlu0 %v1590, 64
      %v2917 = vpop.permute.xlu0 %2916
      %2918 = vrot.lane.b32.xlu0 %v1596, 64
      %v2919 = vpop.permute.xlu0 %2918
      %2920 = vrot.lane.b32.xlu0 %v1600, 64
      %v2921 = vpop.permute.xlu0 %2920
      %2922 = vrot.lane.b32.xlu0 %v1606, 64
      %v2923 = vpop.permute.xlu0 %2922
      %2924 = vrot.lane.b32.xlu0 %v1610, 64
      %v2925 = vpop.permute.xlu0 %2924
      %2926 = vrot.lane.b32.xlu0 %v1616, 64
      %v2927 = vpop.permute.xlu0 %2926
      %2928 = vrot.lane.b32.xlu0 %v1620, 64
      %v2929 = vpop.permute.xlu0 %2928
      %2930 = vrot.lane.b32.xlu0 %v1626, 64
      %v2931 = vpop.permute.xlu0 %2930
      %2932 = vrot.lane.b32.xlu0 %v1630, 64
      %v2933 = vpop.permute.xlu0 %2932
      %2934 = vrot.lane.b32.xlu0 %v1636, 64
      %v2935 = vpop.permute.xlu0 %2934
      %2936 = vrot.lane.b32.xlu0 %v1640, 64
      %v2937 = vpop.permute.xlu0 %2936
      %2938 = vrot.lane.b32.xlu0 %v1646, 64
      %v2939 = vpop.permute.xlu0 %2938
      %2940 = vrot.lane.b32.xlu0 %v1650, 64
      %v2941 = vpop.permute.xlu0 %2940
      %2942 = vrot.lane.b32.xlu0 %v1656, 64
      %v2943 = vpop.permute.xlu0 %2942
      %2944 = vrot.lane.b32.xlu0 %v1660, 64
      %v2945 = vpop.permute.xlu0 %2944
      %2946 = vrot.lane.b32.xlu0 %v1666, 64
      %v2947 = vpop.permute.xlu0 %2946
      %2948 = vrot.lane.b32.xlu0 %v1670, 64
      %v2949 = vpop.permute.xlu0 %2948
      %2950 = vrot.lane.b32.xlu0 %v1676, 64
      %v2951 = vpop.permute.xlu0 %2950
      %2952 = vrot.lane.b32.xlu0 %v1680, 64
      %v2953 = vpop.permute.xlu0 %2952
      %2954 = vrot.lane.b32.xlu0 %v1686, 64
      %v2955 = vpop.permute.xlu0 %2954
      %2956 = vrot.lane.b32.xlu0 %v1690, 64
      %v2957 = vpop.permute.xlu0 %2956
      %2958 = vrot.lane.b32.xlu0 %v1696, 64
      %v2959 = vpop.permute.xlu0 %2958
      %2960 = vrot.lane.b32.xlu0 %v1700, 64
      %v2961 = vpop.permute.xlu0 %2960
      %2962 = vrot.lane.b32.xlu0 %v1706, 64
      %v2963 = vpop.permute.xlu0 %2962
      %2964 = vrot.lane.b32.xlu0 %v1710, 64
      %v2965 = vpop.permute.xlu0 %2964
      %2966 = vrot.lane.b32.xlu0 %v1716, 64
      %v2967 = vpop.permute.xlu0 %2966
      %2968 = vrot.lane.b32.xlu0 %v1720, 64
      %v2969 = vpop.permute.xlu0 %2968
      %2970 = vrot.lane.b32.xlu0 %v1726, 64
      %v2971 = vpop.permute.xlu0 %2970
      %2972 = vrot.lane.b32.xlu0 %v1730, 64
      %v2973 = vpop.permute.xlu0 %2972
      %2974 = vrot.lane.b32.xlu0 %v1736, 64
      %v2975 = vpop.permute.xlu0 %2974
      %2976 = vrot.lane.b32.xlu0 %v1740, 64
      %v2977 = vpop.permute.xlu0 %2976
      %2978 = vrot.lane.b32.xlu0 %v1746, 64
      %v2979 = vpop.permute.xlu0 %2978
      %2980 = vrot.lane.b32.xlu0 %v1750, 64
      %v2981 = vpop.permute.xlu0 %2980
      %2982 = vrot.lane.b32.xlu0 %v1756, 64
      %v2983 = vpop.permute.xlu0 %2982
      %2984 = vrot.lane.b32.xlu0 %v1760, 64
      %v2985 = vpop.permute.xlu0 %2984
      %2986 = vrot.lane.b32.xlu0 %v1766, 64
      %v2987 = vpop.permute.xlu0 %2986
      %2988 = vrot.lane.b32.xlu0 %v1770, 64
      %v2989 = vpop.permute.xlu0 %2988
      %v3054 = vmax.f32 %v2734, %v2863
      %v3055 = vmax.f32 %v2735, %v2865
      %v3056 = vmax.f32 %v2736, %v2867
      %v3057 = vmax.f32 %v2737, %v2869
      %v3058 = vmax.f32 %v2738, %v2871
      %v3059 = vmax.f32 %v2739, %v2873
      %v3060 = vmax.f32 %v2740, %v2875
      %v3061 = vmax.f32 %v2741, %v2877
      %v3062 = vmax.f32 %v2742, %v2879
      %v3063 = vmax.f32 %v2743, %v2881
      %v3064 = vmax.f32 %v2744, %v2883
      %v3065 = vmax.f32 %v2745, %v2885
      %v3066 = vmax.f32 %v2746, %v2887
      %v3067 = vmax.f32 %v2747, %v2889
      %v3068 = vmax.f32 %v2748, %v2891
      %v3069 = vmax.f32 %v2749, %v2893
      %v3070 = vmax.f32 %v2750, %v2895
      %v3071 = vmax.f32 %v2751, %v2897
      %v3072 = vmax.f32 %v2752, %v2899
      %v3073 = vmax.f32 %v2753, %v2901
      %v3074 = vmax.f32 %v2754, %v2903
      %v3075 = vmax.f32 %v2755, %v2905
      %v3076 = vmax.f32 %v2756, %v2907
      %v3077 = vmax.f32 %v2757, %v2909
      %v3078 = vmax.f32 %v2758, %v2911
      %v3079 = vmax.f32 %v2759, %v2913
      %v3080 = vmax.f32 %v2760, %v2915
      %v3081 = vmax.f32 %v2761, %v2917
      %v3082 = vmax.f32 %v2762, %v2919
      %v3083 = vmax.f32 %v2763, %v2921
      %v3084 = vmax.f32 %v2764, %v2923
      %v3085 = vmax.f32 %v2765, %v2925
      %v3086 = vmax.f32 %v2766, %v2927
      %v3087 = vmax.f32 %v2767, %v2929
      %v3088 = vmax.f32 %v2768, %v2931
      %v3089 = vmax.f32 %v2769, %v2933
      %v3090 = vmax.f32 %v2770, %v2935
      %v3091 = vmax.f32 %v2771, %v2937
      %v3092 = vmax.f32 %v2772, %v2939
      %v3093 = vmax.f32 %v2773, %v2941
      %v3094 = vmax.f32 %v2774, %v2943
      %v3095 = vmax.f32 %v2775, %v2945
      %v3096 = vmax.f32 %v2776, %v2947
      %v3097 = vmax.f32 %v2777, %v2949
      %v3098 = vmax.f32 %v2778, %v2951
      %v3099 = vmax.f32 %v2779, %v2953
      %v3100 = vmax.f32 %v2780, %v2955
      %v3101 = vmax.f32 %v2781, %v2957
      %v3102 = vmax.f32 %v2782, %v2959
      %v3103 = vmax.f32 %v2783, %v2961
      %v3104 = vmax.f32 %v2784, %v2963
      %v3105 = vmax.f32 %v2785, %v2965
      %v3106 = vmax.f32 %v2786, %v2967
      %v3107 = vmax.f32 %v2787, %v2969
      %v3108 = vmax.f32 %v2788, %v2971
      %v3109 = vmax.f32 %v2789, %v2973
      %v3110 = vmax.f32 %v2790, %v2975
      %v3111 = vmax.f32 %v2791, %v2977
      %v3112 = vmax.f32 %v2792, %v2979
      %v3113 = vmax.f32 %v2793, %v2981
      %v3114 = vmax.f32 %v2794, %v2983
      %v3115 = vmax.f32 %v2795, %v2985
      %v3116 = vmax.f32 %v2796, %v2987
      %v3117 = vmax.f32 %v2797, %v2989
      %v3118 = vmax.f32 %v3054, %v1807
      %v3119 = vmax.f32 %v3055, %v1811
      %v3120 = vmax.f32 %v3056, %v1817
      %v3121 = vmax.f32 %v3057, %v1821
      %v3122 = vmax.f32 %v3058, %v1827
      %v3123 = vmax.f32 %v3059, %v1831
      %v3124 = vmax.f32 %v3060, %v1837
      %v3125 = vmax.f32 %v3061, %v1841
      %v3126 = vmax.f32 %v3062, %v1847
      %v3127 = vmax.f32 %v3063, %v1851
      %v3128 = vmax.f32 %v3064, %v1857
      %v3129 = vmax.f32 %v3065, %v1861
      %v3130 = vmax.f32 %v3066, %v1867
      %v3131 = vmax.f32 %v3067, %v1871
      %v3132 = vmax.f32 %v3068, %v1877
      %v3133 = vmax.f32 %v3069, %v1881
      %v3134 = vmax.f32 %v3070, %v1887
      %v3135 = vmax.f32 %v3071, %v1891
      %v3136 = vmax.f32 %v3072, %v1897
      %v3137 = vmax.f32 %v3073, %v1901
      %v3138 = vmax.f32 %v3074, %v1907
      %v3139 = vmax.f32 %v3075, %v1911
      %v3140 = vmax.f32 %v3076, %v1917
      %v3141 = vmax.f32 %v3077, %v1921
      %v3142 = vmax.f32 %v3078, %v1927
      %v3143 = vmax.f32 %v3079, %v1931
      %v3144 = vmax.f32 %v3080, %v1937
      %v3145 = vmax.f32 %v3081, %v1941
      %v3146 = vmax.f32 %v3082, %v1947
      %v3147 = vmax.f32 %v3083, %v1951
      %v3148 = vmax.f32 %v3084, %v1957
      %v3149 = vmax.f32 %v3085, %v1961
      %v3150 = vmax.f32 %v3086, %v1967
      %v3151 = vmax.f32 %v3087, %v1971
      %v3152 = vmax.f32 %v3088, %v1977
      %v3153 = vmax.f32 %v3089, %v1981
      %v3154 = vmax.f32 %v3090, %v1987
      %v3155 = vmax.f32 %v3091, %v1991
      %v3156 = vmax.f32 %v3092, %v1997
      %v3157 = vmax.f32 %v3093, %v2001
      %v3158 = vmax.f32 %v3094, %v2007
      %v3159 = vmax.f32 %v3095, %v2011
      %v3160 = vmax.f32 %v3096, %v2017
      %v3161 = vmax.f32 %v3097, %v2021
      %v3162 = vmax.f32 %v3098, %v2027
      %v3163 = vmax.f32 %v3099, %v2031
      %v3164 = vmax.f32 %v3100, %v2037
      %v3165 = vmax.f32 %v3101, %v2041
      %v3166 = vmax.f32 %v3102, %v2047
      %v3167 = vmax.f32 %v3103, %v2051
      %v3168 = vmax.f32 %v3104, %v2057
      %v3169 = vmax.f32 %v3105, %v2061
      %v3170 = vmax.f32 %v3106, %v2067
      %v3171 = vmax.f32 %v3107, %v2071
      %v3172 = vmax.f32 %v3108, %v2077
      %v3173 = vmax.f32 %v3109, %v2081
      %v3174 = vmax.f32 %v3110, %v2087
      %v3175 = vmax.f32 %v3111, %v2091
      %v3176 = vmax.f32 %v3112, %v2097
      %v3177 = vmax.f32 %v3113, %v2101
      %v3178 = vmax.f32 %v3114, %v2107
      %v3179 = vmax.f32 %v3115, %v2111
      %v3180 = vmax.f32 %v3116, %v2117
      %v3181 = vmax.f32 %v3117, %v2121
      %3246 = vrot.lane.b32.xlu0 %v1807, 64
      %v3247 = vpop.permute.xlu0 %3246
      %3248 = vrot.lane.b32.xlu0 %v1811, 64
      %v3249 = vpop.permute.xlu0 %3248
      %3250 = vrot.lane.b32.xlu0 %v1817, 64
      %v3251 = vpop.permute.xlu0 %3250
      %3252 = vrot.lane.b32.xlu0 %v1821, 64
      %v3253 = vpop.permute.xlu0 %3252
      %3254 = vrot.lane.b32.xlu0 %v1827, 64
      %v3255 = vpop.permute.xlu0 %3254
      %3256 = vrot.lane.b32.xlu0 %v1831, 64
      %v3257 = vpop.permute.xlu0 %3256
      %3258 = vrot.lane.b32.xlu0 %v1837, 64
      %v3259 = vpop.permute.xlu0 %3258
      %3260 = vrot.lane.b32.xlu0 %v1841, 64
      %v3261 = vpop.permute.xlu0 %3260
      %3262 = vrot.lane.b32.xlu0 %v1847, 64
      %v3263 = vpop.permute.xlu0 %3262
      %3264 = vrot.lane.b32.xlu0 %v1851, 64
      %v3265 = vpop.permute.xlu0 %3264
      %3266 = vrot.lane.b32.xlu0 %v1857, 64
      %v3267 = vpop.permute.xlu0 %3266
      %3268 = vrot.lane.b32.xlu0 %v1861, 64
      %v3269 = vpop.permute.xlu0 %3268
      %3270 = vrot.lane.b32.xlu0 %v1867, 64
      %v3271 = vpop.permute.xlu0 %3270
      %3272 = vrot.lane.b32.xlu0 %v1871, 64
      %v3273 = vpop.permute.xlu0 %3272
      %3274 = vrot.lane.b32.xlu0 %v1877, 64
      %v3275 = vpop.permute.xlu0 %3274
      %3276 = vrot.lane.b32.xlu0 %v1881, 64
      %v3277 = vpop.permute.xlu0 %3276
      %3278 = vrot.lane.b32.xlu0 %v1887, 64
      %v3279 = vpop.permute.xlu0 %3278
      %3280 = vrot.lane.b32.xlu0 %v1891, 64
      %v3281 = vpop.permute.xlu0 %3280
      %3282 = vrot.lane.b32.xlu0 %v1897, 64
      %v3283 = vpop.permute.xlu0 %3282
      %3284 = vrot.lane.b32.xlu0 %v1901, 64
      %v3285 = vpop.permute.xlu0 %3284
      %3286 = vrot.lane.b32.xlu0 %v1907, 64
      %v3287 = vpop.permute.xlu0 %3286
      %3288 = vrot.lane.b32.xlu0 %v1911, 64
      %v3289 = vpop.permute.xlu0 %3288
      %3290 = vrot.lane.b32.xlu0 %v1917, 64
      %v3291 = vpop.permute.xlu0 %3290
      %3292 = vrot.lane.b32.xlu0 %v1921, 64
      %v3293 = vpop.permute.xlu0 %3292
      %3294 = vrot.lane.b32.xlu0 %v1927, 64
      %v3295 = vpop.permute.xlu0 %3294
      %3296 = vrot.lane.b32.xlu0 %v1931, 64
      %v3297 = vpop.permute.xlu0 %3296
      %3298 = vrot.lane.b32.xlu0 %v1937, 64
      %v3299 = vpop.permute.xlu0 %3298
      %3300 = vrot.lane.b32.xlu0 %v1941, 64
      %v3301 = vpop.permute.xlu0 %3300
      %3302 = vrot.lane.b32.xlu0 %v1947, 64
      %v3303 = vpop.permute.xlu0 %3302
      %3304 = vrot.lane.b32.xlu0 %v1951, 64
      %v3305 = vpop.permute.xlu0 %3304
      %3306 = vrot.lane.b32.xlu0 %v1957, 64
      %v3307 = vpop.permute.xlu0 %3306
      %3308 = vrot.lane.b32.xlu0 %v1961, 64
      %v3309 = vpop.permute.xlu0 %3308
      %3310 = vrot.lane.b32.xlu0 %v1967, 64
      %v3311 = vpop.permute.xlu0 %3310
      %3312 = vrot.lane.b32.xlu0 %v1971, 64
      %v3313 = vpop.permute.xlu0 %3312
      %3314 = vrot.lane.b32.xlu0 %v1977, 64
      %v3315 = vpop.permute.xlu0 %3314
      %3316 = vrot.lane.b32.xlu0 %v1981, 64
      %v3317 = vpop.permute.xlu0 %3316
      %3318 = vrot.lane.b32.xlu0 %v1987, 64
      %v3319 = vpop.permute.xlu0 %3318
      %3320 = vrot.lane.b32.xlu0 %v1991, 64
      %v3321 = vpop.permute.xlu0 %3320
      %3322 = vrot.lane.b32.xlu0 %v1997, 64
      %v3323 = vpop.permute.xlu0 %3322
      %3324 = vrot.lane.b32.xlu0 %v2001, 64
      %v3325 = vpop.permute.xlu0 %3324
      %3326 = vrot.lane.b32.xlu0 %v2007, 64
      %v3327 = vpop.permute.xlu0 %3326
      %3328 = vrot.lane.b32.xlu0 %v2011, 64
      %v3329 = vpop.permute.xlu0 %3328
      %3330 = vrot.lane.b32.xlu0 %v2017, 64
      %v3331 = vpop.permute.xlu0 %3330
      %3332 = vrot.lane.b32.xlu0 %v2021, 64
      %v3333 = vpop.permute.xlu0 %3332
      %3334 = vrot.lane.b32.xlu0 %v2027, 64
      %v3335 = vpop.permute.xlu0 %3334
      %3336 = vrot.lane.b32.xlu0 %v2031, 64
      %v3337 = vpop.permute.xlu0 %3336
      %3338 = vrot.lane.b32.xlu0 %v2037, 64
      %v3339 = vpop.permute.xlu0 %3338
      %3340 = vrot.lane.b32.xlu0 %v2041, 64
      %v3341 = vpop.permute.xlu0 %3340
      %3342 = vrot.lane.b32.xlu0 %v2047, 64
      %v3343 = vpop.permute.xlu0 %3342
      %3344 = vrot.lane.b32.xlu0 %v2051, 64
      %v3345 = vpop.permute.xlu0 %3344
      %3346 = vrot.lane.b32.xlu0 %v2057, 64
      %v3347 = vpop.permute.xlu0 %3346
      %3348 = vrot.lane.b32.xlu0 %v2061, 64
      %v3349 = vpop.permute.xlu0 %3348
      %3350 = vrot.lane.b32.xlu0 %v2067, 64
      %v3351 = vpop.permute.xlu0 %3350
      %3352 = vrot.lane.b32.xlu0 %v2071, 64
      %v3353 = vpop.permute.xlu0 %3352
      %3354 = vrot.lane.b32.xlu0 %v2077, 64
      %v3355 = vpop.permute.xlu0 %3354
      %3356 = vrot.lane.b32.xlu0 %v2081, 64
      %v3357 = vpop.permute.xlu0 %3356
      %3358 = vrot.lane.b32.xlu0 %v2087, 64
      %v3359 = vpop.permute.xlu0 %3358
      %3360 = vrot.lane.b32.xlu0 %v2091, 64
      %v3361 = vpop.permute.xlu0 %3360
      %3362 = vrot.lane.b32.xlu0 %v2097, 64
      %v3363 = vpop.permute.xlu0 %3362
      %3364 = vrot.lane.b32.xlu0 %v2101, 64
      %v3365 = vpop.permute.xlu0 %3364
      %3366 = vrot.lane.b32.xlu0 %v2107, 64
      %v3367 = vpop.permute.xlu0 %3366
      %3368 = vrot.lane.b32.xlu0 %v2111, 64
      %v3369 = vpop.permute.xlu0 %3368
      %3370 = vrot.lane.b32.xlu0 %v2117, 64
      %v3371 = vpop.permute.xlu0 %3370
      %3372 = vrot.lane.b32.xlu0 %v2121, 64
      %v3373 = vpop.permute.xlu0 %3372
      %v3438 = vmax.f32 %v3118, %v3247
      %v3439 = vmax.f32 %v3119, %v3249
      %v3440 = vmax.f32 %v3120, %v3251
      %v3441 = vmax.f32 %v3121, %v3253
      %v3442 = vmax.f32 %v3122, %v3255
      %v3443 = vmax.f32 %v3123, %v3257
      %v3444 = vmax.f32 %v3124, %v3259
      %v3445 = vmax.f32 %v3125, %v3261
      %v3446 = vmax.f32 %v3126, %v3263
      %v3447 = vmax.f32 %v3127, %v3265
      %v3448 = vmax.f32 %v3128, %v3267
      %v3449 = vmax.f32 %v3129, %v3269
      %v3450 = vmax.f32 %v3130, %v3271
      %v3451 = vmax.f32 %v3131, %v3273
      %v3452 = vmax.f32 %v3132, %v3275
      %v3453 = vmax.f32 %v3133, %v3277
      %v3454 = vmax.f32 %v3134, %v3279
      %v3455 = vmax.f32 %v3135, %v3281
      %v3456 = vmax.f32 %v3136, %v3283
      %v3457 = vmax.f32 %v3137, %v3285
      %v3458 = vmax.f32 %v3138, %v3287
      %v3459 = vmax.f32 %v3139, %v3289
      %v3460 = vmax.f32 %v3140, %v3291
      %v3461 = vmax.f32 %v3141, %v3293
      %v3462 = vmax.f32 %v3142, %v3295
      %v3463 = vmax.f32 %v3143, %v3297
      %v3464 = vmax.f32 %v3144, %v3299
      %v3465 = vmax.f32 %v3145, %v3301
      %v3466 = vmax.f32 %v3146, %v3303
      %v3467 = vmax.f32 %v3147, %v3305
      %v3468 = vmax.f32 %v3148, %v3307
      %v3469 = vmax.f32 %v3149, %v3309
      %v3470 = vmax.f32 %v3150, %v3311
      %v3471 = vmax.f32 %v3151, %v3313
      %v3472 = vmax.f32 %v3152, %v3315
      %v3473 = vmax.f32 %v3153, %v3317
      %v3474 = vmax.f32 %v3154, %v3319
      %v3475 = vmax.f32 %v3155, %v3321
      %v3476 = vmax.f32 %v3156, %v3323
      %v3477 = vmax.f32 %v3157, %v3325
      %v3478 = vmax.f32 %v3158, %v3327
      %v3479 = vmax.f32 %v3159, %v3329
      %v3480 = vmax.f32 %v3160, %v3331
      %v3481 = vmax.f32 %v3161, %v3333
      %v3482 = vmax.f32 %v3162, %v3335
      %v3483 = vmax.f32 %v3163, %v3337
      %v3484 = vmax.f32 %v3164, %v3339
      %v3485 = vmax.f32 %v3165, %v3341
      %v3486 = vmax.f32 %v3166, %v3343
      %v3487 = vmax.f32 %v3167, %v3345
      %v3488 = vmax.f32 %v3168, %v3347
      %v3489 = vmax.f32 %v3169, %v3349
      %v3490 = vmax.f32 %v3170, %v3351
      %v3491 = vmax.f32 %v3171, %v3353
      %v3492 = vmax.f32 %v3172, %v3355
      %v3493 = vmax.f32 %v3173, %v3357
      %v3494 = vmax.f32 %v3174, %v3359
      %v3495 = vmax.f32 %v3175, %v3361
      %v3496 = vmax.f32 %v3176, %v3363
      %v3497 = vmax.f32 %v3177, %v3365
      %v3498 = vmax.f32 %v3178, %v3367
      %v3499 = vmax.f32 %v3179, %v3369
      %v3500 = vmax.f32 %v3180, %v3371
      %v3501 = vmax.f32 %v3181, %v3373
      %v3502 = vmax.f32 %v3438, %v1809
      %v3503 = vmax.f32 %v3439, %v1813
      %v3504 = vmax.f32 %v3440, %v1819
      %v3505 = vmax.f32 %v3441, %v1823
      %v3506 = vmax.f32 %v3442, %v1829
      %v3507 = vmax.f32 %v3443, %v1833
      %v3508 = vmax.f32 %v3444, %v1839
      %v3509 = vmax.f32 %v3445, %v1843
      %v3510 = vmax.f32 %v3446, %v1849
      %v3511 = vmax.f32 %v3447, %v1853
      %v3512 = vmax.f32 %v3448, %v1859
      %v3513 = vmax.f32 %v3449, %v1863
      %v3514 = vmax.f32 %v3450, %v1869
      %v3515 = vmax.f32 %v3451, %v1873
      %v3516 = vmax.f32 %v3452, %v1879
      %v3517 = vmax.f32 %v3453, %v1883
      %v3518 = vmax.f32 %v3454, %v1889
      %v3519 = vmax.f32 %v3455, %v1893
      %v3520 = vmax.f32 %v3456, %v1899
      %v3521 = vmax.f32 %v3457, %v1903
      %v3522 = vmax.f32 %v3458, %v1909
      %v3523 = vmax.f32 %v3459, %v1913
      %v3524 = vmax.f32 %v3460, %v1919
      %v3525 = vmax.f32 %v3461, %v1923
      %v3526 = vmax.f32 %v3462, %v1929
      %v3527 = vmax.f32 %v3463, %v1933
      %v3528 = vmax.f32 %v3464, %v1939
      %v3529 = vmax.f32 %v3465, %v1943
      %v3530 = vmax.f32 %v3466, %v1949
      %v3531 = vmax.f32 %v3467, %v1953
      %v3532 = vmax.f32 %v3468, %v1959
      %v3533 = vmax.f32 %v3469, %v1963
      %v3534 = vmax.f32 %v3470, %v1969
      %v3535 = vmax.f32 %v3471, %v1973
      %v3536 = vmax.f32 %v3472, %v1979
      %v3537 = vmax.f32 %v3473, %v1983
      %v3538 = vmax.f32 %v3474, %v1989
      %v3539 = vmax.f32 %v3475, %v1993
      %v3540 = vmax.f32 %v3476, %v1999
      %v3541 = vmax.f32 %v3477, %v2003
      %v3542 = vmax.f32 %v3478, %v2009
      %v3543 = vmax.f32 %v3479, %v2013
      %v3544 = vmax.f32 %v3480, %v2019
      %v3545 = vmax.f32 %v3481, %v2023
      %v3546 = vmax.f32 %v3482, %v2029
      %v3547 = vmax.f32 %v3483, %v2033
      %v3548 = vmax.f32 %v3484, %v2039
      %v3549 = vmax.f32 %v3485, %v2043
      %v3550 = vmax.f32 %v3486, %v2049
      %v3551 = vmax.f32 %v3487, %v2053
      %v3552 = vmax.f32 %v3488, %v2059
      %v3553 = vmax.f32 %v3489, %v2063
      %v3554 = vmax.f32 %v3490, %v2069
      %v3555 = vmax.f32 %v3491, %v2073
      %v3556 = vmax.f32 %v3492, %v2079
      %v3557 = vmax.f32 %v3493, %v2083
      %v3558 = vmax.f32 %v3494, %v2089
      %v3559 = vmax.f32 %v3495, %v2093
      %v3560 = vmax.f32 %v3496, %v2099
      %v3561 = vmax.f32 %v3497, %v2103
      %v3562 = vmax.f32 %v3498, %v2109
      %v3563 = vmax.f32 %v3499, %v2113
      %v3564 = vmax.f32 %v3500, %v2119
      %v3565 = vmax.f32 %v3501, %v2123
      %3630 = vrot.lane.b32.xlu0 %v1809, 64
      %v3631 = vpop.permute.xlu0 %3630
      %3632 = vrot.lane.b32.xlu0 %v1813, 64
      %v3633 = vpop.permute.xlu0 %3632
      %3634 = vrot.lane.b32.xlu0 %v1819, 64
      %v3635 = vpop.permute.xlu0 %3634
      %3636 = vrot.lane.b32.xlu0 %v1823, 64
      %v3637 = vpop.permute.xlu0 %3636
      %3638 = vrot.lane.b32.xlu0 %v1829, 64
      %v3639 = vpop.permute.xlu0 %3638
      %3640 = vrot.lane.b32.xlu0 %v1833, 64
      %v3641 = vpop.permute.xlu0 %3640
      %3642 = vrot.lane.b32.xlu0 %v1839, 64
      %v3643 = vpop.permute.xlu0 %3642
      %3644 = vrot.lane.b32.xlu0 %v1843, 64
      %v3645 = vpop.permute.xlu0 %3644
      %3646 = vrot.lane.b32.xlu0 %v1849, 64
      %v3647 = vpop.permute.xlu0 %3646
      %3648 = vrot.lane.b32.xlu0 %v1853, 64
      %v3649 = vpop.permute.xlu0 %3648
      %3650 = vrot.lane.b32.xlu0 %v1859, 64
      %v3651 = vpop.permute.xlu0 %3650
      %3652 = vrot.lane.b32.xlu0 %v1863, 64
      %v3653 = vpop.permute.xlu0 %3652
      %3654 = vrot.lane.b32.xlu0 %v1869, 64
      %v3655 = vpop.permute.xlu0 %3654
      %3656 = vrot.lane.b32.xlu0 %v1873, 64
      %v3657 = vpop.permute.xlu0 %3656
      %3658 = vrot.lane.b32.xlu0 %v1879, 64
      %v3659 = vpop.permute.xlu0 %3658
      %3660 = vrot.lane.b32.xlu0 %v1883, 64
      %v3661 = vpop.permute.xlu0 %3660
      %3662 = vrot.lane.b32.xlu0 %v1889, 64
      %v3663 = vpop.permute.xlu0 %3662
      %3664 = vrot.lane.b32.xlu0 %v1893, 64
      %v3665 = vpop.permute.xlu0 %3664
      %3666 = vrot.lane.b32.xlu0 %v1899, 64
      %v3667 = vpop.permute.xlu0 %3666
      %3668 = vrot.lane.b32.xlu0 %v1903, 64
      %v3669 = vpop.permute.xlu0 %3668
      %3670 = vrot.lane.b32.xlu0 %v1909, 64
      %v3671 = vpop.permute.xlu0 %3670
      %3672 = vrot.lane.b32.xlu0 %v1913, 64
      %v3673 = vpop.permute.xlu0 %3672
      %3674 = vrot.lane.b32.xlu0 %v1919, 64
      %v3675 = vpop.permute.xlu0 %3674
      %3676 = vrot.lane.b32.xlu0 %v1923, 64
      %v3677 = vpop.permute.xlu0 %3676
      %3678 = vrot.lane.b32.xlu0 %v1929, 64
      %v3679 = vpop.permute.xlu0 %3678
      %3680 = vrot.lane.b32.xlu0 %v1933, 64
      %v3681 = vpop.permute.xlu0 %3680
      %3682 = vrot.lane.b32.xlu0 %v1939, 64
      %v3683 = vpop.permute.xlu0 %3682
      %3684 = vrot.lane.b32.xlu0 %v1943, 64
      %v3685 = vpop.permute.xlu0 %3684
      %3686 = vrot.lane.b32.xlu0 %v1949, 64
      %v3687 = vpop.permute.xlu0 %3686
      %3688 = vrot.lane.b32.xlu0 %v1953, 64
      %v3689 = vpop.permute.xlu0 %3688
      %3690 = vrot.lane.b32.xlu0 %v1959, 64
      %v3691 = vpop.permute.xlu0 %3690
      %3692 = vrot.lane.b32.xlu0 %v1963, 64
      %v3693 = vpop.permute.xlu0 %3692
      %3694 = vrot.lane.b32.xlu0 %v1969, 64
      %v3695 = vpop.permute.xlu0 %3694
      %3696 = vrot.lane.b32.xlu0 %v1973, 64
      %v3697 = vpop.permute.xlu0 %3696
      %3698 = vrot.lane.b32.xlu0 %v1979, 64
      %v3699 = vpop.permute.xlu0 %3698
      %3700 = vrot.lane.b32.xlu0 %v1983, 64
      %v3701 = vpop.permute.xlu0 %3700
      %3702 = vrot.lane.b32.xlu0 %v1989, 64
      %v3703 = vpop.permute.xlu0 %3702
      %3704 = vrot.lane.b32.xlu0 %v1993, 64
      %v3705 = vpop.permute.xlu0 %3704
      %3706 = vrot.lane.b32.xlu0 %v1999, 64
      %v3707 = vpop.permute.xlu0 %3706
      %3708 = vrot.lane.b32.xlu0 %v2003, 64
      %v3709 = vpop.permute.xlu0 %3708
      %3710 = vrot.lane.b32.xlu0 %v2009, 64
      %v3711 = vpop.permute.xlu0 %3710
      %3712 = vrot.lane.b32.xlu0 %v2013, 64
      %v3713 = vpop.permute.xlu0 %3712
      %3714 = vrot.lane.b32.xlu0 %v2019, 64
      %v3715 = vpop.permute.xlu0 %3714
      %3716 = vrot.lane.b32.xlu0 %v2023, 64
      %v3717 = vpop.permute.xlu0 %3716
      %3718 = vrot.lane.b32.xlu0 %v2029, 64
      %v3719 = vpop.permute.xlu0 %3718
      %3720 = vrot.lane.b32.xlu0 %v2033, 64
      %v3721 = vpop.permute.xlu0 %3720
      %3722 = vrot.lane.b32.xlu0 %v2039, 64
      %v3723 = vpop.permute.xlu0 %3722
      %3724 = vrot.lane.b32.xlu0 %v2043, 64
      %v3725 = vpop.permute.xlu0 %3724
      %3726 = vrot.lane.b32.xlu0 %v2049, 64
      %v3727 = vpop.permute.xlu0 %3726
      %3728 = vrot.lane.b32.xlu0 %v2053, 64
      %v3729 = vpop.permute.xlu0 %3728
      %3730 = vrot.lane.b32.xlu0 %v2059, 64
      %v3731 = vpop.permute.xlu0 %3730
      %3732 = vrot.lane.b32.xlu0 %v2063, 64
      %v3733 = vpop.permute.xlu0 %3732
      %3734 = vrot.lane.b32.xlu0 %v2069, 64
      %v3735 = vpop.permute.xlu0 %3734
      %3736 = vrot.lane.b32.xlu0 %v2073, 64
      %v3737 = vpop.permute.xlu0 %3736
      %3738 = vrot.lane.b32.xlu0 %v2079, 64
      %v3739 = vpop.permute.xlu0 %3738
      %3740 = vrot.lane.b32.xlu0 %v2083, 64
      %v3741 = vpop.permute.xlu0 %3740
      %3742 = vrot.lane.b32.xlu0 %v2089, 64
      %v3743 = vpop.permute.xlu0 %3742
      %3744 = vrot.lane.b32.xlu0 %v2093, 64
      %v3745 = vpop.permute.xlu0 %3744
      %3746 = vrot.lane.b32.xlu0 %v2099, 64
      %v3747 = vpop.permute.xlu0 %3746
      %3748 = vrot.lane.b32.xlu0 %v2103, 64
      %v3749 = vpop.permute.xlu0 %3748
      %3750 = vrot.lane.b32.xlu0 %v2109, 64
      %v3751 = vpop.permute.xlu0 %3750
      %3752 = vrot.lane.b32.xlu0 %v2113, 64
      %v3753 = vpop.permute.xlu0 %3752
      %3754 = vrot.lane.b32.xlu0 %v2119, 64
      %v3755 = vpop.permute.xlu0 %3754
      %3756 = vrot.lane.b32.xlu0 %v2123, 64
      %v3757 = vpop.permute.xlu0 %3756
      %v3822 = vmax.f32 %v3502, %v3631
      %v3823 = vmax.f32 %v3503, %v3633
      %v3824 = vmax.f32 %v3504, %v3635
      %v3825 = vmax.f32 %v3505, %v3637
      %v3826 = vmax.f32 %v3506, %v3639
      %v3827 = vmax.f32 %v3507, %v3641
      %v3828 = vmax.f32 %v3508, %v3643
      %v3829 = vmax.f32 %v3509, %v3645
      %v3830 = vmax.f32 %v3510, %v3647
      %v3831 = vmax.f32 %v3511, %v3649
      %v3832 = vmax.f32 %v3512, %v3651
      %v3833 = vmax.f32 %v3513, %v3653
      %v3834 = vmax.f32 %v3514, %v3655
      %v3835 = vmax.f32 %v3515, %v3657
      %v3836 = vmax.f32 %v3516, %v3659
      %v3837 = vmax.f32 %v3517, %v3661
      %v3838 = vmax.f32 %v3518, %v3663
      %v3839 = vmax.f32 %v3519, %v3665
      %v3840 = vmax.f32 %v3520, %v3667
      %v3841 = vmax.f32 %v3521, %v3669
      %v3842 = vmax.f32 %v3522, %v3671
      %v3843 = vmax.f32 %v3523, %v3673
      %v3844 = vmax.f32 %v3524, %v3675
      %v3845 = vmax.f32 %v3525, %v3677
      %v3846 = vmax.f32 %v3526, %v3679
      %v3847 = vmax.f32 %v3527, %v3681
      %v3848 = vmax.f32 %v3528, %v3683
      %v3849 = vmax.f32 %v3529, %v3685
      %v3850 = vmax.f32 %v3530, %v3687
      %v3851 = vmax.f32 %v3531, %v3689
      %v3852 = vmax.f32 %v3532, %v3691
      %v3853 = vmax.f32 %v3533, %v3693
      %v3854 = vmax.f32 %v3534, %v3695
      %v3855 = vmax.f32 %v3535, %v3697
      %v3856 = vmax.f32 %v3536, %v3699
      %v3857 = vmax.f32 %v3537, %v3701
      %v3858 = vmax.f32 %v3538, %v3703
      %v3859 = vmax.f32 %v3539, %v3705
      %v3860 = vmax.f32 %v3540, %v3707
      %v3861 = vmax.f32 %v3541, %v3709
      %v3862 = vmax.f32 %v3542, %v3711
      %v3863 = vmax.f32 %v3543, %v3713
      %v3864 = vmax.f32 %v3544, %v3715
      %v3865 = vmax.f32 %v3545, %v3717
      %v3866 = vmax.f32 %v3546, %v3719
      %v3867 = vmax.f32 %v3547, %v3721
      %v3868 = vmax.f32 %v3548, %v3723
      %v3869 = vmax.f32 %v3549, %v3725
      %v3870 = vmax.f32 %v3550, %v3727
      %v3871 = vmax.f32 %v3551, %v3729
      %v3872 = vmax.f32 %v3552, %v3731
      %v3873 = vmax.f32 %v3553, %v3733
      %v3874 = vmax.f32 %v3554, %v3735
      %v3875 = vmax.f32 %v3555, %v3737
      %v3876 = vmax.f32 %v3556, %v3739
      %v3877 = vmax.f32 %v3557, %v3741
      %v3878 = vmax.f32 %v3558, %v3743
      %v3879 = vmax.f32 %v3559, %v3745
      %v3880 = vmax.f32 %v3560, %v3747
      %v3881 = vmax.f32 %v3561, %v3749
      %v3882 = vmax.f32 %v3562, %v3751
      %v3883 = vmax.f32 %v3563, %v3753
      %v3884 = vmax.f32 %v3564, %v3755
      %v3885 = vmax.f32 %v3565, %v3757
      %v3886 = vmax.f32 %v3822, %v2160
      %v3887 = vmax.f32 %v3823, %v2163
      %v3888 = vmax.f32 %v3824, %v2168
      %v3889 = vmax.f32 %v3825, %v2171
      %v3890 = vmax.f32 %v3826, %v2176
      %v3891 = vmax.f32 %v3827, %v2179
      %v3892 = vmax.f32 %v3828, %v2184
      %v3893 = vmax.f32 %v3829, %v2187
      %v3894 = vmax.f32 %v3830, %v2192
      %v3895 = vmax.f32 %v3831, %v2195
      %v3896 = vmax.f32 %v3832, %v2200
      %v3897 = vmax.f32 %v3833, %v2203
      %v3898 = vmax.f32 %v3834, %v2208
      %v3899 = vmax.f32 %v3835, %v2211
      %v3900 = vmax.f32 %v3836, %v2216
      %v3901 = vmax.f32 %v3837, %v2219
      %v3902 = vmax.f32 %v3838, %v2224
      %v3903 = vmax.f32 %v3839, %v2227
      %v3904 = vmax.f32 %v3840, %v2232
      %v3905 = vmax.f32 %v3841, %v2235
      %v3906 = vmax.f32 %v3842, %v2240
      %v3907 = vmax.f32 %v3843, %v2243
      %v3908 = vmax.f32 %v3844, %v2248
      %v3909 = vmax.f32 %v3845, %v2251
      %v3910 = vmax.f32 %v3846, %v2256
      %v3911 = vmax.f32 %v3847, %v2259
      %v3912 = vmax.f32 %v3848, %v2264
      %v3913 = vmax.f32 %v3849, %v2267
      %v3914 = vmax.f32 %v3850, %v2272
      %v3915 = vmax.f32 %v3851, %v2275
      %v3916 = vmax.f32 %v3852, %v2280
      %v3917 = vmax.f32 %v3853, %v2283
      %v3918 = vmax.f32 %v3854, %v2288
      %v3919 = vmax.f32 %v3855, %v2291
      %v3920 = vmax.f32 %v3856, %v2296
      %v3921 = vmax.f32 %v3857, %v2299
      %v3922 = vmax.f32 %v3858, %v2304
      %v3923 = vmax.f32 %v3859, %v2307
      %v3924 = vmax.f32 %v3860, %v2312
      %v3925 = vmax.f32 %v3861, %v2315
      %v3926 = vmax.f32 %v3862, %v2320
      %v3927 = vmax.f32 %v3863, %v2323
      %v3928 = vmax.f32 %v3864, %v2328
      %v3929 = vmax.f32 %v3865, %v2331
      %v3930 = vmax.f32 %v3866, %v2336
      %v3931 = vmax.f32 %v3867, %v2339
      %v3932 = vmax.f32 %v3868, %v2344
      %v3933 = vmax.f32 %v3869, %v2347
      %v3934 = vmax.f32 %v3870, %v2352
      %v3935 = vmax.f32 %v3871, %v2355
      %v3936 = vmax.f32 %v3872, %v2360
      %v3937 = vmax.f32 %v3873, %v2363
      %v3938 = vmax.f32 %v3874, %v2368
      %v3939 = vmax.f32 %v3875, %v2371
      %v3940 = vmax.f32 %v3876, %v2376
      %v3941 = vmax.f32 %v3877, %v2379
      %v3942 = vmax.f32 %v3878, %v2384
      %v3943 = vmax.f32 %v3879, %v2387
      %v3944 = vmax.f32 %v3880, %v2392
      %v3945 = vmax.f32 %v3881, %v2395
      %v3946 = vmax.f32 %v3882, %v2400
      %v3947 = vmax.f32 %v3883, %v2403
      %v3948 = vmax.f32 %v3884, %v2408
      %v3949 = vmax.f32 %v3885, %v2411
      %v3950 = vld [vmem:[%s2] sm:$0xff]
      %v3951 = vld [vmem:[%s2 + $0x8] sm:$0xff]
      %v3952 = vld [vmem:[%s2 + $0x10] sm:$0xff]
      %v3953 = vld [vmem:[%s2 + $0x18] sm:$0xff]
      %v3954 = vld [vmem:[%s2 + $0x20] sm:$0xff]
      %v3955 = vld [vmem:[%s2 + $0x28] sm:$0xff]
      %v3956 = vld [vmem:[%s2 + $0x30] sm:$0xff]
      %v3957 = vld [vmem:[%s2 + $0x38] sm:$0xff]
      %v3958 = vld [vmem:[%s2 + $0x40] sm:$0xff]
      %v3959 = vld [vmem:[%s2 + $0x48] sm:$0xff]
      %v3960 = vld [vmem:[%s2 + $0x50] sm:$0xff]
      %v3961 = vld [vmem:[%s2 + $0x58] sm:$0xff]
      %v3962 = vld [vmem:[%s2 + $0x60] sm:$0xff]
      %v3963 = vld [vmem:[%s2 + $0x68] sm:$0xff]
      %v3964 = vld [vmem:[%s2 + $0x70] sm:$0xff]
      %v3965 = vld [vmem:[%s2 + $0x78] sm:$0xff]
      %v3966 = vpack.c.bf16 %v3887, %v3886
      %v3967 = vpack.c.bf16 %v3889, %v3888
      %v3968 = vpack.c.bf16 %v3891, %v3890
      %v3969 = vpack.c.bf16 %v3893, %v3892
      %v3970 = vpack.c.bf16 %v3895, %v3894
      %v3971 = vpack.c.bf16 %v3897, %v3896
      %v3972 = vpack.c.bf16 %v3899, %v3898
      %v3973 = vpack.c.bf16 %v3901, %v3900
      %v3974 = vpack.c.bf16 %v3903, %v3902
      %v3975 = vpack.c.bf16 %v3905, %v3904
      %v3976 = vpack.c.bf16 %v3907, %v3906
      %v3977 = vpack.c.bf16 %v3909, %v3908
      %v3978 = vpack.c.bf16 %v3911, %v3910
      %v3979 = vpack.c.bf16 %v3913, %v3912
      %v3980 = vpack.c.bf16 %v3915, %v3914
      %v3981 = vpack.c.bf16 %v3917, %v3916
      %v3982 = vpack.c.bf16 %v3919, %v3918
      %v3983 = vpack.c.bf16 %v3921, %v3920
      %v3984 = vpack.c.bf16 %v3923, %v3922
      %v3985 = vpack.c.bf16 %v3925, %v3924
      %v3986 = vpack.c.bf16 %v3927, %v3926
      %v3987 = vpack.c.bf16 %v3929, %v3928
      %v3988 = vpack.c.bf16 %v3931, %v3930
      %v3989 = vpack.c.bf16 %v3933, %v3932
      %v3990 = vpack.c.bf16 %v3935, %v3934
      %v3991 = vpack.c.bf16 %v3937, %v3936
      %v3992 = vpack.c.bf16 %v3939, %v3938
      %v3993 = vpack.c.bf16 %v3941, %v3940
      %v3994 = vpack.c.bf16 %v3943, %v3942
      %v3995 = vpack.c.bf16 %v3945, %v3944
      %v3996 = vpack.c.bf16 %v3947, %v3946
      %v3997 = vpack.c.bf16 %v3949, %v3948
      %v3998 = vld [vmem:[%s3] sm:$0xff]
      %v3999 = vld [vmem:[%s3 + $0x8] sm:$0xff]
      %v4000 = vld [vmem:[%s3 + $0x10] sm:$0xff]
      %v4001 = vld [vmem:[%s3 + $0x18] sm:$0xff]
      %v4002 = vld [vmem:[%s3 + $0x20] sm:$0xff]
      %v4003 = vld [vmem:[%s3 + $0x28] sm:$0xff]
      %v4004 = vld [vmem:[%s3 + $0x30] sm:$0xff]
      %v4005 = vld [vmem:[%s3 + $0x38] sm:$0xff]
      %4007 = vset.pattern.permute.xlu0 0
      %4008 = vperm.xlu0 %4007, %v3998
      %v4009 = vpop.permute.xlu0 %4008
      %4012 = vset.pattern.permute.xlu0 0
      %4013 = vperm.xlu0 %4012, %v3999
      %v4014 = vpop.permute.xlu0 %4013
      %4017 = vset.pattern.permute.xlu0 0
      %4018 = vperm.xlu0 %4017, %v4000
      %v4019 = vpop.permute.xlu0 %4018
      %4022 = vset.pattern.permute.xlu0 0
      %4023 = vperm.xlu0 %4022, %v4001
      %v4024 = vpop.permute.xlu0 %4023
      %4027 = vset.pattern.permute.xlu0 0
      %4028 = vperm.xlu0 %4027, %v4002
      %v4029 = vpop.permute.xlu0 %4028
      %4032 = vset.pattern.permute.xlu0 0
      %4033 = vperm.xlu0 %4032, %v4003
      %v4034 = vpop.permute.xlu0 %4033
      %4037 = vset.pattern.permute.xlu0 0
      %4038 = vperm.xlu0 %4037, %v4004
      %v4039 = vpop.permute.xlu0 %4038
      %4042 = vset.pattern.permute.xlu0 0
      %4043 = vperm.xlu0 %4042, %v4005
      %v4044 = vpop.permute.xlu0 %4043
      %v4062 = vunpack.c.l.b16 %v3950
      %v4063 = vunpack.c.h.b16 %v3950
      %v4064 = vunpack.c.l.b16 %v3951
      %v4065 = vunpack.c.h.b16 %v3951
      %v4066 = vunpack.c.l.b16 %v3952
      %v4067 = vunpack.c.h.b16 %v3952
      %v4068 = vunpack.c.l.b16 %v3953
      %v4069 = vunpack.c.h.b16 %v3953
      %v4070 = vunpack.c.l.b16 %v3954
      %v4071 = vunpack.c.h.b16 %v3954
      %v4072 = vunpack.c.l.b16 %v3955
      %v4073 = vunpack.c.h.b16 %v3955
      %v4074 = vunpack.c.l.b16 %v3956
      %v4075 = vunpack.c.h.b16 %v3956
      %v4076 = vunpack.c.l.b16 %v3957
      %v4077 = vunpack.c.h.b16 %v3957
      %v4078 = vunpack.c.l.b16 %v3958
      %v4079 = vunpack.c.h.b16 %v3958
      %v4080 = vunpack.c.l.b16 %v3959
      %v4081 = vunpack.c.h.b16 %v3959
      %v4082 = vunpack.c.l.b16 %v3960
      %v4083 = vunpack.c.h.b16 %v3960
      %v4084 = vunpack.c.l.b16 %v3961
      %v4085 = vunpack.c.h.b16 %v3961
      %v4086 = vunpack.c.l.b16 %v3962
      %v4087 = vunpack.c.h.b16 %v3962
      %v4088 = vunpack.c.l.b16 %v3963
      %v4089 = vunpack.c.h.b16 %v3963
      %v4090 = vunpack.c.l.b16 %v3964
      %v4091 = vunpack.c.h.b16 %v3964
      %v4092 = vunpack.c.l.b16 %v3965
      %v4093 = vunpack.c.h.b16 %v3965
      %v4094 = vpack.c.b16 %v4066, %v4062
      %v4095 = vpack.c.b16 %v4067, %v4063
      %v4096 = vpack.c.b16 %v4068, %v4064
      %v4097 = vpack.c.b16 %v4069, %v4065
      %v4098 = vpack.c.b16 %v4074, %v4070
      %v4099 = vpack.c.b16 %v4075, %v4071
      %v4100 = vpack.c.b16 %v4076, %v4072
      %v4101 = vpack.c.b16 %v4077, %v4073
      %v4102 = vpack.c.b16 %v4082, %v4078
      %v4103 = vpack.c.b16 %v4083, %v4079
      %v4104 = vpack.c.b16 %v4084, %v4080
      %v4105 = vpack.c.b16 %v4085, %v4081
      %v4106 = vpack.c.b16 %v4090, %v4086
      %v4107 = vpack.c.b16 %v4091, %v4087
      %v4108 = vpack.c.b16 %v4092, %v4088
      %v4109 = vpack.c.b16 %v4093, %v4089
      %4126 = vmatprep.subr.bf16.mxu0 0
      %4127 = vmatpush1.bf16.msra.mxu0 %v3966
      %4128 = vmatprep.subr.bf16.mxu0 0
      %4129 = vmatpush1.bf16.msra.mxu0 %v3967
      %4130 = vmatprep.subr.bf16.mxu0 0
      %4131 = vmatpush1.bf16.msra.mxu0 %v3968
      %4132 = vmatprep.subr.bf16.mxu0 0
      %4133 = vmatpush1.bf16.msra.mxu0 %v3969
      %4134 = vmatprep.subr.bf16.mxu0 0
      %4135 = vmatpush1.bf16.msra.mxu0 %v3970
      %4136 = vmatprep.subr.bf16.mxu0 0
      %4137 = vmatpush1.bf16.msra.mxu0 %v3971
      %4138 = vmatprep.subr.bf16.mxu0 0
      %4139 = vmatpush1.bf16.msra.mxu0 %v3972
      %4140 = vmatprep.subr.bf16.mxu0 0
      %4141 = vmatpush1.bf16.msra.mxu0 %v3973
      %4142 = vmatprep.subr.bf16.mxu0 0
      %4143 = vmatpush1.bf16.msra.mxu0 %v3974
      %4144 = vmatprep.subr.bf16.mxu0 0
      %4145 = vmatpush1.bf16.msra.mxu0 %v3975
      %4146 = vmatprep.subr.bf16.mxu0 0
      %4147 = vmatpush1.bf16.msra.mxu0 %v3976
      %4148 = vmatprep.subr.bf16.mxu0 0
      %4149 = vmatpush1.bf16.msra.mxu0 %v3977
      %4150 = vmatprep.subr.bf16.mxu0 0
      %4151 = vmatpush1.bf16.msra.mxu0 %v3978
      %4152 = vmatprep.subr.bf16.mxu0 0
      %4153 = vmatpush1.bf16.msra.mxu0 %v3979
      %4154 = vmatprep.subr.bf16.mxu0 0
      %4155 = vmatpush1.bf16.msra.mxu0 %v3980
      %4156 = vmatprep.subr.bf16.mxu0 0
      %4157 = vmatpush1.bf16.msra.mxu0 %v3981
      %4158 = vmatprep.mubr.bf16.mxu0 %v4095
      %4159 = vmatmul.mubr.bf16.gmra.mrb[0].mxu0 %v4094
      %v4160 = vpop.f32.mrb[0].mxu0
      %v4161 = vadd.f32 %v4009, %v4160
      %v4162 = vpop.f32.mrb[0].mxu0
      %v4163 = vpop.f32.mrb[0].mxu0
      %v4164 = vadd.f32 %v4014, %v4163
      %v4165 = vpop.f32.mrb[0].mxu0
      %4166 = vmatprep.mubr.bf16.mxu0 %v4099
      %4167 = vmatmul.mubr.bf16.gmra.mrb[0].mxu0 %v4098
      %v4168 = vpop.f32.mrb[0].mxu0
      %v4169 = vadd.f32 %v4019, %v4168
      %v4170 = vpop.f32.mrb[0].mxu0
      %v4171 = vpop.f32.mrb[0].mxu0
      %v4172 = vadd.f32 %v4024, %v4171
      %v4173 = vpop.f32.mrb[0].mxu0
      %4174 = vmatprep.mubr.bf16.mxu0 %v4103
      %4175 = vmatmul.mubr.bf16.gmra.mrb[0].mxu0 %v4102
      %v4176 = vpop.f32.mrb[0].mxu0
      %v4177 = vadd.f32 %v4029, %v4176
      %v4178 = vpop.f32.mrb[0].mxu0
      %v4179 = vpop.f32.mrb[0].mxu0
      %v4180 = vadd.f32 %v4034, %v4179
      %v4181 = vpop.f32.mrb[0].mxu0
      %4182 = vmatprep.mubr.bf16.mxu0 %v4107
      %4183 = vmatmul.mubr.bf16.gmra.mrb[0].mxu0 %v4106
      %v4184 = vpop.f32.mrb[0].mxu0
      %v4185 = vadd.f32 %v4039, %v4184
      %v4186 = vpop.f32.mrb[0].mxu0
      %v4187 = vpop.f32.mrb[0].mxu0
      %v4188 = vadd.f32 %v4044, %v4187
      %v4189 = vpop.f32.mrb[0].mxu0
      %4190 = vdwg.mxu0
      %4191 = vmatprep.subr.bf16.mxu0 0
      %4192 = vmatpush1.bf16.msra.mxu0 %v3982
      %4193 = vmatprep.subr.bf16.mxu0 0
      %4194 = vmatpush1.bf16.msra.mxu0 %v3983
      %4195 = vmatprep.subr.bf16.mxu0 0
      %4196 = vmatpush1.bf16.msra.mxu0 %v3984
      %4197 = vmatprep.subr.bf16.mxu0 0
      %4198 = vmatpush1.bf16.msra.mxu0 %v3985
      %4199 = vmatprep.subr.bf16.mxu0 0
      %4200 = vmatpush1.bf16.msra.mxu0 %v3986
      %4201 = vmatprep.subr.bf16.mxu0 0
      %4202 = vmatpush1.bf16.msra.mxu0 %v3987
      %4203 = vmatprep.subr.bf16.mxu0 0
      %4204 = vmatpush1.bf16.msra.mxu0 %v3988
      %4205 = vmatprep.subr.bf16.mxu0 0
      %4206 = vmatpush1.bf16.msra.mxu0 %v3989
      %4207 = vmatprep.subr.bf16.mxu0 0
      %4208 = vmatpush1.bf16.msra.mxu0 %v3990
      %4209 = vmatprep.subr.bf16.mxu0 0
      %4210 = vmatpush1.bf16.msra.mxu0 %v3991
      %4211 = vmatprep.subr.bf16.mxu0 0
      %4212 = vmatpush1.bf16.msra.mxu0 %v3992
      %4213 = vmatprep.subr.bf16.mxu0 0
      %4214 = vmatpush1.bf16.msra.mxu0 %v3993
      %4215 = vmatprep.subr.bf16.mxu0 0
      %4216 = vmatpush1.bf16.msra.mxu0 %v3994
      %4217 = vmatprep.subr.bf16.mxu0 0
      %4218 = vmatpush1.bf16.msra.mxu0 %v3995
      %4219 = vmatprep.subr.bf16.mxu0 0
      %4220 = vmatpush1.bf16.msra.mxu0 %v3996
      %4221 = vmatprep.subr.bf16.mxu0 0
      %4222 = vmatpush1.bf16.msra.mxu0 %v3997
      %4223 = vmatprep.mubr.bf16.mxu0 %v4097
      %4224 = vmatmul.mubr.bf16.gmra.mrb[0].mxu0 %v4096
      %v4225 = vpop.f32.mrb[0].mxu0
      %v4226 = vadd.f32 %v4161, %v4225
      %v4227 = vpop.f32.mrb[0].mxu0
      %v4228 = vpop.f32.mrb[0].mxu0
      %v4229 = vadd.f32 %v4164, %v4228
      %v4230 = vpop.f32.mrb[0].mxu0
      %4231 = vmatprep.mubr.bf16.mxu0 %v4101
      %4232 = vmatmul.mubr.bf16.gmra.mrb[0].mxu0 %v4100
      %v4233 = vpop.f32.mrb[0].mxu0
      %v4234 = vadd.f32 %v4169, %v4233
      %v4235 = vpop.f32.mrb[0].mxu0
      %v4236 = vpop.f32.mrb[0].mxu0
      %v4237 = vadd.f32 %v4172, %v4236
      %v4238 = vpop.f32.mrb[0].mxu0
      %4239 = vmatprep.mubr.bf16.mxu0 %v4105
      %4240 = vmatmul.mubr.bf16.gmra.mrb[0].mxu0 %v4104
      %v4241 = vpop.f32.mrb[0].mxu0
      %v4242 = vadd.f32 %v4177, %v4241
      %v4243 = vpop.f32.mrb[0].mxu0
      %v4244 = vpop.f32.mrb[0].mxu0
      %v4245 = vadd.f32 %v4180, %v4244
      %v4246 = vpop.f32.mrb[0].mxu0
      %4247 = vmatprep.mubr.bf16.mxu0 %v4109
      %4248 = vmatmul.mubr.bf16.gmra.mrb[0].mxu0 %v4108
      %v4249 = vpop.f32.mrb[0].mxu0
      %v4250 = vadd.f32 %v4185, %v4249
      %v4251 = vpop.f32.mrb[0].mxu0
      %v4252 = vpop.f32.mrb[0].mxu0
      %v4253 = vadd.f32 %v4188, %v4252
      %v4254 = vpop.f32.mrb[0].mxu0
      %4255 = vdwg.mxu0
      %v4256 = vmax.f32 %v4226, 0.0
      %v4257 = vmax.f32 %v4229, 0.0
      %v4258 = vmax.f32 %v4234, 0.0
      %v4259 = vmax.f32 %v4237, 0.0
      %v4260 = vmax.f32 %v4242, 0.0
      %v4261 = vmax.f32 %v4245, 0.0
      %v4262 = vmax.f32 %v4250, 0.0
      %v4263 = vmax.f32 %v4253, 0.0
      %v4264 = vpack.c.bf16 %v4257, %v4256
      %v4265 = vpack.c.bf16 %v4259, %v4258
      %v4266 = vpack.c.bf16 %v4261, %v4260
      %v4267 = vpack.c.bf16 %v4263, %v4262
      %v4268 = vld [vmem:[%s4] sm:$0xff]
      %v4269 = vld [vmem:[%s4 + $0x8] sm:$0xff]
      %v4270 = vld [vmem:[%s4 + $0x10] sm:$0xf]
      %v4271 = vld [vmem:[%s4 + $0x14] sm:$0xff]
      %v4272 = vld [vmem:[%s4 + $0x1c] sm:$0xff]
      %v4273 = vld [vmem:[%s4 + $0x24] sm:$0xf]
      %v4274 = vld [vmem:[%s4 + $0x28] sm:$0xff]
      %v4275 = vld [vmem:[%s4 + $0x30] sm:$0xff]
      %v4276 = vld [vmem:[%s4 + $0x38] sm:$0xf]
      %v4277 = vld [vmem:[%s4 + $0x3c] sm:$0xff]
      %v4278 = vld [vmem:[%s4 + $0x44] sm:$0xff]
      %v4279 = vld [vmem:[%s4 + $0x4c] sm:$0xf]
      %v4280 = vld [vmem:[%s4 + $0x50] sm:$0xff]
      %v4281 = vld [vmem:[%s4 + $0x58] sm:$0xff]
      %v4282 = vld [vmem:[%s4 + $0x60] sm:$0xf]
      %v4283 = vld [vmem:[%s4 + $0x64] sm:$0xff]
      %v4284 = vld [vmem:[%s4 + $0x6c] sm:$0xff]
      %v4285 = vld [vmem:[%s4 + $0x74] sm:$0xf]
      %v4286 = vld [vmem:[%s4 + $0x78] sm:$0xff]
      %v4287 = vld [vmem:[%s4 + $0x80] sm:$0xff]
      %v4288 = vld [vmem:[%s4 + $0x88] sm:$0xf]
      %v4289 = vld [vmem:[%s4 + $0x8c] sm:$0xff]
      %v4290 = vld [vmem:[%s4 + $0x94] sm:$0xff]
      %v4291 = vld [vmem:[%s4 + $0x9c] sm:$0xf]
      %v4316 = vunpack.c.l.b16 %v4268
      %v4317 = vunpack.c.h.b16 %v4268
      %v4318 = vunpack.c.l.b16 %v4269
      %v4319 = vunpack.c.h.b16 %v4269
      %v4320 = vunpack.c.l.b16 %v4270
      %v4321 = vunpack.c.l.b16 %v4271
      %v4322 = vunpack.c.h.b16 %v4271
      %v4323 = vunpack.c.l.b16 %v4272
      %v4324 = vunpack.c.h.b16 %v4272
      %v4325 = vunpack.c.l.b16 %v4273
      %v4326 = vunpack.c.l.b16 %v4274
      %v4327 = vunpack.c.h.b16 %v4274
      %v4328 = vunpack.c.l.b16 %v4275
      %v4329 = vunpack.c.h.b16 %v4275
      %v4330 = vunpack.c.l.b16 %v4276
      %v4331 = vunpack.c.l.b16 %v4277
      %v4332 = vunpack.c.h.b16 %v4277
      %v4333 = vunpack.c.l.b16 %v4278
      %v4334 = vunpack.c.h.b16 %v4278
      %v4335 = vunpack.c.l.b16 %v4279
      %v4336 = vunpack.c.l.b16 %v4280
      %v4337 = vunpack.c.h.b16 %v4280
      %v4338 = vunpack.c.l.b16 %v4281
      %v4339 = vunpack.c.h.b16 %v4281
      %v4340 = vunpack.c.l.b16 %v4282
      %v4341 = vunpack.c.l.b16 %v4283
      %v4342 = vunpack.c.h.b16 %v4283
      %v4343 = vunpack.c.l.b16 %v4284
      %v4344 = vunpack.c.h.b16 %v4284
      %v4345 = vunpack.c.l.b16 %v4285
      %v4346 = vunpack.c.l.b16 %v4286
      %v4347 = vunpack.c.h.b16 %v4286
      %v4348 = vunpack.c.l.b16 %v4287
      %v4349 = vunpack.c.h.b16 %v4287
      %v4350 = vunpack.c.l.b16 %v4288
      %v4351 = vunpack.c.l.b16 %v4289
      %v4352 = vunpack.c.h.b16 %v4289
      %v4353 = vunpack.c.l.b16 %v4290
      %v4354 = vunpack.c.h.b16 %v4290
      %v4355 = vunpack.c.l.b16 %v4291
      %v4356 = vpack.c.b16 %v4321, %v4316
      %v4357 = vpack.c.b16 %v4322, %v4317
      %v4358 = vpack.c.b16 %v4323, %v4318
      %v4359 = vpack.c.b16 %v4324, %v4319
      %v4360 = vpack.c.b16 %v4325, %v4320
      %v4361 = vpack.c.b16 %v4331, %v4326
      %v4362 = vpack.c.b16 %v4332, %v4327
      %v4363 = vpack.c.b16 %v4333, %v4328
      %v4364 = vpack.c.b16 %v4334, %v4329
      %v4365 = vpack.c.b16 %v4335, %v4330
      %v4366 = vpack.c.b16 %v4341, %v4336
      %v4367 = vpack.c.b16 %v4342, %v4337
      %v4368 = vpack.c.b16 %v4343, %v4338
      %v4369 = vpack.c.b16 %v4344, %v4339
      %v4370 = vpack.c.b16 %v4345, %v4340
      %v4371 = vpack.c.b16 %v4351, %v4346
      %v4372 = vpack.c.b16 %v4352, %v4347
      %v4373 = vpack.c.b16 %v4353, %v4348
      %v4374 = vpack.c.b16 %v4354, %v4349
      %v4375 = vpack.c.b16 %v4355, %v4350
      %vm4396 = vcmask 523264
      %v4398 = vsel %vm4396, %v4264, 0
      %v4401 = vsel %vm4396, %v4265, 0
      %v4404 = vsel %vm4396, %v4266, 0
      %v4407 = vsel %vm4396, %v4267, 0
      %4409 = vmatprep.subr.bf16.mxu0 %v4357
      %4410 = vmatpush1.bf16.msra.mxu0 %v4356
      %4411 = vmatprep.subr.bf16.mxu0 %v4362
      %4412 = vmatpush1.bf16.msra.mxu0 %v4361
      %4413 = vmatprep.subr.bf16.mxu0 %v4367
      %4414 = vmatpush1.bf16.msra.mxu0 %v4366
      %4415 = vmatprep.subr.bf16.mxu0 %v4372
      %4416 = vmatpush1.bf16.msra.mxu0 %v4371
      %4417 = vmatprep.subr.bf16.mxu0 0
      %4418 = vmatpush1.bf16.msra.mxu0 0
      %4419 = vmatprep.subr.bf16.mxu0 0
      %4420 = vmatpush1.bf16.msra.mxu0 0
      %4421 = vmatprep.subr.bf16.mxu0 0
      %4422 = vmatpush1.bf16.msra.mxu0 0
      %4423 = vmatprep.subr.bf16.mxu0 0
      %4424 = vmatpush1.bf16.msra.mxu0 0
      %4425 = vmatprep.subr.bf16.mxu0 0
      %4426 = vmatpush1.bf16.msra.mxu0 0
      %4427 = vmatprep.subr.bf16.mxu0 0
      %4428 = vmatpush1.bf16.msra.mxu0 0
      %4429 = vmatprep.subr.bf16.mxu0 0
      %4430 = vmatpush1.bf16.msra.mxu0 0
      %4431 = vmatprep.subr.bf16.mxu0 0
      %4432 = vmatpush1.bf16.msra.mxu0 0
      %4433 = vmatprep.subr.bf16.mxu0 0
      %4434 = vmatpush1.bf16.msra.mxu0 0
      %4435 = vmatprep.subr.bf16.mxu0 0
      %4436 = vmatpush1.bf16.msra.mxu0 0
      %4437 = vmatprep.subr.bf16.mxu0 0
      %4438 = vmatpush1.bf16.msra.mxu0 0
      %4439 = vmatprep.subr.bf16.mxu0 0
      %4440 = vmatpush1.bf16.msra.mxu0 0
      %4441 = vmatprep.mubr.bf16.mxu0 0
      %4442 = vmatmul.mubr.bf16.gmra.mrb[0].mxu0 %v4398
      %v4443 = vpop.f32.mrb[0].mxu0
      %v4444 = vadd.f32 0.0, %v4443
      %v4445 = vpop.f32.mrb[0].mxu0
      %v4446 = vadd.f32 0.0, %v4445
      %v4447 = vpop.f32.mrb[0].mxu0
      %v4448 = vadd.f32 0.0, %v4447
      %v4449 = vpop.f32.mrb[0].mxu0
      %v4450 = vadd.f32 0.0, %v4449
      %4451 = vmatprep.mubr.bf16.mxu0 0
      %4452 = vmatmul.mubr.bf16.gmra.mrb[0].mxu0 %v4401
      %v4453 = vpop.f32.mrb[0].mxu0
      %v4454 = vadd.f32 0.0, %v4453
      %v4455 = vpop.f32.mrb[0].mxu0
      %v4456 = vadd.f32 0.0, %v4455
      %v4457 = vpop.f32.mrb[0].mxu0
      %v4458 = vadd.f32 0.0, %v4457
      %v4459 = vpop.f32.mrb[0].mxu0
      %v4460 = vadd.f32 0.0, %v4459
      %4461 = vmatprep.mubr.bf16.mxu0 0
      %4462 = vmatmul.mubr.bf16.gmra.mrb[0].mxu0 %v4404
      %v4463 = vpop.f32.mrb[0].mxu0
      %v4464 = vadd.f32 0.0, %v4463
      %v4465 = vpop.f32.mrb[0].mxu0
      %v4466 = vadd.f32 0.0, %v4465
      %v4467 = vpop.f32.mrb[0].mxu0
      %v4468 = vadd.f32 0.0, %v4467
      %v4469 = vpop.f32.mrb[0].mxu0
      %v4470 = vadd.f32 0.0, %v4469
      %4471 = vmatprep.mubr.bf16.mxu0 0
      %4472 = vmatmul.mubr.bf16.gmra.mrb[0].mxu0 %v4407
      %v4473 = vpop.f32.mrb[0].mxu0
      %v4474 = vadd.f32 0.0, %v4473
      %v4475 = vpop.f32.mrb[0].mxu0
      %v4476 = vadd.f32 0.0, %v4475
      %v4477 = vpop.f32.mrb[0].mxu0
      %v4478 = vadd.f32 0.0, %v4477
      %v4479 = vpop.f32.mrb[0].mxu0
      %v4480 = vadd.f32 0.0, %v4479
      %4481 = vdwg.mxu0
      %4482 = vmatprep.subr.bf16.mxu0 %v4359
      %4483 = vmatpush1.bf16.msra.mxu0 %v4358
      %4484 = vmatprep.subr.bf16.mxu0 %v4364
      %4485 = vmatpush1.bf16.msra.mxu0 %v4363
      %4486 = vmatprep.subr.bf16.mxu0 %v4369
      %4487 = vmatpush1.bf16.msra.mxu0 %v4368
      %4488 = vmatprep.subr.bf16.mxu0 %v4374
      %4489 = vmatpush1.bf16.msra.mxu0 %v4373
      %4490 = vmatprep.subr.bf16.mxu0 0
      %4491 = vmatpush1.bf16.msra.mxu0 0
      %4492 = vmatprep.subr.bf16.mxu0 0
      %4493 = vmatpush1.bf16.msra.mxu0 0
      %4494 = vmatprep.subr.bf16.mxu0 0
      %4495 = vmatpush1.bf16.msra.mxu0 0
      %4496 = vmatprep.subr.bf16.mxu0 0
      %4497 = vmatpush1.bf16.msra.mxu0 0
      %4498 = vmatprep.subr.bf16.mxu0 0
      %4499 = vmatpush1.bf16.msra.mxu0 0
      %4500 = vmatprep.subr.bf16.mxu0 0
      %4501 = vmatpush1.bf16.msra.mxu0 0
      %4502 = vmatprep.subr.bf16.mxu0 0
      %4503 = vmatpush1.bf16.msra.mxu0 0
      %4504 = vmatprep.subr.bf16.mxu0 0
      %4505 = vmatpush1.bf16.msra.mxu0 0
      %4506 = vmatprep.subr.bf16.mxu0 0
      %4507 = vmatpush1.bf16.msra.mxu0 0
      %4508 = vmatprep.subr.bf16.mxu0 0
      %4509 = vmatpush1.bf16.msra.mxu0 0
      %4510 = vmatprep.subr.bf16.mxu0 0
      %4511 = vmatpush1.bf16.msra.mxu0 0
      %4512 = vmatprep.subr.bf16.mxu0 0
      %4513 = vmatpush1.bf16.msra.mxu0 0
      %4514 = vmatprep.mubr.bf16.mxu0 0
      %4515 = vmatmul.mubr.bf16.gmra.mrb[0].mxu0 %v4398
      %v4516 = vpop.f32.mrb[0].mxu0
      %v4517 = vadd.f32 0.0, %v4516
      %v4518 = vpop.f32.mrb[0].mxu0
      %v4519 = vadd.f32 0.0, %v4518
      %v4520 = vpop.f32.mrb[0].mxu0
      %v4521 = vadd.f32 0.0, %v4520
      %v4522 = vpop.f32.mrb[0].mxu0
      %v4523 = vadd.f32 0.0, %v4522
      %4524 = vmatprep.mubr.bf16.mxu0 0
      %4525 = vmatmul.mubr.bf16.gmra.mrb[0].mxu0 %v4401
      %v4526 = vpop.f32.mrb[0].mxu0
      %v4527 = vadd.f32 0.0, %v4526
      %v4528 = vpop.f32.mrb[0].mxu0
      %v4529 = vadd.f32 0.0, %v4528
      %v4530 = vpop.f32.mrb[0].mxu0
      %v4531 = vadd.f32 0.0, %v4530
      %v4532 = vpop.f32.mrb[0].mxu0
      %v4533 = vadd.f32 0.0, %v4532
      %4534 = vmatprep.mubr.bf16.mxu0 0
      %4535 = vmatmul.mubr.bf16.gmra.mrb[0].mxu0 %v4404
      %v4536 = vpop.f32.mrb[0].mxu0
      %v4537 = vadd.f32 0.0, %v4536
      %v4538 = vpop.f32.mrb[0].mxu0
      %v4539 = vadd.f32 0.0, %v4538
      %v4540 = vpop.f32.mrb[0].mxu0
      %v4541 = vadd.f32 0.0, %v4540
      %v4542 = vpop.f32.mrb[0].mxu0
      %v4543 = vadd.f32 0.0, %v4542
      %4544 = vmatprep.mubr.bf16.mxu0 0
      %4545 = vmatmul.mubr.bf16.gmra.mrb[0].mxu0 %v4407
      %v4546 = vpop.f32.mrb[0].mxu0
      %v4547 = vadd.f32 0.0, %v4546
      %v4548 = vpop.f32.mrb[0].mxu0
      %v4549 = vadd.f32 0.0, %v4548
      %v4550 = vpop.f32.mrb[0].mxu0
      %v4551 = vadd.f32 0.0, %v4550
      %v4552 = vpop.f32.mrb[0].mxu0
      %v4553 = vadd.f32 0.0, %v4552
      %4554 = vdwg.mxu0
      %4555 = vmatprep.subr.bf16.mxu0 0
      %4556 = vmatpush1.bf16.msra.mxu0 %v4360
      %4557 = vmatprep.subr.bf16.mxu0 0
      %4558 = vmatpush1.bf16.msra.mxu0 %v4365
      %4559 = vmatprep.subr.bf16.mxu0 0
      %4560 = vmatpush1.bf16.msra.mxu0 %v4370
      %4561 = vmatprep.subr.bf16.mxu0 0
      %4562 = vmatpush1.bf16.msra.mxu0 %v4375
      %4563 = vmatprep.subr.bf16.mxu0 0
      %4564 = vmatpush1.bf16.msra.mxu0 0
      %4565 = vmatprep.subr.bf16.mxu0 0
      %4566 = vmatpush1.bf16.msra.mxu0 0
      %4567 = vmatprep.subr.bf16.mxu0 0
      %4568 = vmatpush1.bf16.msra.mxu0 0
      %4569 = vmatprep.subr.bf16.mxu0 0
      %4570 = vmatpush1.bf16.msra.mxu0 0
      %4571 = vmatprep.subr.bf16.mxu0 0
      %4572 = vmatpush1.bf16.msra.mxu0 0
      %4573 = vmatprep.subr.bf16.mxu0 0
      %4574 = vmatpush1.bf16.msra.mxu0 0
      %4575 = vmatprep.subr.bf16.mxu0 0
      %4576 = vmatpush1.bf16.msra.mxu0 0
      %4577 = vmatprep.subr.bf16.mxu0 0
      %4578 = vmatpush1.bf16.msra.mxu0 0
      %4579 = vmatprep.subr.bf16.mxu0 0
      %4580 = vmatpush1.bf16.msra.mxu0 0
      %4581 = vmatprep.subr.bf16.mxu0 0
      %4582 = vmatpush1.bf16.msra.mxu0 0
      %4583 = vmatprep.subr.bf16.mxu0 0
      %4584 = vmatpush1.bf16.msra.mxu0 0
      %4585 = vmatprep.subr.bf16.mxu0 0
      %4586 = vmatpush1.bf16.msra.mxu0 0
      %4587 = vmatprep.mubr.bf16.mxu0 0
      %4588 = vmatmul.mubr.bf16.gmra.mrb[0].mxu0 %v4398
      %v4589 = vpop.f32.mrb[0].mxu0
      %v4590 = vadd.f32 0.0, %v4589
      %v4591 = vpop.f32.mrb[0].mxu0
      %v4592 = vpop.f32.mrb[0].mxu0
      %v4593 = vadd.f32 0.0, %v4592
      %v4594 = vpop.f32.mrb[0].mxu0
      %4595 = vmatprep.mubr.bf16.mxu0 0
      %4596 = vmatmul.mubr.bf16.gmra.mrb[0].mxu0 %v4401
      %v4597 = vpop.f32.mrb[0].mxu0
      %v4598 = vadd.f32 0.0, %v4597
      %v4599 = vpop.f32.mrb[0].mxu0
      %v4600 = vpop.f32.mrb[0].mxu0
      %v4601 = vadd.f32 0.0, %v4600
      %v4602 = vpop.f32.mrb[0].mxu0
      %4603 = vmatprep.mubr.bf16.mxu0 0
      %4604 = vmatmul.mubr.bf16.gmra.mrb[0].mxu0 %v4404
      %v4605 = vpop.f32.mrb[0].mxu0
      %v4606 = vadd.f32 0.0, %v4605
      %v4607 = vpop.f32.mrb[0].mxu0
      %v4608 = vpop.f32.mrb[0].mxu0
      %v4609 = vadd.f32 0.0, %v4608
      %v4610 = vpop.f32.mrb[0].mxu0
      %4611 = vmatprep.mubr.bf16.mxu0 0
      %4612 = vmatmul.mubr.bf16.gmra.mrb[0].mxu0 %v4407
      %v4613 = vpop.f32.mrb[0].mxu0
      %v4614 = vadd.f32 0.0, %v4613
      %v4615 = vpop.f32.mrb[0].mxu0
      %v4616 = vpop.f32.mrb[0].mxu0
      %v4617 = vadd.f32 0.0, %v4616
      %v4618 = vpop.f32.mrb[0].mxu0
      %4619 = vdwg.mxu0
      %v4620 = vpack.c.bf16 %v4448, %v4444
      %v4621 = vpack.c.bf16 %v4458, %v4454
      %v4622 = vpack.c.bf16 %v4468, %v4464
      %v4623 = vpack.c.bf16 %v4478, %v4474
      %4624 = vst.msk [vmem:[#allocation2] sm:$0xff] %vm4396, %v4620
      %4625 = vst.msk [vmem:[#allocation2 + $0x8] sm:$0xff] %vm4396, %v4621
      %4626 = vst.msk [vmem:[#allocation2 + $0x10] sm:$0xff] %vm4396, %v4622
      %4627 = vst.msk [vmem:[#allocation2 + $0x18] sm:$0xff] %vm4396, %v4623
      %4632 = vrot.lane.b32.xlu0 %v4620, 64
      %v4633 = vpop.permute.xlu0 %4632
      %4634 = vrot.lane.b32.xlu0 %v4621, 64
      %v4635 = vpop.permute.xlu0 %4634
      %4636 = vrot.lane.b32.xlu0 %v4622, 64
      %v4637 = vpop.permute.xlu0 %4636
      %4638 = vrot.lane.b32.xlu0 %v4623, 64
      %v4639 = vpop.permute.xlu0 %4638
      %4644 = vst.msk [vmem:[#allocation2 + $0x20] sm:$0xff] %vm4396, %v4633
      %4645 = vst.msk [vmem:[#allocation2 + $0x28] sm:$0xff] %vm4396, %v4635
      %4646 = vst.msk [vmem:[#allocation2 + $0x30] sm:$0xff] %vm4396, %v4637
      %4647 = vst.msk [vmem:[#allocation2 + $0x38] sm:$0xff] %vm4396, %v4639
      %v4648 = vpack.c.bf16 %v4450, %v4446
      %v4649 = vpack.c.bf16 %v4460, %v4456
      %v4650 = vpack.c.bf16 %v4470, %v4466
      %v4651 = vpack.c.bf16 %v4480, %v4476
      %4652 = vst.msk [vmem:[#allocation2 + $0x40] sm:$0xff] %vm4396, %v4648
      %4653 = vst.msk [vmem:[#allocation2 + $0x48] sm:$0xff] %vm4396, %v4649
      %4654 = vst.msk [vmem:[#allocation2 + $0x50] sm:$0xff] %vm4396, %v4650
      %4655 = vst.msk [vmem:[#allocation2 + $0x58] sm:$0xff] %vm4396, %v4651
      %4660 = vrot.lane.b32.xlu0 %v4648, 64
      %v4661 = vpop.permute.xlu0 %4660
      %4662 = vrot.lane.b32.xlu0 %v4649, 64
      %v4663 = vpop.permute.xlu0 %4662
      %4664 = vrot.lane.b32.xlu0 %v4650, 64
      %v4665 = vpop.permute.xlu0 %4664
      %4666 = vrot.lane.b32.xlu0 %v4651, 64
      %v4667 = vpop.permute.xlu0 %4666
      %4672 = vst.msk [vmem:[#allocation2 + $0x60] sm:$0xff] %vm4396, %v4661
      %4673 = vst.msk [vmem:[#allocation2 + $0x68] sm:$0xff] %vm4396, %v4663
      %4674 = vst.msk [vmem:[#allocation2 + $0x70] sm:$0xff] %vm4396, %v4665
      %4675 = vst.msk [vmem:[#allocation2 + $0x78] sm:$0xff] %vm4396, %v4667
      %v4676 = vpack.c.bf16 %v4521, %v4517
      %v4677 = vpack.c.bf16 %v4531, %v4527
      %v4678 = vpack.c.bf16 %v4541, %v4537
      %v4679 = vpack.c.bf16 %v4551, %v4547
      %4680 = vst.msk [vmem:[#allocation2 + $0x80] sm:$0xff] %vm4396, %v4676
      %4681 = vst.msk [vmem:[#allocation2 + $0x88] sm:$0xff] %vm4396, %v4677
      %4682 = vst.msk [vmem:[#allocation2 + $0x90] sm:$0xff] %vm4396, %v4678
      %4683 = vst.msk [vmem:[#allocation2 + $0x98] sm:$0xff] %vm4396, %v4679
      %4688 = vrot.lane.b32.xlu0 %v4676, 64
      %v4689 = vpop.permute.xlu0 %4688
      %4690 = vrot.lane.b32.xlu0 %v4677, 64
      %v4691 = vpop.permute.xlu0 %4690
      %4692 = vrot.lane.b32.xlu0 %v4678, 64
      %v4693 = vpop.permute.xlu0 %4692
      %4694 = vrot.lane.b32.xlu0 %v4679, 64
      %v4695 = vpop.permute.xlu0 %4694
      %4700 = vst.msk [vmem:[#allocation2 + $0xa0] sm:$0xff] %vm4396, %v4689
      %4701 = vst.msk [vmem:[#allocation2 + $0xa8] sm:$0xff] %vm4396, %v4691
      %4702 = vst.msk [vmem:[#allocation2 + $0xb0] sm:$0xff] %vm4396, %v4693
      %4703 = vst.msk [vmem:[#allocation2 + $0xb8] sm:$0xff] %vm4396, %v4695
      %v4704 = vpack.c.bf16 %v4523, %v4519
      %v4705 = vpack.c.bf16 %v4533, %v4529
      %v4706 = vpack.c.bf16 %v4543, %v4539
      %v4707 = vpack.c.bf16 %v4553, %v4549
      %4708 = vst.msk [vmem:[#allocation2 + $0xc0] sm:$0xff] %vm4396, %v4704
      %4709 = vst.msk [vmem:[#allocation2 + $0xc8] sm:$0xff] %vm4396, %v4705
      %4710 = vst.msk [vmem:[#allocation2 + $0xd0] sm:$0xff] %vm4396, %v4706
      %4711 = vst.msk [vmem:[#allocation2 + $0xd8] sm:$0xff] %vm4396, %v4707
      %4716 = vrot.lane.b32.xlu0 %v4704, 64
      %v4717 = vpop.permute.xlu0 %4716
      %4718 = vrot.lane.b32.xlu0 %v4705, 64
      %v4719 = vpop.permute.xlu0 %4718
      %4720 = vrot.lane.b32.xlu0 %v4706, 64
      %v4721 = vpop.permute.xlu0 %4720
      %4722 = vrot.lane.b32.xlu0 %v4707, 64
      %v4723 = vpop.permute.xlu0 %4722
      %4728 = vst.msk [vmem:[#allocation2 + $0xe0] sm:$0xff] %vm4396, %v4717
      %4729 = vst.msk [vmem:[#allocation2 + $0xe8] sm:$0xff] %vm4396, %v4719
      %4730 = vst.msk [vmem:[#allocation2 + $0xf0] sm:$0xff] %vm4396, %v4721
      %4731 = vst.msk [vmem:[#allocation2 + $0xf8] sm:$0xff] %vm4396, %v4723
      %v4732 = vpack.c.bf16 %v4593, %v4590
      %v4733 = vpack.c.bf16 %v4601, %v4598
      %v4734 = vpack.c.bf16 %v4609, %v4606
      %v4735 = vpack.c.bf16 %v4617, %v4614
      %4736 = vst.msk [vmem:[#allocation2 + $0x100] sm:$0xff] %vm4396, %v4732
      %4737 = vst.msk [vmem:[#allocation2 + $0x108] sm:$0xff] %vm4396, %v4733
      %4738 = vst.msk [vmem:[#allocation2 + $0x110] sm:$0xff] %vm4396, %v4734
      %4739 = vst.msk [vmem:[#allocation2 + $0x118] sm:$0xff] %vm4396, %v4735
      %v4740 = vld [vmem:[%s5] sm:$0xff]
      %v4741 = vld [vmem:[%s5 + $0x8] sm:$0xff]
      %v4742 = vld [vmem:[%s5 + $0x10] sm:$0xf]
      %v4743 = vld [vmem:[%s5 + $0x14] sm:$0xff]
      %v4744 = vld [vmem:[%s5 + $0x1c] sm:$0xff]
      %v4745 = vld [vmem:[%s5 + $0x24] sm:$0xf]
      %v4746 = vld [vmem:[%s5 + $0x28] sm:$0xff]
      %v4747 = vld [vmem:[%s5 + $0x30] sm:$0xff]
      %v4748 = vld [vmem:[%s5 + $0x38] sm:$0xf]
      %v4749 = vld [vmem:[%s5 + $0x3c] sm:$0xff]
      %v4750 = vld [vmem:[%s5 + $0x44] sm:$0xff]
      %v4751 = vld [vmem:[%s5 + $0x4c] sm:$0xf]
      %v4752 = vld [vmem:[%s5 + $0x50] sm:$0xff]
      %v4753 = vld [vmem:[%s5 + $0x58] sm:$0xff]
      %v4754 = vld [vmem:[%s5 + $0x60] sm:$0xf]
      %v4755 = vld [vmem:[%s5 + $0x64] sm:$0xff]
      %v4756 = vld [vmem:[%s5 + $0x6c] sm:$0xff]
      %v4757 = vld [vmem:[%s5 + $0x74] sm:$0xf]
      %v4758 = vld [vmem:[%s5 + $0x78] sm:$0xff]
      %v4759 = vld [vmem:[%s5 + $0x80] sm:$0xff]
      %v4760 = vld [vmem:[%s5 + $0x88] sm:$0xf]
      %v4761 = vld [vmem:[%s5 + $0x8c] sm:$0xff]
      %v4762 = vld [vmem:[%s5 + $0x94] sm:$0xff]
      %v4763 = vld [vmem:[%s5 + $0x9c] sm:$0xf]
      %v4764 = vld [vmem:[%s5 + $0xa0] sm:$0xff]
      %v4765 = vld [vmem:[%s5 + $0xa8] sm:$0xff]
      %v4766 = vld [vmem:[%s5 + $0xb0] sm:$0xf]
      %v4767 = vld [vmem:[%s5 + $0xb4] sm:$0xff]
      %v4768 = vld [vmem:[%s5 + $0xbc] sm:$0xff]
      %v4769 = vld [vmem:[%s5 + $0xc4] sm:$0xf]
      %v4770 = vld [vmem:[%s5 + $0xc8] sm:$0xff]
      %v4771 = vld [vmem:[%s5 + $0xd0] sm:$0xff]
      %v4772 = vld [vmem:[%s5 + $0xd8] sm:$0xf]
      %v4773 = vld [vmem:[%s5 + $0xdc] sm:$0xff]
      %v4774 = vld [vmem:[%s5 + $0xe4] sm:$0xff]
      %v4775 = vld [vmem:[%s5 + $0xec] sm:$0xf]
      %v4776 = vld [vmem:[%s5 + $0xf0] sm:$0xff]
      %v4777 = vld [vmem:[%s5 + $0xf8] sm:$0xff]
      %v4778 = vld [vmem:[%s5 + $0x100] sm:$0xf]
      %v4779 = vld [vmem:[%s5 + $0x104] sm:$0xff]
      %v4780 = vld [vmem:[%s5 + $0x10c] sm:$0xff]
      %v4781 = vld [vmem:[%s5 + $0x114] sm:$0xf]
      %v4782 = vld [vmem:[%s5 + $0x118] sm:$0xff]
      %v4783 = vld [vmem:[%s5 + $0x120] sm:$0xff]
      %v4784 = vld [vmem:[%s5 + $0x128] sm:$0xf]
      %v4785 = vld [vmem:[%s5 + $0x12c] sm:$0xff]
      %v4786 = vld [vmem:[%s5 + $0x134] sm:$0xff]
      %v4787 = vld [vmem:[%s5 + $0x13c] sm:$0xf]
      %v4788 = vld [vmem:[#allocation2] sm:$0xff]
      %v4789 = vld [vmem:[#allocation2 + $0x8] sm:$0xff]
      %v4790 = vld [vmem:[#allocation2 + $0x10] sm:$0xff]
      %v4791 = vld [vmem:[#allocation2 + $0x18] sm:$0xff]
      %v4792 = vld [vmem:[#allocation2 + $0x20] sm:$0xff]
      %v4793 = vld [vmem:[#allocation2 + $0x28] sm:$0xff]
      %v4794 = vld [vmem:[#allocation2 + $0x30] sm:$0xff]
      %v4795 = vld [vmem:[#allocation2 + $0x38] sm:$0xff]
      %v4796 = vld [vmem:[#allocation2 + $0x40] sm:$0xff]
      %v4797 = vld [vmem:[#allocation2 + $0x48] sm:$0xff]
      %v4798 = vld [vmem:[#allocation2 + $0x50] sm:$0xff]
      %v4799 = vld [vmem:[#allocation2 + $0x58] sm:$0xff]
      %v4800 = vld [vmem:[#allocation2 + $0x60] sm:$0xff]
      %v4801 = vld [vmem:[#allocation2 + $0x68] sm:$0xff]
      %v4802 = vld [vmem:[#allocation2 + $0x70] sm:$0xff]
      %v4803 = vld [vmem:[#allocation2 + $0x78] sm:$0xff]
      %v4804 = vld [vmem:[#allocation2 + $0x80] sm:$0xff]
      %v4805 = vld [vmem:[#allocation2 + $0x88] sm:$0xff]
      %v4806 = vld [vmem:[#allocation2 + $0x90] sm:$0xff]
      %v4807 = vld [vmem:[#allocation2 + $0x98] sm:$0xff]
      %v4808 = vld [vmem:[#allocation2 + $0xa0] sm:$0xff]
      %v4809 = vld [vmem:[#allocation2 + $0xa8] sm:$0xff]
      %v4810 = vld [vmem:[#allocation2 + $0xb0] sm:$0xff]
      %v4811 = vld [vmem:[#allocation2 + $0xb8] sm:$0xff]
      %v4812 = vld [vmem:[#allocation2 + $0xc0] sm:$0xff]
      %v4813 = vld [vmem:[#allocation2 + $0xc8] sm:$0xff]
      %v4814 = vld [vmem:[#allocation2 + $0xd0] sm:$0xff]
      %v4815 = vld [vmem:[#allocation2 + $0xd8] sm:$0xff]
      %v4816 = vld [vmem:[#allocation2 + $0xe0] sm:$0xff]
      %v4817 = vld [vmem:[#allocation2 + $0xe8] sm:$0xff]
      %v4818 = vld [vmem:[#allocation2 + $0xf0] sm:$0xff]
      %v4819 = vld [vmem:[#allocation2 + $0xf8] sm:$0xff]
      %v4820 = vld [vmem:[#allocation2 + $0x100] sm:$0xff]
      %v4821 = vld [vmem:[#allocation2 + $0x108] sm:$0xff]
      %v4822 = vld [vmem:[#allocation2 + $0x110] sm:$0xff]
      %v4823 = vld [vmem:[#allocation2 + $0x118] sm:$0xff]
      %v4824 = vld [vmem:[%s6] sm:$0xff]
      %v4825 = vld [vmem:[%s6 + $0x8] sm:$0xff]
      %v4826 = vld [vmem:[%s6 + $0x10] sm:$0xff]
      %v4827 = vld [vmem:[%s6 + $0x18] sm:$0xff]
      %v4828 = vld [vmem:[%s6 + $0x20] sm:$0xff]
      %v4829 = vld [vmem:[%s6 + $0x28] sm:$0xff]
      %v4830 = vld [vmem:[%s6 + $0x30] sm:$0xff]
      %v4831 = vld [vmem:[%s6 + $0x38] sm:$0xff]
      %v4832 = vld [vmem:[%s6 + $0x40] sm:$0xff]
      %v4833 = vld [vmem:[%s6 + $0x48] sm:$0xff]
      %v4834 = vld [vmem:[%s6 + $0x50] sm:$0xff]
      %v4835 = vld [vmem:[%s6 + $0x58] sm:$0xff]
      %v4836 = vld [vmem:[%s6 + $0x60] sm:$0xff]
      %v4837 = vld [vmem:[%s6 + $0x68] sm:$0xff]
      %v4838 = vld [vmem:[%s6 + $0x70] sm:$0xff]
      %v4839 = vld [vmem:[%s6 + $0x78] sm:$0xff]
      %4841 = vset.pattern.permute.xlu0 0
      %4842 = vperm.xlu0 %4841, %v4824
      %v4843 = vpop.permute.xlu0 %4842
      %4846 = vset.pattern.permute.xlu0 0
      %4847 = vperm.xlu0 %4846, %v4825
      %v4848 = vpop.permute.xlu0 %4847
      %4851 = vset.pattern.permute.xlu0 0
      %4852 = vperm.xlu0 %4851, %v4826
      %v4853 = vpop.permute.xlu0 %4852
      %4856 = vset.pattern.permute.xlu0 0
      %4857 = vperm.xlu0 %4856, %v4827
      %v4858 = vpop.permute.xlu0 %4857
      %4861 = vset.pattern.permute.xlu0 0
      %4862 = vperm.xlu0 %4861, %v4828
      %v4863 = vpop.permute.xlu0 %4862
      %4866 = vset.pattern.permute.xlu0 0
      %4867 = vperm.xlu0 %4866, %v4829
      %v4868 = vpop.permute.xlu0 %4867
      %4871 = vset.pattern.permute.xlu0 0
      %4872 = vperm.xlu0 %4871, %v4830
      %v4873 = vpop.permute.xlu0 %4872
      %4876 = vset.pattern.permute.xlu0 0
      %4877 = vperm.xlu0 %4876, %v4831
      %v4878 = vpop.permute.xlu0 %4877
      %4881 = vset.pattern.permute.xlu0 0
      %4882 = vperm.xlu0 %4881, %v4832
      %v4883 = vpop.permute.xlu0 %4882
      %4886 = vset.pattern.permute.xlu0 0
      %4887 = vperm.xlu0 %4886, %v4833
      %v4888 = vpop.permute.xlu0 %4887
      %4891 = vset.pattern.permute.xlu0 0
      %4892 = vperm.xlu0 %4891, %v4834
      %v4893 = vpop.permute.xlu0 %4892
      %4896 = vset.pattern.permute.xlu0 0
      %4897 = vperm.xlu0 %4896, %v4835
      %v4898 = vpop.permute.xlu0 %4897
      %4901 = vset.pattern.permute.xlu0 0
      %4902 = vperm.xlu0 %4901, %v4836
      %v4903 = vpop.permute.xlu0 %4902
      %4906 = vset.pattern.permute.xlu0 0
      %4907 = vperm.xlu0 %4906, %v4837
      %v4908 = vpop.permute.xlu0 %4907
      %4911 = vset.pattern.permute.xlu0 0
      %4912 = vperm.xlu0 %4911, %v4838
      %v4913 = vpop.permute.xlu0 %4912
      %4916 = vset.pattern.permute.xlu0 0
      %4917 = vperm.xlu0 %4916, %v4839
      %v4918 = vpop.permute.xlu0 %4917
      %v4968 = vunpack.c.l.b16 %v4740
      %v4969 = vunpack.c.h.b16 %v4740
      %v4970 = vunpack.c.l.b16 %v4741
      %v4971 = vunpack.c.h.b16 %v4741
      %v4972 = vunpack.c.l.b16 %v4742
      %v4973 = vunpack.c.l.b16 %v4743
      %v4974 = vunpack.c.h.b16 %v4743
      %v4975 = vunpack.c.l.b16 %v4744
      %v4976 = vunpack.c.h.b16 %v4744
      %v4977 = vunpack.c.l.b16 %v4745
      %v4978 = vunpack.c.l.b16 %v4746
      %v4979 = vunpack.c.h.b16 %v4746
      %v4980 = vunpack.c.l.b16 %v4747
      %v4981 = vunpack.c.h.b16 %v4747
      %v4982 = vunpack.c.l.b16 %v4748
      %v4983 = vunpack.c.l.b16 %v4749
      %v4984 = vunpack.c.h.b16 %v4749
      %v4985 = vunpack.c.l.b16 %v4750
      %v4986 = vunpack.c.h.b16 %v4750
      %v4987 = vunpack.c.l.b16 %v4751
      %v4988 = vunpack.c.l.b16 %v4752
      %v4989 = vunpack.c.h.b16 %v4752
      %v4990 = vunpack.c.l.b16 %v4753
      %v4991 = vunpack.c.h.b16 %v4753
      %v4992 = vunpack.c.l.b16 %v4754
      %v4993 = vunpack.c.l.b16 %v4755
      %v4994 = vunpack.c.h.b16 %v4755
      %v4995 = vunpack.c.l.b16 %v4756
      %v4996 = vunpack.c.h.b16 %v4756
      %v4997 = vunpack.c.l.b16 %v4757
      %v4998 = vunpack.c.l.b16 %v4758
      %v4999 = vunpack.c.h.b16 %v4758
      %v5000 = vunpack.c.l.b16 %v4759
      %v5001 = vunpack.c.h.b16 %v4759
      %v5002 = vunpack.c.l.b16 %v4760
      %v5003 = vunpack.c.l.b16 %v4761
      %v5004 = vunpack.c.h.b16 %v4761
      %v5005 = vunpack.c.l.b16 %v4762
      %v5006 = vunpack.c.h.b16 %v4762
      %v5007 = vunpack.c.l.b16 %v4763
      %v5008 = vunpack.c.l.b16 %v4764
      %v5009 = vunpack.c.h.b16 %v4764
      %v5010 = vunpack.c.l.b16 %v4765
      %v5011 = vunpack.c.h.b16 %v4765
      %v5012 = vunpack.c.l.b16 %v4766
      %v5013 = vunpack.c.l.b16 %v4767
      %v5014 = vunpack.c.h.b16 %v4767
      %v5015 = vunpack.c.l.b16 %v4768
      %v5016 = vunpack.c.h.b16 %v4768
      %v5017 = vunpack.c.l.b16 %v4769
      %v5018 = vunpack.c.l.b16 %v4770
      %v5019 = vunpack.c.h.b16 %v4770
      %v5020 = vunpack.c.l.b16 %v4771
      %v5021 = vunpack.c.h.b16 %v4771
      %v5022 = vunpack.c.l.b16 %v4772
      %v5023 = vunpack.c.l.b16 %v4773
      %v5024 = vunpack.c.h.b16 %v4773
      %v5025 = vunpack.c.l.b16 %v4774
      %v5026 = vunpack.c.h.b16 %v4774
      %v5027 = vunpack.c.l.b16 %v4775
      %v5028 = vunpack.c.l.b16 %v4776
      %v5029 = vunpack.c.h.b16 %v4776
      %v5030 = vunpack.c.l.b16 %v4777
      %v5031 = vunpack.c.h.b16 %v4777
      %v5032 = vunpack.c.l.b16 %v4778
      %v5033 = vunpack.c.l.b16 %v4779
      %v5034 = vunpack.c.h.b16 %v4779
      %v5035 = vunpack.c.l.b16 %v4780
      %v5036 = vunpack.c.h.b16 %v4780
      %v5037 = vunpack.c.l.b16 %v4781
      %v5038 = vunpack.c.l.b16 %v4782
      %v5039 = vunpack.c.h.b16 %v4782
      %v5040 = vunpack.c.l.b16 %v4783
      %v5041 = vunpack.c.h.b16 %v4783
      %v5042 = vunpack.c.l.b16 %v4784
      %v5043 = vunpack.c.l.b16 %v4785
      %v5044 = vunpack.c.h.b16 %v4785
      %v5045 = vunpack.c.l.b16 %v4786
      %v5046 = vunpack.c.h.b16 %v4786
      %v5047 = vunpack.c.l.b16 %v4787
      %v5048 = vpack.c.b16 %v4973, %v4968
      %v5049 = vpack.c.b16 %v4974, %v4969
      %v5050 = vpack.c.b16 %v4975, %v4970
      %v5051 = vpack.c.b16 %v4976, %v4971
      %v5052 = vpack.c.b16 %v4977, %v4972
      %v5053 = vpack.c.b16 %v4983, %v4978
      %v5054 = vpack.c.b16 %v4984, %v4979
      %v5055 = vpack.c.b16 %v4985, %v4980
      %v5056 = vpack.c.b16 %v4986, %v4981
      %v5057 = vpack.c.b16 %v4987, %v4982
      %v5058 = vpack.c.b16 %v4993, %v4988
      %v5059 = vpack.c.b16 %v4994, %v4989
      %v5060 = vpack.c.b16 %v4995, %v4990
      %v5061 = vpack.c.b16 %v4996, %v4991
      %v5062 = vpack.c.b16 %v4997, %v4992
      %v5063 = vpack.c.b16 %v5003, %v4998
      %v5064 = vpack.c.b16 %v5004, %v4999
      %v5065 = vpack.c.b16 %v5005, %v5000
      %v5066 = vpack.c.b16 %v5006, %v5001
      %v5067 = vpack.c.b16 %v5007, %v5002
      %v5068 = vpack.c.b16 %v5013, %v5008
      %v5069 = vpack.c.b16 %v5014, %v5009
      %v5070 = vpack.c.b16 %v5015, %v5010
      %v5071 = vpack.c.b16 %v5016, %v5011
      %v5072 = vpack.c.b16 %v5017, %v5012
      %v5073 = vpack.c.b16 %v5023, %v5018
      %v5074 = vpack.c.b16 %v5024, %v5019
      %v5075 = vpack.c.b16 %v5025, %v5020
      %v5076 = vpack.c.b16 %v5026, %v5021
      %v5077 = vpack.c.b16 %v5027, %v5022
      %v5078 = vpack.c.b16 %v5033, %v5028
      %v5079 = vpack.c.b16 %v5034, %v5029
      %v5080 = vpack.c.b16 %v5035, %v5030
      %v5081 = vpack.c.b16 %v5036, %v5031
      %v5082 = vpack.c.b16 %v5037, %v5032
      %v5083 = vpack.c.b16 %v5043, %v5038
      %v5084 = vpack.c.b16 %v5044, %v5039
      %v5085 = vpack.c.b16 %v5045, %v5040
      %v5086 = vpack.c.b16 %v5046, %v5041
      %v5087 = vpack.c.b16 %v5047, %v5042
      %v5121 = vsel %vm4396, %v5052, 0
      %v5124 = vsel %vm4396, %v5057, 0
      %v5127 = vsel %vm4396, %v5062, 0
      %v5130 = vsel %vm4396, %v5067, 0
      %v5133 = vsel %vm4396, %v5072, 0
      %v5136 = vsel %vm4396, %v5077, 0
      %v5139 = vsel %vm4396, %v5082, 0
      %v5142 = vsel %vm4396, %v5087, 0
      %5144 = vmatprep.subr.bf16.mxu0 0
      %5145 = vmatpush1.bf16.msra.mxu0 %v4788
      %5146 = vmatprep.subr.bf16.mxu0 0
      %5147 = vmatpush1.bf16.msra.mxu0 %v4789
      %5148 = vmatprep.subr.bf16.mxu0 0
      %5149 = vmatpush1.bf16.msra.mxu0 %v4790
      %5150 = vmatprep.subr.bf16.mxu0 0
      %5151 = vmatpush1.bf16.msra.mxu0 %v4791
      %5152 = vmatprep.subr.bf16.mxu0 0
      %5153 = vmatpush1.bf16.msra.mxu0 %v4792
      %5154 = vmatprep.subr.bf16.mxu0 0
      %5155 = vmatpush1.bf16.msra.mxu0 %v4793
      %5156 = vmatprep.subr.bf16.mxu0 0
      %5157 = vmatpush1.bf16.msra.mxu0 %v4794
      %5158 = vmatprep.subr.bf16.mxu0 0
      %5159 = vmatpush1.bf16.msra.mxu0 %v4795
      %5160 = vmatprep.subr.bf16.mxu0 0
      %5161 = vmatpush1.bf16.msra.mxu0 %v4796
      %5162 = vmatprep.subr.bf16.mxu0 0
      %5163 = vmatpush1.bf16.msra.mxu0 %v4797
      %5164 = vmatprep.subr.bf16.mxu0 0
      %5165 = vmatpush1.bf16.msra.mxu0 %v4798
      %5166 = vmatprep.subr.bf16.mxu0 0
      %5167 = vmatpush1.bf16.msra.mxu0 %v4799
      %5168 = vmatprep.subr.bf16.mxu0 0
      %5169 = vmatpush1.bf16.msra.mxu0 %v4800
      %5170 = vmatprep.subr.bf16.mxu0 0
      %5171 = vmatpush1.bf16.msra.mxu0 %v4801
      %5172 = vmatprep.subr.bf16.mxu0 0
      %5173 = vmatpush1.bf16.msra.mxu0 %v4802
      %5174 = vmatprep.subr.bf16.mxu0 0
      %5175 = vmatpush1.bf16.msra.mxu0 %v4803
      %5176 = vmatprep.mubr.bf16.mxu0 %v5049
      %5177 = vmatmul.mubr.bf16.gmra.mrb[0].mxu0 %v5048
      %v5178 = vpop.f32.mrb[0].mxu0
      %v5179 = vadd.f32 %v4843, %v5178
      %v5180 = vpop.f32.mrb[0].mxu0
      %v5181 = vpop.f32.mrb[0].mxu0
      %v5182 = vadd.f32 %v4848, %v5181
      %v5183 = vpop.f32.mrb[0].mxu0
      %5184 = vmatprep.mubr.bf16.mxu0 %v5054
      %5185 = vmatmul.mubr.bf16.gmra.mrb[0].mxu0 %v5053
      %v5186 = vpop.f32.mrb[0].mxu0
      %v5187 = vadd.f32 %v4853, %v5186
      %v5188 = vpop.f32.mrb[0].mxu0
      %v5189 = vpop.f32.mrb[0].mxu0
      %v5190 = vadd.f32 %v4858, %v5189
      %v5191 = vpop.f32.mrb[0].mxu0
      %5192 = vmatprep.mubr.bf16.mxu0 %v5059
      %5193 = vmatmul.mubr.bf16.gmra.mrb[0].mxu0 %v5058
      %v5194 = vpop.f32.mrb[0].mxu0
      %v5195 = vadd.f32 %v4863, %v5194
      %v5196 = vpop.f32.mrb[0].mxu0
      %v5197 = vpop.f32.mrb[0].mxu0
      %v5198 = vadd.f32 %v4868, %v5197
      %v5199 = vpop.f32.mrb[0].mxu0
      %5200 = vmatprep.mubr.bf16.mxu0 %v5064
      %5201 = vmatmul.mubr.bf16.gmra.mrb[0].mxu0 %v5063
      %v5202 = vpop.f32.mrb[0].mxu0
      %v5203 = vadd.f32 %v4873, %v5202
      %v5204 = vpop.f32.mrb[0].mxu0
      %v5205 = vpop.f32.mrb[0].mxu0
      %v5206 = vadd.f32 %v4878, %v5205
      %v5207 = vpop.f32.mrb[0].mxu0
      %5208 = vmatprep.mubr.bf16.mxu0 %v5069
      %5209 = vmatmul.mubr.bf16.gmra.mrb[0].mxu0 %v5068
      %v5210 = vpop.f32.mrb[0].mxu0
      %v5211 = vadd.f32 %v4883, %v5210
      %v5212 = vpop.f32.mrb[0].mxu0
      %v5213 = vpop.f32.mrb[0].mxu0
      %v5214 = vadd.f32 %v4888, %v5213
      %v5215 = vpop.f32.mrb[0].mxu0
      %5216 = vmatprep.mubr.bf16.mxu0 %v5074
      %5217 = vmatmul.mubr.bf16.gmra.mrb[0].mxu0 %v5073
      %v5218 = vpop.f32.mrb[0].mxu0
      %v5219 = vadd.f32 %v4893, %v5218
      %v5220 = vpop.f32.mrb[0].mxu0
      %v5221 = vpop.f32.mrb[0].mxu0
      %v5222 = vadd.f32 %v4898, %v5221
      %v5223 = vpop.f32.mrb[0].mxu0
      %5224 = vmatprep.mubr.bf16.mxu0 %v5079
      %5225 = vmatmul.mubr.bf16.gmra.mrb[0].mxu0 %v5078
      %v5226 = vpop.f32.mrb[0].mxu0
      %v5227 = vadd.f32 %v4903, %v5226
      %v5228 = vpop.f32.mrb[0].mxu0
      %v5229 = vpop.f32.mrb[0].mxu0
      %v5230 = vadd.f32 %v4908, %v5229
      %v5231 = vpop.f32.mrb[0].mxu0
      %5232 = vmatprep.mubr.bf16.mxu0 %v5084
      %5233 = vmatmul.mubr.bf16.gmra.mrb[0].mxu0 %v5083
      %v5234 = vpop.f32.mrb[0].mxu0
      %v5235 = vadd.f32 %v4913, %v5234
      %v5236 = vpop.f32.mrb[0].mxu0
      %v5237 = vpop.f32.mrb[0].mxu0
      %v5238 = vadd.f32 %v4918, %v5237
      %v5239 = vpop.f32.mrb[0].mxu0
      %5240 = vdwg.mxu0
      %5241 = vmatprep.subr.bf16.mxu0 0
      %5242 = vmatpush1.bf16.msra.mxu0 %v4804
      %5243 = vmatprep.subr.bf16.mxu0 0
      %5244 = vmatpush1.bf16.msra.mxu0 %v4805
      %5245 = vmatprep.subr.bf16.mxu0 0
      %5246 = vmatpush1.bf16.msra.mxu0 %v4806
      %5247 = vmatprep.subr.bf16.mxu0 0
      %5248 = vmatpush1.bf16.msra.mxu0 %v4807
      %5249 = vmatprep.subr.bf16.mxu0 0
      %5250 = vmatpush1.bf16.msra.mxu0 %v4808
      %5251 = vmatprep.subr.bf16.mxu0 0
      %5252 = vmatpush1.bf16.msra.mxu0 %v4809
      %5253 = vmatprep.subr.bf16.mxu0 0
      %5254 = vmatpush1.bf16.msra.mxu0 %v4810
      %5255 = vmatprep.subr.bf16.mxu0 0
      %5256 = vmatpush1.bf16.msra.mxu0 %v4811
      %5257 = vmatprep.subr.bf16.mxu0 0
      %5258 = vmatpush1.bf16.msra.mxu0 %v4812
      %5259 = vmatprep.subr.bf16.mxu0 0
      %5260 = vmatpush1.bf16.msra.mxu0 %v4813
      %5261 = vmatprep.subr.bf16.mxu0 0
      %5262 = vmatpush1.bf16.msra.mxu0 %v4814
      %5263 = vmatprep.subr.bf16.mxu0 0
      %5264 = vmatpush1.bf16.msra.mxu0 %v4815
      %5265 = vmatprep.subr.bf16.mxu0 0
      %5266 = vmatpush1.bf16.msra.mxu0 %v4816
      %5267 = vmatprep.subr.bf16.mxu0 0
      %5268 = vmatpush1.bf16.msra.mxu0 %v4817
      %5269 = vmatprep.subr.bf16.mxu0 0
      %5270 = vmatpush1.bf16.msra.mxu0 %v4818
      %5271 = vmatprep.subr.bf16.mxu0 0
      %5272 = vmatpush1.bf16.msra.mxu0 %v4819
      %5273 = vmatprep.mubr.bf16.mxu0 %v5051
      %5274 = vmatmul.mubr.bf16.gmra.mrb[0].mxu0 %v5050
      %v5275 = vpop.f32.mrb[0].mxu0
      %v5276 = vadd.f32 %v5179, %v5275
      %v5277 = vpop.f32.mrb[0].mxu0
      %v5278 = vpop.f32.mrb[0].mxu0
      %v5279 = vadd.f32 %v5182, %v5278
      %v5280 = vpop.f32.mrb[0].mxu0
      %5281 = vmatprep.mubr.bf16.mxu0 %v5056
      %5282 = vmatmul.mubr.bf16.gmra.mrb[0].mxu0 %v5055
      %v5283 = vpop.f32.mrb[0].mxu0
      %v5284 = vadd.f32 %v5187, %v5283
      %v5285 = vpop.f32.mrb[0].mxu0
      %v5286 = vpop.f32.mrb[0].mxu0
      %v5287 = vadd.f32 %v5190, %v5286
      %v5288 = vpop.f32.mrb[0].mxu0
      %5289 = vmatprep.mubr.bf16.mxu0 %v5061
      %5290 = vmatmul.mubr.bf16.gmra.mrb[0].mxu0 %v5060
      %v5291 = vpop.f32.mrb[0].mxu0
      %v5292 = vadd.f32 %v5195, %v5291
      %v5293 = vpop.f32.mrb[0].mxu0
      %v5294 = vpop.f32.mrb[0].mxu0
      %v5295 = vadd.f32 %v5198, %v5294
      %v5296 = vpop.f32.mrb[0].mxu0
      %5297 = vmatprep.mubr.bf16.mxu0 %v5066
      %5298 = vmatmul.mubr.bf16.gmra.mrb[0].mxu0 %v5065
      %v5299 = vpop.f32.mrb[0].mxu0
      %v5300 = vadd.f32 %v5203, %v5299
      %v5301 = vpop.f32.mrb[0].mxu0
      %v5302 = vpop.f32.mrb[0].mxu0
      %v5303 = vadd.f32 %v5206, %v5302
      %v5304 = vpop.f32.mrb[0].mxu0
      %5305 = vmatprep.mubr.bf16.mxu0 %v5071
      %5306 = vmatmul.mubr.bf16.gmra.mrb[0].mxu0 %v5070
      %v5307 = vpop.f32.mrb[0].mxu0
      %v5308 = vadd.f32 %v5211, %v5307
      %v5309 = vpop.f32.mrb[0].mxu0
      %v5310 = vpop.f32.mrb[0].mxu0
      %v5311 = vadd.f32 %v5214, %v5310
      %v5312 = vpop.f32.mrb[0].mxu0
      %5313 = vmatprep.mubr.bf16.mxu0 %v5076
      %5314 = vmatmul.mubr.bf16.gmra.mrb[0].mxu0 %v5075
      %v5315 = vpop.f32.mrb[0].mxu0
      %v5316 = vadd.f32 %v5219, %v5315
      %v5317 = vpop.f32.mrb[0].mxu0
      %v5318 = vpop.f32.mrb[0].mxu0
      %v5319 = vadd.f32 %v5222, %v5318
      %v5320 = vpop.f32.mrb[0].mxu0
      %5321 = vmatprep.mubr.bf16.mxu0 %v5081
      %5322 = vmatmul.mubr.bf16.gmra.mrb[0].mxu0 %v5080
      %v5323 = vpop.f32.mrb[0].mxu0
      %v5324 = vadd.f32 %v5227, %v5323
      %v5325 = vpop.f32.mrb[0].mxu0
      %v5326 = vpop.f32.mrb[0].mxu0
      %v5327 = vadd.f32 %v5230, %v5326
      %v5328 = vpop.f32.mrb[0].mxu0
      %5329 = vmatprep.mubr.bf16.mxu0 %v5086
      %5330 = vmatmul.mubr.bf16.gmra.mrb[0].mxu0 %v5085
      %v5331 = vpop.f32.mrb[0].mxu0
      %v5332 = vadd.f32 %v5235, %v5331
      %v5333 = vpop.f32.mrb[0].mxu0
      %v5334 = vpop.f32.mrb[0].mxu0
      %v5335 = vadd.f32 %v5238, %v5334
      %v5336 = vpop.f32.mrb[0].mxu0
      %5337 = vdwg.mxu0
      %5338 = vmatprep.subr.bf16.mxu0 0
      %5339 = vmatpush1.bf16.msra.mxu0 %v4820
      %5340 = vmatprep.subr.bf16.mxu0 0
      %5341 = vmatpush1.bf16.msra.mxu0 %v4821
      %5342 = vmatprep.subr.bf16.mxu0 0
      %5343 = vmatpush1.bf16.msra.mxu0 %v4822
      %5344 = vmatprep.subr.bf16.mxu0 0
      %5345 = vmatpush1.bf16.msra.mxu0 %v4823
      %5346 = vmatprep.subr.bf16.mxu0 0
      %5347 = vmatpush1.bf16.msra.mxu0 0
      %5348 = vmatprep.subr.bf16.mxu0 0
      %5349 = vmatpush1.bf16.msra.mxu0 0
      %5350 = vmatprep.subr.bf16.mxu0 0
      %5351 = vmatpush1.bf16.msra.mxu0 0
      %5352 = vmatprep.subr.bf16.mxu0 0
      %5353 = vmatpush1.bf16.msra.mxu0 0
      %5354 = vmatprep.subr.bf16.mxu0 0
      %5355 = vmatpush1.bf16.msra.mxu0 0
      %5356 = vmatprep.subr.bf16.mxu0 0
      %5357 = vmatpush1.bf16.msra.mxu0 0
      %5358 = vmatprep.subr.bf16.mxu0 0
      %5359 = vmatpush1.bf16.msra.mxu0 0
      %5360 = vmatprep.subr.bf16.mxu0 0
      %5361 = vmatpush1.bf16.msra.mxu0 0
      %5362 = vmatprep.subr.bf16.mxu0 0
      %5363 = vmatpush1.bf16.msra.mxu0 0
      %5364 = vmatprep.subr.bf16.mxu0 0
      %5365 = vmatpush1.bf16.msra.mxu0 0
      %5366 = vmatprep.subr.bf16.mxu0 0
      %5367 = vmatpush1.bf16.msra.mxu0 0
      %5368 = vmatprep.subr.bf16.mxu0 0
      %5369 = vmatpush1.bf16.msra.mxu0 0
      %5370 = vmatprep.mubr.bf16.mxu0 0
      %5371 = vmatmul.mubr.bf16.gmra.mrb[0].mxu0 %v5121
      %v5372 = vpop.f32.mrb[0].mxu0
      %v5373 = vadd.f32 %v5276, %v5372
      %v5374 = vpop.f32.mrb[0].mxu0
      %v5375 = vpop.f32.mrb[0].mxu0
      %v5376 = vadd.f32 %v5279, %v5375
      %v5377 = vpop.f32.mrb[0].mxu0
      %5378 = vmatprep.mubr.bf16.mxu0 0
      %5379 = vmatmul.mubr.bf16.gmra.mrb[0].mxu0 %v5124
      %v5380 = vpop.f32.mrb[0].mxu0
      %v5381 = vadd.f32 %v5284, %v5380
      %v5382 = vpop.f32.mrb[0].mxu0
      %v5383 = vpop.f32.mrb[0].mxu0
      %v5384 = vadd.f32 %v5287, %v5383
      %v5385 = vpop.f32.mrb[0].mxu0
      %5386 = vmatprep.mubr.bf16.mxu0 0
      %5387 = vmatmul.mubr.bf16.gmra.mrb[0].mxu0 %v5127
      %v5388 = vpop.f32.mrb[0].mxu0
      %v5389 = vadd.f32 %v5292, %v5388
      %v5390 = vpop.f32.mrb[0].mxu0
      %v5391 = vpop.f32.mrb[0].mxu0
      %v5392 = vadd.f32 %v5295, %v5391
      %v5393 = vpop.f32.mrb[0].mxu0
      %5394 = vmatprep.mubr.bf16.mxu0 0
      %5395 = vmatmul.mubr.bf16.gmra.mrb[0].mxu0 %v5130
      %v5396 = vpop.f32.mrb[0].mxu0
      %v5397 = vadd.f32 %v5300, %v5396
      %v5398 = vpop.f32.mrb[0].mxu0
      %v5399 = vpop.f32.mrb[0].mxu0
      %v5400 = vadd.f32 %v5303, %v5399
      %v5401 = vpop.f32.mrb[0].mxu0
      %5402 = vmatprep.mubr.bf16.mxu0 0
      %5403 = vmatmul.mubr.bf16.gmra.mrb[0].mxu0 %v5133
      %v5404 = vpop.f32.mrb[0].mxu0
      %v5405 = vadd.f32 %v5308, %v5404
      %v5406 = vpop.f32.mrb[0].mxu0
      %v5407 = vpop.f32.mrb[0].mxu0
      %v5408 = vadd.f32 %v5311, %v5407
      %v5409 = vpop.f32.mrb[0].mxu0
      %5410 = vmatprep.mubr.bf16.mxu0 0
      %5411 = vmatmul.mubr.bf16.gmra.mrb[0].mxu0 %v5136
      %v5412 = vpop.f32.mrb[0].mxu0
      %v5413 = vadd.f32 %v5316, %v5412
      %v5414 = vpop.f32.mrb[0].mxu0
      %v5415 = vpop.f32.mrb[0].mxu0
      %v5416 = vadd.f32 %v5319, %v5415
      %v5417 = vpop.f32.mrb[0].mxu0
      %5418 = vmatprep.mubr.bf16.mxu0 0
      %5419 = vmatmul.mubr.bf16.gmra.mrb[0].mxu0 %v5139
      %v5420 = vpop.f32.mrb[0].mxu0
      %v5421 = vadd.f32 %v5324, %v5420
      %v5422 = vpop.f32.mrb[0].mxu0
      %v5423 = vpop.f32.mrb[0].mxu0
      %v5424 = vadd.f32 %v5327, %v5423
      %v5425 = vpop.f32.mrb[0].mxu0
      %5426 = vmatprep.mubr.bf16.mxu0 0
      %5427 = vmatmul.mubr.bf16.gmra.mrb[0].mxu0 %v5142
      %v5428 = vpop.f32.mrb[0].mxu0
      %v5429 = vadd.f32 %v5332, %v5428
      %v5430 = vpop.f32.mrb[0].mxu0
      %v5431 = vpop.f32.mrb[0].mxu0
      %v5432 = vadd.f32 %v5335, %v5431
      %v5433 = vpop.f32.mrb[0].mxu0
      %5434 = vdwg.mxu0
      %v5435 = vmax.f32 %v5373, 0.0
      %v5436 = vmax.f32 %v5376, 0.0
      %v5437 = vmax.f32 %v5381, 0.0
      %v5438 = vmax.f32 %v5384, 0.0
      %v5439 = vmax.f32 %v5389, 0.0
      %v5440 = vmax.f32 %v5392, 0.0
      %v5441 = vmax.f32 %v5397, 0.0
      %v5442 = vmax.f32 %v5400, 0.0
      %v5443 = vmax.f32 %v5405, 0.0
      %v5444 = vmax.f32 %v5408, 0.0
      %v5445 = vmax.f32 %v5413, 0.0
      %v5446 = vmax.f32 %v5416, 0.0
      %v5447 = vmax.f32 %v5421, 0.0
      %v5448 = vmax.f32 %v5424, 0.0
      %v5449 = vmax.f32 %v5429, 0.0
      %v5450 = vmax.f32 %v5432, 0.0
      %v5451 = vpack.c.bf16 %v5436, %v5435
      %v5452 = vpack.c.bf16 %v5438, %v5437
      %v5453 = vpack.c.bf16 %v5440, %v5439
      %v5454 = vpack.c.bf16 %v5442, %v5441
      %v5455 = vpack.c.bf16 %v5444, %v5443
      %v5456 = vpack.c.bf16 %v5446, %v5445
      %v5457 = vpack.c.bf16 %v5448, %v5447
      %v5458 = vpack.c.bf16 %v5450, %v5449
      %v5459 = vld [vmem:[%s7] sm:$0xff]
      %v5460 = vld [vmem:[%s7 + $0x8] sm:$0xff]
      %v5461 = vld [vmem:[%s7 + $0x10] sm:$0xff]
      %v5462 = vld [vmem:[%s7 + $0x18] sm:$0xff]
      %v5463 = vld [vmem:[%s7 + $0x20] sm:$0xff]
      %v5464 = vld [vmem:[%s7 + $0x28] sm:$0xff]
      %v5465 = vld [vmem:[%s7 + $0x30] sm:$0xff]
      %v5466 = vld [vmem:[%s7 + $0x38] sm:$0xff]
      %v5475 = vunpack.c.l.b16 %v5459
      %v5476 = vunpack.c.h.b16 %v5459
      %v5477 = vunpack.c.l.b16 %v5460
      %v5478 = vunpack.c.h.b16 %v5460
      %v5479 = vunpack.c.l.b16 %v5461
      %v5480 = vunpack.c.h.b16 %v5461
      %v5481 = vunpack.c.l.b16 %v5462
      %v5482 = vunpack.c.h.b16 %v5462
      %v5483 = vunpack.c.l.b16 %v5463
      %v5484 = vunpack.c.h.b16 %v5463
      %v5485 = vunpack.c.l.b16 %v5464
      %v5486 = vunpack.c.h.b16 %v5464
      %v5487 = vunpack.c.l.b16 %v5465
      %v5488 = vunpack.c.h.b16 %v5465
      %v5489 = vunpack.c.l.b16 %v5466
      %v5490 = vunpack.c.h.b16 %v5466
      %v5491 = vpack.c.b16 %v5477, %v5475
      %v5492 = vpack.c.b16 %v5478, %v5476
      %v5493 = vpack.c.b16 %v5481, %v5479
      %v5494 = vpack.c.b16 %v5482, %v5480
      %v5495 = vpack.c.b16 %v5485, %v5483
      %v5496 = vpack.c.b16 %v5486, %v5484
      %v5497 = vpack.c.b16 %v5489, %v5487
      %v5498 = vpack.c.b16 %v5490, %v5488
      %v5508 = vsel %vm4396, %v5451, 0
      %v5511 = vsel %vm4396, %v5452, 0
      %v5514 = vsel %vm4396, %v5453, 0
      %v5517 = vsel %vm4396, %v5454, 0
      %v5520 = vsel %vm4396, %v5455, 0
      %v5523 = vsel %vm4396, %v5456, 0
      %v5526 = vsel %vm4396, %v5457, 0
      %v5529 = vsel %vm4396, %v5458, 0
      %5531 = vmatprep.subr.bf16.mxu0 %v5492
      %5532 = vmatpush1.bf16.msra.mxu0 %v5491
      %5533 = vmatprep.subr.bf16.mxu0 %v5494
      %5534 = vmatpush1.bf16.msra.mxu0 %v5493
      %5535 = vmatprep.subr.bf16.mxu0 %v5496
      %5536 = vmatpush1.bf16.msra.mxu0 %v5495
      %5537 = vmatprep.subr.bf16.mxu0 %v5498
      %5538 = vmatpush1.bf16.msra.mxu0 %v5497
      %5539 = vmatprep.subr.bf16.mxu0 0
      %5540 = vmatpush1.bf16.msra.mxu0 0
      %5541 = vmatprep.subr.bf16.mxu0 0
      %5542 = vmatpush1.bf16.msra.mxu0 0
      %5543 = vmatprep.subr.bf16.mxu0 0
      %5544 = vmatpush1.bf16.msra.mxu0 0
      %5545 = vmatprep.subr.bf16.mxu0 0
      %5546 = vmatpush1.bf16.msra.mxu0 0
      %5547 = vmatprep.subr.bf16.mxu0 0
      %5548 = vmatpush1.bf16.msra.mxu0 0
      %5549 = vmatprep.subr.bf16.mxu0 0
      %5550 = vmatpush1.bf16.msra.mxu0 0
      %5551 = vmatprep.subr.bf16.mxu0 0
      %5552 = vmatpush1.bf16.msra.mxu0 0
      %5553 = vmatprep.subr.bf16.mxu0 0
      %5554 = vmatpush1.bf16.msra.mxu0 0
      %5555 = vmatprep.subr.bf16.mxu0 0
      %5556 = vmatpush1.bf16.msra.mxu0 0
      %5557 = vmatprep.subr.bf16.mxu0 0
      %5558 = vmatpush1.bf16.msra.mxu0 0
      %5559 = vmatprep.subr.bf16.mxu0 0
      %5560 = vmatpush1.bf16.msra.mxu0 0
      %5561 = vmatprep.subr.bf16.mxu0 0
      %5562 = vmatpush1.bf16.msra.mxu0 0
      %5563 = vmatprep.mubr.bf16.mxu0 0
      %5564 = vmatmul.mubr.bf16.gmra.mrb[0].mxu0 %v5508
      %v5565 = vpop.f32.mrb[0].mxu0
      %v5566 = vadd.f32 0.0, %v5565
      %v5567 = vpop.f32.mrb[0].mxu0
      %v5568 = vadd.f32 0.0, %v5567
      %v5569 = vpop.f32.mrb[0].mxu0
      %v5570 = vadd.f32 0.0, %v5569
      %v5571 = vpop.f32.mrb[0].mxu0
      %v5572 = vadd.f32 0.0, %v5571
      %5573 = vmatprep.mubr.bf16.mxu0 0
      %5574 = vmatmul.mubr.bf16.gmra.mrb[0].mxu0 %v5511
      %v5575 = vpop.f32.mrb[0].mxu0
      %v5576 = vadd.f32 0.0, %v5575
      %v5577 = vpop.f32.mrb[0].mxu0
      %v5578 = vadd.f32 0.0, %v5577
      %v5579 = vpop.f32.mrb[0].mxu0
      %v5580 = vadd.f32 0.0, %v5579
      %v5581 = vpop.f32.mrb[0].mxu0
      %v5582 = vadd.f32 0.0, %v5581
      %5583 = vmatprep.mubr.bf16.mxu0 0
      %5584 = vmatmul.mubr.bf16.gmra.mrb[0].mxu0 %v5514
      %v5585 = vpop.f32.mrb[0].mxu0
      %v5586 = vadd.f32 0.0, %v5585
      %v5587 = vpop.f32.mrb[0].mxu0
      %v5588 = vadd.f32 0.0, %v5587
      %v5589 = vpop.f32.mrb[0].mxu0
      %v5590 = vadd.f32 0.0, %v5589
      %v5591 = vpop.f32.mrb[0].mxu0
      %v5592 = vadd.f32 0.0, %v5591
      %5593 = vmatprep.mubr.bf16.mxu0 0
      %5594 = vmatmul.mubr.bf16.gmra.mrb[0].mxu0 %v5517
      %v5595 = vpop.f32.mrb[0].mxu0
      %v5596 = vadd.f32 0.0, %v5595
      %v5597 = vpop.f32.mrb[0].mxu0
      %v5598 = vadd.f32 0.0, %v5597
      %v5599 = vpop.f32.mrb[0].mxu0
      %v5600 = vadd.f32 0.0, %v5599
      %v5601 = vpop.f32.mrb[0].mxu0
      %v5602 = vadd.f32 0.0, %v5601
      %5603 = vmatprep.mubr.bf16.mxu0 0
      %5604 = vmatmul.mubr.bf16.gmra.mrb[0].mxu0 %v5520
      %v5605 = vpop.f32.mrb[0].mxu0
      %v5606 = vadd.f32 0.0, %v5605
      %v5607 = vpop.f32.mrb[0].mxu0
      %v5608 = vadd.f32 0.0, %v5607
      %v5609 = vpop.f32.mrb[0].mxu0
      %v5610 = vadd.f32 0.0, %v5609
      %v5611 = vpop.f32.mrb[0].mxu0
      %v5612 = vadd.f32 0.0, %v5611
      %5613 = vmatprep.mubr.bf16.mxu0 0
      %5614 = vmatmul.mubr.bf16.gmra.mrb[0].mxu0 %v5523
      %v5615 = vpop.f32.mrb[0].mxu0
      %v5616 = vadd.f32 0.0, %v5615
      %v5617 = vpop.f32.mrb[0].mxu0
      %v5618 = vadd.f32 0.0, %v5617
      %v5619 = vpop.f32.mrb[0].mxu0
      %v5620 = vadd.f32 0.0, %v5619
      %v5621 = vpop.f32.mrb[0].mxu0
      %v5622 = vadd.f32 0.0, %v5621
      %5623 = vmatprep.mubr.bf16.mxu0 0
      %5624 = vmatmul.mubr.bf16.gmra.mrb[0].mxu0 %v5526
      %v5625 = vpop.f32.mrb[0].mxu0
      %v5626 = vadd.f32 0.0, %v5625
      %v5627 = vpop.f32.mrb[0].mxu0
      %v5628 = vadd.f32 0.0, %v5627
      %v5629 = vpop.f32.mrb[0].mxu0
      %v5630 = vadd.f32 0.0, %v5629
      %v5631 = vpop.f32.mrb[0].mxu0
      %v5632 = vadd.f32 0.0, %v5631
      %5633 = vmatprep.mubr.bf16.mxu0 0
      %5634 = vmatmul.mubr.bf16.gmra.mrb[0].mxu0 %v5529
      %v5635 = vpop.f32.mrb[0].mxu0
      %v5636 = vadd.f32 0.0, %v5635
      %v5637 = vpop.f32.mrb[0].mxu0
      %v5638 = vadd.f32 0.0, %v5637
      %v5639 = vpop.f32.mrb[0].mxu0
      %v5640 = vadd.f32 0.0, %v5639
      %v5641 = vpop.f32.mrb[0].mxu0
      %v5642 = vadd.f32 0.0, %v5641
      %5643 = vdwg.mxu0
      %5660 = vrot.lane.b32.xlu0 %v5566, 112
      %v5661 = vpop.permute.xlu0 %5660
      %5662 = vrot.lane.b32.xlu0 %v5570, 112
      %v5663 = vpop.permute.xlu0 %5662
      %5664 = vrot.lane.b32.xlu0 %v5576, 112
      %v5665 = vpop.permute.xlu0 %5664
      %5666 = vrot.lane.b32.xlu0 %v5580, 112
      %v5667 = vpop.permute.xlu0 %5666
      %5668 = vrot.lane.b32.xlu0 %v5586, 112
      %v5669 = vpop.permute.xlu0 %5668
      %5670 = vrot.lane.b32.xlu0 %v5590, 112
      %v5671 = vpop.permute.xlu0 %5670
      %5672 = vrot.lane.b32.xlu0 %v5596, 112
      %v5673 = vpop.permute.xlu0 %5672
      %5674 = vrot.lane.b32.xlu0 %v5600, 112
      %v5675 = vpop.permute.xlu0 %5674
      %5676 = vrot.lane.b32.xlu0 %v5606, 112
      %v5677 = vpop.permute.xlu0 %5676
      %5678 = vrot.lane.b32.xlu0 %v5610, 112
      %v5679 = vpop.permute.xlu0 %5678
      %5680 = vrot.lane.b32.xlu0 %v5616, 112
      %v5681 = vpop.permute.xlu0 %5680
      %5682 = vrot.lane.b32.xlu0 %v5620, 112
      %v5683 = vpop.permute.xlu0 %5682
      %5684 = vrot.lane.b32.xlu0 %v5626, 112
      %v5685 = vpop.permute.xlu0 %5684
      %5686 = vrot.lane.b32.xlu0 %v5630, 112
      %v5687 = vpop.permute.xlu0 %5686
      %5688 = vrot.lane.b32.xlu0 %v5636, 112
      %v5689 = vpop.permute.xlu0 %5688
      %5690 = vrot.lane.b32.xlu0 %v5640, 112
      %v5691 = vpop.permute.xlu0 %5690
      %v5708 = vmax.f32 %v5566, %v5661
      %v5709 = vmax.f32 %v5570, %v5663
      %v5710 = vmax.f32 %v5576, %v5665
      %v5711 = vmax.f32 %v5580, %v5667
      %v5712 = vmax.f32 %v5586, %v5669
      %v5713 = vmax.f32 %v5590, %v5671
      %v5714 = vmax.f32 %v5596, %v5673
      %v5715 = vmax.f32 %v5600, %v5675
      %v5716 = vmax.f32 %v5606, %v5677
      %v5717 = vmax.f32 %v5610, %v5679
      %v5718 = vmax.f32 %v5616, %v5681
      %v5719 = vmax.f32 %v5620, %v5683
      %v5720 = vmax.f32 %v5626, %v5685
      %v5721 = vmax.f32 %v5630, %v5687
      %v5722 = vmax.f32 %v5636, %v5689
      %v5723 = vmax.f32 %v5640, %v5691
      %5724 = vrot.lane.b32.xlu0 %v5566, 96
      %v5725 = vpop.permute.xlu0 %5724
      %5726 = vrot.lane.b32.xlu0 %v5570, 96
      %v5727 = vpop.permute.xlu0 %5726
      %5728 = vrot.lane.b32.xlu0 %v5576, 96
      %v5729 = vpop.permute.xlu0 %5728
      %5730 = vrot.lane.b32.xlu0 %v5580, 96
      %v5731 = vpop.permute.xlu0 %5730
      %5732 = vrot.lane.b32.xlu0 %v5586, 96
      %v5733 = vpop.permute.xlu0 %5732
      %5734 = vrot.lane.b32.xlu0 %v5590, 96
      %v5735 = vpop.permute.xlu0 %5734
      %5736 = vrot.lane.b32.xlu0 %v5596, 96
      %v5737 = vpop.permute.xlu0 %5736
      %5738 = vrot.lane.b32.xlu0 %v5600, 96
      %v5739 = vpop.permute.xlu0 %5738
      %5740 = vrot.lane.b32.xlu0 %v5606, 96
      %v5741 = vpop.permute.xlu0 %5740
      %5742 = vrot.lane.b32.xlu0 %v5610, 96
      %v5743 = vpop.permute.xlu0 %5742
      %5744 = vrot.lane.b32.xlu0 %v5616, 96
      %v5745 = vpop.permute.xlu0 %5744
      %5746 = vrot.lane.b32.xlu0 %v5620, 96
      %v5747 = vpop.permute.xlu0 %5746
      %5748 = vrot.lane.b32.xlu0 %v5626, 96
      %v5749 = vpop.permute.xlu0 %5748
      %5750 = vrot.lane.b32.xlu0 %v5630, 96
      %v5751 = vpop.permute.xlu0 %5750
      %5752 = vrot.lane.b32.xlu0 %v5636, 96
      %v5753 = vpop.permute.xlu0 %5752
      %5754 = vrot.lane.b32.xlu0 %v5640, 96
      %v5755 = vpop.permute.xlu0 %5754
      %v5772 = vmax.f32 %v5708, %v5725
      %v5773 = vmax.f32 %v5709, %v5727
      %v5774 = vmax.f32 %v5710, %v5729
      %v5775 = vmax.f32 %v5711, %v5731
      %v5776 = vmax.f32 %v5712, %v5733
      %v5777 = vmax.f32 %v5713, %v5735
      %v5778 = vmax.f32 %v5714, %v5737
      %v5779 = vmax.f32 %v5715, %v5739
      %v5780 = vmax.f32 %v5716, %v5741
      %v5781 = vmax.f32 %v5717, %v5743
      %v5782 = vmax.f32 %v5718, %v5745
      %v5783 = vmax.f32 %v5719, %v5747
      %v5784 = vmax.f32 %v5720, %v5749
      %v5785 = vmax.f32 %v5721, %v5751
      %v5786 = vmax.f32 %v5722, %v5753
      %v5787 = vmax.f32 %v5723, %v5755
      %5788 = vrot.lane.b32.xlu0 %v5566, 80
      %v5789 = vpop.permute.xlu0 %5788
      %5790 = vrot.lane.b32.xlu0 %v5570, 80
      %v5791 = vpop.permute.xlu0 %5790
      %5792 = vrot.lane.b32.xlu0 %v5576, 80
      %v5793 = vpop.permute.xlu0 %5792
      %5794 = vrot.lane.b32.xlu0 %v5580, 80
      %v5795 = vpop.permute.xlu0 %5794
      %5796 = vrot.lane.b32.xlu0 %v5586, 80
      %v5797 = vpop.permute.xlu0 %5796
      %5798 = vrot.lane.b32.xlu0 %v5590, 80
      %v5799 = vpop.permute.xlu0 %5798
      %5800 = vrot.lane.b32.xlu0 %v5596, 80
      %v5801 = vpop.permute.xlu0 %5800
      %5802 = vrot.lane.b32.xlu0 %v5600, 80
      %v5803 = vpop.permute.xlu0 %5802
      %5804 = vrot.lane.b32.xlu0 %v5606, 80
      %v5805 = vpop.permute.xlu0 %5804
      %5806 = vrot.lane.b32.xlu0 %v5610, 80
      %v5807 = vpop.permute.xlu0 %5806
      %5808 = vrot.lane.b32.xlu0 %v5616, 80
      %v5809 = vpop.permute.xlu0 %5808
      %5810 = vrot.lane.b32.xlu0 %v5620, 80
      %v5811 = vpop.permute.xlu0 %5810
      %5812 = vrot.lane.b32.xlu0 %v5626, 80
      %v5813 = vpop.permute.xlu0 %5812
      %5814 = vrot.lane.b32.xlu0 %v5630, 80
      %v5815 = vpop.permute.xlu0 %5814
      %5816 = vrot.lane.b32.xlu0 %v5636, 80
      %v5817 = vpop.permute.xlu0 %5816
      %5818 = vrot.lane.b32.xlu0 %v5640, 80
      %v5819 = vpop.permute.xlu0 %5818
      %v5836 = vmax.f32 %v5772, %v5789
      %v5837 = vmax.f32 %v5773, %v5791
      %v5838 = vmax.f32 %v5774, %v5793
      %v5839 = vmax.f32 %v5775, %v5795
      %v5840 = vmax.f32 %v5776, %v5797
      %v5841 = vmax.f32 %v5777, %v5799
      %v5842 = vmax.f32 %v5778, %v5801
      %v5843 = vmax.f32 %v5779, %v5803
      %v5844 = vmax.f32 %v5780, %v5805
      %v5845 = vmax.f32 %v5781, %v5807
      %v5846 = vmax.f32 %v5782, %v5809
      %v5847 = vmax.f32 %v5783, %v5811
      %v5848 = vmax.f32 %v5784, %v5813
      %v5849 = vmax.f32 %v5785, %v5815
      %v5850 = vmax.f32 %v5786, %v5817
      %v5851 = vmax.f32 %v5787, %v5819
      %5852 = vrot.lane.b32.xlu0 %v5566, 64
      %v5853 = vpop.permute.xlu0 %5852
      %5854 = vrot.lane.b32.xlu0 %v5570, 64
      %v5855 = vpop.permute.xlu0 %5854
      %5856 = vrot.lane.b32.xlu0 %v5576, 64
      %v5857 = vpop.permute.xlu0 %5856
      %5858 = vrot.lane.b32.xlu0 %v5580, 64
      %v5859 = vpop.permute.xlu0 %5858
      %5860 = vrot.lane.b32.xlu0 %v5586, 64
      %v5861 = vpop.permute.xlu0 %5860
      %5862 = vrot.lane.b32.xlu0 %v5590, 64
      %v5863 = vpop.permute.xlu0 %5862
      %5864 = vrot.lane.b32.xlu0 %v5596, 64
      %v5865 = vpop.permute.xlu0 %5864
      %5866 = vrot.lane.b32.xlu0 %v5600, 64
      %v5867 = vpop.permute.xlu0 %5866
      %5868 = vrot.lane.b32.xlu0 %v5606, 64
      %v5869 = vpop.permute.xlu0 %5868
      %5870 = vrot.lane.b32.xlu0 %v5610, 64
      %v5871 = vpop.permute.xlu0 %5870
      %5872 = vrot.lane.b32.xlu0 %v5616, 64
      %v5873 = vpop.permute.xlu0 %5872
      %5874 = vrot.lane.b32.xlu0 %v5620, 64
      %v5875 = vpop.permute.xlu0 %5874
      %5876 = vrot.lane.b32.xlu0 %v5626, 64
      %v5877 = vpop.permute.xlu0 %5876
      %5878 = vrot.lane.b32.xlu0 %v5630, 64
      %v5879 = vpop.permute.xlu0 %5878
      %5880 = vrot.lane.b32.xlu0 %v5636, 64
      %v5881 = vpop.permute.xlu0 %5880
      %5882 = vrot.lane.b32.xlu0 %v5640, 64
      %v5883 = vpop.permute.xlu0 %5882
      %v5900 = vmax.f32 %v5836, %v5853
      %v5901 = vmax.f32 %v5837, %v5855
      %v5902 = vmax.f32 %v5838, %v5857
      %v5903 = vmax.f32 %v5839, %v5859
      %v5904 = vmax.f32 %v5840, %v5861
      %v5905 = vmax.f32 %v5841, %v5863
      %v5906 = vmax.f32 %v5842, %v5865
      %v5907 = vmax.f32 %v5843, %v5867
      %v5908 = vmax.f32 %v5844, %v5869
      %v5909 = vmax.f32 %v5845, %v5871
      %v5910 = vmax.f32 %v5846, %v5873
      %v5911 = vmax.f32 %v5847, %v5875
      %v5912 = vmax.f32 %v5848, %v5877
      %v5913 = vmax.f32 %v5849, %v5879
      %v5914 = vmax.f32 %v5850, %v5881
      %v5915 = vmax.f32 %v5851, %v5883
      %5916 = vrot.lane.b32.xlu0 %v5566, 48
      %v5917 = vpop.permute.xlu0 %5916
      %5918 = vrot.lane.b32.xlu0 %v5570, 48
      %v5919 = vpop.permute.xlu0 %5918
      %5920 = vrot.lane.b32.xlu0 %v5576, 48
      %v5921 = vpop.permute.xlu0 %5920
      %5922 = vrot.lane.b32.xlu0 %v5580, 48
      %v5923 = vpop.permute.xlu0 %5922
      %5924 = vrot.lane.b32.xlu0 %v5586, 48
      %v5925 = vpop.permute.xlu0 %5924
      %5926 = vrot.lane.b32.xlu0 %v5590, 48
      %v5927 = vpop.permute.xlu0 %5926
      %5928 = vrot.lane.b32.xlu0 %v5596, 48
      %v5929 = vpop.permute.xlu0 %5928
      %5930 = vrot.lane.b32.xlu0 %v5600, 48
      %v5931 = vpop.permute.xlu0 %5930
      %5932 = vrot.lane.b32.xlu0 %v5606, 48
      %v5933 = vpop.permute.xlu0 %5932
      %5934 = vrot.lane.b32.xlu0 %v5610, 48
      %v5935 = vpop.permute.xlu0 %5934
      %5936 = vrot.lane.b32.xlu0 %v5616, 48
      %v5937 = vpop.permute.xlu0 %5936
      %5938 = vrot.lane.b32.xlu0 %v5620, 48
      %v5939 = vpop.permute.xlu0 %5938
      %5940 = vrot.lane.b32.xlu0 %v5626, 48
      %v5941 = vpop.permute.xlu0 %5940
      %5942 = vrot.lane.b32.xlu0 %v5630, 48
      %v5943 = vpop.permute.xlu0 %5942
      %5944 = vrot.lane.b32.xlu0 %v5636, 48
      %v5945 = vpop.permute.xlu0 %5944
      %5946 = vrot.lane.b32.xlu0 %v5640, 48
      %v5947 = vpop.permute.xlu0 %5946
      %v5964 = vmax.f32 %v5900, %v5917
      %v5965 = vmax.f32 %v5901, %v5919
      %v5966 = vmax.f32 %v5902, %v5921
      %v5967 = vmax.f32 %v5903, %v5923
      %v5968 = vmax.f32 %v5904, %v5925
      %v5969 = vmax.f32 %v5905, %v5927
      %v5970 = vmax.f32 %v5906, %v5929
      %v5971 = vmax.f32 %v5907, %v5931
      %v5972 = vmax.f32 %v5908, %v5933
      %v5973 = vmax.f32 %v5909, %v5935
      %v5974 = vmax.f32 %v5910, %v5937
      %v5975 = vmax.f32 %v5911, %v5939
      %v5976 = vmax.f32 %v5912, %v5941
      %v5977 = vmax.f32 %v5913, %v5943
      %v5978 = vmax.f32 %v5914, %v5945
      %v5979 = vmax.f32 %v5915, %v5947
      %5980 = vrot.lane.b32.xlu0 %v5566, 32
      %v5981 = vpop.permute.xlu0 %5980
      %5982 = vrot.lane.b32.xlu0 %v5570, 32
      %v5983 = vpop.permute.xlu0 %5982
      %5984 = vrot.lane.b32.xlu0 %v5576, 32
      %v5985 = vpop.permute.xlu0 %5984
      %5986 = vrot.lane.b32.xlu0 %v5580, 32
      %v5987 = vpop.permute.xlu0 %5986
      %5988 = vrot.lane.b32.xlu0 %v5586, 32
      %v5989 = vpop.permute.xlu0 %5988
      %5990 = vrot.lane.b32.xlu0 %v5590, 32
      %v5991 = vpop.permute.xlu0 %5990
      %5992 = vrot.lane.b32.xlu0 %v5596, 32
      %v5993 = vpop.permute.xlu0 %5992
      %5994 = vrot.lane.b32.xlu0 %v5600, 32
      %v5995 = vpop.permute.xlu0 %5994
      %5996 = vrot.lane.b32.xlu0 %v5606, 32
      %v5997 = vpop.permute.xlu0 %5996
      %5998 = vrot.lane.b32.xlu0 %v5610, 32
      %v5999 = vpop.permute.xlu0 %5998
      %6000 = vrot.lane.b32.xlu0 %v5616, 32
      %v6001 = vpop.permute.xlu0 %6000
      %6002 = vrot.lane.b32.xlu0 %v5620, 32
      %v6003 = vpop.permute.xlu0 %6002
      %6004 = vrot.lane.b32.xlu0 %v5626, 32
      %v6005 = vpop.permute.xlu0 %6004
      %6006 = vrot.lane.b32.xlu0 %v5630, 32
      %v6007 = vpop.permute.xlu0 %6006
      %6008 = vrot.lane.b32.xlu0 %v5636, 32
      %v6009 = vpop.permute.xlu0 %6008
      %6010 = vrot.lane.b32.xlu0 %v5640, 32
      %v6011 = vpop.permute.xlu0 %6010
      %v6028 = vmax.f32 %v5964, %v5981
      %v6029 = vmax.f32 %v5965, %v5983
      %v6030 = vmax.f32 %v5966, %v5985
      %v6031 = vmax.f32 %v5967, %v5987
      %v6032 = vmax.f32 %v5968, %v5989
      %v6033 = vmax.f32 %v5969, %v5991
      %v6034 = vmax.f32 %v5970, %v5993
      %v6035 = vmax.f32 %v5971, %v5995
      %v6036 = vmax.f32 %v5972, %v5997
      %v6037 = vmax.f32 %v5973, %v5999
      %v6038 = vmax.f32 %v5974, %v6001
      %v6039 = vmax.f32 %v5975, %v6003
      %v6040 = vmax.f32 %v5976, %v6005
      %v6041 = vmax.f32 %v5977, %v6007
      %v6042 = vmax.f32 %v5978, %v6009
      %v6043 = vmax.f32 %v5979, %v6011
      %6044 = vrot.lane.b32.xlu0 %v5566, 16
      %v6045 = vpop.permute.xlu0 %6044
      %6046 = vrot.lane.b32.xlu0 %v5570, 16
      %v6047 = vpop.permute.xlu0 %6046
      %6048 = vrot.lane.b32.xlu0 %v5576, 16
      %v6049 = vpop.permute.xlu0 %6048
      %6050 = vrot.lane.b32.xlu0 %v5580, 16
      %v6051 = vpop.permute.xlu0 %6050
      %6052 = vrot.lane.b32.xlu0 %v5586, 16
      %v6053 = vpop.permute.xlu0 %6052
      %6054 = vrot.lane.b32.xlu0 %v5590, 16
      %v6055 = vpop.permute.xlu0 %6054
      %6056 = vrot.lane.b32.xlu0 %v5596, 16
      %v6057 = vpop.permute.xlu0 %6056
      %6058 = vrot.lane.b32.xlu0 %v5600, 16
      %v6059 = vpop.permute.xlu0 %6058
      %6060 = vrot.lane.b32.xlu0 %v5606, 16
      %v6061 = vpop.permute.xlu0 %6060
      %6062 = vrot.lane.b32.xlu0 %v5610, 16
      %v6063 = vpop.permute.xlu0 %6062
      %6064 = vrot.lane.b32.xlu0 %v5616, 16
      %v6065 = vpop.permute.xlu0 %6064
      %6066 = vrot.lane.b32.xlu0 %v5620, 16
      %v6067 = vpop.permute.xlu0 %6066
      %6068 = vrot.lane.b32.xlu0 %v5626, 16
      %v6069 = vpop.permute.xlu0 %6068
      %6070 = vrot.lane.b32.xlu0 %v5630, 16
      %v6071 = vpop.permute.xlu0 %6070
      %6072 = vrot.lane.b32.xlu0 %v5636, 16
      %v6073 = vpop.permute.xlu0 %6072
      %6074 = vrot.lane.b32.xlu0 %v5640, 16
      %v6075 = vpop.permute.xlu0 %6074
      %v6092 = vmax.f32 %v6028, %v6045
      %v6093 = vmax.f32 %v6029, %v6047
      %v6094 = vmax.f32 %v6030, %v6049
      %v6095 = vmax.f32 %v6031, %v6051
      %v6096 = vmax.f32 %v6032, %v6053
      %v6097 = vmax.f32 %v6033, %v6055
      %v6098 = vmax.f32 %v6034, %v6057
      %v6099 = vmax.f32 %v6035, %v6059
      %v6100 = vmax.f32 %v6036, %v6061
      %v6101 = vmax.f32 %v6037, %v6063
      %v6102 = vmax.f32 %v6038, %v6065
      %v6103 = vmax.f32 %v6039, %v6067
      %v6104 = vmax.f32 %v6040, %v6069
      %v6105 = vmax.f32 %v6041, %v6071
      %v6106 = vmax.f32 %v6042, %v6073
      %v6107 = vmax.f32 %v6043, %v6075
      %v6108 = vmax.f32 %v6092, %v5568
      %v6109 = vmax.f32 %v6093, %v5572
      %v6110 = vmax.f32 %v6094, %v5578
      %v6111 = vmax.f32 %v6095, %v5582
      %v6112 = vmax.f32 %v6096, %v5588
      %v6113 = vmax.f32 %v6097, %v5592
      %v6114 = vmax.f32 %v6098, %v5598
      %v6115 = vmax.f32 %v6099, %v5602
      %v6116 = vmax.f32 %v6100, %v5608
      %v6117 = vmax.f32 %v6101, %v5612
      %v6118 = vmax.f32 %v6102, %v5618
      %v6119 = vmax.f32 %v6103, %v5622
      %v6120 = vmax.f32 %v6104, %v5628
      %v6121 = vmax.f32 %v6105, %v5632
      %v6122 = vmax.f32 %v6106, %v5638
      %v6123 = vmax.f32 %v6107, %v5642
      %v6124 = vld [vmem:[%s8] sm:$0xf]
      %v6125 = vld [vmem:[%s8 + $0x4] sm:$0xf]
      %v6126 = vld [vmem:[%s8 + $0x8] sm:$0xf]
      %v6127 = vld [vmem:[%s8 + $0xc] sm:$0xf]
      %v6128 = vld [vmem:[%s8 + $0x10] sm:$0xf]
      %v6129 = vld [vmem:[%s8 + $0x14] sm:$0xf]
      %v6130 = vld [vmem:[%s8 + $0x18] sm:$0xf]
      %v6131 = vld [vmem:[%s8 + $0x1c] sm:$0xf]
      %v6132 = vpack.c.bf16 %v6109, %v6108
      %v6133 = vpack.c.bf16 %v6111, %v6110
      %v6134 = vpack.c.bf16 %v6113, %v6112
      %v6135 = vpack.c.bf16 %v6115, %v6114
      %v6136 = vpack.c.bf16 %v6117, %v6116
      %v6137 = vpack.c.bf16 %v6119, %v6118
      %v6138 = vpack.c.bf16 %v6121, %v6120
      %v6139 = vpack.c.bf16 %v6123, %v6122
      %v6140 = vld [vmem:[%s9] sm:$0xff]
      %v6141 = vld [vmem:[%s9 + $0x8] sm:$0xff]
      %v6142 = vld [vmem:[%s9 + $0x10] sm:$0xff]
      %v6143 = vld [vmem:[%s9 + $0x18] sm:$0xff]
      %v6144 = vld [vmem:[%s9 + $0x20] sm:$0xff]
      %v6145 = vld [vmem:[%s9 + $0x28] sm:$0xff]
      %v6146 = vld [vmem:[%s9 + $0x30] sm:$0xff]
      %v6147 = vld [vmem:[%s9 + $0x38] sm:$0xff]
      %6149 = vset.pattern.permute.xlu0 0
      %6150 = vperm.xlu0 %6149, %v6140
      %v6151 = vpop.permute.xlu0 %6150
      %6154 = vset.pattern.permute.xlu0 0
      %6155 = vperm.xlu0 %6154, %v6141
      %v6156 = vpop.permute.xlu0 %6155
      %6159 = vset.pattern.permute.xlu0 0
      %6160 = vperm.xlu0 %6159, %v6142
      %v6161 = vpop.permute.xlu0 %6160
      %6164 = vset.pattern.permute.xlu0 0
      %6165 = vperm.xlu0 %6164, %v6143
      %v6166 = vpop.permute.xlu0 %6165
      %6169 = vset.pattern.permute.xlu0 0
      %6170 = vperm.xlu0 %6169, %v6144
      %v6171 = vpop.permute.xlu0 %6170
      %6174 = vset.pattern.permute.xlu0 0
      %6175 = vperm.xlu0 %6174, %v6145
      %v6176 = vpop.permute.xlu0 %6175
      %6179 = vset.pattern.permute.xlu0 0
      %6180 = vperm.xlu0 %6179, %v6146
      %v6181 = vpop.permute.xlu0 %6180
      %6184 = vset.pattern.permute.xlu0 0
      %6185 = vperm.xlu0 %6184, %v6147
      %v6186 = vpop.permute.xlu0 %6185
      %v6196 = vunpack.c.l.b16 %v6124
      %v6197 = vunpack.c.l.b16 %v6125
      %v6198 = vunpack.c.l.b16 %v6126
      %v6199 = vunpack.c.l.b16 %v6127
      %v6200 = vunpack.c.l.b16 %v6128
      %v6201 = vunpack.c.l.b16 %v6129
      %v6202 = vunpack.c.l.b16 %v6130
      %v6203 = vunpack.c.l.b16 %v6131
      %v6204 = vpack.c.b16 %v6197, %v6196
      %v6205 = vpack.c.b16 %v6199, %v6198
      %v6206 = vpack.c.b16 %v6201, %v6200
      %v6207 = vpack.c.b16 %v6203, %v6202
      %6212 = vmatprep.subr.bf16.mxu0 0
      %6213 = vmatpush1.bf16.msra.mxu0 %v6132
      %6214 = vmatprep.subr.bf16.mxu0 0
      %6215 = vmatpush1.bf16.msra.mxu0 %v6133
      %6216 = vmatprep.subr.bf16.mxu0 0
      %6217 = vmatpush1.bf16.msra.mxu0 %v6134
      %6218 = vmatprep.subr.bf16.mxu0 0
      %6219 = vmatpush1.bf16.msra.mxu0 %v6135
      %6220 = vmatprep.subr.bf16.mxu0 0
      %6221 = vmatpush1.bf16.msra.mxu0 %v6136
      %6222 = vmatprep.subr.bf16.mxu0 0
      %6223 = vmatpush1.bf16.msra.mxu0 %v6137
      %6224 = vmatprep.subr.bf16.mxu0 0
      %6225 = vmatpush1.bf16.msra.mxu0 %v6138
      %6226 = vmatprep.subr.bf16.mxu0 0
      %6227 = vmatpush1.bf16.msra.mxu0 %v6139
      %6228 = vmatprep.subr.bf16.mxu0 0
      %6229 = vmatpush1.bf16.msra.mxu0 0
      %6230 = vmatprep.subr.bf16.mxu0 0
      %6231 = vmatpush1.bf16.msra.mxu0 0
      %6232 = vmatprep.subr.bf16.mxu0 0
      %6233 = vmatpush1.bf16.msra.mxu0 0
      %6234 = vmatprep.subr.bf16.mxu0 0
      %6235 = vmatpush1.bf16.msra.mxu0 0
      %6236 = vmatprep.subr.bf16.mxu0 0
      %6237 = vmatpush1.bf16.msra.mxu0 0
      %6238 = vmatprep.subr.bf16.mxu0 0
      %6239 = vmatpush1.bf16.msra.mxu0 0
      %6240 = vmatprep.subr.bf16.mxu0 0
      %6241 = vmatpush1.bf16.msra.mxu0 0
      %6242 = vmatprep.subr.bf16.mxu0 0
      %6243 = vmatpush1.bf16.msra.mxu0 0
      %6244 = vmatprep.mubr.bf16.mxu0 0
      %6245 = vmatmul.mubr.bf16.gmra.mrb[0].mxu0 %v6204
      %v6246 = vpop.f32.mrb[0].mxu0
      %v6247 = vadd.f32 %v6151, %v6246
      %v6248 = vpop.f32.mrb[0].mxu0
      %v6249 = vpop.f32.mrb[0].mxu0
      %v6250 = vadd.f32 %v6156, %v6249
      %v6251 = vpop.f32.mrb[0].mxu0
      %6252 = vmatprep.mubr.bf16.mxu0 0
      %6253 = vmatmul.mubr.bf16.gmra.mrb[0].mxu0 %v6205
      %v6254 = vpop.f32.mrb[0].mxu0
      %v6255 = vadd.f32 %v6161, %v6254
      %v6256 = vpop.f32.mrb[0].mxu0
      %v6257 = vpop.f32.mrb[0].mxu0
      %v6258 = vadd.f32 %v6166, %v6257
      %v6259 = vpop.f32.mrb[0].mxu0
      %6260 = vmatprep.mubr.bf16.mxu0 0
      %6261 = vmatmul.mubr.bf16.gmra.mrb[0].mxu0 %v6206
      %v6262 = vpop.f32.mrb[0].mxu0
      %v6263 = vadd.f32 %v6171, %v6262
      %v6264 = vpop.f32.mrb[0].mxu0
      %v6265 = vpop.f32.mrb[0].mxu0
      %v6266 = vadd.f32 %v6176, %v6265
      %v6267 = vpop.f32.mrb[0].mxu0
      %6268 = vmatprep.mubr.bf16.mxu0 0
      %6269 = vmatmul.mubr.bf16.gmra.mrb[0].mxu0 %v6207
      %v6270 = vpop.f32.mrb[0].mxu0
      %v6271 = vadd.f32 %v6181, %v6270
      %v6272 = vpop.f32.mrb[0].mxu0
      %v6273 = vpop.f32.mrb[0].mxu0
      %v6274 = vadd.f32 %v6186, %v6273
      %v6275 = vpop.f32.mrb[0].mxu0
      %6276 = vdwg.mxu0
      %v6277 = vmax.f32 %v6247, 0.0
      %v6278 = vmax.f32 %v6250, 0.0
      %v6279 = vmax.f32 %v6255, 0.0
      %v6280 = vmax.f32 %v6258, 0.0
      %v6281 = vmax.f32 %v6263, 0.0
      %v6282 = vmax.f32 %v6266, 0.0
      %v6283 = vmax.f32 %v6271, 0.0
      %v6284 = vmax.f32 %v6274, 0.0
      %v6285 = vpack.c.bf16 %v6278, %v6277
      %v6286 = vpack.c.bf16 %v6280, %v6279
      %v6287 = vpack.c.bf16 %v6282, %v6281
      %v6288 = vpack.c.bf16 %v6284, %v6283
      %v6289 = vld [vmem:[%s10] sm:$0xff]
      %v6290 = vld [vmem:[%s10 + $0x8] sm:$0xff]
      %v6293 = vunpack.c.l.b16 %v6289
      %v6294 = vunpack.c.h.b16 %v6289
      %v6295 = vunpack.c.l.b16 %v6290
      %v6296 = vunpack.c.h.b16 %v6290
      %v6297 = vpack.c.b16 %v6295, %v6293
      %v6298 = vpack.c.b16 %v6296, %v6294
      %vm6301 = vcmask 130048
      %v6303 = vsel %vm6301, %v6285, 0
      %v6306 = vsel %vm6301, %v6286, 0
      %v6309 = vsel %vm6301, %v6287, 0
      %v6312 = vsel %vm6301, %v6288, 0
      %6314 = vmatprep.subr.bf16.mxu0 %v6298
      %6315 = vmatpush1.bf16.msra.mxu0 %v6297
      %6316 = vmatprep.subr.bf16.mxu0 0
      %6317 = vmatpush1.bf16.msra.mxu0 0
      %6318 = vmatprep.subr.bf16.mxu0 0
      %6319 = vmatpush1.bf16.msra.mxu0 0
      %6320 = vmatprep.subr.bf16.mxu0 0
      %6321 = vmatpush1.bf16.msra.mxu0 0
      %6322 = vmatprep.subr.bf16.mxu0 0
      %6323 = vmatpush1.bf16.msra.mxu0 0
      %6324 = vmatprep.subr.bf16.mxu0 0
      %6325 = vmatpush1.bf16.msra.mxu0 0
      %6326 = vmatprep.subr.bf16.mxu0 0
      %6327 = vmatpush1.bf16.msra.mxu0 0
      %6328 = vmatprep.subr.bf16.mxu0 0
      %6329 = vmatpush1.bf16.msra.mxu0 0
      %6330 = vmatprep.subr.bf16.mxu0 0
      %6331 = vmatpush1.bf16.msra.mxu0 0
      %6332 = vmatprep.subr.bf16.mxu0 0
      %6333 = vmatpush1.bf16.msra.mxu0 0
      %6334 = vmatprep.subr.bf16.mxu0 0
      %6335 = vmatpush1.bf16.msra.mxu0 0
      %6336 = vmatprep.subr.bf16.mxu0 0
      %6337 = vmatpush1.bf16.msra.mxu0 0
      %6338 = vmatprep.subr.bf16.mxu0 0
      %6339 = vmatpush1.bf16.msra.mxu0 0
      %6340 = vmatprep.subr.bf16.mxu0 0
      %6341 = vmatpush1.bf16.msra.mxu0 0
      %6342 = vmatprep.subr.bf16.mxu0 0
      %6343 = vmatpush1.bf16.msra.mxu0 0
      %6344 = vmatprep.subr.bf16.mxu0 0
      %6345 = vmatpush1.bf16.msra.mxu0 0
      %6346 = vmatprep.mubr.bf16.mxu0 0
      %6347 = vmatmul.mubr.bf16.gmra.mrb[0].mxu0 %v6303
      %v6348 = vpop.f32.mrb[0].mxu0
      %v6349 = vadd.f32 0.0, %v6348
      %v6350 = vpop.f32.mrb[0].mxu0
      %v6351 = vadd.f32 0.0, %v6350
      %v6352 = vpop.f32.mrb[0].mxu0
      %v6353 = vadd.f32 0.0, %v6352
      %v6354 = vpop.f32.mrb[0].mxu0
      %v6355 = vadd.f32 0.0, %v6354
      %6356 = vmatprep.mubr.bf16.mxu0 0
      %6357 = vmatmul.mubr.bf16.gmra.mrb[0].mxu0 %v6306
      %v6358 = vpop.f32.mrb[0].mxu0
      %v6359 = vadd.f32 0.0, %v6358
      %v6360 = vpop.f32.mrb[0].mxu0
      %v6361 = vadd.f32 0.0, %v6360
      %v6362 = vpop.f32.mrb[0].mxu0
      %v6363 = vadd.f32 0.0, %v6362
      %v6364 = vpop.f32.mrb[0].mxu0
      %v6365 = vadd.f32 0.0, %v6364
      %6366 = vmatprep.mubr.bf16.mxu0 0
      %6367 = vmatmul.mubr.bf16.gmra.mrb[0].mxu0 %v6309
      %v6368 = vpop.f32.mrb[0].mxu0
      %v6369 = vadd.f32 0.0, %v6368
      %v6370 = vpop.f32.mrb[0].mxu0
      %v6371 = vadd.f32 0.0, %v6370
      %v6372 = vpop.f32.mrb[0].mxu0
      %v6373 = vadd.f32 0.0, %v6372
      %v6374 = vpop.f32.mrb[0].mxu0
      %v6375 = vadd.f32 0.0, %v6374
      %6376 = vmatprep.mubr.bf16.mxu0 0
      %6377 = vmatmul.mubr.bf16.gmra.mrb[0].mxu0 %v6312
      %v6378 = vpop.f32.mrb[0].mxu0
      %v6379 = vadd.f32 0.0, %v6378
      %v6380 = vpop.f32.mrb[0].mxu0
      %v6381 = vadd.f32 0.0, %v6380
      %v6382 = vpop.f32.mrb[0].mxu0
      %v6383 = vadd.f32 0.0, %v6382
      %v6384 = vpop.f32.mrb[0].mxu0
      %v6385 = vadd.f32 0.0, %v6384
      %6386 = vdwg.mxu0
      %v6387 = vpack.c.bf16 %v6353, %v6349
      %v6388 = vpack.c.bf16 %v6363, %v6359
      %v6389 = vpack.c.bf16 %v6373, %v6369
      %v6390 = vpack.c.bf16 %v6383, %v6379
      %6391 = vst.msk [vmem:[#allocation3] sm:$0xff] %vm6301, %v6387
      %6392 = vst.msk [vmem:[#allocation3 + $0x8] sm:$0xff] %vm6301, %v6388
      %6393 = vst.msk [vmem:[#allocation3 + $0x10] sm:$0xff] %vm6301, %v6389
      %6394 = vst.msk [vmem:[#allocation3 + $0x18] sm:$0xff] %vm6301, %v6390
      %6399 = vrot.lane.b32.xlu0 %v6387, 112
      %v6400 = vpop.permute.xlu0 %6399
      %6401 = vrot.lane.b32.xlu0 %v6388, 112
      %v6402 = vpop.permute.xlu0 %6401
      %6403 = vrot.lane.b32.xlu0 %v6389, 112
      %v6404 = vpop.permute.xlu0 %6403
      %6405 = vrot.lane.b32.xlu0 %v6390, 112
      %v6406 = vpop.permute.xlu0 %6405
      %6411 = vst.msk [vmem:[#allocation3 + $0x20] sm:$0xff] %vm6301, %v6400
      %6412 = vst.msk [vmem:[#allocation3 + $0x28] sm:$0xff] %vm6301, %v6402
      %6413 = vst.msk [vmem:[#allocation3 + $0x30] sm:$0xff] %vm6301, %v6404
      %6414 = vst.msk [vmem:[#allocation3 + $0x38] sm:$0xff] %vm6301, %v6406
      %6415 = vrot.lane.b32.xlu0 %v6387, 96
      %v6416 = vpop.permute.xlu0 %6415
      %6417 = vrot.lane.b32.xlu0 %v6388, 96
      %v6418 = vpop.permute.xlu0 %6417
      %6419 = vrot.lane.b32.xlu0 %v6389, 96
      %v6420 = vpop.permute.xlu0 %6419
      %6421 = vrot.lane.b32.xlu0 %v6390, 96
      %v6422 = vpop.permute.xlu0 %6421
      %6427 = vst.msk [vmem:[#allocation3 + $0x40] sm:$0xff] %vm6301, %v6416
      %6428 = vst.msk [vmem:[#allocation3 + $0x48] sm:$0xff] %vm6301, %v6418
      %6429 = vst.msk [vmem:[#allocation3 + $0x50] sm:$0xff] %vm6301, %v6420
      %6430 = vst.msk [vmem:[#allocation3 + $0x58] sm:$0xff] %vm6301, %v6422
      %6431 = vrot.lane.b32.xlu0 %v6387, 80
      %v6432 = vpop.permute.xlu0 %6431
      %6433 = vrot.lane.b32.xlu0 %v6388, 80
      %v6434 = vpop.permute.xlu0 %6433
      %6435 = vrot.lane.b32.xlu0 %v6389, 80
      %v6436 = vpop.permute.xlu0 %6435
      %6437 = vrot.lane.b32.xlu0 %v6390, 80
      %v6438 = vpop.permute.xlu0 %6437
      %6443 = vst.msk [vmem:[#allocation3 + $0x60] sm:$0xff] %vm6301, %v6432
      %6444 = vst.msk [vmem:[#allocation3 + $0x68] sm:$0xff] %vm6301, %v6434
      %6445 = vst.msk [vmem:[#allocation3 + $0x70] sm:$0xff] %vm6301, %v6436
      %6446 = vst.msk [vmem:[#allocation3 + $0x78] sm:$0xff] %vm6301, %v6438
      %6447 = vrot.lane.b32.xlu0 %v6387, 64
      %v6448 = vpop.permute.xlu0 %6447
      %6449 = vrot.lane.b32.xlu0 %v6388, 64
      %v6450 = vpop.permute.xlu0 %6449
      %6451 = vrot.lane.b32.xlu0 %v6389, 64
      %v6452 = vpop.permute.xlu0 %6451
      %6453 = vrot.lane.b32.xlu0 %v6390, 64
      %v6454 = vpop.permute.xlu0 %6453
      %6459 = vst.msk [vmem:[#allocation3 + $0x80] sm:$0xff] %vm6301, %v6448
      %6460 = vst.msk [vmem:[#allocation3 + $0x88] sm:$0xff] %vm6301, %v6450
      %6461 = vst.msk [vmem:[#allocation3 + $0x90] sm:$0xff] %vm6301, %v6452
      %6462 = vst.msk [vmem:[#allocation3 + $0x98] sm:$0xff] %vm6301, %v6454
      %6463 = vrot.lane.b32.xlu0 %v6387, 48
      %v6464 = vpop.permute.xlu0 %6463
      %6465 = vrot.lane.b32.xlu0 %v6388, 48
      %v6466 = vpop.permute.xlu0 %6465
      %6467 = vrot.lane.b32.xlu0 %v6389, 48
      %v6468 = vpop.permute.xlu0 %6467
      %6469 = vrot.lane.b32.xlu0 %v6390, 48
      %v6470 = vpop.permute.xlu0 %6469
      %6475 = vst.msk [vmem:[#allocation3 + $0xa0] sm:$0xff] %vm6301, %v6464
      %6476 = vst.msk [vmem:[#allocation3 + $0xa8] sm:$0xff] %vm6301, %v6466
      %6477 = vst.msk [vmem:[#allocation3 + $0xb0] sm:$0xff] %vm6301, %v6468
      %6478 = vst.msk [vmem:[#allocation3 + $0xb8] sm:$0xff] %vm6301, %v6470
      %6479 = vrot.lane.b32.xlu0 %v6387, 32
      %v6480 = vpop.permute.xlu0 %6479
      %6481 = vrot.lane.b32.xlu0 %v6388, 32
      %v6482 = vpop.permute.xlu0 %6481
      %6483 = vrot.lane.b32.xlu0 %v6389, 32
      %v6484 = vpop.permute.xlu0 %6483
      %6485 = vrot.lane.b32.xlu0 %v6390, 32
      %v6486 = vpop.permute.xlu0 %6485
      %6491 = vst.msk [vmem:[#allocation3 + $0xc0] sm:$0xff] %vm6301, %v6480
      %6492 = vst.msk [vmem:[#allocation3 + $0xc8] sm:$0xff] %vm6301, %v6482
      %6493 = vst.msk [vmem:[#allocation3 + $0xd0] sm:$0xff] %vm6301, %v6484
      %6494 = vst.msk [vmem:[#allocation3 + $0xd8] sm:$0xff] %vm6301, %v6486
      %6495 = vrot.lane.b32.xlu0 %v6387, 16
      %v6496 = vpop.permute.xlu0 %6495
      %6497 = vrot.lane.b32.xlu0 %v6388, 16
      %v6498 = vpop.permute.xlu0 %6497
      %6499 = vrot.lane.b32.xlu0 %v6389, 16
      %v6500 = vpop.permute.xlu0 %6499
      %6501 = vrot.lane.b32.xlu0 %v6390, 16
      %v6502 = vpop.permute.xlu0 %6501
      %6507 = vst.msk [vmem:[#allocation3 + $0xe0] sm:$0xff] %vm6301, %v6496
      %6508 = vst.msk [vmem:[#allocation3 + $0xe8] sm:$0xff] %vm6301, %v6498
      %6509 = vst.msk [vmem:[#allocation3 + $0xf0] sm:$0xff] %vm6301, %v6500
      %6510 = vst.msk [vmem:[#allocation3 + $0xf8] sm:$0xff] %vm6301, %v6502
      %v6511 = vpack.c.bf16 %v6355, %v6351
      %v6512 = vpack.c.bf16 %v6365, %v6361
      %v6513 = vpack.c.bf16 %v6375, %v6371
      %v6514 = vpack.c.bf16 %v6385, %v6381
      %6515 = vst.msk [vmem:[#allocation3 + $0x100] sm:$0xff] %vm6301, %v6511
      %6516 = vst.msk [vmem:[#allocation3 + $0x108] sm:$0xff] %vm6301, %v6512
      %6517 = vst.msk [vmem:[#allocation3 + $0x110] sm:$0xff] %vm6301, %v6513
      %6518 = vst.msk [vmem:[#allocation3 + $0x118] sm:$0xff] %vm6301, %v6514
      %v6519 = vld [vmem:[%s11] sm:$0xff]
      %v6520 = vld [vmem:[%s11 + $0x8] sm:$0xff]
      %v6521 = vld [vmem:[%s11 + $0x10] sm:$0xf]
      %v6522 = vld [vmem:[%s11 + $0x14] sm:$0xff]
      %v6523 = vld [vmem:[%s11 + $0x1c] sm:$0xff]
      %v6524 = vld [vmem:[%s11 + $0x24] sm:$0xf]
      %v6525 = vld [vmem:[%s11 + $0x28] sm:$0xff]
      %v6526 = vld [vmem:[%s11 + $0x30] sm:$0xff]
      %v6527 = vld [vmem:[%s11 + $0x38] sm:$0xf]
      %v6528 = vld [vmem:[%s11 + $0x3c] sm:$0xff]
      %v6529 = vld [vmem:[%s11 + $0x44] sm:$0xff]
      %v6530 = vld [vmem:[%s11 + $0x4c] sm:$0xf]
      %v6531 = vld [vmem:[%s11 + $0x50] sm:$0xff]
      %v6532 = vld [vmem:[%s11 + $0x58] sm:$0xff]
      %v6533 = vld [vmem:[%s11 + $0x60] sm:$0xf]
      %v6534 = vld [vmem:[%s11 + $0x64] sm:$0xff]
      %v6535 = vld [vmem:[%s11 + $0x6c] sm:$0xff]
      %v6536 = vld [vmem:[%s11 + $0x74] sm:$0xf]
      %v6537 = vld [vmem:[%s11 + $0x78] sm:$0xff]
      %v6538 = vld [vmem:[%s11 + $0x80] sm:$0xff]
      %v6539 = vld [vmem:[%s11 + $0x88] sm:$0xf]
      %v6540 = vld [vmem:[%s11 + $0x8c] sm:$0xff]
      %v6541 = vld [vmem:[%s11 + $0x94] sm:$0xff]
      %v6542 = vld [vmem:[%s11 + $0x9c] sm:$0xf]
      %v6543 = vld [vmem:[%s11 + $0xa0] sm:$0xff]
      %v6544 = vld [vmem:[%s11 + $0xa8] sm:$0xff]
      %v6545 = vld [vmem:[%s11 + $0xb0] sm:$0xf]
      %v6546 = vld [vmem:[%s11 + $0xb4] sm:$0xff]
      %v6547 = vld [vmem:[%s11 + $0xbc] sm:$0xff]
      %v6548 = vld [vmem:[%s11 + $0xc4] sm:$0xf]
      %v6549 = vld [vmem:[%s11 + $0xc8] sm:$0xff]
      %v6550 = vld [vmem:[%s11 + $0xd0] sm:$0xff]
      %v6551 = vld [vmem:[%s11 + $0xd8] sm:$0xf]
      %v6552 = vld [vmem:[%s11 + $0xdc] sm:$0xff]
      %v6553 = vld [vmem:[%s11 + $0xe4] sm:$0xff]
      %v6554 = vld [vmem:[%s11 + $0xec] sm:$0xf]
      %v6555 = vld [vmem:[%s11 + $0xf0] sm:$0xff]
      %v6556 = vld [vmem:[%s11 + $0xf8] sm:$0xff]
      %v6557 = vld [vmem:[%s11 + $0x100] sm:$0xf]
      %v6558 = vld [vmem:[%s11 + $0x104] sm:$0xff]
      %v6559 = vld [vmem:[%s11 + $0x10c] sm:$0xff]
      %v6560 = vld [vmem:[%s11 + $0x114] sm:$0xf]
      %v6561 = vld [vmem:[%s11 + $0x118] sm:$0xff]
      %v6562 = vld [vmem:[%s11 + $0x120] sm:$0xff]
      %v6563 = vld [vmem:[%s11 + $0x128] sm:$0xf]
      %v6564 = vld [vmem:[%s11 + $0x12c] sm:$0xff]
      %v6565 = vld [vmem:[%s11 + $0x134] sm:$0xff]
      %v6566 = vld [vmem:[%s11 + $0x13c] sm:$0xf]
      %v6567 = vld [vmem:[#allocation3] sm:$0xff]
      %v6568 = vld [vmem:[#allocation3 + $0x8] sm:$0xff]
      %v6569 = vld [vmem:[#allocation3 + $0x10] sm:$0xff]
      %v6570 = vld [vmem:[#allocation3 + $0x18] sm:$0xff]
      %v6571 = vld [vmem:[#allocation3 + $0x20] sm:$0xff]
      %v6572 = vld [vmem:[#allocation3 + $0x28] sm:$0xff]
      %v6573 = vld [vmem:[#allocation3 + $0x30] sm:$0xff]
      %v6574 = vld [vmem:[#allocation3 + $0x38] sm:$0xff]
      %v6575 = vld [vmem:[#allocation3 + $0x40] sm:$0xff]
      %v6576 = vld [vmem:[#allocation3 + $0x48] sm:$0xff]
      %v6577 = vld [vmem:[#allocation3 + $0x50] sm:$0xff]
      %v6578 = vld [vmem:[#allocation3 + $0x58] sm:$0xff]
      %v6579 = vld [vmem:[#allocation3 + $0x60] sm:$0xff]
      %v6580 = vld [vmem:[#allocation3 + $0x68] sm:$0xff]
      %v6581 = vld [vmem:[#allocation3 + $0x70] sm:$0xff]
      %v6582 = vld [vmem:[#allocation3 + $0x78] sm:$0xff]
      %v6583 = vld [vmem:[#allocation3 + $0x80] sm:$0xff]
      %v6584 = vld [vmem:[#allocation3 + $0x88] sm:$0xff]
      %v6585 = vld [vmem:[#allocation3 + $0x90] sm:$0xff]
      %v6586 = vld [vmem:[#allocation3 + $0x98] sm:$0xff]
      %v6587 = vld [vmem:[#allocation3 + $0xa0] sm:$0xff]
      %v6588 = vld [vmem:[#allocation3 + $0xa8] sm:$0xff]
      %v6589 = vld [vmem:[#allocation3 + $0xb0] sm:$0xff]
      %v6590 = vld [vmem:[#allocation3 + $0xb8] sm:$0xff]
      %v6591 = vld [vmem:[#allocation3 + $0xc0] sm:$0xff]
      %v6592 = vld [vmem:[#allocation3 + $0xc8] sm:$0xff]
      %v6593 = vld [vmem:[#allocation3 + $0xd0] sm:$0xff]
      %v6594 = vld [vmem:[#allocation3 + $0xd8] sm:$0xff]
      %v6595 = vld [vmem:[#allocation3 + $0xe0] sm:$0xff]
      %v6596 = vld [vmem:[#allocation3 + $0xe8] sm:$0xff]
      %v6597 = vld [vmem:[#allocation3 + $0xf0] sm:$0xff]
      %v6598 = vld [vmem:[#allocation3 + $0xf8] sm:$0xff]
      %v6599 = vld [vmem:[#allocation3 + $0x100] sm:$0xff]
      %v6600 = vld [vmem:[#allocation3 + $0x108] sm:$0xff]
      %v6601 = vld [vmem:[#allocation3 + $0x110] sm:$0xff]
      %v6602 = vld [vmem:[#allocation3 + $0x118] sm:$0xff]
      %v6603 = vld [vmem:[%s12] sm:$0xff]
      %v6604 = vld [vmem:[%s12 + $0x8] sm:$0xff]
      %v6605 = vld [vmem:[%s12 + $0x10] sm:$0xff]
      %v6606 = vld [vmem:[%s12 + $0x18] sm:$0xff]
      %v6607 = vld [vmem:[%s12 + $0x20] sm:$0xff]
      %v6608 = vld [vmem:[%s12 + $0x28] sm:$0xff]
      %v6609 = vld [vmem:[%s12 + $0x30] sm:$0xff]
      %v6610 = vld [vmem:[%s12 + $0x38] sm:$0xff]
      %v6611 = vld [vmem:[%s12 + $0x40] sm:$0xff]
      %v6612 = vld [vmem:[%s12 + $0x48] sm:$0xff]
      %v6613 = vld [vmem:[%s12 + $0x50] sm:$0xff]
      %v6614 = vld [vmem:[%s12 + $0x58] sm:$0xff]
      %v6615 = vld [vmem:[%s12 + $0x60] sm:$0xff]
      %v6616 = vld [vmem:[%s12 + $0x68] sm:$0xff]
      %v6617 = vld [vmem:[%s12 + $0x70] sm:$0xff]
      %v6618 = vld [vmem:[%s12 + $0x78] sm:$0xff]
      %6620 = vset.pattern.permute.xlu0 0
      %6621 = vperm.xlu0 %6620, %v6603
      %v6622 = vpop.permute.xlu0 %6621
      %6625 = vset.pattern.permute.xlu0 0
      %6626 = vperm.xlu0 %6625, %v6604
      %v6627 = vpop.permute.xlu0 %6626
      %6630 = vset.pattern.permute.xlu0 0
      %6631 = vperm.xlu0 %6630, %v6605
      %v6632 = vpop.permute.xlu0 %6631
      %6635 = vset.pattern.permute.xlu0 0
      %6636 = vperm.xlu0 %6635, %v6606
      %v6637 = vpop.permute.xlu0 %6636
      %6640 = vset.pattern.permute.xlu0 0
      %6641 = vperm.xlu0 %6640, %v6607
      %v6642 = vpop.permute.xlu0 %6641
      %6645 = vset.pattern.permute.xlu0 0
      %6646 = vperm.xlu0 %6645, %v6608
      %v6647 = vpop.permute.xlu0 %6646
      %6650 = vset.pattern.permute.xlu0 0
      %6651 = vperm.xlu0 %6650, %v6609
      %v6652 = vpop.permute.xlu0 %6651
      %6655 = vset.pattern.permute.xlu0 0
      %6656 = vperm.xlu0 %6655, %v6610
      %v6657 = vpop.permute.xlu0 %6656
      %6660 = vset.pattern.permute.xlu0 0
      %6661 = vperm.xlu0 %6660, %v6611
      %v6662 = vpop.permute.xlu0 %6661
      %6665 = vset.pattern.permute.xlu0 0
      %6666 = vperm.xlu0 %6665, %v6612
      %v6667 = vpop.permute.xlu0 %6666
      %6670 = vset.pattern.permute.xlu0 0
      %6671 = vperm.xlu0 %6670, %v6613
      %v6672 = vpop.permute.xlu0 %6671
      %6675 = vset.pattern.permute.xlu0 0
      %6676 = vperm.xlu0 %6675, %v6614
      %v6677 = vpop.permute.xlu0 %6676
      %6680 = vset.pattern.permute.xlu0 0
      %6681 = vperm.xlu0 %6680, %v6615
      %v6682 = vpop.permute.xlu0 %6681
      %6685 = vset.pattern.permute.xlu0 0
      %6686 = vperm.xlu0 %6685, %v6616
      %v6687 = vpop.permute.xlu0 %6686
      %6690 = vset.pattern.permute.xlu0 0
      %6691 = vperm.xlu0 %6690, %v6617
      %v6692 = vpop.permute.xlu0 %6691
      %6695 = vset.pattern.permute.xlu0 0
      %6696 = vperm.xlu0 %6695, %v6618
      %v6697 = vpop.permute.xlu0 %6696
      %v6747 = vunpack.c.l.b16 %v6519
      %v6748 = vunpack.c.h.b16 %v6519
      %v6749 = vunpack.c.l.b16 %v6520
      %v6750 = vunpack.c.h.b16 %v6520
      %v6751 = vunpack.c.l.b16 %v6521
      %v6752 = vunpack.c.l.b16 %v6522
      %v6753 = vunpack.c.h.b16 %v6522
      %v6754 = vunpack.c.l.b16 %v6523
      %v6755 = vunpack.c.h.b16 %v6523
      %v6756 = vunpack.c.l.b16 %v6524
      %v6757 = vunpack.c.l.b16 %v6525
      %v6758 = vunpack.c.h.b16 %v6525
      %v6759 = vunpack.c.l.b16 %v6526
      %v6760 = vunpack.c.h.b16 %v6526
      %v6761 = vunpack.c.l.b16 %v6527
      %v6762 = vunpack.c.l.b16 %v6528
      %v6763 = vunpack.c.h.b16 %v6528
      %v6764 = vunpack.c.l.b16 %v6529
      %v6765 = vunpack.c.h.b16 %v6529
      %v6766 = vunpack.c.l.b16 %v6530
      %v6767 = vunpack.c.l.b16 %v6531
      %v6768 = vunpack.c.h.b16 %v6531
      %v6769 = vunpack.c.l.b16 %v6532
      %v6770 = vunpack.c.h.b16 %v6532
      %v6771 = vunpack.c.l.b16 %v6533
      %v6772 = vunpack.c.l.b16 %v6534
      %v6773 = vunpack.c.h.b16 %v6534
      %v6774 = vunpack.c.l.b16 %v6535
      %v6775 = vunpack.c.h.b16 %v6535
      %v6776 = vunpack.c.l.b16 %v6536
      %v6777 = vunpack.c.l.b16 %v6537
      %v6778 = vunpack.c.h.b16 %v6537
      %v6779 = vunpack.c.l.b16 %v6538
      %v6780 = vunpack.c.h.b16 %v6538
      %v6781 = vunpack.c.l.b16 %v6539
      %v6782 = vunpack.c.l.b16 %v6540
      %v6783 = vunpack.c.h.b16 %v6540
      %v6784 = vunpack.c.l.b16 %v6541
      %v6785 = vunpack.c.h.b16 %v6541
      %v6786 = vunpack.c.l.b16 %v6542
      %v6787 = vunpack.c.l.b16 %v6543
      %v6788 = vunpack.c.h.b16 %v6543
      %v6789 = vunpack.c.l.b16 %v6544
      %v6790 = vunpack.c.h.b16 %v6544
      %v6791 = vunpack.c.l.b16 %v6545
      %v6792 = vunpack.c.l.b16 %v6546
      %v6793 = vunpack.c.h.b16 %v6546
      %v6794 = vunpack.c.l.b16 %v6547
      %v6795 = vunpack.c.h.b16 %v6547
      %v6796 = vunpack.c.l.b16 %v6548
      %v6797 = vunpack.c.l.b16 %v6549
      %v6798 = vunpack.c.h.b16 %v6549
      %v6799 = vunpack.c.l.b16 %v6550
      %v6800 = vunpack.c.h.b16 %v6550
      %v6801 = vunpack.c.l.b16 %v6551
      %v6802 = vunpack.c.l.b16 %v6552
      %v6803 = vunpack.c.h.b16 %v6552
      %v6804 = vunpack.c.l.b16 %v6553
      %v6805 = vunpack.c.h.b16 %v6553
      %v6806 = vunpack.c.l.b16 %v6554
      %v6807 = vunpack.c.l.b16 %v6555
      %v6808 = vunpack.c.h.b16 %v6555
      %v6809 = vunpack.c.l.b16 %v6556
      %v6810 = vunpack.c.h.b16 %v6556
      %v6811 = vunpack.c.l.b16 %v6557
      %v6812 = vunpack.c.l.b16 %v6558
      %v6813 = vunpack.c.h.b16 %v6558
      %v6814 = vunpack.c.l.b16 %v6559
      %v6815 = vunpack.c.h.b16 %v6559
      %v6816 = vunpack.c.l.b16 %v6560
      %v6817 = vunpack.c.l.b16 %v6561
      %v6818 = vunpack.c.h.b16 %v6561
      %v6819 = vunpack.c.l.b16 %v6562
      %v6820 = vunpack.c.h.b16 %v6562
      %v6821 = vunpack.c.l.b16 %v6563
      %v6822 = vunpack.c.l.b16 %v6564
      %v6823 = vunpack.c.h.b16 %v6564
      %v6824 = vunpack.c.l.b16 %v6565
      %v6825 = vunpack.c.h.b16 %v6565
      %v6826 = vunpack.c.l.b16 %v6566
      %v6827 = vpack.c.b16 %v6752, %v6747
      %v6828 = vpack.c.b16 %v6753, %v6748
      %v6829 = vpack.c.b16 %v6754, %v6749
      %v6830 = vpack.c.b16 %v6755, %v6750
      %v6831 = vpack.c.b16 %v6756, %v6751
      %v6832 = vpack.c.b16 %v6762, %v6757
      %v6833 = vpack.c.b16 %v6763, %v6758
      %v6834 = vpack.c.b16 %v6764, %v6759
      %v6835 = vpack.c.b16 %v6765, %v6760
      %v6836 = vpack.c.b16 %v6766, %v6761
      %v6837 = vpack.c.b16 %v6772, %v6767
      %v6838 = vpack.c.b16 %v6773, %v6768
      %v6839 = vpack.c.b16 %v6774, %v6769
      %v6840 = vpack.c.b16 %v6775, %v6770
      %v6841 = vpack.c.b16 %v6776, %v6771
      %v6842 = vpack.c.b16 %v6782, %v6777
      %v6843 = vpack.c.b16 %v6783, %v6778
      %v6844 = vpack.c.b16 %v6784, %v6779
      %v6845 = vpack.c.b16 %v6785, %v6780
      %v6846 = vpack.c.b16 %v6786, %v6781
      %v6847 = vpack.c.b16 %v6792, %v6787
      %v6848 = vpack.c.b16 %v6793, %v6788
      %v6849 = vpack.c.b16 %v6794, %v6789
      %v6850 = vpack.c.b16 %v6795, %v6790
      %v6851 = vpack.c.b16 %v6796, %v6791
      %v6852 = vpack.c.b16 %v6802, %v6797
      %v6853 = vpack.c.b16 %v6803, %v6798
      %v6854 = vpack.c.b16 %v6804, %v6799
      %v6855 = vpack.c.b16 %v6805, %v6800
      %v6856 = vpack.c.b16 %v6806, %v6801
      %v6857 = vpack.c.b16 %v6812, %v6807
      %v6858 = vpack.c.b16 %v6813, %v6808
      %v6859 = vpack.c.b16 %v6814, %v6809
      %v6860 = vpack.c.b16 %v6815, %v6810
      %v6861 = vpack.c.b16 %v6816, %v6811
      %v6862 = vpack.c.b16 %v6822, %v6817
      %v6863 = vpack.c.b16 %v6823, %v6818
      %v6864 = vpack.c.b16 %v6824, %v6819
      %v6865 = vpack.c.b16 %v6825, %v6820
      %v6866 = vpack.c.b16 %v6826, %v6821
      %v6900 = vsel %vm4396, %v6831, 0
      %v6903 = vsel %vm4396, %v6836, 0
      %v6906 = vsel %vm4396, %v6841, 0
      %v6909 = vsel %vm4396, %v6846, 0
      %v6912 = vsel %vm4396, %v6851, 0
      %v6915 = vsel %vm4396, %v6856, 0
      %v6918 = vsel %vm4396, %v6861, 0
      %v6921 = vsel %vm4396, %v6866, 0
      %6923 = vmatprep.subr.bf16.mxu0 0
      %6924 = vmatpush1.bf16.msra.mxu0 %v6567
      %6925 = vmatprep.subr.bf16.mxu0 0
      %6926 = vmatpush1.bf16.msra.mxu0 %v6568
      %6927 = vmatprep.subr.bf16.mxu0 0
      %6928 = vmatpush1.bf16.msra.mxu0 %v6569
      %6929 = vmatprep.subr.bf16.mxu0 0
      %6930 = vmatpush1.bf16.msra.mxu0 %v6570
      %6931 = vmatprep.subr.bf16.mxu0 0
      %6932 = vmatpush1.bf16.msra.mxu0 %v6571
      %6933 = vmatprep.subr.bf16.mxu0 0
      %6934 = vmatpush1.bf16.msra.mxu0 %v6572
      %6935 = vmatprep.subr.bf16.mxu0 0
      %6936 = vmatpush1.bf16.msra.mxu0 %v6573
      %6937 = vmatprep.subr.bf16.mxu0 0
      %6938 = vmatpush1.bf16.msra.mxu0 %v6574
      %6939 = vmatprep.subr.bf16.mxu0 0
      %6940 = vmatpush1.bf16.msra.mxu0 %v6575
      %6941 = vmatprep.subr.bf16.mxu0 0
      %6942 = vmatpush1.bf16.msra.mxu0 %v6576
      %6943 = vmatprep.subr.bf16.mxu0 0
      %6944 = vmatpush1.bf16.msra.mxu0 %v6577
      %6945 = vmatprep.subr.bf16.mxu0 0
      %6946 = vmatpush1.bf16.msra.mxu0 %v6578
      %6947 = vmatprep.subr.bf16.mxu0 0
      %6948 = vmatpush1.bf16.msra.mxu0 %v6579
      %6949 = vmatprep.subr.bf16.mxu0 0
      %6950 = vmatpush1.bf16.msra.mxu0 %v6580
      %6951 = vmatprep.subr.bf16.mxu0 0
      %6952 = vmatpush1.bf16.msra.mxu0 %v6581
      %6953 = vmatprep.subr.bf16.mxu0 0
      %6954 = vmatpush1.bf16.msra.mxu0 %v6582
      %6955 = vmatprep.mubr.bf16.mxu0 %v6828
      %6956 = vmatmul.mubr.bf16.gmra.mrb[0].mxu0 %v6827
      %v6957 = vpop.f32.mrb[0].mxu0
      %v6958 = vadd.f32 %v6622, %v6957
      %v6959 = vpop.f32.mrb[0].mxu0
      %v6960 = vpop.f32.mrb[0].mxu0
      %v6961 = vadd.f32 %v6627, %v6960
      %v6962 = vpop.f32.mrb[0].mxu0
      %6963 = vmatprep.mubr.bf16.mxu0 %v6833
      %6964 = vmatmul.mubr.bf16.gmra.mrb[0].mxu0 %v6832
      %v6965 = vpop.f32.mrb[0].mxu0
      %v6966 = vadd.f32 %v6632, %v6965
      %v6967 = vpop.f32.mrb[0].mxu0
      %v6968 = vpop.f32.mrb[0].mxu0
      %v6969 = vadd.f32 %v6637, %v6968
      %v6970 = vpop.f32.mrb[0].mxu0
      %6971 = vmatprep.mubr.bf16.mxu0 %v6838
      %6972 = vmatmul.mubr.bf16.gmra.mrb[0].mxu0 %v6837
      %v6973 = vpop.f32.mrb[0].mxu0
      %v6974 = vadd.f32 %v6642, %v6973
      %v6975 = vpop.f32.mrb[0].mxu0
      %v6976 = vpop.f32.mrb[0].mxu0
      %v6977 = vadd.f32 %v6647, %v6976
      %v6978 = vpop.f32.mrb[0].mxu0
      %6979 = vmatprep.mubr.bf16.mxu0 %v6843
      %6980 = vmatmul.mubr.bf16.gmra.mrb[0].mxu0 %v6842
      %v6981 = vpop.f32.mrb[0].mxu0
      %v6982 = vadd.f32 %v6652, %v6981
      %v6983 = vpop.f32.mrb[0].mxu0
      %v6984 = vpop.f32.mrb[0].mxu0
      %v6985 = vadd.f32 %v6657, %v6984
      %v6986 = vpop.f32.mrb[0].mxu0
      %6987 = vmatprep.mubr.bf16.mxu0 %v6848
      %6988 = vmatmul.mubr.bf16.gmra.mrb[0].mxu0 %v6847
      %v6989 = vpop.f32.mrb[0].mxu0
      %v6990 = vadd.f32 %v6662, %v6989
      %v6991 = vpop.f32.mrb[0].mxu0
      %v6992 = vpop.f32.mrb[0].mxu0
      %v6993 = vadd.f32 %v6667, %v6992
      %v6994 = vpop.f32.mrb[0].mxu0
      %6995 = vmatprep.mubr.bf16.mxu0 %v6853
      %6996 = vmatmul.mubr.bf16.gmra.mrb[0].mxu0 %v6852
      %v6997 = vpop.f32.mrb[0].mxu0
      %v6998 = vadd.f32 %v6672, %v6997
      %v6999 = vpop.f32.mrb[0].mxu0
      %v7000 = vpop.f32.mrb[0].mxu0
      %v7001 = vadd.f32 %v6677, %v7000
      %v7002 = vpop.f32.mrb[0].mxu0
      %7003 = vmatprep.mubr.bf16.mxu0 %v6858
      %7004 = vmatmul.mubr.bf16.gmra.mrb[0].mxu0 %v6857
      %v7005 = vpop.f32.mrb[0].mxu0
      %v7006 = vadd.f32 %v6682, %v7005
      %v7007 = vpop.f32.mrb[0].mxu0
      %v7008 = vpop.f32.mrb[0].mxu0
      %v7009 = vadd.f32 %v6687, %v7008
      %v7010 = vpop.f32.mrb[0].mxu0
      %7011 = vmatprep.mubr.bf16.mxu0 %v6863
      %7012 = vmatmul.mubr.bf16.gmra.mrb[0].mxu0 %v6862
      %v7013 = vpop.f32.mrb[0].mxu0
      %v7014 = vadd.f32 %v6692, %v7013
      %v7015 = vpop.f32.mrb[0].mxu0
      %v7016 = vpop.f32.mrb[0].mxu0
      %v7017 = vadd.f32 %v6697, %v7016
      %v7018 = vpop.f32.mrb[0].mxu0
      %7019 = vdwg.mxu0
      %7020 = vmatprep.subr.bf16.mxu0 0
      %7021 = vmatpush1.bf16.msra.mxu0 %v6583
      %7022 = vmatprep.subr.bf16.mxu0 0
      %7023 = vmatpush1.bf16.msra.mxu0 %v6584
      %7024 = vmatprep.subr.bf16.mxu0 0
      %7025 = vmatpush1.bf16.msra.mxu0 %v6585
      %7026 = vmatprep.subr.bf16.mxu0 0
      %7027 = vmatpush1.bf16.msra.mxu0 %v6586
      %7028 = vmatprep.subr.bf16.mxu0 0
      %7029 = vmatpush1.bf16.msra.mxu0 %v6587
      %7030 = vmatprep.subr.bf16.mxu0 0
      %7031 = vmatpush1.bf16.msra.mxu0 %v6588
      %7032 = vmatprep.subr.bf16.mxu0 0
      %7033 = vmatpush1.bf16.msra.mxu0 %v6589
      %7034 = vmatprep.subr.bf16.mxu0 0
      %7035 = vmatpush1.bf16.msra.mxu0 %v6590
      %7036 = vmatprep.subr.bf16.mxu0 0
      %7037 = vmatpush1.bf16.msra.mxu0 %v6591
      %7038 = vmatprep.subr.bf16.mxu0 0
      %7039 = vmatpush1.bf16.msra.mxu0 %v6592
      %7040 = vmatprep.subr.bf16.mxu0 0
      %7041 = vmatpush1.bf16.msra.mxu0 %v6593
      %7042 = vmatprep.subr.bf16.mxu0 0
      %7043 = vmatpush1.bf16.msra.mxu0 %v6594
      %7044 = vmatprep.subr.bf16.mxu0 0
      %7045 = vmatpush1.bf16.msra.mxu0 %v6595
      %7046 = vmatprep.subr.bf16.mxu0 0
      %7047 = vmatpush1.bf16.msra.mxu0 %v6596
      %7048 = vmatprep.subr.bf16.mxu0 0
      %7049 = vmatpush1.bf16.msra.mxu0 %v6597
      %7050 = vmatprep.subr.bf16.mxu0 0
      %7051 = vmatpush1.bf16.msra.mxu0 %v6598
      %7052 = vmatprep.mubr.bf16.mxu0 %v6830
      %7053 = vmatmul.mubr.bf16.gmra.mrb[0].mxu0 %v6829
      %v7054 = vpop.f32.mrb[0].mxu0
      %v7055 = vadd.f32 %v6958, %v7054
      %v7056 = vpop.f32.mrb[0].mxu0
      %v7057 = vpop.f32.mrb[0].mxu0
      %v7058 = vadd.f32 %v6961, %v7057
      %v7059 = vpop.f32.mrb[0].mxu0
      %7060 = vmatprep.mubr.bf16.mxu0 %v6835
      %7061 = vmatmul.mubr.bf16.gmra.mrb[0].mxu0 %v6834
      %v7062 = vpop.f32.mrb[0].mxu0
      %v7063 = vadd.f32 %v6966, %v7062
      %v7064 = vpop.f32.mrb[0].mxu0
      %v7065 = vpop.f32.mrb[0].mxu0
      %v7066 = vadd.f32 %v6969, %v7065
      %v7067 = vpop.f32.mrb[0].mxu0
      %7068 = vmatprep.mubr.bf16.mxu0 %v6840
      %7069 = vmatmul.mubr.bf16.gmra.mrb[0].mxu0 %v6839
      %v7070 = vpop.f32.mrb[0].mxu0
      %v7071 = vadd.f32 %v6974, %v7070
      %v7072 = vpop.f32.mrb[0].mxu0
      %v7073 = vpop.f32.mrb[0].mxu0
      %v7074 = vadd.f32 %v6977, %v7073
      %v7075 = vpop.f32.mrb[0].mxu0
      %7076 = vmatprep.mubr.bf16.mxu0 %v6845
      %7077 = vmatmul.mubr.bf16.gmra.mrb[0].mxu0 %v6844
      %v7078 = vpop.f32.mrb[0].mxu0
      %v7079 = vadd.f32 %v6982, %v7078
      %v7080 = vpop.f32.mrb[0].mxu0
      %v7081 = vpop.f32.mrb[0].mxu0
      %v7082 = vadd.f32 %v6985, %v7081
      %v7083 = vpop.f32.mrb[0].mxu0
      %7084 = vmatprep.mubr.bf16.mxu0 %v6850
      %7085 = vmatmul.mubr.bf16.gmra.mrb[0].mxu0 %v6849
      %v7086 = vpop.f32.mrb[0].mxu0
      %v7087 = vadd.f32 %v6990, %v7086
      %v7088 = vpop.f32.mrb[0].mxu0
      %v7089 = vpop.f32.mrb[0].mxu0
      %v7090 = vadd.f32 %v6993, %v7089
      %v7091 = vpop.f32.mrb[0].mxu0
      %7092 = vmatprep.mubr.bf16.mxu0 %v6855
      %7093 = vmatmul.mubr.bf16.gmra.mrb[0].mxu0 %v6854
      %v7094 = vpop.f32.mrb[0].mxu0
      %v7095 = vadd.f32 %v6998, %v7094
      %v7096 = vpop.f32.mrb[0].mxu0
      %v7097 = vpop.f32.mrb[0].mxu0
      %v7098 = vadd.f32 %v7001, %v7097
      %v7099 = vpop.f32.mrb[0].mxu0
      %7100 = vmatprep.mubr.bf16.mxu0 %v6860
      %7101 = vmatmul.mubr.bf16.gmra.mrb[0].mxu0 %v6859
      %v7102 = vpop.f32.mrb[0].mxu0
      %v7103 = vadd.f32 %v7006, %v7102
      %v7104 = vpop.f32.mrb[0].mxu0
      %v7105 = vpop.f32.mrb[0].mxu0
      %v7106 = vadd.f32 %v7009, %v7105
      %v7107 = vpop.f32.mrb[0].mxu0
      %7108 = vmatprep.mubr.bf16.mxu0 %v6865
      %7109 = vmatmul.mubr.bf16.gmra.mrb[0].mxu0 %v6864
      %v7110 = vpop.f32.mrb[0].mxu0
      %v7111 = vadd.f32 %v7014, %v7110
      %v7112 = vpop.f32.mrb[0].mxu0
      %v7113 = vpop.f32.mrb[0].mxu0
      %v7114 = vadd.f32 %v7017, %v7113
      %v7115 = vpop.f32.mrb[0].mxu0
      %7116 = vdwg.mxu0
      %7117 = vmatprep.subr.bf16.mxu0 0
      %7118 = vmatpush1.bf16.msra.mxu0 %v6599
      %7119 = vmatprep.subr.bf16.mxu0 0
      %7120 = vmatpush1.bf16.msra.mxu0 %v6600
      %7121 = vmatprep.subr.bf16.mxu0 0
      %7122 = vmatpush1.bf16.msra.mxu0 %v6601
      %7123 = vmatprep.subr.bf16.mxu0 0
      %7124 = vmatpush1.bf16.msra.mxu0 %v6602
      %7125 = vmatprep.subr.bf16.mxu0 0
      %7126 = vmatpush1.bf16.msra.mxu0 0
      %7127 = vmatprep.subr.bf16.mxu0 0
      %7128 = vmatpush1.bf16.msra.mxu0 0
      %7129 = vmatprep.subr.bf16.mxu0 0
      %7130 = vmatpush1.bf16.msra.mxu0 0
      %7131 = vmatprep.subr.bf16.mxu0 0
      %7132 = vmatpush1.bf16.msra.mxu0 0
      %7133 = vmatprep.subr.bf16.mxu0 0
      %7134 = vmatpush1.bf16.msra.mxu0 0
      %7135 = vmatprep.subr.bf16.mxu0 0
      %7136 = vmatpush1.bf16.msra.mxu0 0
      %7137 = vmatprep.subr.bf16.mxu0 0
      %7138 = vmatpush1.bf16.msra.mxu0 0
      %7139 = vmatprep.subr.bf16.mxu0 0
      %7140 = vmatpush1.bf16.msra.mxu0 0
      %7141 = vmatprep.subr.bf16.mxu0 0
      %7142 = vmatpush1.bf16.msra.mxu0 0
      %7143 = vmatprep.subr.bf16.mxu0 0
      %7144 = vmatpush1.bf16.msra.mxu0 0
      %7145 = vmatprep.subr.bf16.mxu0 0
      %7146 = vmatpush1.bf16.msra.mxu0 0
      %7147 = vmatprep.subr.bf16.mxu0 0
      %7148 = vmatpush1.bf16.msra.mxu0 0
      %7149 = vmatprep.mubr.bf16.mxu0 0
      %7150 = vmatmul.mubr.bf16.gmra.mrb[0].mxu0 %v6900
      %v7151 = vpop.f32.mrb[0].mxu0
      %v7152 = vadd.f32 %v7055, %v7151
      %v7153 = vpop.f32.mrb[0].mxu0
      %v7154 = vpop.f32.mrb[0].mxu0
      %v7155 = vadd.f32 %v7058, %v7154
      %v7156 = vpop.f32.mrb[0].mxu0
      %7157 = vmatprep.mubr.bf16.mxu0 0
      %7158 = vmatmul.mubr.bf16.gmra.mrb[0].mxu0 %v6903
      %v7159 = vpop.f32.mrb[0].mxu0
      %v7160 = vadd.f32 %v7063, %v7159
      %v7161 = vpop.f32.mrb[0].mxu0
      %v7162 = vpop.f32.mrb[0].mxu0
      %v7163 = vadd.f32 %v7066, %v7162
      %v7164 = vpop.f32.mrb[0].mxu0
      %7165 = vmatprep.mubr.bf16.mxu0 0
      %7166 = vmatmul.mubr.bf16.gmra.mrb[0].mxu0 %v6906
      %v7167 = vpop.f32.mrb[0].mxu0
      %v7168 = vadd.f32 %v7071, %v7167
      %v7169 = vpop.f32.mrb[0].mxu0
      %v7170 = vpop.f32.mrb[0].mxu0
      %v7171 = vadd.f32 %v7074, %v7170
      %v7172 = vpop.f32.mrb[0].mxu0
      %7173 = vmatprep.mubr.bf16.mxu0 0
      %7174 = vmatmul.mubr.bf16.gmra.mrb[0].mxu0 %v6909
      %v7175 = vpop.f32.mrb[0].mxu0
      %v7176 = vadd.f32 %v7079, %v7175
      %v7177 = vpop.f32.mrb[0].mxu0
      %v7178 = vpop.f32.mrb[0].mxu0
      %v7179 = vadd.f32 %v7082, %v7178
      %v7180 = vpop.f32.mrb[0].mxu0
      %7181 = vmatprep.mubr.bf16.mxu0 0
      %7182 = vmatmul.mubr.bf16.gmra.mrb[0].mxu0 %v6912
      %v7183 = vpop.f32.mrb[0].mxu0
      %v7184 = vadd.f32 %v7087, %v7183
      %v7185 = vpop.f32.mrb[0].mxu0
      %v7186 = vpop.f32.mrb[0].mxu0
      %v7187 = vadd.f32 %v7090, %v7186
      %v7188 = vpop.f32.mrb[0].mxu0
      %7189 = vmatprep.mubr.bf16.mxu0 0
      %7190 = vmatmul.mubr.bf16.gmra.mrb[0].mxu0 %v6915
      %v7191 = vpop.f32.mrb[0].mxu0
      %v7192 = vadd.f32 %v7095, %v7191
      %v7193 = vpop.f32.mrb[0].mxu0
      %v7194 = vpop.f32.mrb[0].mxu0
      %v7195 = vadd.f32 %v7098, %v7194
      %v7196 = vpop.f32.mrb[0].mxu0
      %7197 = vmatprep.mubr.bf16.mxu0 0
      %7198 = vmatmul.mubr.bf16.gmra.mrb[0].mxu0 %v6918
      %v7199 = vpop.f32.mrb[0].mxu0
      %v7200 = vadd.f32 %v7103, %v7199
      %v7201 = vpop.f32.mrb[0].mxu0
      %v7202 = vpop.f32.mrb[0].mxu0
      %v7203 = vadd.f32 %v7106, %v7202
      %v7204 = vpop.f32.mrb[0].mxu0
      %7205 = vmatprep.mubr.bf16.mxu0 0
      %7206 = vmatmul.mubr.bf16.gmra.mrb[0].mxu0 %v6921
      %v7207 = vpop.f32.mrb[0].mxu0
      %v7208 = vadd.f32 %v7111, %v7207
      %v7209 = vpop.f32.mrb[0].mxu0
      %v7210 = vpop.f32.mrb[0].mxu0
      %v7211 = vadd.f32 %v7114, %v7210
      %v7212 = vpop.f32.mrb[0].mxu0
      %7213 = vdwg.mxu0
      %v7214 = vmax.f32 %v7152, 0.0
      %v7215 = vmax.f32 %v7155, 0.0
      %v7216 = vmax.f32 %v7160, 0.0
      %v7217 = vmax.f32 %v7163, 0.0
      %v7218 = vmax.f32 %v7168, 0.0
      %v7219 = vmax.f32 %v7171, 0.0
      %v7220 = vmax.f32 %v7176, 0.0
      %v7221 = vmax.f32 %v7179, 0.0
      %v7222 = vmax.f32 %v7184, 0.0
      %v7223 = vmax.f32 %v7187, 0.0
      %v7224 = vmax.f32 %v7192, 0.0
      %v7225 = vmax.f32 %v7195, 0.0
      %v7226 = vmax.f32 %v7200, 0.0
      %v7227 = vmax.f32 %v7203, 0.0
      %v7228 = vmax.f32 %v7208, 0.0
      %v7229 = vmax.f32 %v7211, 0.0
      %v7230 = vld [vmem:[%s13] sm:$0xff]
      %v7231 = vld [vmem:[%s13 + $0x8] sm:$0xff]
      %v7232 = vld [vmem:[%s13 + $0x10] sm:$0xff]
      %v7233 = vld [vmem:[%s13 + $0x18] sm:$0xff]
      %v7234 = vld [vmem:[%s13 + $0x20] sm:$0xff]
      %v7235 = vld [vmem:[%s13 + $0x28] sm:$0xff]
      %v7236 = vld [vmem:[%s13 + $0x30] sm:$0xff]
      %v7237 = vld [vmem:[%s13 + $0x38] sm:$0xff]
      %v7238 = vld [vmem:[%s13 + $0x40] sm:$0xff]
      %v7239 = vld [vmem:[%s13 + $0x48] sm:$0xff]
      %v7240 = vld [vmem:[%s13 + $0x50] sm:$0xff]
      %v7241 = vld [vmem:[%s13 + $0x58] sm:$0xff]
      %v7242 = vld [vmem:[%s13 + $0x60] sm:$0xff]
      %v7243 = vld [vmem:[%s13 + $0x68] sm:$0xff]
      %v7244 = vld [vmem:[%s13 + $0x70] sm:$0xff]
      %v7245 = vld [vmem:[%s13 + $0x78] sm:$0xff]
      %7247 = vset.pattern.permute.xlu0 0
      %7248 = vperm.xlu0 %7247, %v7230
      %v7249 = vpop.permute.xlu0 %7248
      %7252 = vset.pattern.permute.xlu0 0
      %7253 = vperm.xlu0 %7252, %v7231
      %v7254 = vpop.permute.xlu0 %7253
      %7257 = vset.pattern.permute.xlu0 0
      %7258 = vperm.xlu0 %7257, %v7232
      %v7259 = vpop.permute.xlu0 %7258
      %7262 = vset.pattern.permute.xlu0 0
      %7263 = vperm.xlu0 %7262, %v7233
      %v7264 = vpop.permute.xlu0 %7263
      %7267 = vset.pattern.permute.xlu0 0
      %7268 = vperm.xlu0 %7267, %v7234
      %v7269 = vpop.permute.xlu0 %7268
      %7272 = vset.pattern.permute.xlu0 0
      %7273 = vperm.xlu0 %7272, %v7235
      %v7274 = vpop.permute.xlu0 %7273
      %7277 = vset.pattern.permute.xlu0 0
      %7278 = vperm.xlu0 %7277, %v7236
      %v7279 = vpop.permute.xlu0 %7278
      %7282 = vset.pattern.permute.xlu0 0
      %7283 = vperm.xlu0 %7282, %v7237
      %v7284 = vpop.permute.xlu0 %7283
      %7287 = vset.pattern.permute.xlu0 0
      %7288 = vperm.xlu0 %7287, %v7238
      %v7289 = vpop.permute.xlu0 %7288
      %7292 = vset.pattern.permute.xlu0 0
      %7293 = vperm.xlu0 %7292, %v7239
      %v7294 = vpop.permute.xlu0 %7293
      %7297 = vset.pattern.permute.xlu0 0
      %7298 = vperm.xlu0 %7297, %v7240
      %v7299 = vpop.permute.xlu0 %7298
      %7302 = vset.pattern.permute.xlu0 0
      %7303 = vperm.xlu0 %7302, %v7241
      %v7304 = vpop.permute.xlu0 %7303
      %7307 = vset.pattern.permute.xlu0 0
      %7308 = vperm.xlu0 %7307, %v7242
      %v7309 = vpop.permute.xlu0 %7308
      %7312 = vset.pattern.permute.xlu0 0
      %7313 = vperm.xlu0 %7312, %v7243
      %v7314 = vpop.permute.xlu0 %7313
      %7317 = vset.pattern.permute.xlu0 0
      %7318 = vperm.xlu0 %7317, %v7244
      %v7319 = vpop.permute.xlu0 %7318
      %7322 = vset.pattern.permute.xlu0 0
      %7323 = vperm.xlu0 %7322, %v7245
      %v7324 = vpop.permute.xlu0 %7323
      %v7326 = vmul.f32 %v7214, %v7249
      %v7327 = vmul.f32 %v7215, %v7254
      %v7328 = vmul.f32 %v7216, %v7259
      %v7329 = vmul.f32 %v7217, %v7264
      %v7330 = vmul.f32 %v7218, %v7269
      %v7331 = vmul.f32 %v7219, %v7274
      %v7332 = vmul.f32 %v7220, %v7279
      %v7333 = vmul.f32 %v7221, %v7284
      %v7334 = vmul.f32 %v7222, %v7289
      %v7335 = vmul.f32 %v7223, %v7294
      %v7336 = vmul.f32 %v7224, %v7299
      %v7337 = vmul.f32 %v7225, %v7304
      %v7338 = vmul.f32 %v7226, %v7309
      %v7339 = vmul.f32 %v7227, %v7314
      %v7340 = vmul.f32 %v7228, %v7319
      %v7341 = vmul.f32 %v7229, %v7324
      %v7342 = vsel %vm6301, %v7326, 0.0
      %v7343 = vsel %vm6301, %v7327, 0.0
      %v7344 = vadd.f32 %v7342, %v7343
      %v7345 = vsel %vm6301, %v7328, 0.0
      %v7346 = vadd.f32 %v7344, %v7345
      %v7347 = vsel %vm6301, %v7329, 0.0
      %v7348 = vadd.f32 %v7346, %v7347
      %v7349 = vsel %vm6301, %v7330, 0.0
      %v7350 = vadd.f32 %v7348, %v7349
      %v7351 = vsel %vm6301, %v7331, 0.0
      %v7352 = vadd.f32 %v7350, %v7351
      %v7353 = vsel %vm6301, %v7332, 0.0
      %v7354 = vadd.f32 %v7352, %v7353
      %v7355 = vsel %vm6301, %v7333, 0.0
      %v7356 = vadd.f32 %v7354, %v7355
      %v7357 = vsel %vm6301, %v7334, 0.0
      %v7358 = vadd.f32 %v7356, %v7357
      %v7359 = vsel %vm6301, %v7335, 0.0
      %v7360 = vadd.f32 %v7358, %v7359
      %v7361 = vsel %vm6301, %v7336, 0.0
      %v7362 = vadd.f32 %v7360, %v7361
      %v7363 = vsel %vm6301, %v7337, 0.0
      %v7364 = vadd.f32 %v7362, %v7363
      %v7365 = vsel %vm6301, %v7338, 0.0
      %v7366 = vadd.f32 %v7364, %v7365
      %v7367 = vsel %vm6301, %v7339, 0.0
      %v7368 = vadd.f32 %v7366, %v7367
      %v7369 = vsel %vm6301, %v7340, 0.0
      %v7370 = vadd.f32 %v7368, %v7369
      %v7371 = vsel %vm6301, %v7341, 0.0
      %v7372 = vadd.f32 %v7370, %v7371
      %v7373 = vrot.slane %v7372, 4
      %v7374 = vadd.f32 %v7372, %v7373
      %v7375 = vrot.slane %v7374, 2
      %v7376 = vadd.f32 %v7374, %v7375
      %v7377 = vrot.slane %v7376, 1
      %v7378 = vadd.f32 %v7376, %v7377
      %v7379 = vld [vmem:[#allocation4] sm:$0x1]
      %7381 = vset.pattern.permute.xlu0 0
      %7382 = vperm.xlu0 %7381, %v7379
      %v7383 = vpop.permute.xlu0 %7382
      %v7385 = vlaneseq
      %v7386 = vshrl.u32 %v7385, 7
      %v7387 = vsub.s32 0, %v7386
      %v7388 = vrot.slane %v7383, %v7387
      %v7389 = vadd.f32 %v7378, %v7388
      %v7390 = vmax.f32 %v7389, 0.0
      %v7391 = vld [vmem:[%s15] sm:$0xff]
      %v7392 = vld [vmem:[%s15 + $0x8] sm:$0xff]
      %v7393 = vld [vmem:[%s15 + $0x10] sm:$0xff]
      %v7394 = vld [vmem:[%s15 + $0x18] sm:$0xff]
      %v7396 = vsel %vm6301, %v7390, 0
      %7398 = vmatprep.subr.mxu0 %v7392
      %7399 = vmatpush1.msra.mxu0 %v7391
      %7400 = vmatprep.subr.mxu0 %v7394
      %7401 = vmatpush1.msra.mxu0 %v7393
      %7402 = vmatprep.subr.mxu0 0.0
      %7403 = vmatpush1.msra.mxu0 0.0
      %7404 = vmatprep.subr.mxu0 0.0
      %7405 = vmatpush1.msra.mxu0 0.0
      %7406 = vmatprep.subr.mxu0 0.0
      %7407 = vmatpush1.msra.mxu0 0.0
      %7408 = vmatprep.subr.mxu0 0.0
      %7409 = vmatpush1.msra.mxu0 0.0
      %7410 = vmatprep.subr.mxu0 0.0
      %7411 = vmatpush1.msra.mxu0 0.0
      %7412 = vmatprep.subr.mxu0 0.0
      %7413 = vmatpush1.msra.mxu0 0.0
      %7414 = vmatprep.subr.mxu0 0.0
      %7415 = vmatpush1.msra.mxu0 0.0
      %7416 = vmatprep.subr.mxu0 0.0
      %7417 = vmatpush1.msra.mxu0 0.0
      %7418 = vmatprep.subr.mxu0 0.0
      %7419 = vmatpush1.msra.mxu0 0.0
      %7420 = vmatprep.subr.mxu0 0.0
      %7421 = vmatpush1.msra.mxu0 0.0
      %7422 = vmatprep.subr.mxu0 0.0
      %7423 = vmatpush1.msra.mxu0 0.0
      %7424 = vmatprep.subr.mxu0 0.0
      %7425 = vmatpush1.msra.mxu0 0.0
      %7426 = vmatprep.subr.mxu0 0.0
      %7427 = vmatpush1.msra.mxu0 0.0
      %7428 = vmatprep.subr.mxu0 0.0
      %7429 = vmatpush1.msra.mxu0 0.0
      %7430 = vmatprep.subr.mxu0 0.0
      %7431 = vmatpush1.msra.mxu0 0.0
      %7432 = vmatprep.subr.mxu0 0.0
      %7433 = vmatpush1.msra.mxu0 0.0
      %7434 = vmatprep.subr.mxu0 0.0
      %7435 = vmatpush1.msra.mxu0 0.0
      %7436 = vmatprep.subr.mxu0 0.0
      %7437 = vmatpush1.msra.mxu0 0.0
      %7438 = vmatprep.subr.mxu0 0.0
      %7439 = vmatpush1.msra.mxu0 0.0
      %7440 = vmatprep.subr.mxu0 0.0
      %7441 = vmatpush1.msra.mxu0 0.0
      %7442 = vmatprep.subr.mxu0 0.0
      %7443 = vmatpush1.msra.mxu0 0.0
      %7444 = vmatprep.subr.mxu0 0.0
      %7445 = vmatpush1.msra.mxu0 0.0
      %7446 = vmatprep.subr.mxu0 0.0
      %7447 = vmatpush1.msra.mxu0 0.0
      %7448 = vmatprep.subr.mxu0 0.0
      %7449 = vmatpush1.msra.mxu0 0.0
      %7450 = vmatprep.subr.mxu0 0.0
      %7451 = vmatpush1.msra.mxu0 0.0
      %7452 = vmatprep.subr.mxu0 0.0
      %7453 = vmatpush1.msra.mxu0 0.0
      %7454 = vmatprep.subr.mxu0 0.0
      %7455 = vmatpush1.msra.mxu0 0.0
      %7456 = vmatprep.subr.mxu0 0.0
      %7457 = vmatpush1.msra.mxu0 0.0
      %7458 = vmatprep.subr.mxu0 0.0
      %7459 = vmatpush1.msra.mxu0 0.0
      %7460 = vmatprep.subr.mxu0 0.0
      %7461 = vmatpush1.msra.mxu0 0.0
      %7462 = vmatprep.mubr.f32.mxu0 0.0
      %7463 = vmatmul.mubr.f32.gmra.mrb[0].mxu0 %v7396
      %v7464 = vpop.f32.mrb[0].mxu0
      %v7465 = vadd.f32 0.0, %v7464
      %v7466 = vpop.f32.mrb[0].mxu0
      %v7467 = vadd.f32 0.0, %v7466
      %7468 = vdwg.mxu0
      %v7469 = vsub.f32 0.0, %v7465
      %v7470 = vsub.f32 0.0, %v7467
      %v7471 = vmul.f32 %v7469, 1.442695
      %v7472 = vpow.pop %v7471
      %v7473 = vmul.f32 %v7470, 1.442695
      %v7474 = vpow.pop %v7473
      %v7475 = vadd.f32 %v7472, 1.0
      %v7476 = vadd.f32 %v7474, 1.0
      %v7477 = vrcp.pop %v7475
      %v7478 = vrcp.pop %v7476
      %v7481 = vcombine.low %v7477, %v7478
      %v7483 = vunpack.c.l.s4 1966171168
      %v7484 = vunpack.c.0.s8 %v7483
      %v7485 = vlaneseq
      %v7486 = vshrl.u32 %v7485, 7
      %v7487 = vsub.s32 %v7484, %v7486
      %v7488 = vrot.slane %v7481, %v7487
      %v7490 = vunpack.c.l.s4 1966171168
      %v7491 = vunpack.c.0.s8 %v7490
      %v7492 = vlaneseq
      %v7493 = vshrl.u32 %v7492, 7
      %v7494 = vsub.s32 %v7491, %v7493
      %v7495 = vrot.slane %v7488, %v7494
      %v7497 = vlaneseq
      %vm7498 = vcmp.ge.s32.totalorder %v7497, 0
      %vm7499 = vcmp.lt.s32.totalorder %v7497, 256
      %vm7500 = vmand %vm7498, %vm7499
      %7501 = vst.msk [vmem:[%s521] sm:$0x3] %vm7500, %v7495
      %p7502 = scmp.lt.s32.totalorder %s29, 1
      %s7503 = scalar_select %p7502, %s29, 1
      %s7504 = smul.addr %s7503, 2
      %s7505 = scalar_lea.vmem %s16, %s7504
      // Predicated region
      $region85: #{attention_forward.1} parent=83 // pred_check
        %p7506 = pneg %p388
      $region86: #{attention_forward.1} parent=83 // pred_check_branch
        %7508 = sbr.rel (%p7506) target = $region88
      $region87: #{attention_forward.1} parent=83 // pred_region
        _
      $region88: #{attention_forward.1} parent=83 // pred_fallthru
        _
    $region84: #{attention_forward.1} parent=5 // pred_fallthru
      _
    %p7509 = scmp.le.s32.totalorder 2, %s24
    // Predicated region
    $region89: #{attention_forward.1} parent=5 // pred_check
      %p7510 = pneg %p7509
    $region90: #{attention_forward.1} parent=5 // pred_check_branch
      %7512 = sbr.rel (%p7510) target = $region92
    $region91: #{attention_forward.1} parent=5 // pred_region
      %s7513 = ssub.s32 %s24, 2
      // Predicated region
      $region93: #{attention_forward.1} parent=91 // pred_check
        %p7514 = pneg %p394
      $region94: #{attention_forward.1} parent=91 // pred_check_branch
        %7516 = sbr.rel (%p7514) target = $region96
      $region95: #{attention_forward.1} parent=91 // pred_region
        %p7517 = scmp.lt.s32.totalorder %s30, 1
        %s7518 = scalar_select %p7517, %s30, 1
        %s7519 = smul.addr %s7518, 2
        %s7520 = scalar_lea.vmem %s16, %s7519
      $region96: #{attention_forward.1} parent=91 // pred_fallthru
        _
    $region92: #{attention_forward.1} parent=5 // pred_fallthru
      _
  $region6: #{attention_forward.1} parent=0 // loop_footer
    %s28 = sadd.s32 1, %s24
  $region7: #{attention_forward.1} parent=0 // loop_footer_branch
    %23 = sbr.rel target = $region3
  $region8: #{attention_forward.1} parent=0 // loop_exit
    _

</llo_original>
